<compile_context>
chip_gen: v7x
topology: tpu7x:2x2x1
jax: 0.10.0
libtpu: 0.0.40
codegen_flags: <defaults>
</compile_context>

<pallas_src>
import functools

import jax
import jax.numpy as jnp
from jax import lax
from jax.experimental import pallas as pl
from jax.experimental.pallas import tpu as pltpu

EPS = 1e-5
DILATIONS = (6, 12, 18)   # output_stride == 16
LANE = 128


def _round_up(v, m):
    return (v + m - 1) // m * m


def _pick_tile_h(h, w):
    """Largest divisor of h keeping tile rows (tile_h * w) <= 1024."""
    best = 1
    for th in range(1, h + 1):
        if h % th == 0 and th * w <= 1024:
            best = th
    return best


# ----------------------------------------------------------------------------
# Fused encoder kernel.  For one (image, row-tile) block it computes
#   out = ReLU(BN_cat( sum_i ReLU(BN_i(conv_i(x))) @ Wcat_i + pooled_bias ))
# ----------------------------------------------------------------------------
def _encoder_tile_kernel(
    x_ref,          # (Hp, Wp, Cin)    padded image (compute dtype), resident
    w0_ref,         # (Cin, Cp)        1x1 ASPP branch weight
    wd_ref,         # (3, 9, Cin, Cp)  dilated 3x3 ASPP weights (per tap)
    wc_ref,         # (4, Cp, Cp)      Concat1x1 weight row-blocks, branches 0..3
    br_scale_ref,   # (4, 1, Cp) f32   folded BN scale, branches 0..3
    br_shift_ref,   # (4, 1, Cp) f32   folded BN shift, branches 0..3
    bias4_ref,      # (1, Cp) f32      pooled-branch contribution (per image)
    cat_scale_ref,  # (1, Cp) f32
    cat_shift_ref,  # (1, Cp) f32
    o_ref,          # (tile_h * W, Cp) f32
    *, tile_h, width, dmax, dilations,
):
    th, w = tile_h, width
    m = th * w
    cin = x_ref.shape[-1]
    cdt = x_ref.dtype

    # First output row handled by this tile (relative to the unpadded image).
    h0 = pl.multiple_of(pl.program_id(1) * th, th)

    def tap(h_start, w_start):
        # Shifted (th, w, cin) window of the padded image, flattened to (m, cin).
        blk = x_ref[pl.ds(h_start, th), pl.ds(w_start, w), :]
        return blk.reshape(m, cin)

    def bn_relu(acc, idx):
        y = acc * br_scale_ref[idx, :, :] + br_shift_ref[idx, :, :]
        return jnp.maximum(y, 0.0)

    # --- branch 0: 1x1 conv + BN + ReLU, fused into the concat conv ----------
    y = jnp.dot(tap(h0 + dmax, dmax), w0_ref[...],
                preferred_element_type=jnp.float32)
    y = bn_relu(y, 0)
    acc = jnp.dot(y.astype(cdt), wc_ref[0, :, :],
                  preferred_element_type=jnp.float32)

    # --- branches 1..3: dilated 3x3 convs (9 shifted matmuls each) -----------
    for bi, d in enumerate(dilations):
        conv = jnp.zeros_like(acc)
        for kh in range(3):
            for kw in range(3):
                xt = tap(h0 + dmax - d + kh * d, dmax - d + kw * d)
                conv = conv + jnp.dot(xt, wd_ref[bi, kh * 3 + kw, :, :],
                                      preferred_element_type=jnp.float32)
        y = bn_relu(conv, bi + 1)
        acc = acc + jnp.dot(y.astype(cdt), wc_ref[bi + 1, :, :],
                            preferred_element_type=jnp.float32)

    # --- branch 4 (global pool) enters as a per-image constant bias ----------
    acc = acc + bias4_ref[...]

    # --- Concat1x1 BN + ReLU (Dropout is identity in eval mode) --------------
    out = jnp.maximum(acc * cat_scale_ref[...] + cat_shift_ref[...], 0.0)
    o_ref[...] = out.astype(o_ref.dtype)


# ----------------------------------------------------------------------------
# Parameter packing: pad Cout -> Cp (multiple of 128) and split the concat
# weight into per-branch row blocks.
# ----------------------------------------------------------------------------
def _prepare_params(params, cin, cout, cp):
    def pad_last(a):
        pad = [(0, 0)] * (a.ndim - 1) + [(0, cp - cout)]
        return jnp.pad(a, pad)

    w0 = pad_last(params["aspp0_w"])                                   # (cin, cp)
    wd = jnp.stack(
        [pad_last(params[f"aspp{i + 1}_w"]).reshape(9, cin, cp) for i in range(3)],
        axis=0)                                                        # (3,9,cin,cp)
    w4 = pad_last(params["aspp4_w"])                                   # (cin, cp)

    cat_w = params["cat_w"]                                            # (5*cout, cout)
    blocks = []
    for i in range(5):
        blk = cat_w[i * cout:(i + 1) * cout, :]
        blocks.append(jnp.pad(blk, ((0, cp - cout), (0, cp - cout))))  # (cp, cp)
    wc = jnp.stack(blocks[:4], axis=0)                                 # (4, cp, cp)
    wc4 = blocks[4]                                                    # (cp, cp)

    br_scale = jnp.stack([pad_last(params[f"aspp{i}_scale"]) for i in range(4)], 0)
    br_shift = jnp.stack([pad_last(params[f"aspp{i}_shift"]) for i in range(4)], 0)

    return dict(
        w0=w0, wd=wd, wc=wc, w4=w4, wc4=wc4,
        br_scale=br_scale, br_shift=br_shift,
        s4=pad_last(params["aspp4_scale"]), b4=pad_last(params["aspp4_shift"]),
        cat_scale=pad_last(params["cat_scale"]),
        cat_shift=pad_last(params["cat_shift"]))


# ----------------------------------------------------------------------------
# Encoder forward (Pallas path)
# ----------------------------------------------------------------------------
def encoder_forward(x_nchw, params, *, compute_dtype=jnp.bfloat16, tile_h=None):
    x = jnp.transpose(x_nchw, (0, 2, 3, 1)).astype(jnp.float32)   # -> NHWC
    n, h, w, cin = x.shape
    cout = params["aspp0_w"].shape[-1]
    cp = _round_up(cout, LANE)
    dmax = max(DILATIONS)

    if tile_h is None:
        tile_h = _pick_tile_h(h, w)
    assert h % tile_h == 0, (h, tile_h)
    m_tile = tile_h * w

    kp = _prepare_params(params, cin, cout, cp)

    # Global-average-pool branch: tiny, plain JAX, folded into a per-image bias
    # (its output is constant over HxW; the bilinear upsample of a 1x1 source
    # with align_corners=False is exactly that broadcast).
    pooled = jnp.mean(x, axis=(1, 2))                                  # (n, cin)
    y4 = jnp.maximum(
        jnp.dot(pooled, kp["w4"], precision="highest") * kp["s4"] + kp["b4"], 0.0)
    bias4 = jnp.dot(y4, kp["wc4"], precision="highest").reshape(n, 1, cp)

    xp = jnp.pad(x, ((0, 0), (dmax, dmax), (dmax, dmax), (0, 0)))
    xp = xp.astype(compute_dtype)
    hp, wp = h + 2 * dmax, w + 2 * dmax

    w0 = kp["w0"].astype(compute_dtype)
    wd = kp["wd"].astype(compute_dtype)
    wc = kp["wc"].astype(compute_dtype)

    kernel = functools.partial(
        _encoder_tile_kernel, tile_h=tile_h, width=w, dmax=dmax,
        dilations=DILATIONS)

    flops = 2 * n * h * w * (cin * cp * (1 + 9 * len(DILATIONS)) + cp * cp * 4)
    bytes_accessed = int(
        xp.size * xp.dtype.itemsize
        + w0.size * w0.dtype.itemsize
        + wd.size * wd.dtype.itemsize
        + wc.size * wc.dtype.itemsize
        + (kp["br_scale"].size + kp["br_shift"].size + bias4.size
           + kp["cat_scale"].size + kp["cat_shift"].size) * 4
        + n * h * w * cp * 4)

    out_flat = pl.pallas_call(
        kernel,
        out_shape=jax.ShapeDtypeStruct((n, h * w, cp), jnp.float32),
        grid=(n, h // tile_h),
        in_specs=[
            # Whole padded image: index depends only on the image axis, so it
            # is fetched once per image and stays resident across row tiles.
            pl.BlockSpec((None, hp, wp, cin), lambda i, t: (i, 0, 0, 0)),
            pl.BlockSpec((cin, cp), lambda i, t: (0, 0)),
            pl.BlockSpec((3, 9, cin, cp), lambda i, t: (0, 0, 0, 0)),
            pl.BlockSpec((4, cp, cp), lambda i, t: (0, 0, 0)),
            pl.BlockSpec((4, 1, cp), lambda i, t: (0, 0, 0)),
            pl.BlockSpec((4, 1, cp), lambda i, t: (0, 0, 0)),
            pl.BlockSpec((None, 1, cp), lambda i, t: (i, 0, 0)),
            pl.BlockSpec((1, cp), lambda i, t: (0, 0)),
            pl.BlockSpec((1, cp), lambda i, t: (0, 0)),
        ],
        out_specs=pl.BlockSpec((None, m_tile, cp), lambda i, t: (i, t, 0)),
        compiler_params=pltpu.CompilerParams(
            dimension_semantics=("parallel", "parallel"),
            vmem_limit_bytes=48 * 1024 * 1024),
        cost_estimate=pl.CostEstimate(
            flops=flops, transcendentals=0, bytes_accessed=bytes_accessed),
    )(xp, w0, wd, wc, kp["br_scale"], kp["br_shift"], bias4,
      kp["cat_scale"], kp["cat_shift"])

    out = out_flat[:, :, :cout].reshape(n, h, w, cout)
    return jnp.transpose(out, (0, 3, 1, 2))   # back to NCHW


# ----------------------------------------------------------------------------
# Parameter init (BN folded into scale/shift, eval mode)
# ----------------------------------------------------------------------------
def init_params(key, in_channels, out_channels):
    keys = jax.random.split(key, 32)
    it = iter(keys)
    params = {}

    def bn(prefix, c):
        gamma = jax.random.uniform(next(it), (c,), minval=0.5, maxval=1.5)
        beta = 0.1 * jax.random.normal(next(it), (c,))
        mean = 0.1 * jax.random.normal(next(it), (c,))
        var = jax.random.uniform(next(it), (c,), minval=0.5, maxval=1.5)
        scale = gamma / jnp.sqrt(var + EPS)
        shift = beta - mean * scale
        params[prefix + "_scale"] = scale.reshape(1, c).astype(jnp.float32)
        params[prefix + "_shift"] = shift.reshape(1, c).astype(jnp.float32)

    params["aspp0_w"] = (0.3 * jax.random.normal(next(it), (in_channels, out_channels))).astype(jnp.float32)
    bn("aspp0", out_channels)
    for i in range(3):
        params[f"aspp{i+1}_w"] = (
            0.1 * jax.random.normal(next(it), (3, 3, in_channels, out_channels))
        ).astype(jnp.float32)
        bn(f"aspp{i+1}", out_channels)
    params["aspp4_w"] = (0.3 * jax.random.normal(next(it), (in_channels, out_channels))).astype(jnp.float32)
    bn("aspp4", out_channels)
    params["cat_w"] = (0.2 * jax.random.normal(next(it), (5 * out_channels, out_channels))).astype(jnp.float32)
    bn("cat", out_channels)
    return params


# ----------------------------------------------------------------------------
# Pure-JAX reference (correctness check only)
# ----------------------------------------------------------------------------
def reference_forward(x_nchw, params):
    x = jnp.transpose(x_nchw, (0, 2, 3, 1)).astype(jnp.float32)
    N, H, W, Cin = x.shape
    Cout = params["aspp0_w"].shape[-1]
    dn = ("NHWC", "HWIO", "NHWC")

    def bn_relu(y, prefix):
        s = params[prefix + "_scale"].reshape(1, 1, 1, -1)
        b = params[prefix + "_shift"].reshape(1, 1, 1, -1)
        return jnp.maximum(y * s + b, 0.0)

    outs = []
    y = lax.conv_general_dilated(x, params["aspp0_w"].reshape(1, 1, Cin, Cout),
                                 (1, 1), "VALID", dimension_numbers=dn)
    outs.append(bn_relu(y, "aspp0"))
    for i, d in enumerate(DILATIONS):
        y = lax.conv_general_dilated(x, params[f"aspp{i+1}_w"], (1, 1),
                                     [(d, d), (d, d)], rhs_dilation=(d, d),
                                     dimension_numbers=dn)
        outs.append(bn_relu(y, f"aspp{i+1}"))
    pooled = jnp.mean(x, axis=(1, 2), keepdims=True)
    y = lax.conv_general_dilated(pooled, params["aspp4_w"].reshape(1, 1, Cin, Cout),
                                 (1, 1), "VALID", dimension_numbers=dn)
    y = bn_relu(y, "aspp4")
    outs.append(jnp.broadcast_to(y, (N, H, W, Cout)))
    cat = jnp.concatenate(outs, axis=-1)
    y = lax.conv_general_dilated(cat, params["cat_w"].reshape(1, 1, 5 * Cout, Cout),
                                 (1, 1), "VALID", dimension_numbers=dn)
    y = bn_relu(y, "cat")
    return jnp.transpose(y, (0, 3, 1, 2))


if __name__ == "__main__":
    key = jax.random.PRNGKey(0)
    kx, kparam = jax.random.split(key)

    N, Cin, H, W = 2, 8, 16, 16
    Cout = 8

    x = jax.random.normal(kx, (N, Cin, H, W), dtype=jnp.float32)
    params = init_params(kparam, Cin, Cout)

    # f32 compute path: exact check against the XLA reference.
    out = jax.block_until_ready(
        encoder_forward(x, params, compute_dtype=jnp.float32, tile_h=8))
    assert out.shape == (N, Cout, H, W), out.shape

    ref = jax.block_until_ready(reference_forward(x, params))
    max_err = float(jnp.max(jnp.abs(out - ref)))
    if not jnp.allclose(out, ref, rtol=1e-3, atol=1e-3):
        raise AssertionError(f"Pallas/reference mismatch, max abs err={max_err:e}")

    # bf16 MXU path (the perf configuration on v5e/v6e/v7x): run + sanity check.
    out_bf16 = jax.block_until_ready(
        encoder_forward(x, params, compute_dtype=jnp.bfloat16, tile_h=8))
    assert out_bf16.shape == (N, Cout, H, W), out_bf16.shape
    if not bool(jnp.all(jnp.isfinite(out_bf16))):
        raise AssertionError("bf16 path produced non-finite values")

    print("KERNEL_OK")
</pallas_src>

<mosaic_0001>
module attributes {stable_mosaic.version = 11 : i64} {
  func.func @_encoder_tile_kernel(%arg0: i32, %arg1: i32, %arg2: memref<1x52x52x8xf32, #tpu.memory_space<vmem>>, %arg3: memref<8x128xf32, #tpu.memory_space<vmem>>, %arg4: memref<3x9x8x128xf32, #tpu.memory_space<vmem>>, %arg5: memref<4x128x128xf32, #tpu.memory_space<vmem>>, %arg6: memref<4x1x128xf32, #tpu.memory_space<vmem>>, %arg7: memref<4x1x128xf32, #tpu.memory_space<vmem>>, %arg8: memref<1x1x128xf32, #tpu.memory_space<vmem>>, %arg9: memref<1x128xf32, #tpu.memory_space<vmem>>, %arg10: memref<1x128xf32, #tpu.memory_space<vmem>>, %arg11: memref<1x128x128xf32, #tpu.memory_space<vmem>>) attributes {dimension_semantics = [#tpu.dimension_semantics<parallel>, #tpu.dimension_semantics<parallel>], iteration_bounds = array<i64: 2, 2>, scalar_prefetch = 0 : i64, scratch_operands = 0 : i64, tpu.core_type = #tpu.core_type<tc>, window_params = [{transform_indices = @transform_0, window_bounds = array<i64: 1, 52, 52, 8>}, {pipeline_mode = #tpu.pipeline_mode<synchronous>, transform_indices = @transform_1, window_bounds = array<i64: 8, 128>}, {pipeline_mode = #tpu.pipeline_mode<synchronous>, transform_indices = @transform_2, window_bounds = array<i64: 3, 9, 8, 128>}, {pipeline_mode = #tpu.pipeline_mode<synchronous>, transform_indices = @transform_3, window_bounds = array<i64: 4, 128, 128>}, {pipeline_mode = #tpu.pipeline_mode<synchronous>, transform_indices = @transform_4, window_bounds = array<i64: 4, 1, 128>}, {pipeline_mode = #tpu.pipeline_mode<synchronous>, transform_indices = @transform_5, window_bounds = array<i64: 4, 1, 128>}, {transform_indices = @transform_6, window_bounds = array<i64: 1, 1, 128>}, {pipeline_mode = #tpu.pipeline_mode<synchronous>, transform_indices = @transform_7, window_bounds = array<i64: 1, 128>}, {pipeline_mode = #tpu.pipeline_mode<synchronous>, transform_indices = @transform_8, window_bounds = array<i64: 1, 128>}, {transform_indices = @transform_9, window_bounds = array<i64: 1, 128, 128>}]} {
    %c8_i32 = arith.constant 8 : i32
    %0 = arith.muli %arg1, %c8_i32 : i32
    %1 = tpu.assume_multiple %0, 8 : i32
    %c18_i32 = arith.constant 18 : i32
    %2 = arith.addi %1, %c18_i32 : i32
    %c0 = arith.constant 0 : index
    %3 = arith.index_cast %2 : i32 to index
    %c18 = arith.constant 18 : index
    %c0_0 = arith.constant 0 : index
    %4 = vector.load %arg2[%c0, %3, %c18, %c0_0] : memref<1x52x52x8xf32, #tpu.memory_space<vmem>>, vector<1x8x16x8xf32>
    %5 = vector.shape_cast %4 : vector<1x8x16x8xf32> to vector<8x16x8xf32>
    %6 = vector.shape_cast %5 : vector<8x16x8xf32> to vector<128x8xf32>
    %c0_1 = arith.constant 0 : index
    %c0_2 = arith.constant 0 : index
    %7 = vector.load %arg3[%c0_1, %c0_2] : memref<8x128xf32, #tpu.memory_space<vmem>>, vector<8x128xf32>
    %cst = arith.constant dense<0.000000e+00> : vector<128x128xf32>
    %8 = tpu.matmul %6, %7, %cst {dimension_numbers = #tpu.dot_dimension_numbers<[1], [0], [0], [1], [0, 0, 1, 1], [], []>} : vector<128x8xf32>, vector<8x128xf32>, vector<128x128xf32> -> vector<128x128xf32>
    %c0_3 = arith.constant 0 : index
    %c0_4 = arith.constant 0 : index
    %c0_5 = arith.constant 0 : index
    %9 = vector.load %arg6[%c0_3, %c0_4, %c0_5] : memref<4x1x128xf32, #tpu.memory_space<vmem>>, vector<1x1x128xf32>
    %10 = vector.shape_cast %9 : vector<1x1x128xf32> to vector<1x128xf32>
    %11 = vector.broadcast %10 : vector<1x128xf32> to vector<128x128xf32>
    %12 = arith.mulf %8, %11 : vector<128x128xf32>
    %c0_6 = arith.constant 0 : index
    %c0_7 = arith.constant 0 : index
    %c0_8 = arith.constant 0 : index
    %13 = vector.load %arg7[%c0_6, %c0_7, %c0_8] : memref<4x1x128xf32, #tpu.memory_space<vmem>>, vector<1x1x128xf32>
    %14 = vector.shape_cast %13 : vector<1x1x128xf32> to vector<1x128xf32>
    %15 = vector.broadcast %14 : vector<1x128xf32> to vector<128x128xf32>
    %16 = arith.addf %12, %15 : vector<128x128xf32>
    %cst_9 = arith.constant 0.000000e+00 : f32
    %17 = vector.broadcast %cst_9 : f32 to vector<128x128xf32>
    %18 = arith.maximumf %16, %17 : vector<128x128xf32>
    %c0_10 = arith.constant 0 : index
    %c0_11 = arith.constant 0 : index
    %c0_12 = arith.constant 0 : index
    %19 = vector.load %arg5[%c0_10, %c0_11, %c0_12] : memref<4x128x128xf32, #tpu.memory_space<vmem>>, vector<1x128x128xf32>
    %20 = vector.shape_cast %19 : vector<1x128x128xf32> to vector<128x128xf32>
    %cst_13 = arith.constant dense<0.000000e+00> : vector<128x128xf32>
    %21 = tpu.matmul %18, %20, %cst_13 {dimension_numbers = #tpu.dot_dimension_numbers<[1], [0], [0], [1], [0, 0, 1, 1], [], []>} : vector<128x128xf32>, vector<128x128xf32>, vector<128x128xf32> -> vector<128x128xf32>
    %cst_14 = arith.constant 0.000000e+00 : f32
    %22 = vector.broadcast %cst_14 : f32 to vector<128x128xf32>
    %c18_i32_15 = arith.constant 18 : i32
    %23 = arith.addi %1, %c18_i32_15 : i32
    %c6_i32 = arith.constant 6 : i32
    %24 = arith.subi %23, %c6_i32 : i32
    %c0_i32 = arith.constant 0 : i32
    %25 = arith.addi %24, %c0_i32 : i32
    %c0_16 = arith.constant 0 : index
    %26 = arith.index_cast %25 : i32 to index
    %c12 = arith.constant 12 : index
    %c0_17 = arith.constant 0 : index
    %27 = vector.load %arg2[%c0_16, %26, %c12, %c0_17] : memref<1x52x52x8xf32, #tpu.memory_space<vmem>>, vector<1x8x16x8xf32>
    %28 = vector.shape_cast %27 : vector<1x8x16x8xf32> to vector<8x16x8xf32>
    %29 = vector.shape_cast %28 : vector<8x16x8xf32> to vector<128x8xf32>
    %c0_18 = arith.constant 0 : index
    %c0_19 = arith.constant 0 : index
    %c0_20 = arith.constant 0 : index
    %c0_21 = arith.constant 0 : index
    %30 = vector.load %arg4[%c0_18, %c0_19, %c0_20, %c0_21] : memref<3x9x8x128xf32, #tpu.memory_space<vmem>>, vector<1x1x8x128xf32>
    %31 = vector.shape_cast %30 : vector<1x1x8x128xf32> to vector<8x128xf32>
    %cst_22 = arith.constant dense<0.000000e+00> : vector<128x128xf32>
    %32 = tpu.matmul %29, %31, %cst_22 {dimension_numbers = #tpu.dot_dimension_numbers<[1], [0], [0], [1], [0, 0, 1, 1], [], []>} : vector<128x8xf32>, vector<8x128xf32>, vector<128x128xf32> -> vector<128x128xf32>
    %33 = arith.addf %22, %32 : vector<128x128xf32>
    %c18_i32_23 = arith.constant 18 : i32
    %34 = arith.addi %1, %c18_i32_23 : i32
    %c6_i32_24 = arith.constant 6 : i32
    %35 = arith.subi %34, %c6_i32_24 : i32
    %c0_i32_25 = arith.constant 0 : i32
    %36 = arith.addi %35, %c0_i32_25 : i32
    %c0_26 = arith.constant 0 : index
    %37 = arith.index_cast %36 : i32 to index
    %c18_27 = arith.constant 18 : index
    %c0_28 = arith.constant 0 : index
    %38 = vector.load %arg2[%c0_26, %37, %c18_27, %c0_28] : memref<1x52x52x8xf32, #tpu.memory_space<vmem>>, vector<1x8x16x8xf32>
    %39 = vector.shape_cast %38 : vector<1x8x16x8xf32> to vector<8x16x8xf32>
    %40 = vector.shape_cast %39 : vector<8x16x8xf32> to vector<128x8xf32>
    %c0_29 = arith.constant 0 : index
    %c1 = arith.constant 1 : index
    %c0_30 = arith.constant 0 : index
    %c0_31 = arith.constant 0 : index
    %41 = vector.load %arg4[%c0_29, %c1, %c0_30, %c0_31] : memref<3x9x8x128xf32, #tpu.memory_space<vmem>>, vector<1x1x8x128xf32>
    %42 = vector.shape_cast %41 : vector<1x1x8x128xf32> to vector<8x128xf32>
    %cst_32 = arith.constant dense<0.000000e+00> : vector<128x128xf32>
    %43 = tpu.matmul %40, %42, %cst_32 {dimension_numbers = #tpu.dot_dimension_numbers<[1], [0], [0], [1], [0, 0, 1, 1], [], []>} : vector<128x8xf32>, vector<8x128xf32>, vector<128x128xf32> -> vector<128x128xf32>
    %44 = arith.addf %33, %43 : vector<128x128xf32>
    %c18_i32_33 = arith.constant 18 : i32
    %45 = arith.addi %1, %c18_i32_33 : i32
    %c6_i32_34 = arith.constant 6 : i32
    %46 = arith.subi %45, %c6_i32_34 : i32
    %c0_i32_35 = arith.constant 0 : i32
    %47 = arith.addi %46, %c0_i32_35 : i32
    %c0_36 = arith.constant 0 : index
    %48 = arith.index_cast %47 : i32 to index
    %c24 = arith.constant 24 : index
    %c0_37 = arith.constant 0 : index
    %49 = vector.load %arg2[%c0_36, %48, %c24, %c0_37] : memref<1x52x52x8xf32, #tpu.memory_space<vmem>>, vector<1x8x16x8xf32>
    %50 = vector.shape_cast %49 : vector<1x8x16x8xf32> to vector<8x16x8xf32>
    %51 = vector.shape_cast %50 : vector<8x16x8xf32> to vector<128x8xf32>
    %c0_38 = arith.constant 0 : index
    %c2 = arith.constant 2 : index
    %c0_39 = arith.constant 0 : index
    %c0_40 = arith.constant 0 : index
    %52 = vector.load %arg4[%c0_38, %c2, %c0_39, %c0_40] : memref<3x9x8x128xf32, #tpu.memory_space<vmem>>, vector<1x1x8x128xf32>
    %53 = vector.shape_cast %52 : vector<1x1x8x128xf32> to vector<8x128xf32>
    %cst_41 = arith.constant dense<0.000000e+00> : vector<128x128xf32>
    %54 = tpu.matmul %51, %53, %cst_41 {dimension_numbers = #tpu.dot_dimension_numbers<[1], [0], [0], [1], [0, 0, 1, 1], [], []>} : vector<128x8xf32>, vector<8x128xf32>, vector<128x128xf32> -> vector<128x128xf32>
    %55 = arith.addf %44, %54 : vector<128x128xf32>
    %c18_i32_42 = arith.constant 18 : i32
    %56 = arith.addi %1, %c18_i32_42 : i32
    %c6_i32_43 = arith.constant 6 : i32
    %57 = arith.subi %56, %c6_i32_43 : i32
    %c6_i32_44 = arith.constant 6 : i32
    %58 = arith.addi %57, %c6_i32_44 : i32
    %c0_45 = arith.constant 0 : index
    %59 = arith.index_cast %58 : i32 to index
    %c12_46 = arith.constant 12 : index
    %c0_47 = arith.constant 0 : index
    %60 = vector.load %arg2[%c0_45, %59, %c12_46, %c0_47] : memref<1x52x52x8xf32, #tpu.memory_space<vmem>>, vector<1x8x16x8xf32>
    %61 = vector.shape_cast %60 : vector<1x8x16x8xf32> to vector<8x16x8xf32>
    %62 = vector.shape_cast %61 : vector<8x16x8xf32> to vector<128x8xf32>
    %c0_48 = arith.constant 0 : index
    %c3 = arith.constant 3 : index
    %c0_49 = arith.constant 0 : index
    %c0_50 = arith.constant 0 : index
    %63 = vector.load %arg4[%c0_48, %c3, %c0_49, %c0_50] : memref<3x9x8x128xf32, #tpu.memory_space<vmem>>, vector<1x1x8x128xf32>
    %64 = vector.shape_cast %63 : vector<1x1x8x128xf32> to vector<8x128xf32>
    %cst_51 = arith.constant dense<0.000000e+00> : vector<128x128xf32>
    %65 = tpu.matmul %62, %64, %cst_51 {dimension_numbers = #tpu.dot_dimension_numbers<[1], [0], [0], [1], [0, 0, 1, 1], [], []>} : vector<128x8xf32>, vector<8x128xf32>, vector<128x128xf32> -> vector<128x128xf32>
    %66 = arith.addf %55, %65 : vector<128x128xf32>
    %c18_i32_52 = arith.constant 18 : i32
    %67 = arith.addi %1, %c18_i32_52 : i32
    %c6_i32_53 = arith.constant 6 : i32
    %68 = arith.subi %67, %c6_i32_53 : i32
    %c6_i32_54 = arith.constant 6 : i32
    %69 = arith.addi %68, %c6_i32_54 : i32
    %c0_55 = arith.constant 0 : index
    %70 = arith.index_cast %69 : i32 to index
    %c18_56 = arith.constant 18 : index
    %c0_57 = arith.constant 0 : index
    %71 = vector.load %arg2[%c0_55, %70, %c18_56, %c0_57] : memref<1x52x52x8xf32, #tpu.memory_space<vmem>>, vector<1x8x16x8xf32>
    %72 = vector.shape_cast %71 : vector<1x8x16x8xf32> to vector<8x16x8xf32>
    %73 = vector.shape_cast %72 : vector<8x16x8xf32> to vector<128x8xf32>
    %c0_58 = arith.constant 0 : index
    %c4 = arith.constant 4 : index
    %c0_59 = arith.constant 0 : index
    %c0_60 = arith.constant 0 : index
    %74 = vector.load %arg4[%c0_58, %c4, %c0_59, %c0_60] : memref<3x9x8x128xf32, #tpu.memory_space<vmem>>, vector<1x1x8x128xf32>
    %75 = vector.shape_cast %74 : vector<1x1x8x128xf32> to vector<8x128xf32>
    %cst_61 = arith.constant dense<0.000000e+00> : vector<128x128xf32>
    %76 = tpu.matmul %73, %75, %cst_61 {dimension_numbers = #tpu.dot_dimension_numbers<[1], [0], [0], [1], [0, 0, 1, 1], [], []>} : vector<128x8xf32>, vector<8x128xf32>, vector<128x128xf32> -> vector<128x128xf32>
    %77 = arith.addf %66, %76 : vector<128x128xf32>
    %c18_i32_62 = arith.constant 18 : i32
    %78 = arith.addi %1, %c18_i32_62 : i32
    %c6_i32_63 = arith.constant 6 : i32
    %79 = arith.subi %78, %c6_i32_63 : i32
    %c6_i32_64 = arith.constant 6 : i32
    %80 = arith.addi %79, %c6_i32_64 : i32
    %c0_65 = arith.constant 0 : index
    %81 = arith.index_cast %80 : i32 to index
    %c24_66 = arith.constant 24 : index
    %c0_67 = arith.constant 0 : index
    %82 = vector.load %arg2[%c0_65, %81, %c24_66, %c0_67] : memref<1x52x52x8xf32, #tpu.memory_space<vmem>>, vector<1x8x16x8xf32>
    %83 = vector.shape_cast %82 : vector<1x8x16x8xf32> to vector<8x16x8xf32>
    %84 = vector.shape_cast %83 : vector<8x16x8xf32> to vector<128x8xf32>
    %c0_68 = arith.constant 0 : index
    %c5 = arith.constant 5 : index
    %c0_69 = arith.constant 0 : index
    %c0_70 = arith.constant 0 : index
    %85 = vector.load %arg4[%c0_68, %c5, %c0_69, %c0_70] : memref<3x9x8x128xf32, #tpu.memory_space<vmem>>, vector<1x1x8x128xf32>
    %86 = vector.shape_cast %85 : vector<1x1x8x128xf32> to vector<8x128xf32>
    %cst_71 = arith.constant dense<0.000000e+00> : vector<128x128xf32>
    %87 = tpu.matmul %84, %86, %cst_71 {dimension_numbers = #tpu.dot_dimension_numbers<[1], [0], [0], [1], [0, 0, 1, 1], [], []>} : vector<128x8xf32>, vector<8x128xf32>, vector<128x128xf32> -> vector<128x128xf32>
    %88 = arith.addf %77, %87 : vector<128x128xf32>
    %c18_i32_72 = arith.constant 18 : i32
    %89 = arith.addi %1, %c18_i32_72 : i32
    %c6_i32_73 = arith.constant 6 : i32
    %90 = arith.subi %89, %c6_i32_73 : i32
    %c12_i32 = arith.constant 12 : i32
    %91 = arith.addi %90, %c12_i32 : i32
    %c0_74 = arith.constant 0 : index
    %92 = arith.index_cast %91 : i32 to index
    %c12_75 = arith.constant 12 : index
    %c0_76 = arith.constant 0 : index
    %93 = vector.load %arg2[%c0_74, %92, %c12_75, %c0_76] : memref<1x52x52x8xf32, #tpu.memory_space<vmem>>, vector<1x8x16x8xf32>
    %94 = vector.shape_cast %93 : vector<1x8x16x8xf32> to vector<8x16x8xf32>
    %95 = vector.shape_cast %94 : vector<8x16x8xf32> to vector<128x8xf32>
    %c0_77 = arith.constant 0 : index
    %c6 = arith.constant 6 : index
    %c0_78 = arith.constant 0 : index
    %c0_79 = arith.constant 0 : index
    %96 = vector.load %arg4[%c0_77, %c6, %c0_78, %c0_79] : memref<3x9x8x128xf32, #tpu.memory_space<vmem>>, vector<1x1x8x128xf32>
    %97 = vector.shape_cast %96 : vector<1x1x8x128xf32> to vector<8x128xf32>
    %cst_80 = arith.constant dense<0.000000e+00> : vector<128x128xf32>
    %98 = tpu.matmul %95, %97, %cst_80 {dimension_numbers = #tpu.dot_dimension_numbers<[1], [0], [0], [1], [0, 0, 1, 1], [], []>} : vector<128x8xf32>, vector<8x128xf32>, vector<128x128xf32> -> vector<128x128xf32>
    %99 = arith.addf %88, %98 : vector<128x128xf32>
    %c18_i32_81 = arith.constant 18 : i32
    %100 = arith.addi %1, %c18_i32_81 : i32
    %c6_i32_82 = arith.constant 6 : i32
    %101 = arith.subi %100, %c6_i32_82 : i32
    %c12_i32_83 = arith.constant 12 : i32
    %102 = arith.addi %101, %c12_i32_83 : i32
    %c0_84 = arith.constant 0 : index
    %103 = arith.index_cast %102 : i32 to index
    %c18_85 = arith.constant 18 : index
    %c0_86 = arith.constant 0 : index
    %104 = vector.load %arg2[%c0_84, %103, %c18_85, %c0_86] : memref<1x52x52x8xf32, #tpu.memory_space<vmem>>, vector<1x8x16x8xf32>
    %105 = vector.shape_cast %104 : vector<1x8x16x8xf32> to vector<8x16x8xf32>
    %106 = vector.shape_cast %105 : vector<8x16x8xf32> to vector<128x8xf32>
    %c0_87 = arith.constant 0 : index
    %c7 = arith.constant 7 : index
    %c0_88 = arith.constant 0 : index
    %c0_89 = arith.constant 0 : index
    %107 = vector.load %arg4[%c0_87, %c7, %c0_88, %c0_89] : memref<3x9x8x128xf32, #tpu.memory_space<vmem>>, vector<1x1x8x128xf32>
    %108 = vector.shape_cast %107 : vector<1x1x8x128xf32> to vector<8x128xf32>
    %cst_90 = arith.constant dense<0.000000e+00> : vector<128x128xf32>
    %109 = tpu.matmul %106, %108, %cst_90 {dimension_numbers = #tpu.dot_dimension_numbers<[1], [0], [0], [1], [0, 0, 1, 1], [], []>} : vector<128x8xf32>, vector<8x128xf32>, vector<128x128xf32> -> vector<128x128xf32>
    %110 = arith.addf %99, %109 : vector<128x128xf32>
    %c18_i32_91 = arith.constant 18 : i32
    %111 = arith.addi %1, %c18_i32_91 : i32
    %c6_i32_92 = arith.constant 6 : i32
    %112 = arith.subi %111, %c6_i32_92 : i32
    %c12_i32_93 = arith.constant 12 : i32
    %113 = arith.addi %112, %c12_i32_93 : i32
    %c0_94 = arith.constant 0 : index
    %114 = arith.index_cast %113 : i32 to index
    %c24_95 = arith.constant 24 : index
    %c0_96 = arith.constant 0 : index
    %115 = vector.load %arg2[%c0_94, %114, %c24_95, %c0_96] : memref<1x52x52x8xf32, #tpu.memory_space<vmem>>, vector<1x8x16x8xf32>
    %116 = vector.shape_cast %115 : vector<1x8x16x8xf32> to vector<8x16x8xf32>
    %117 = vector.shape_cast %116 : vector<8x16x8xf32> to vector<128x8xf32>
    %c0_97 = arith.constant 0 : index
    %c8 = arith.constant 8 : index
    %c0_98 = arith.constant 0 : index
    %c0_99 = arith.constant 0 : index
    %118 = vector.load %arg4[%c0_97, %c8, %c0_98, %c0_99] : memref<3x9x8x128xf32, #tpu.memory_space<vmem>>, vector<1x1x8x128xf32>
    %119 = vector.shape_cast %118 : vector<1x1x8x128xf32> to vector<8x128xf32>
    %cst_100 = arith.constant dense<0.000000e+00> : vector<128x128xf32>
    %120 = tpu.matmul %117, %119, %cst_100 {dimension_numbers = #tpu.dot_dimension_numbers<[1], [0], [0], [1], [0, 0, 1, 1], [], []>} : vector<128x8xf32>, vector<8x128xf32>, vector<128x128xf32> -> vector<128x128xf32>
    %121 = arith.addf %110, %120 : vector<128x128xf32>
    %c1_101 = arith.constant 1 : index
    %c0_102 = arith.constant 0 : index
    %c0_103 = arith.constant 0 : index
    %122 = vector.load %arg6[%c1_101, %c0_102, %c0_103] : memref<4x1x128xf32, #tpu.memory_space<vmem>>, vector<1x1x128xf32>
    %123 = vector.shape_cast %122 : vector<1x1x128xf32> to vector<1x128xf32>
    %124 = vector.broadcast %123 : vector<1x128xf32> to vector<128x128xf32>
    %125 = arith.mulf %121, %124 : vector<128x128xf32>
    %c1_104 = arith.constant 1 : index
    %c0_105 = arith.constant 0 : index
    %c0_106 = arith.constant 0 : index
    %126 = vector.load %arg7[%c1_104, %c0_105, %c0_106] : memref<4x1x128xf32, #tpu.memory_space<vmem>>, vector<1x1x128xf32>
    %127 = vector.shape_cast %126 : vector<1x1x128xf32> to vector<1x128xf32>
    %128 = vector.broadcast %127 : vector<1x128xf32> to vector<128x128xf32>
    %129 = arith.addf %125, %128 : vector<128x128xf32>
    %cst_107 = arith.constant 0.000000e+00 : f32
    %130 = vector.broadcast %cst_107 : f32 to vector<128x128xf32>
    %131 = arith.maximumf %129, %130 : vector<128x128xf32>
    %c1_108 = arith.constant 1 : index
    %c0_109 = arith.constant 0 : index
    %c0_110 = arith.constant 0 : index
    %132 = vector.load %arg5[%c1_108, %c0_109, %c0_110] : memref<4x128x128xf32, #tpu.memory_space<vmem>>, vector<1x128x128xf32>
    %133 = vector.shape_cast %132 : vector<1x128x128xf32> to vector<128x128xf32>
    %cst_111 = arith.constant dense<0.000000e+00> : vector<128x128xf32>
    %134 = tpu.matmul %131, %133, %cst_111 {dimension_numbers = #tpu.dot_dimension_numbers<[1], [0], [0], [1], [0, 0, 1, 1], [], []>} : vector<128x128xf32>, vector<128x128xf32>, vector<128x128xf32> -> vector<128x128xf32>
    %135 = arith.addf %21, %134 : vector<128x128xf32>
    %cst_112 = arith.constant 0.000000e+00 : f32
    %136 = vector.broadcast %cst_112 : f32 to vector<128x128xf32>
    %c18_i32_113 = arith.constant 18 : i32
    %137 = arith.addi %1, %c18_i32_113 : i32
    %c12_i32_114 = arith.constant 12 : i32
    %138 = arith.subi %137, %c12_i32_114 : i32
    %c0_i32_115 = arith.constant 0 : i32
    %139 = arith.addi %138, %c0_i32_115 : i32
    %c0_116 = arith.constant 0 : index
    %140 = arith.index_cast %139 : i32 to index
    %c6_117 = arith.constant 6 : index
    %c0_118 = arith.constant 0 : index
    %141 = vector.load %arg2[%c0_116, %140, %c6_117, %c0_118] : memref<1x52x52x8xf32, #tpu.memory_space<vmem>>, vector<1x8x16x8xf32>
    %142 = vector.shape_cast %141 : vector<1x8x16x8xf32> to vector<8x16x8xf32>
    %143 = vector.shape_cast %142 : vector<8x16x8xf32> to vector<128x8xf32>
    %c1_119 = arith.constant 1 : index
    %c0_120 = arith.constant 0 : index
    %c0_121 = arith.constant 0 : index
    %c0_122 = arith.constant 0 : index
    %144 = vector.load %arg4[%c1_119, %c0_120, %c0_121, %c0_122] : memref<3x9x8x128xf32, #tpu.memory_space<vmem>>, vector<1x1x8x128xf32>
    %145 = vector.shape_cast %144 : vector<1x1x8x128xf32> to vector<8x128xf32>
    %cst_123 = arith.constant dense<0.000000e+00> : vector<128x128xf32>
    %146 = tpu.matmul %143, %145, %cst_123 {dimension_numbers = #tpu.dot_dimension_numbers<[1], [0], [0], [1], [0, 0, 1, 1], [], []>} : vector<128x8xf32>, vector<8x128xf32>, vector<128x128xf32> -> vector<128x128xf32>
    %147 = arith.addf %136, %146 : vector<128x128xf32>
    %c18_i32_124 = arith.constant 18 : i32
    %148 = arith.addi %1, %c18_i32_124 : i32
    %c12_i32_125 = arith.constant 12 : i32
    %149 = arith.subi %148, %c12_i32_125 : i32
    %c0_i32_126 = arith.constant 0 : i32
    %150 = arith.addi %149, %c0_i32_126 : i32
    %c0_127 = arith.constant 0 : index
    %151 = arith.index_cast %150 : i32 to index
    %c18_128 = arith.constant 18 : index
    %c0_129 = arith.constant 0 : index
    %152 = vector.load %arg2[%c0_127, %151, %c18_128, %c0_129] : memref<1x52x52x8xf32, #tpu.memory_space<vmem>>, vector<1x8x16x8xf32>
    %153 = vector.shape_cast %152 : vector<1x8x16x8xf32> to vector<8x16x8xf32>
    %154 = vector.shape_cast %153 : vector<8x16x8xf32> to vector<128x8xf32>
    %c1_130 = arith.constant 1 : index
    %c1_131 = arith.constant 1 : index
    %c0_132 = arith.constant 0 : index
    %c0_133 = arith.constant 0 : index
    %155 = vector.load %arg4[%c1_130, %c1_131, %c0_132, %c0_133] : memref<3x9x8x128xf32, #tpu.memory_space<vmem>>, vector<1x1x8x128xf32>
    %156 = vector.shape_cast %155 : vector<1x1x8x128xf32> to vector<8x128xf32>
    %cst_134 = arith.constant dense<0.000000e+00> : vector<128x128xf32>
    %157 = tpu.matmul %154, %156, %cst_134 {dimension_numbers = #tpu.dot_dimension_numbers<[1], [0], [0], [1], [0, 0, 1, 1], [], []>} : vector<128x8xf32>, vector<8x128xf32>, vector<128x128xf32> -> vector<128x128xf32>
    %158 = arith.addf %147, %157 : vector<128x128xf32>
    %c18_i32_135 = arith.constant 18 : i32
    %159 = arith.addi %1, %c18_i32_135 : i32
    %c12_i32_136 = arith.constant 12 : i32
    %160 = arith.subi %159, %c12_i32_136 : i32
    %c0_i32_137 = arith.constant 0 : i32
    %161 = arith.addi %160, %c0_i32_137 : i32
    %c0_138 = arith.constant 0 : index
    %162 = arith.index_cast %161 : i32 to index
    %c30 = arith.constant 30 : index
    %c0_139 = arith.constant 0 : index
    %163 = vector.load %arg2[%c0_138, %162, %c30, %c0_139] : memref<1x52x52x8xf32, #tpu.memory_space<vmem>>, vector<1x8x16x8xf32>
    %164 = vector.shape_cast %163 : vector<1x8x16x8xf32> to vector<8x16x8xf32>
    %165 = vector.shape_cast %164 : vector<8x16x8xf32> to vector<128x8xf32>
    %c1_140 = arith.constant 1 : index
    %c2_141 = arith.constant 2 : index
    %c0_142 = arith.constant 0 : index
    %c0_143 = arith.constant 0 : index
    %166 = vector.load %arg4[%c1_140, %c2_141, %c0_142, %c0_143] : memref<3x9x8x128xf32, #tpu.memory_space<vmem>>, vector<1x1x8x128xf32>
    %167 = vector.shape_cast %166 : vector<1x1x8x128xf32> to vector<8x128xf32>
    %cst_144 = arith.constant dense<0.000000e+00> : vector<128x128xf32>
    %168 = tpu.matmul %165, %167, %cst_144 {dimension_numbers = #tpu.dot_dimension_numbers<[1], [0], [0], [1], [0, 0, 1, 1], [], []>} : vector<128x8xf32>, vector<8x128xf32>, vector<128x128xf32> -> vector<128x128xf32>
    %169 = arith.addf %158, %168 : vector<128x128xf32>
    %c18_i32_145 = arith.constant 18 : i32
    %170 = arith.addi %1, %c18_i32_145 : i32
    %c12_i32_146 = arith.constant 12 : i32
    %171 = arith.subi %170, %c12_i32_146 : i32
    %c12_i32_147 = arith.constant 12 : i32
    %172 = arith.addi %171, %c12_i32_147 : i32
    %c0_148 = arith.constant 0 : index
    %173 = arith.index_cast %172 : i32 to index
    %c6_149 = arith.constant 6 : index
    %c0_150 = arith.constant 0 : index
    %174 = vector.load %arg2[%c0_148, %173, %c6_149, %c0_150] : memref<1x52x52x8xf32, #tpu.memory_space<vmem>>, vector<1x8x16x8xf32>
    %175 = vector.shape_cast %174 : vector<1x8x16x8xf32> to vector<8x16x8xf32>
    %176 = vector.shape_cast %175 : vector<8x16x8xf32> to vector<128x8xf32>
    %c1_151 = arith.constant 1 : index
    %c3_152 = arith.constant 3 : index
    %c0_153 = arith.constant 0 : index
    %c0_154 = arith.constant 0 : index
    %177 = vector.load %arg4[%c1_151, %c3_152, %c0_153, %c0_154] : memref<3x9x8x128xf32, #tpu.memory_space<vmem>>, vector<1x1x8x128xf32>
    %178 = vector.shape_cast %177 : vector<1x1x8x128xf32> to vector<8x128xf32>
    %cst_155 = arith.constant dense<0.000000e+00> : vector<128x128xf32>
    %179 = tpu.matmul %176, %178, %cst_155 {dimension_numbers = #tpu.dot_dimension_numbers<[1], [0], [0], [1], [0, 0, 1, 1], [], []>} : vector<128x8xf32>, vector<8x128xf32>, vector<128x128xf32> -> vector<128x128xf32>
    %180 = arith.addf %169, %179 : vector<128x128xf32>
    %c18_i32_156 = arith.constant 18 : i32
    %181 = arith.addi %1, %c18_i32_156 : i32
    %c12_i32_157 = arith.constant 12 : i32
    %182 = arith.subi %181, %c12_i32_157 : i32
    %c12_i32_158 = arith.constant 12 : i32
    %183 = arith.addi %182, %c12_i32_158 : i32
    %c0_159 = arith.constant 0 : index
    %184 = arith.index_cast %183 : i32 to index
    %c18_160 = arith.constant 18 : index
    %c0_161 = arith.constant 0 : index
    %185 = vector.load %arg2[%c0_159, %184, %c18_160, %c0_161] : memref<1x52x52x8xf32, #tpu.memory_space<vmem>>, vector<1x8x16x8xf32>
    %186 = vector.shape_cast %185 : vector<1x8x16x8xf32> to vector<8x16x8xf32>
    %187 = vector.shape_cast %186 : vector<8x16x8xf32> to vector<128x8xf32>
    %c1_162 = arith.constant 1 : index
    %c4_163 = arith.constant 4 : index
    %c0_164 = arith.constant 0 : index
    %c0_165 = arith.constant 0 : index
    %188 = vector.load %arg4[%c1_162, %c4_163, %c0_164, %c0_165] : memref<3x9x8x128xf32, #tpu.memory_space<vmem>>, vector<1x1x8x128xf32>
    %189 = vector.shape_cast %188 : vector<1x1x8x128xf32> to vector<8x128xf32>
    %cst_166 = arith.constant dense<0.000000e+00> : vector<128x128xf32>
    %190 = tpu.matmul %187, %189, %cst_166 {dimension_numbers = #tpu.dot_dimension_numbers<[1], [0], [0], [1], [0, 0, 1, 1], [], []>} : vector<128x8xf32>, vector<8x128xf32>, vector<128x128xf32> -> vector<128x128xf32>
    %191 = arith.addf %180, %190 : vector<128x128xf32>
    %c18_i32_167 = arith.constant 18 : i32
    %192 = arith.addi %1, %c18_i32_167 : i32
    %c12_i32_168 = arith.constant 12 : i32
    %193 = arith.subi %192, %c12_i32_168 : i32
    %c12_i32_169 = arith.constant 12 : i32
    %194 = arith.addi %193, %c12_i32_169 : i32
    %c0_170 = arith.constant 0 : index
    %195 = arith.index_cast %194 : i32 to index
    %c30_171 = arith.constant 30 : index
    %c0_172 = arith.constant 0 : index
    %196 = vector.load %arg2[%c0_170, %195, %c30_171, %c0_172] : memref<1x52x52x8xf32, #tpu.memory_space<vmem>>, vector<1x8x16x8xf32>
    %197 = vector.shape_cast %196 : vector<1x8x16x8xf32> to vector<8x16x8xf32>
    %198 = vector.shape_cast %197 : vector<8x16x8xf32> to vector<128x8xf32>
    %c1_173 = arith.constant 1 : index
    %c5_174 = arith.constant 5 : index
    %c0_175 = arith.constant 0 : index
    %c0_176 = arith.constant 0 : index
    %199 = vector.load %arg4[%c1_173, %c5_174, %c0_175, %c0_176] : memref<3x9x8x128xf32, #tpu.memory_space<vmem>>, vector<1x1x8x128xf32>
    %200 = vector.shape_cast %199 : vector<1x1x8x128xf32> to vector<8x128xf32>
    %cst_177 = arith.constant dense<0.000000e+00> : vector<128x128xf32>
    %201 = tpu.matmul %198, %200, %cst_177 {dimension_numbers = #tpu.dot_dimension_numbers<[1], [0], [0], [1], [0, 0, 1, 1], [], []>} : vector<128x8xf32>, vector<8x128xf32>, vector<128x128xf32> -> vector<128x128xf32>
    %202 = arith.addf %191, %201 : vector<128x128xf32>
    %c18_i32_178 = arith.constant 18 : i32
    %203 = arith.addi %1, %c18_i32_178 : i32
    %c12_i32_179 = arith.constant 12 : i32
    %204 = arith.subi %203, %c12_i32_179 : i32
    %c24_i32 = arith.constant 24 : i32
    %205 = arith.addi %204, %c24_i32 : i32
    %c0_180 = arith.constant 0 : index
    %206 = arith.index_cast %205 : i32 to index
    %c6_181 = arith.constant 6 : index
    %c0_182 = arith.constant 0 : index
    %207 = vector.load %arg2[%c0_180, %206, %c6_181, %c0_182] : memref<1x52x52x8xf32, #tpu.memory_space<vmem>>, vector<1x8x16x8xf32>
    %208 = vector.shape_cast %207 : vector<1x8x16x8xf32> to vector<8x16x8xf32>
    %209 = vector.shape_cast %208 : vector<8x16x8xf32> to vector<128x8xf32>
    %c1_183 = arith.constant 1 : index
    %c6_184 = arith.constant 6 : index
    %c0_185 = arith.constant 0 : index
    %c0_186 = arith.constant 0 : index
    %210 = vector.load %arg4[%c1_183, %c6_184, %c0_185, %c0_186] : memref<3x9x8x128xf32, #tpu.memory_space<vmem>>, vector<1x1x8x128xf32>
    %211 = vector.shape_cast %210 : vector<1x1x8x128xf32> to vector<8x128xf32>
    %cst_187 = arith.constant dense<0.000000e+00> : vector<128x128xf32>
    %212 = tpu.matmul %209, %211, %cst_187 {dimension_numbers = #tpu.dot_dimension_numbers<[1], [0], [0], [1], [0, 0, 1, 1], [], []>} : vector<128x8xf32>, vector<8x128xf32>, vector<128x128xf32> -> vector<128x128xf32>
    %213 = arith.addf %202, %212 : vector<128x128xf32>
    %c18_i32_188 = arith.constant 18 : i32
    %214 = arith.addi %1, %c18_i32_188 : i32
    %c12_i32_189 = arith.constant 12 : i32
    %215 = arith.subi %214, %c12_i32_189 : i32
    %c24_i32_190 = arith.constant 24 : i32
    %216 = arith.addi %215, %c24_i32_190 : i32
    %c0_191 = arith.constant 0 : index
    %217 = arith.index_cast %216 : i32 to index
    %c18_192 = arith.constant 18 : index
    %c0_193 = arith.constant 0 : index
    %218 = vector.load %arg2[%c0_191, %217, %c18_192, %c0_193] : memref<1x52x52x8xf32, #tpu.memory_space<vmem>>, vector<1x8x16x8xf32>
    %219 = vector.shape_cast %218 : vector<1x8x16x8xf32> to vector<8x16x8xf32>
    %220 = vector.shape_cast %219 : vector<8x16x8xf32> to vector<128x8xf32>
    %c1_194 = arith.constant 1 : index
    %c7_195 = arith.constant 7 : index
    %c0_196 = arith.constant 0 : index
    %c0_197 = arith.constant 0 : index
    %221 = vector.load %arg4[%c1_194, %c7_195, %c0_196, %c0_197] : memref<3x9x8x128xf32, #tpu.memory_space<vmem>>, vector<1x1x8x128xf32>
    %222 = vector.shape_cast %221 : vector<1x1x8x128xf32> to vector<8x128xf32>
    %cst_198 = arith.constant dense<0.000000e+00> : vector<128x128xf32>
    %223 = tpu.matmul %220, %222, %cst_198 {dimension_numbers = #tpu.dot_dimension_numbers<[1], [0], [0], [1], [0, 0, 1, 1], [], []>} : vector<128x8xf32>, vector<8x128xf32>, vector<128x128xf32> -> vector<128x128xf32>
    %224 = arith.addf %213, %223 : vector<128x128xf32>
    %c18_i32_199 = arith.constant 18 : i32
    %225 = arith.addi %1, %c18_i32_199 : i32
    %c12_i32_200 = arith.constant 12 : i32
    %226 = arith.subi %225, %c12_i32_200 : i32
    %c24_i32_201 = arith.constant 24 : i32
    %227 = arith.addi %226, %c24_i32_201 : i32
    %c0_202 = arith.constant 0 : index
    %228 = arith.index_cast %227 : i32 to index
    %c30_203 = arith.constant 30 : index
    %c0_204 = arith.constant 0 : index
    %229 = vector.load %arg2[%c0_202, %228, %c30_203, %c0_204] : memref<1x52x52x8xf32, #tpu.memory_space<vmem>>, vector<1x8x16x8xf32>
    %230 = vector.shape_cast %229 : vector<1x8x16x8xf32> to vector<8x16x8xf32>
    %231 = vector.shape_cast %230 : vector<8x16x8xf32> to vector<128x8xf32>
    %c1_205 = arith.constant 1 : index
    %c8_206 = arith.constant 8 : index
    %c0_207 = arith.constant 0 : index
    %c0_208 = arith.constant 0 : index
    %232 = vector.load %arg4[%c1_205, %c8_206, %c0_207, %c0_208] : memref<3x9x8x128xf32, #tpu.memory_space<vmem>>, vector<1x1x8x128xf32>
    %233 = vector.shape_cast %232 : vector<1x1x8x128xf32> to vector<8x128xf32>
    %cst_209 = arith.constant dense<0.000000e+00> : vector<128x128xf32>
    %234 = tpu.matmul %231, %233, %cst_209 {dimension_numbers = #tpu.dot_dimension_numbers<[1], [0], [0], [1], [0, 0, 1, 1], [], []>} : vector<128x8xf32>, vector<8x128xf32>, vector<128x128xf32> -> vector<128x128xf32>
    %235 = arith.addf %224, %234 : vector<128x128xf32>
    %c2_210 = arith.constant 2 : index
    %c0_211 = arith.constant 0 : index
    %c0_212 = arith.constant 0 : index
    %236 = vector.load %arg6[%c2_210, %c0_211, %c0_212] : memref<4x1x128xf32, #tpu.memory_space<vmem>>, vector<1x1x128xf32>
    %237 = vector.shape_cast %236 : vector<1x1x128xf32> to vector<1x128xf32>
    %238 = vector.broadcast %237 : vector<1x128xf32> to vector<128x128xf32>
    %239 = arith.mulf %235, %238 : vector<128x128xf32>
    %c2_213 = arith.constant 2 : index
    %c0_214 = arith.constant 0 : index
    %c0_215 = arith.constant 0 : index
    %240 = vector.load %arg7[%c2_213, %c0_214, %c0_215] : memref<4x1x128xf32, #tpu.memory_space<vmem>>, vector<1x1x128xf32>
    %241 = vector.shape_cast %240 : vector<1x1x128xf32> to vector<1x128xf32>
    %242 = vector.broadcast %241 : vector<1x128xf32> to vector<128x128xf32>
    %243 = arith.addf %239, %242 : vector<128x128xf32>
    %cst_216 = arith.constant 0.000000e+00 : f32
    %244 = vector.broadcast %cst_216 : f32 to vector<128x128xf32>
    %245 = arith.maximumf %243, %244 : vector<128x128xf32>
    %c2_217 = arith.constant 2 : index
    %c0_218 = arith.constant 0 : index
    %c0_219 = arith.constant 0 : index
    %246 = vector.load %arg5[%c2_217, %c0_218, %c0_219] : memref<4x128x128xf32, #tpu.memory_space<vmem>>, vector<1x128x128xf32>
    %247 = vector.shape_cast %246 : vector<1x128x128xf32> to vector<128x128xf32>
    %cst_220 = arith.constant dense<0.000000e+00> : vector<128x128xf32>
    %248 = tpu.matmul %245, %247, %cst_220 {dimension_numbers = #tpu.dot_dimension_numbers<[1], [0], [0], [1], [0, 0, 1, 1], [], []>} : vector<128x128xf32>, vector<128x128xf32>, vector<128x128xf32> -> vector<128x128xf32>
    %249 = arith.addf %135, %248 : vector<128x128xf32>
    %cst_221 = arith.constant 0.000000e+00 : f32
    %250 = vector.broadcast %cst_221 : f32 to vector<128x128xf32>
    %c18_i32_222 = arith.constant 18 : i32
    %251 = arith.addi %1, %c18_i32_222 : i32
    %c18_i32_223 = arith.constant 18 : i32
    %252 = arith.subi %251, %c18_i32_223 : i32
    %c0_i32_224 = arith.constant 0 : i32
    %253 = arith.addi %252, %c0_i32_224 : i32
    %c0_225 = arith.constant 0 : index
    %254 = arith.index_cast %253 : i32 to index
    %c0_226 = arith.constant 0 : index
    %c0_227 = arith.constant 0 : index
    %255 = vector.load %arg2[%c0_225, %254, %c0_226, %c0_227] : memref<1x52x52x8xf32, #tpu.memory_space<vmem>>, vector<1x8x16x8xf32>
    %256 = vector.shape_cast %255 : vector<1x8x16x8xf32> to vector<8x16x8xf32>
    %257 = vector.shape_cast %256 : vector<8x16x8xf32> to vector<128x8xf32>
    %c2_228 = arith.constant 2 : index
    %c0_229 = arith.constant 0 : index
    %c0_230 = arith.constant 0 : index
    %c0_231 = arith.constant 0 : index
    %258 = vector.load %arg4[%c2_228, %c0_229, %c0_230, %c0_231] : memref<3x9x8x128xf32, #tpu.memory_space<vmem>>, vector<1x1x8x128xf32>
    %259 = vector.shape_cast %258 : vector<1x1x8x128xf32> to vector<8x128xf32>
    %cst_232 = arith.constant dense<0.000000e+00> : vector<128x128xf32>
    %260 = tpu.matmul %257, %259, %cst_232 {dimension_numbers = #tpu.dot_dimension_numbers<[1], [0], [0], [1], [0, 0, 1, 1], [], []>} : vector<128x8xf32>, vector<8x128xf32>, vector<128x128xf32> -> vector<128x128xf32>
    %261 = arith.addf %250, %260 : vector<128x128xf32>
    %c18_i32_233 = arith.constant 18 : i32
    %262 = arith.addi %1, %c18_i32_233 : i32
    %c18_i32_234 = arith.constant 18 : i32
    %263 = arith.subi %262, %c18_i32_234 : i32
    %c0_i32_235 = arith.constant 0 : i32
    %264 = arith.addi %263, %c0_i32_235 : i32
    %c0_236 = arith.constant 0 : index
    %265 = arith.index_cast %264 : i32 to index
    %c18_237 = arith.constant 18 : index
    %c0_238 = arith.constant 0 : index
    %266 = vector.load %arg2[%c0_236, %265, %c18_237, %c0_238] : memref<1x52x52x8xf32, #tpu.memory_space<vmem>>, vector<1x8x16x8xf32>
    %267 = vector.shape_cast %266 : vector<1x8x16x8xf32> to vector<8x16x8xf32>
    %268 = vector.shape_cast %267 : vector<8x16x8xf32> to vector<128x8xf32>
    %c2_239 = arith.constant 2 : index
    %c1_240 = arith.constant 1 : index
    %c0_241 = arith.constant 0 : index
    %c0_242 = arith.constant 0 : index
    %269 = vector.load %arg4[%c2_239, %c1_240, %c0_241, %c0_242] : memref<3x9x8x128xf32, #tpu.memory_space<vmem>>, vector<1x1x8x128xf32>
    %270 = vector.shape_cast %269 : vector<1x1x8x128xf32> to vector<8x128xf32>
    %cst_243 = arith.constant dense<0.000000e+00> : vector<128x128xf32>
    %271 = tpu.matmul %268, %270, %cst_243 {dimension_numbers = #tpu.dot_dimension_numbers<[1], [0], [0], [1], [0, 0, 1, 1], [], []>} : vector<128x8xf32>, vector<8x128xf32>, vector<128x128xf32> -> vector<128x128xf32>
    %272 = arith.addf %261, %271 : vector<128x128xf32>
    %c18_i32_244 = arith.constant 18 : i32
    %273 = arith.addi %1, %c18_i32_244 : i32
    %c18_i32_245 = arith.constant 18 : i32
    %274 = arith.subi %273, %c18_i32_245 : i32
    %c0_i32_246 = arith.constant 0 : i32
    %275 = arith.addi %274, %c0_i32_246 : i32
    %c0_247 = arith.constant 0 : index
    %276 = arith.index_cast %275 : i32 to index
    %c36 = arith.constant 36 : index
    %c0_248 = arith.constant 0 : index
    %277 = vector.load %arg2[%c0_247, %276, %c36, %c0_248] : memref<1x52x52x8xf32, #tpu.memory_space<vmem>>, vector<1x8x16x8xf32>
    %278 = vector.shape_cast %277 : vector<1x8x16x8xf32> to vector<8x16x8xf32>
    %279 = vector.shape_cast %278 : vector<8x16x8xf32> to vector<128x8xf32>
    %c2_249 = arith.constant 2 : index
    %c2_250 = arith.constant 2 : index
    %c0_251 = arith.constant 0 : index
    %c0_252 = arith.constant 0 : index
    %280 = vector.load %arg4[%c2_249, %c2_250, %c0_251, %c0_252] : memref<3x9x8x128xf32, #tpu.memory_space<vmem>>, vector<1x1x8x128xf32>
    %281 = vector.shape_cast %280 : vector<1x1x8x128xf32> to vector<8x128xf32>
    %cst_253 = arith.constant dense<0.000000e+00> : vector<128x128xf32>
    %282 = tpu.matmul %279, %281, %cst_253 {dimension_numbers = #tpu.dot_dimension_numbers<[1], [0], [0], [1], [0, 0, 1, 1], [], []>} : vector<128x8xf32>, vector<8x128xf32>, vector<128x128xf32> -> vector<128x128xf32>
    %283 = arith.addf %272, %282 : vector<128x128xf32>
    %c18_i32_254 = arith.constant 18 : i32
    %284 = arith.addi %1, %c18_i32_254 : i32
    %c18_i32_255 = arith.constant 18 : i32
    %285 = arith.subi %284, %c18_i32_255 : i32
    %c18_i32_256 = arith.constant 18 : i32
    %286 = arith.addi %285, %c18_i32_256 : i32
    %c0_257 = arith.constant 0 : index
    %287 = arith.index_cast %286 : i32 to index
    %c0_258 = arith.constant 0 : index
    %c0_259 = arith.constant 0 : index
    %288 = vector.load %arg2[%c0_257, %287, %c0_258, %c0_259] : memref<1x52x52x8xf32, #tpu.memory_space<vmem>>, vector<1x8x16x8xf32>
    %289 = vector.shape_cast %288 : vector<1x8x16x8xf32> to vector<8x16x8xf32>
    %290 = vector.shape_cast %289 : vector<8x16x8xf32> to vector<128x8xf32>
    %c2_260 = arith.constant 2 : index
    %c3_261 = arith.constant 3 : index
    %c0_262 = arith.constant 0 : index
    %c0_263 = arith.constant 0 : index
    %291 = vector.load %arg4[%c2_260, %c3_261, %c0_262, %c0_263] : memref<3x9x8x128xf32, #tpu.memory_space<vmem>>, vector<1x1x8x128xf32>
    %292 = vector.shape_cast %291 : vector<1x1x8x128xf32> to vector<8x128xf32>
    %cst_264 = arith.constant dense<0.000000e+00> : vector<128x128xf32>
    %293 = tpu.matmul %290, %292, %cst_264 {dimension_numbers = #tpu.dot_dimension_numbers<[1], [0], [0], [1], [0, 0, 1, 1], [], []>} : vector<128x8xf32>, vector<8x128xf32>, vector<128x128xf32> -> vector<128x128xf32>
    %294 = arith.addf %283, %293 : vector<128x128xf32>
    %c18_i32_265 = arith.constant 18 : i32
    %295 = arith.addi %1, %c18_i32_265 : i32
    %c18_i32_266 = arith.constant 18 : i32
    %296 = arith.subi %295, %c18_i32_266 : i32
    %c18_i32_267 = arith.constant 18 : i32
    %297 = arith.addi %296, %c18_i32_267 : i32
    %c0_268 = arith.constant 0 : index
    %298 = arith.index_cast %297 : i32 to index
    %c18_269 = arith.constant 18 : index
    %c0_270 = arith.constant 0 : index
    %299 = vector.load %arg2[%c0_268, %298, %c18_269, %c0_270] : memref<1x52x52x8xf32, #tpu.memory_space<vmem>>, vector<1x8x16x8xf32>
    %300 = vector.shape_cast %299 : vector<1x8x16x8xf32> to vector<8x16x8xf32>
    %301 = vector.shape_cast %300 : vector<8x16x8xf32> to vector<128x8xf32>
    %c2_271 = arith.constant 2 : index
    %c4_272 = arith.constant 4 : index
    %c0_273 = arith.constant 0 : index
    %c0_274 = arith.constant 0 : index
    %302 = vector.load %arg4[%c2_271, %c4_272, %c0_273, %c0_274] : memref<3x9x8x128xf32, #tpu.memory_space<vmem>>, vector<1x1x8x128xf32>
    %303 = vector.shape_cast %302 : vector<1x1x8x128xf32> to vector<8x128xf32>
    %cst_275 = arith.constant dense<0.000000e+00> : vector<128x128xf32>
    %304 = tpu.matmul %301, %303, %cst_275 {dimension_numbers = #tpu.dot_dimension_numbers<[1], [0], [0], [1], [0, 0, 1, 1], [], []>} : vector<128x8xf32>, vector<8x128xf32>, vector<128x128xf32> -> vector<128x128xf32>
    %305 = arith.addf %294, %304 : vector<128x128xf32>
    %c18_i32_276 = arith.constant 18 : i32
    %306 = arith.addi %1, %c18_i32_276 : i32
    %c18_i32_277 = arith.constant 18 : i32
    %307 = arith.subi %306, %c18_i32_277 : i32
    %c18_i32_278 = arith.constant 18 : i32
    %308 = arith.addi %307, %c18_i32_278 : i32
    %c0_279 = arith.constant 0 : index
    %309 = arith.index_cast %308 : i32 to index
    %c36_280 = arith.constant 36 : index
    %c0_281 = arith.constant 0 : index
    %310 = vector.load %arg2[%c0_279, %309, %c36_280, %c0_281] : memref<1x52x52x8xf32, #tpu.memory_space<vmem>>, vector<1x8x16x8xf32>
    %311 = vector.shape_cast %310 : vector<1x8x16x8xf32> to vector<8x16x8xf32>
    %312 = vector.shape_cast %311 : vector<8x16x8xf32> to vector<128x8xf32>
    %c2_282 = arith.constant 2 : index
    %c5_283 = arith.constant 5 : index
    %c0_284 = arith.constant 0 : index
    %c0_285 = arith.constant 0 : index
    %313 = vector.load %arg4[%c2_282, %c5_283, %c0_284, %c0_285] : memref<3x9x8x128xf32, #tpu.memory_space<vmem>>, vector<1x1x8x128xf32>
    %314 = vector.shape_cast %313 : vector<1x1x8x128xf32> to vector<8x128xf32>
    %cst_286 = arith.constant dense<0.000000e+00> : vector<128x128xf32>
    %315 = tpu.matmul %312, %314, %cst_286 {dimension_numbers = #tpu.dot_dimension_numbers<[1], [0], [0], [1], [0, 0, 1, 1], [], []>} : vector<128x8xf32>, vector<8x128xf32>, vector<128x128xf32> -> vector<128x128xf32>
    %316 = arith.addf %305, %315 : vector<128x128xf32>
    %c18_i32_287 = arith.constant 18 : i32
    %317 = arith.addi %1, %c18_i32_287 : i32
    %c18_i32_288 = arith.constant 18 : i32
    %318 = arith.subi %317, %c18_i32_288 : i32
    %c36_i32 = arith.constant 36 : i32
    %319 = arith.addi %318, %c36_i32 : i32
    %c0_289 = arith.constant 0 : index
    %320 = arith.index_cast %319 : i32 to index
    %c0_290 = arith.constant 0 : index
    %c0_291 = arith.constant 0 : index
    %321 = vector.load %arg2[%c0_289, %320, %c0_290, %c0_291] : memref<1x52x52x8xf32, #tpu.memory_space<vmem>>, vector<1x8x16x8xf32>
    %322 = vector.shape_cast %321 : vector<1x8x16x8xf32> to vector<8x16x8xf32>
    %323 = vector.shape_cast %322 : vector<8x16x8xf32> to vector<128x8xf32>
    %c2_292 = arith.constant 2 : index
    %c6_293 = arith.constant 6 : index
    %c0_294 = arith.constant 0 : index
    %c0_295 = arith.constant 0 : index
    %324 = vector.load %arg4[%c2_292, %c6_293, %c0_294, %c0_295] : memref<3x9x8x128xf32, #tpu.memory_space<vmem>>, vector<1x1x8x128xf32>
    %325 = vector.shape_cast %324 : vector<1x1x8x128xf32> to vector<8x128xf32>
    %cst_296 = arith.constant dense<0.000000e+00> : vector<128x128xf32>
    %326 = tpu.matmul %323, %325, %cst_296 {dimension_numbers = #tpu.dot_dimension_numbers<[1], [0], [0], [1], [0, 0, 1, 1], [], []>} : vector<128x8xf32>, vector<8x128xf32>, vector<128x128xf32> -> vector<128x128xf32>
    %327 = arith.addf %316, %326 : vector<128x128xf32>
    %c18_i32_297 = arith.constant 18 : i32
    %328 = arith.addi %1, %c18_i32_297 : i32
    %c18_i32_298 = arith.constant 18 : i32
    %329 = arith.subi %328, %c18_i32_298 : i32
    %c36_i32_299 = arith.constant 36 : i32
    %330 = arith.addi %329, %c36_i32_299 : i32
    %c0_300 = arith.constant 0 : index
    %331 = arith.index_cast %330 : i32 to index
    %c18_301 = arith.constant 18 : index
    %c0_302 = arith.constant 0 : index
    %332 = vector.load %arg2[%c0_300, %331, %c18_301, %c0_302] : memref<1x52x52x8xf32, #tpu.memory_space<vmem>>, vector<1x8x16x8xf32>
    %333 = vector.shape_cast %332 : vector<1x8x16x8xf32> to vector<8x16x8xf32>
    %334 = vector.shape_cast %333 : vector<8x16x8xf32> to vector<128x8xf32>
    %c2_303 = arith.constant 2 : index
    %c7_304 = arith.constant 7 : index
    %c0_305 = arith.constant 0 : index
    %c0_306 = arith.constant 0 : index
    %335 = vector.load %arg4[%c2_303, %c7_304, %c0_305, %c0_306] : memref<3x9x8x128xf32, #tpu.memory_space<vmem>>, vector<1x1x8x128xf32>
    %336 = vector.shape_cast %335 : vector<1x1x8x128xf32> to vector<8x128xf32>
    %cst_307 = arith.constant dense<0.000000e+00> : vector<128x128xf32>
    %337 = tpu.matmul %334, %336, %cst_307 {dimension_numbers = #tpu.dot_dimension_numbers<[1], [0], [0], [1], [0, 0, 1, 1], [], []>} : vector<128x8xf32>, vector<8x128xf32>, vector<128x128xf32> -> vector<128x128xf32>
    %338 = arith.addf %327, %337 : vector<128x128xf32>
    %c18_i32_308 = arith.constant 18 : i32
    %339 = arith.addi %1, %c18_i32_308 : i32
    %c18_i32_309 = arith.constant 18 : i32
    %340 = arith.subi %339, %c18_i32_309 : i32
    %c36_i32_310 = arith.constant 36 : i32
    %341 = arith.addi %340, %c36_i32_310 : i32
    %c0_311 = arith.constant 0 : index
    %342 = arith.index_cast %341 : i32 to index
    %c36_312 = arith.constant 36 : index
    %c0_313 = arith.constant 0 : index
    %343 = vector.load %arg2[%c0_311, %342, %c36_312, %c0_313] : memref<1x52x52x8xf32, #tpu.memory_space<vmem>>, vector<1x8x16x8xf32>
    %344 = vector.shape_cast %343 : vector<1x8x16x8xf32> to vector<8x16x8xf32>
    %345 = vector.shape_cast %344 : vector<8x16x8xf32> to vector<128x8xf32>
    %c2_314 = arith.constant 2 : index
    %c8_315 = arith.constant 8 : index
    %c0_316 = arith.constant 0 : index
    %c0_317 = arith.constant 0 : index
    %346 = vector.load %arg4[%c2_314, %c8_315, %c0_316, %c0_317] : memref<3x9x8x128xf32, #tpu.memory_space<vmem>>, vector<1x1x8x128xf32>
    %347 = vector.shape_cast %346 : vector<1x1x8x128xf32> to vector<8x128xf32>
    %cst_318 = arith.constant dense<0.000000e+00> : vector<128x128xf32>
    %348 = tpu.matmul %345, %347, %cst_318 {dimension_numbers = #tpu.dot_dimension_numbers<[1], [0], [0], [1], [0, 0, 1, 1], [], []>} : vector<128x8xf32>, vector<8x128xf32>, vector<128x128xf32> -> vector<128x128xf32>
    %349 = arith.addf %338, %348 : vector<128x128xf32>
    %c3_319 = arith.constant 3 : index
    %c0_320 = arith.constant 0 : index
    %c0_321 = arith.constant 0 : index
    %350 = vector.load %arg6[%c3_319, %c0_320, %c0_321] : memref<4x1x128xf32, #tpu.memory_space<vmem>>, vector<1x1x128xf32>
    %351 = vector.shape_cast %350 : vector<1x1x128xf32> to vector<1x128xf32>
    %352 = vector.broadcast %351 : vector<1x128xf32> to vector<128x128xf32>
    %353 = arith.mulf %349, %352 : vector<128x128xf32>
    %c3_322 = arith.constant 3 : index
    %c0_323 = arith.constant 0 : index
    %c0_324 = arith.constant 0 : index
    %354 = vector.load %arg7[%c3_322, %c0_323, %c0_324] : memref<4x1x128xf32, #tpu.memory_space<vmem>>, vector<1x1x128xf32>
    %355 = vector.shape_cast %354 : vector<1x1x128xf32> to vector<1x128xf32>
    %356 = vector.broadcast %355 : vector<1x128xf32> to vector<128x128xf32>
    %357 = arith.addf %353, %356 : vector<128x128xf32>
    %cst_325 = arith.constant 0.000000e+00 : f32
    %358 = vector.broadcast %cst_325 : f32 to vector<128x128xf32>
    %359 = arith.maximumf %357, %358 : vector<128x128xf32>
    %c3_326 = arith.constant 3 : index
    %c0_327 = arith.constant 0 : index
    %c0_328 = arith.constant 0 : index
    %360 = vector.load %arg5[%c3_326, %c0_327, %c0_328] : memref<4x128x128xf32, #tpu.memory_space<vmem>>, vector<1x128x128xf32>
    %361 = vector.shape_cast %360 : vector<1x128x128xf32> to vector<128x128xf32>
    %cst_329 = arith.constant dense<0.000000e+00> : vector<128x128xf32>
    %362 = tpu.matmul %359, %361, %cst_329 {dimension_numbers = #tpu.dot_dimension_numbers<[1], [0], [0], [1], [0, 0, 1, 1], [], []>} : vector<128x128xf32>, vector<128x128xf32>, vector<128x128xf32> -> vector<128x128xf32>
    %363 = arith.addf %249, %362 : vector<128x128xf32>
    %c0_330 = arith.constant 0 : index
    %c0_331 = arith.constant 0 : index
    %c0_332 = arith.constant 0 : index
    %364 = vector.load %arg8[%c0_330, %c0_331, %c0_332] : memref<1x1x128xf32, #tpu.memory_space<vmem>>, vector<1x1x128xf32>
    %365 = vector.shape_cast %364 : vector<1x1x128xf32> to vector<1x128xf32>
    %366 = vector.broadcast %365 : vector<1x128xf32> to vector<128x128xf32>
    %367 = arith.addf %363, %366 : vector<128x128xf32>
    %c0_333 = arith.constant 0 : index
    %c0_334 = arith.constant 0 : index
    %368 = vector.load %arg9[%c0_333, %c0_334] : memref<1x128xf32, #tpu.memory_space<vmem>>, vector<1x128xf32>
    %369 = vector.broadcast %368 : vector<1x128xf32> to vector<128x128xf32>
    %370 = arith.mulf %367, %369 : vector<128x128xf32>
    %c0_335 = arith.constant 0 : index
    %c0_336 = arith.constant 0 : index
    %371 = vector.load %arg10[%c0_335, %c0_336] : memref<1x128xf32, #tpu.memory_space<vmem>>, vector<1x128xf32>
    %372 = vector.broadcast %371 : vector<1x128xf32> to vector<128x128xf32>
    %373 = arith.addf %370, %372 : vector<128x128xf32>
    %cst_337 = arith.constant 0.000000e+00 : f32
    %374 = vector.broadcast %cst_337 : f32 to vector<128x128xf32>
    %375 = arith.maximumf %373, %374 : vector<128x128xf32>
    %c0_338 = arith.constant 0 : index
    %c0_339 = arith.constant 0 : index
    %c0_340 = arith.constant 0 : index
    %376 = vector.load %arg11[%c0_338, %c0_339, %c0_340] : memref<1x128x128xf32, #tpu.memory_space<vmem>>, vector<1x128x128xf32>
    %377 = vector.shape_cast %376 : vector<1x128x128xf32> to vector<128x128xf32>
    %378 = vector.shape_cast %375 : vector<128x128xf32> to vector<1x128x128xf32>
    tpu.vector_store %arg11[%c0_338, %c0_339, %c0_340], %378 {strides = array<i32>} : memref<1x128x128xf32, #tpu.memory_space<vmem>>, vector<1x128x128xf32>,
    return
  }
  func.func @transform_0(%arg0: i32, %arg1: i32) -> (i32, i32, i32, i32) {
    %c0_i32 = arith.constant 0 : i32
    %c0_i32_0 = arith.constant 0 : i32
    %c0_i32_1 = arith.constant 0 : i32
    %c0_i32_2 = arith.constant 0 : i32
    return %arg0, %c0_i32, %c0_i32_0, %c0_i32_1 : i32, i32, i32, i32
  }
  func.func @transform_1(%arg0: i32, %arg1: i32) -> (i32, i32) {
    %c0_i32 = arith.constant 0 : i32
    %c0_i32_0 = arith.constant 0 : i32
    %c0_i32_1 = arith.constant 0 : i32
    return %c0_i32, %c0_i32_0 : i32, i32
  }
  func.func @transform_2(%arg0: i32, %arg1: i32) -> (i32, i32, i32, i32) {
    %c0_i32 = arith.constant 0 : i32
    %c0_i32_0 = arith.constant 0 : i32
    %c0_i32_1 = arith.constant 0 : i32
    %c0_i32_2 = arith.constant 0 : i32
    %c0_i32_3 = arith.constant 0 : i32
    return %c0_i32, %c0_i32_0, %c0_i32_1, %c0_i32_2 : i32, i32, i32, i32
  }
  func.func @transform_3(%arg0: i32, %arg1: i32) -> (i32, i32, i32) {
    %c0_i32 = arith.constant 0 : i32
    %c0_i32_0 = arith.constant 0 : i32
    %c0_i32_1 = arith.constant 0 : i32
    %c0_i32_2 = arith.constant 0 : i32
    return %c0_i32, %c0_i32_0, %c0_i32_1 : i32, i32, i32
  }
  func.func @transform_4(%arg0: i32, %arg1: i32) -> (i32, i32, i32) {
    %c0_i32 = arith.constant 0 : i32
    %c0_i32_0 = arith.constant 0 : i32
    %c0_i32_1 = arith.constant 0 : i32
    %c0_i32_2 = arith.constant 0 : i32
    return %c0_i32, %c0_i32_0, %c0_i32_1 : i32, i32, i32
  }
  func.func @transform_5(%arg0: i32, %arg1: i32) -> (i32, i32, i32) {
    %c0_i32 = arith.constant 0 : i32
    %c0_i32_0 = arith.constant 0 : i32
    %c0_i32_1 = arith.constant 0 : i32
    %c0_i32_2 = arith.constant 0 : i32
    return %c0_i32, %c0_i32_0, %c0_i32_1 : i32, i32, i32
  }
  func.func @transform_6(%arg0: i32, %arg1: i32) -> (i32, i32, i32) {
    %c0_i32 = arith.constant 0 : i32
    %c0_i32_0 = arith.constant 0 : i32
    %c0_i32_1 = arith.constant 0 : i32
    return %arg0, %c0_i32, %c0_i32_0 : i32, i32, i32
  }
  func.func @transform_7(%arg0: i32, %arg1: i32) -> (i32, i32) {
    %c0_i32 = arith.constant 0 : i32
    %c0_i32_0 = arith.constant 0 : i32
    %c0_i32_1 = arith.constant 0 : i32
    return %c0_i32, %c0_i32_0 : i32, i32
  }
  func.func @transform_8(%arg0: i32, %arg1: i32) -> (i32, i32) {
    %c0_i32 = arith.constant 0 : i32
    %c0_i32_0 = arith.constant 0 : i32
    %c0_i32_1 = arith.constant 0 : i32
    return %c0_i32, %c0_i32_0 : i32, i32
  }
  func.func @transform_9(%arg0: i32, %arg1: i32) -> (i32, i32, i32) {
    %c0_i32 = arith.constant 0 : i32
    %c0_i32_0 = arith.constant 0 : i32
    return %arg0, %arg1, %c0_i32 : i32, i32, i32
  }
}

</mosaic_0001>

<llo_original>
// kernel: tpu_custom_call.1
$region0: #{tpu_custom_call.1}
  #allocation0 [shape = 'u32[]', space=smem, size = 0x4, offset = 0x4, fixed_abs, tag = 'smem constant byte address 0x4 - core index']
  #allocation1 [shape = 'u32[144,128]{1,0:T(1,128)}', space=vmem, size = 0x12000, scoped, tag = 'internal scratch']
  %s0 = inlined_call_operand.vmem [shape: f32[2,52,52,8], index: 0, kind: input, shape index: {}]
  %s1 = inlined_call_operand.vmem [shape: f32[8,128], index: 1, kind: input, shape index: {}]
  %s2 = inlined_call_operand.vmem [shape: f32[3,9,8,128], index: 2, kind: input, shape index: {}]
  %s3 = inlined_call_operand.vmem [shape: f32[4,128,128], index: 3, kind: input, shape index: {}]
  %s4 = inlined_call_operand.vmem [shape: f32[4,1,128], index: 4, kind: input, shape index: {}]
  %s5 = inlined_call_operand.vmem [shape: f32[4,1,128], index: 5, kind: input, shape index: {}]
  %s6 = inlined_call_operand.vmem [shape: f32[2,1,128], index: 6, kind: input, shape index: {}]
  %s7 = inlined_call_operand.vmem [shape: f32[1,128], index: 7, kind: input, shape index: {}]
  %s8 = inlined_call_operand.vmem [shape: f32[1,128], index: 8, kind: input, shape index: {}]
  %s9 = inlined_call_operand.hbm [shape: f32[2,256,128], index: 9, kind: output, shape index: {}]
  %s10 = sld [smem:[#allocation0]]
  $region69: #{tpu_custom_call.1} parent=0
    _
  %s12 = ssub.s32 1, %s10
  %s13 = scalar_select 0, %s12, %s10
  $region1: #{tpu_custom_call.1} parent=0
    #allocation2 [shape = 'u8[131072]{0}', space=vmem, size = 0x20000, scoped, tag = 'output window, operand 0']
    #allocation3 [shape = 's32[2]{0}', space=sflag, size = 0x8, scoped, tag = 'scoped memory for tpu_custom_call.1']
    %14 = vsyncpa [#allocation3], 0
    %s15 = scalar_lea.sflag [#allocation3], 1
    %16 = vsyncpa %s15, 0
    loop: start=0, step=1, limit=6
    $region2: #{tpu_custom_call.1} parent=1 // loop_pre_header
      _
    $region3: #{tpu_custom_call.1} parent=1 // loop_header
      %s18 = sphi 0, %s22
      %p19 = scmp.ge.s32.totalorder %s18, 6
      %s25 = sphi 0, %s37
      %s26 = sphi 0, %s33
      %s27 = sphi 0, %s25
      %s28 = sphi 0, %s26
      %s29 = sphi 0, %s27
      %s30 = sphi 0, %s28
      %s40 = sphi 0, %s42
      %s43 = sphi 0, %s40
      %s44 = sphi 0, %s43
      %s60 = sphi 0, %s44
      %s64 = sphi 0, %s64
      %s66 = sphi 0, %s64
      %s67 = sphi 0, %s66
      %s81 = sphi 0, %s67
      %s85 = sphi 0, %s85
      %s87 = sphi 0, %s85
      %s88 = sphi 0, %s87
      %s102 = sphi 0, %s88
      %s106 = sphi 0, %s106
      %s108 = sphi 0, %s106
      %s109 = sphi 0, %s108
      %s123 = sphi 0, %s109
      %s127 = sphi 0, %s127
      %s129 = sphi 0, %s127
      %s130 = sphi 0, %s129
      %s144 = sphi 0, %s130
      %s148 = sphi 0, %s148
      %s150 = sphi 0, %s148
      %s151 = sphi 0, %s150
      %s165 = sphi 0, %s151
      %s171 = sphi 0, %s173
      %s174 = sphi 0, %s171
      %s175 = sphi 0, %s174
      %s191 = sphi 0, %s175
      %s195 = sphi 0, %s195
      %s197 = sphi 0, %s195
      %s198 = sphi 0, %s197
      %s212 = sphi 0, %s198
      %s216 = sphi 0, %s216
      %s218 = sphi 0, %s216
      %s219 = sphi 0, %s218
      %s233 = sphi 0, %s219
      %s241 = sphi 0, %s243
      %s244 = sphi 0, %s241
      %s245 = sphi 0, %s244
      %s261 = sphi 0, %s245
    $region4: #{tpu_custom_call.1} parent=1 // loop_header_branch
      %21 = sbr.rel (%p19) target = $region8
    $region5: #{tpu_custom_call.1} parent=1 // loop_body
      %s23 = ssub.s32 %s18, 1
      %s24 = ssub.s32 %s18, 2
      %s31 = sadd.s32 1, %s26
      %p32 = scmp.ge.s32.totalorder %s31, 2
      %s33 = scalar_select %p32, 0, %s31
      %s34 = sadd.s32 1, %s25
      %s35 = scalar_select %p32, %s34, %s25
      %p36 = scmp.ge.s32.totalorder %s35, 2
      %s37 = scalar_select %p36, 0, %s35
      %s38 = ssub.s32 %s25, %s37
      %p39 = scmp.eq.s32.totalorder %s38, 0
      %s41 = sadd.s32 %s40, 1
      %s42 = scalar_select %p39, %s40, %s41
      %p45 = pneg %p39
      %p46 = scmp.eq.s32.totalorder %s18, 3
      %p47 = por %p45, %p46
      %p48 = scmp.ne.s32.totalorder %s40, %s43
      %p49 = scmp.eq.s32.totalorder %s18, 0
      %p50 = por %p48, %p49
      %p51 = scmp.ne.s32.totalorder %s40, %s43
      %p52 = scmp.eq.s32.totalorder %s23, 3
      %p53 = por %p51, %p52
      %p54 = scmp.ne.s32.totalorder %s43, %s44
      %p55 = scmp.eq.s32.totalorder %s23, 0
      %p56 = por %p54, %p55
      %p57 = scmp.ne.s32.totalorder %s43, %s44
      %p58 = scmp.eq.s32.totalorder %s24, 3
      %p59 = por %p57, %p58
      %p61 = scmp.ne.s32.totalorder %s44, %s60
      %p62 = scmp.eq.s32.totalorder %s24, 0
      %p63 = por %p61, %p62
      %s65 = sadd.s32 %s64, 1
      %p68 = scmp.eq.s32.totalorder %s18, 3
      %p69 = scmp.ne.s32.totalorder %s64, %s66
      %p70 = scmp.eq.s32.totalorder %s18, 0
      %p71 = por %p69, %p70
      %p72 = scmp.ne.s32.totalorder %s64, %s66
      %p73 = scmp.eq.s32.totalorder %s23, 3
      %p74 = por %p72, %p73
      %p75 = scmp.ne.s32.totalorder %s66, %s67
      %p76 = scmp.eq.s32.totalorder %s23, 0
      %p77 = por %p75, %p76
      %p78 = scmp.ne.s32.totalorder %s66, %s67
      %p79 = scmp.eq.s32.totalorder %s24, 3
      %p80 = por %p78, %p79
      %p82 = scmp.ne.s32.totalorder %s67, %s81
      %p83 = scmp.eq.s32.totalorder %s24, 0
      %p84 = por %p82, %p83
      %s86 = sadd.s32 %s85, 1
      %p89 = scmp.eq.s32.totalorder %s18, 3
      %p90 = scmp.ne.s32.totalorder %s85, %s87
      %p91 = scmp.eq.s32.totalorder %s18, 0
      %p92 = por %p90, %p91
      %p93 = scmp.ne.s32.totalorder %s85, %s87
      %p94 = scmp.eq.s32.totalorder %s23, 3
      %p95 = por %p93, %p94
      %p96 = scmp.ne.s32.totalorder %s87, %s88
      %p97 = scmp.eq.s32.totalorder %s23, 0
      %p98 = por %p96, %p97
      %p99 = scmp.ne.s32.totalorder %s87, %s88
      %p100 = scmp.eq.s32.totalorder %s24, 3
      %p101 = por %p99, %p100
      %p103 = scmp.ne.s32.totalorder %s88, %s102
      %p104 = scmp.eq.s32.totalorder %s24, 0
      %p105 = por %p103, %p104
      %s107 = sadd.s32 %s106, 1
      %p110 = scmp.eq.s32.totalorder %s18, 3
      %p111 = scmp.ne.s32.totalorder %s106, %s108
      %p112 = scmp.eq.s32.totalorder %s18, 0
      %p113 = por %p111, %p112
      %p114 = scmp.ne.s32.totalorder %s106, %s108
      %p115 = scmp.eq.s32.totalorder %s23, 3
      %p116 = por %p114, %p115
      %p117 = scmp.ne.s32.totalorder %s108, %s109
      %p118 = scmp.eq.s32.totalorder %s23, 0
      %p119 = por %p117, %p118
      %p120 = scmp.ne.s32.totalorder %s108, %s109
      %p121 = scmp.eq.s32.totalorder %s24, 3
      %p122 = por %p120, %p121
      %p124 = scmp.ne.s32.totalorder %s109, %s123
      %p125 = scmp.eq.s32.totalorder %s24, 0
      %p126 = por %p124, %p125
      %s128 = sadd.s32 %s127, 1
      %p131 = scmp.eq.s32.totalorder %s18, 3
      %p132 = scmp.ne.s32.totalorder %s127, %s129
      %p133 = scmp.eq.s32.totalorder %s18, 0
      %p134 = por %p132, %p133
      %p135 = scmp.ne.s32.totalorder %s127, %s129
      %p136 = scmp.eq.s32.totalorder %s23, 3
      %p137 = por %p135, %p136
      %p138 = scmp.ne.s32.totalorder %s129, %s130
      %p139 = scmp.eq.s32.totalorder %s23, 0
      %p140 = por %p138, %p139
      %p141 = scmp.ne.s32.totalorder %s129, %s130
      %p142 = scmp.eq.s32.totalorder %s24, 3
      %p143 = por %p141, %p142
      %p145 = scmp.ne.s32.totalorder %s130, %s144
      %p146 = scmp.eq.s32.totalorder %s24, 0
      %p147 = por %p145, %p146
      %s149 = sadd.s32 %s148, 1
      %p152 = scmp.eq.s32.totalorder %s18, 3
      %p153 = scmp.ne.s32.totalorder %s148, %s150
      %p154 = scmp.eq.s32.totalorder %s18, 0
      %p155 = por %p153, %p154
      %p156 = scmp.ne.s32.totalorder %s148, %s150
      %p157 = scmp.eq.s32.totalorder %s23, 3
      %p158 = por %p156, %p157
      %p159 = scmp.ne.s32.totalorder %s150, %s151
      %p160 = scmp.eq.s32.totalorder %s23, 0
      %p161 = por %p159, %p160
      %p162 = scmp.ne.s32.totalorder %s150, %s151
      %p163 = scmp.eq.s32.totalorder %s24, 3
      %p164 = por %p162, %p163
      %p166 = scmp.ne.s32.totalorder %s151, %s165
      %p167 = scmp.eq.s32.totalorder %s24, 0
      %p168 = por %p166, %p167
      %s169 = ssub.s32 %s25, %s37
      %p170 = scmp.eq.s32.totalorder %s169, 0
      %s172 = sadd.s32 %s171, 1
      %s173 = scalar_select %p170, %s171, %s172
      %p176 = pneg %p170
      %p177 = scmp.eq.s32.totalorder %s18, 3
      %p178 = por %p176, %p177
      %p179 = scmp.ne.s32.totalorder %s171, %s174
      %p180 = scmp.eq.s32.totalorder %s18, 0
      %p181 = por %p179, %p180
      %p182 = scmp.ne.s32.totalorder %s171, %s174
      %p183 = scmp.eq.s32.totalorder %s23, 3
      %p184 = por %p182, %p183
      %p185 = scmp.ne.s32.totalorder %s174, %s175
      %p186 = scmp.eq.s32.totalorder %s23, 0
      %p187 = por %p185, %p186
      %p188 = scmp.ne.s32.totalorder %s174, %s175
      %p189 = scmp.eq.s32.totalorder %s24, 3
      %p190 = por %p188, %p189
      %p192 = scmp.ne.s32.totalorder %s175, %s191
      %p193 = scmp.eq.s32.totalorder %s24, 0
      %p194 = por %p192, %p193
      %s196 = sadd.s32 %s195, 1
      %p199 = scmp.eq.s32.totalorder %s18, 3
      %p200 = scmp.ne.s32.totalorder %s195, %s197
      %p201 = scmp.eq.s32.totalorder %s18, 0
      %p202 = por %p200, %p201
      %p203 = scmp.ne.s32.totalorder %s195, %s197
      %p204 = scmp.eq.s32.totalorder %s23, 3
      %p205 = por %p203, %p204
      %p206 = scmp.ne.s32.totalorder %s197, %s198
      %p207 = scmp.eq.s32.totalorder %s23, 0
      %p208 = por %p206, %p207
      %p209 = scmp.ne.s32.totalorder %s197, %s198
      %p210 = scmp.eq.s32.totalorder %s24, 3
      %p211 = por %p209, %p210
      %p213 = scmp.ne.s32.totalorder %s198, %s212
      %p214 = scmp.eq.s32.totalorder %s24, 0
      %p215 = por %p213, %p214
      %s217 = sadd.s32 %s216, 1
      %p220 = scmp.eq.s32.totalorder %s18, 3
      %p221 = scmp.ne.s32.totalorder %s216, %s218
      %p222 = scmp.eq.s32.totalorder %s18, 0
      %p223 = por %p221, %p222
      %p224 = scmp.ne.s32.totalorder %s216, %s218
      %p225 = scmp.eq.s32.totalorder %s23, 3
      %p226 = por %p224, %p225
      %p227 = scmp.ne.s32.totalorder %s218, %s219
      %p228 = scmp.eq.s32.totalorder %s23, 0
      %p229 = por %p227, %p228
      %p230 = scmp.ne.s32.totalorder %s218, %s219
      %p231 = scmp.eq.s32.totalorder %s24, 3
      %p232 = por %p230, %p231
      %p234 = scmp.ne.s32.totalorder %s219, %s233
      %p235 = scmp.eq.s32.totalorder %s24, 0
      %p236 = por %p234, %p235
      %s237 = ssub.s32 %s25, %s37
      %s238 = ssub.s32 %s26, %s33
      %s239 = sor.u32 %s237, %s238
      %p240 = scmp.eq.s32.totalorder %s239, 0
      %s242 = sadd.s32 %s241, 1
      %s243 = scalar_select %p240, %s241, %s242
      %p246 = pneg %p240
      %p247 = scmp.eq.s32.totalorder %s18, 3
      %p248 = por %p246, %p247
      %p249 = scmp.ne.s32.totalorder %s241, %s244
      %p250 = scmp.eq.s32.totalorder %s18, 0
      %p251 = por %p249, %p250
      %p252 = scmp.ne.s32.totalorder %s241, %s244
      %p253 = scmp.eq.s32.totalorder %s23, 3
      %p254 = por %p252, %p253
      %p255 = scmp.ne.s32.totalorder %s244, %s245
      %p256 = scmp.eq.s32.totalorder %s23, 0
      %p257 = por %p255, %p256
      %p258 = scmp.ne.s32.totalorder %s244, %s245
      %p259 = scmp.eq.s32.totalorder %s24, 3
      %p260 = por %p258, %p259
      %p262 = scmp.ne.s32.totalorder %s245, %s261
      %p263 = scmp.eq.s32.totalorder %s24, 0
      %p264 = por %p262, %p263
      %p265 = scmp.le.s32.totalorder 1, %s18
      %p266 = scmp.lt.s32.totalorder %s18, 5
      %p267 = pnand %p265, %p266
      %p268 = pneg %p267
      // Predicated region
      $region9: #{tpu_custom_call.1} parent=5 // pred_check
        _
      $region10: #{tpu_custom_call.1} parent=5 // pred_check_branch
        %270 = sbr.rel (%p267) target = $region12
      $region11: #{tpu_custom_call.1} parent=5 // pred_region
        %s271 = ssub.s32 %s18, 1
        // Predicated region
        $region13: #{tpu_custom_call.1} parent=11 // pred_check
          %p272 = pneg %p77
        $region14: #{tpu_custom_call.1} parent=11 // pred_check_branch
          %274 = sbr.rel (%p272) target = $region16
        $region15: #{tpu_custom_call.1} parent=11 // pred_region
          _
        $region16: #{tpu_custom_call.1} parent=11 // pred_fallthru
          _
        // Predicated region
        $region17: #{tpu_custom_call.1} parent=11 // pred_check
          %p275 = pneg %p98
        $region18: #{tpu_custom_call.1} parent=11 // pred_check_branch
          %277 = sbr.rel (%p275) target = $region20
        $region19: #{tpu_custom_call.1} parent=11 // pred_region
          _
        $region20: #{tpu_custom_call.1} parent=11 // pred_fallthru
          _
        // Predicated region
        $region21: #{tpu_custom_call.1} parent=11 // pred_check
          %p278 = pneg %p119
        $region22: #{tpu_custom_call.1} parent=11 // pred_check_branch
          %280 = sbr.rel (%p278) target = $region24
        $region23: #{tpu_custom_call.1} parent=11 // pred_region
          _
        $region24: #{tpu_custom_call.1} parent=11 // pred_fallthru
          _
        // Predicated region
        $region25: #{tpu_custom_call.1} parent=11 // pred_check
          %p281 = pneg %p140
        $region26: #{tpu_custom_call.1} parent=11 // pred_check_branch
          %283 = sbr.rel (%p281) target = $region28
        $region27: #{tpu_custom_call.1} parent=11 // pred_region
          _
        $region28: #{tpu_custom_call.1} parent=11 // pred_fallthru
          _
        // Predicated region
        $region29: #{tpu_custom_call.1} parent=11 // pred_check
          %p284 = pneg %p161
        $region30: #{tpu_custom_call.1} parent=11 // pred_check_branch
          %286 = sbr.rel (%p284) target = $region32
        $region31: #{tpu_custom_call.1} parent=11 // pred_region
          _
        $region32: #{tpu_custom_call.1} parent=11 // pred_fallthru
          _
        // Predicated region
        $region33: #{tpu_custom_call.1} parent=11 // pred_check
          %p287 = pneg %p208
        $region34: #{tpu_custom_call.1} parent=11 // pred_check_branch
          %289 = sbr.rel (%p287) target = $region36
        $region35: #{tpu_custom_call.1} parent=11 // pred_region
          _
        $region36: #{tpu_custom_call.1} parent=11 // pred_fallthru
          _
        // Predicated region
        $region37: #{tpu_custom_call.1} parent=11 // pred_check
          %p290 = pneg %p229
        $region38: #{tpu_custom_call.1} parent=11 // pred_check_branch
          %292 = sbr.rel (%p290) target = $region40
        $region39: #{tpu_custom_call.1} parent=11 // pred_region
          _
        $region40: #{tpu_custom_call.1} parent=11 // pred_fallthru
          _
      $region12: #{tpu_custom_call.1} parent=5 // pred_fallthru
        _
      %p293 = scmp.lt.s32.totalorder %s18, 4
      // Predicated region
      $region41: #{tpu_custom_call.1} parent=5 // pred_check
        %p294 = pneg %p293
      $region42: #{tpu_custom_call.1} parent=5 // pred_check_branch
        %296 = sbr.rel (%p294) target = $region44
      $region43: #{tpu_custom_call.1} parent=5 // pred_region
        // Predicated region
        $region45: #{tpu_custom_call.1} parent=43 // pred_check
          %p297 = pneg %p50
        $region46: #{tpu_custom_call.1} parent=43 // pred_check_branch
          %299 = sbr.rel (%p297) target = $region48
        $region47: #{tpu_custom_call.1} parent=43 // pred_region
          %p300 = scmp.lt.s32.totalorder %s25, 1
          %s301 = scalar_select %p300, %s25, 1
          %s302 = smul.addr %s301, 364
          %s303 = smul.addr %s302, 8
          %s304 = scalar_lea.vmem %s0, %s303
        $region48: #{tpu_custom_call.1} parent=43 // pred_fallthru
          _
        // Predicated region
        $region49: #{tpu_custom_call.1} parent=43 // pred_check
          %p305 = pneg %p181
        $region50: #{tpu_custom_call.1} parent=43 // pred_check_branch
          %307 = sbr.rel (%p305) target = $region52
        $region51: #{tpu_custom_call.1} parent=43 // pred_region
          %p308 = scmp.lt.s32.totalorder %s25, 1
          %s309 = scalar_select %p308, %s25, 1
          %s310 = scalar_lea.vmem %s6, %s309
        $region52: #{tpu_custom_call.1} parent=43 // pred_fallthru
          _
      $region44: #{tpu_custom_call.1} parent=5 // pred_fallthru
        _
      %p311 = scmp.le.s32.totalorder 1, %s18
      %p312 = scmp.lt.s32.totalorder %s18, 5
      %p313 = pnand %p311, %p312
      %p314 = pneg %p313
      // Predicated region
      $region53: #{tpu_custom_call.1} parent=5 // pred_check
        _
      $region54: #{tpu_custom_call.1} parent=5 // pred_check_branch
        %316 = sbr.rel (%p313) target = $region56
      $region55: #{tpu_custom_call.1} parent=5 // pred_region
        %s317 = ssub.s32 %s18, 1
        %p318 = scmp.lt.s32.totalorder %s27, 1
        %s319 = scalar_select %p318, %s27, 1
        %s320 = smul.addr %s319, 364
        %s321 = smul.addr %s320, 8
        %s322 = scalar_lea.vmem %s0, %s321
        %p323 = pneg %p56
        %p324 = pneg %p53
        %p325 = pneg %p77
        %p326 = pneg %p74
        %p327 = pneg %p98
        %p328 = pneg %p95
        %p329 = pneg %p119
        %p330 = pneg %p116
        %p331 = pneg %p140
        %p332 = pneg %p137
        %p333 = pneg %p161
        %p334 = pneg %p158
        %p335 = scmp.lt.s32.totalorder %s27, 1
        %s336 = scalar_select %p335, %s27, 1
        %s337 = scalar_lea.vmem %s6, %s336
        %p338 = pneg %p187
        %p339 = pneg %p184
        %p340 = pneg %p208
        %p341 = pneg %p205
        %p342 = pneg %p229
        %p343 = pneg %p226
        %p344 = pneg %p257
        %p345 = pneg %p254
        %s346 = sand.u32 %s244, 1
        %s347 = scalar_lea.sflag [#allocation3], %s346
        %s348 = sand.u32 %s244, 1
        %s349 = smul.addr %s348, 128
        %s350 = scalar_lea.vmem [#allocation2], %s349
        %p351 = scmp.lt.s32.totalorder %s27, 1
        %s352 = scalar_select %p351, %s27, 1
        %s353 = smul.addr %s352, 364
        %s354 = smul.addr %s353, 8
        %s355 = scalar_lea.vmem %s0, %s354
        %p356 = scmp.lt.s32.totalorder %s27, 1
        %s357 = scalar_select %p356, %s27, 1
        %s358 = scalar_lea.vmem %s6, %s357
        %s359 = smul.u32 16, %s28
        %s360 = smul.u32 %s28, 8
        %s361 = sadd.s32 %s360, 18
        %s362 = smul.u32 %s361, 56
        %s363 = scalar_lea.vmem %s355, %s362
        %v364 = vld [vmem:[%s363 + $0x12] sm:$0xff]
        %v365 = vld [vmem:[%s363 + $0x1a] sm:$0xff]
        %v366 = vld [vmem:[%s363 + $0x4a] sm:$0xff]
        %v367 = vld [vmem:[%s363 + $0x52] sm:$0xff]
        %v368 = vld [vmem:[%s363 + $0x82] sm:$0xff]
        %v369 = vld [vmem:[%s363 + $0x8a] sm:$0xff]
        %v370 = vld [vmem:[%s363 + $0xba] sm:$0xff]
        %v371 = vld [vmem:[%s363 + $0xc2] sm:$0xff]
        %v372 = vld [vmem:[%s363 + $0xf2] sm:$0xff]
        %v373 = vld [vmem:[%s363 + $0xfa] sm:$0xff]
        %v374 = vld [vmem:[%s363 + $0x12a] sm:$0xff]
        %v375 = vld [vmem:[%s363 + $0x132] sm:$0xff]
        %v376 = vld [vmem:[%s363 + $0x162] sm:$0xff]
        %v377 = vld [vmem:[%s363 + $0x16a] sm:$0xff]
        %v378 = vld [vmem:[%s363 + $0x19a] sm:$0xff]
        %v379 = vld [vmem:[%s363 + $0x1a2] sm:$0xff]
        %v380 = vld [vmem:[%s1] sm:$0xff]
        %vm381 = vcmask 64512
        %v383 = vsel %vm381, %v364, 0
        %v386 = vsel %vm381, %v365, 0
        %v389 = vsel %vm381, %v366, 0
        %v392 = vsel %vm381, %v367, 0
        %v395 = vsel %vm381, %v368, 0
        %v398 = vsel %vm381, %v369, 0
        %v401 = vsel %vm381, %v370, 0
        %v404 = vsel %vm381, %v371, 0
        %v407 = vsel %vm381, %v372, 0
        %v410 = vsel %vm381, %v373, 0
        %v413 = vsel %vm381, %v374, 0
        %v416 = vsel %vm381, %v375, 0
        %v419 = vsel %vm381, %v376, 0
        %v422 = vsel %vm381, %v377, 0
        %v425 = vsel %vm381, %v378, 0
        %v428 = vsel %vm381, %v379, 0
        %430 = vmatprep.subr.mxu0 0.0
        %431 = vmatpush1.msra.mxu0 %v380
        %432 = vmatprep.subr.mxu0 0.0
        %433 = vmatpush1.msra.mxu0 0.0
        %434 = vmatprep.subr.mxu0 0.0
        %435 = vmatpush1.msra.mxu0 0.0
        %436 = vmatprep.subr.mxu0 0.0
        %437 = vmatpush1.msra.mxu0 0.0
        %438 = vmatprep.subr.mxu0 0.0
        %439 = vmatpush1.msra.mxu0 0.0
        %440 = vmatprep.subr.mxu0 0.0
        %441 = vmatpush1.msra.mxu0 0.0
        %442 = vmatprep.subr.mxu0 0.0
        %443 = vmatpush1.msra.mxu0 0.0
        %444 = vmatprep.subr.mxu0 0.0
        %445 = vmatpush1.msra.mxu0 0.0
        %446 = vmatprep.subr.mxu0 0.0
        %447 = vmatpush1.msra.mxu0 0.0
        %448 = vmatprep.subr.mxu0 0.0
        %449 = vmatpush1.msra.mxu0 0.0
        %450 = vmatprep.subr.mxu0 0.0
        %451 = vmatpush1.msra.mxu0 0.0
        %452 = vmatprep.subr.mxu0 0.0
        %453 = vmatpush1.msra.mxu0 0.0
        %454 = vmatprep.subr.mxu0 0.0
        %455 = vmatpush1.msra.mxu0 0.0
        %456 = vmatprep.subr.mxu0 0.0
        %457 = vmatpush1.msra.mxu0 0.0
        %458 = vmatprep.subr.mxu0 0.0
        %459 = vmatpush1.msra.mxu0 0.0
        %460 = vmatprep.subr.mxu0 0.0
        %461 = vmatpush1.msra.mxu0 0.0
        %462 = vmatprep.subr.mxu0 0.0
        %463 = vmatpush1.msra.mxu0 0.0
        %464 = vmatprep.subr.mxu0 0.0
        %465 = vmatpush1.msra.mxu0 0.0
        %466 = vmatprep.subr.mxu0 0.0
        %467 = vmatpush1.msra.mxu0 0.0
        %468 = vmatprep.subr.mxu0 0.0
        %469 = vmatpush1.msra.mxu0 0.0
        %470 = vmatprep.subr.mxu0 0.0
        %471 = vmatpush1.msra.mxu0 0.0
        %472 = vmatprep.subr.mxu0 0.0
        %473 = vmatpush1.msra.mxu0 0.0
        %474 = vmatprep.subr.mxu0 0.0
        %475 = vmatpush1.msra.mxu0 0.0
        %476 = vmatprep.subr.mxu0 0.0
        %477 = vmatpush1.msra.mxu0 0.0
        %478 = vmatprep.subr.mxu0 0.0
        %479 = vmatpush1.msra.mxu0 0.0
        %480 = vmatprep.subr.mxu0 0.0
        %481 = vmatpush1.msra.mxu0 0.0
        %482 = vmatprep.subr.mxu0 0.0
        %483 = vmatpush1.msra.mxu0 0.0
        %484 = vmatprep.subr.mxu0 0.0
        %485 = vmatpush1.msra.mxu0 0.0
        %486 = vmatprep.subr.mxu0 0.0
        %487 = vmatpush1.msra.mxu0 0.0
        %488 = vmatprep.subr.mxu0 0.0
        %489 = vmatpush1.msra.mxu0 0.0
        %490 = vmatprep.subr.mxu0 0.0
        %491 = vmatpush1.msra.mxu0 0.0
        %492 = vmatprep.subr.mxu0 0.0
        %493 = vmatpush1.msra.mxu0 0.0
        %494 = vmatprep.mubr.f32.mxu0 0.0
        %495 = vmatmul.mubr.f32.gmra.mrb[0].mxu0 %v383
        %v496 = vpop.f32.mrb[0].mxu0
        %v497 = vadd.f32 0.0, %v496
        %v498 = vpop.f32.mrb[0].mxu0
        %499 = vmatprep.mubr.f32.mxu0 0.0
        %500 = vmatmul.mubr.f32.gmra.mrb[0].mxu0 %v386
        %v501 = vpop.f32.mrb[0].mxu0
        %v502 = vadd.f32 0.0, %v501
        %v503 = vpop.f32.mrb[0].mxu0
        %504 = vmatprep.mubr.f32.mxu0 0.0
        %505 = vmatmul.mubr.f32.gmra.mrb[0].mxu0 %v389
        %v506 = vpop.f32.mrb[0].mxu0
        %v507 = vadd.f32 0.0, %v506
        %v508 = vpop.f32.mrb[0].mxu0
        %509 = vmatprep.mubr.f32.mxu0 0.0
        %510 = vmatmul.mubr.f32.gmra.mrb[0].mxu0 %v392
        %v511 = vpop.f32.mrb[0].mxu0
        %v512 = vadd.f32 0.0, %v511
        %v513 = vpop.f32.mrb[0].mxu0
        %514 = vmatprep.mubr.f32.mxu0 0.0
        %515 = vmatmul.mubr.f32.gmra.mrb[0].mxu0 %v395
        %v516 = vpop.f32.mrb[0].mxu0
        %v517 = vadd.f32 0.0, %v516
        %v518 = vpop.f32.mrb[0].mxu0
        %519 = vmatprep.mubr.f32.mxu0 0.0
        %520 = vmatmul.mubr.f32.gmra.mrb[0].mxu0 %v398
        %v521 = vpop.f32.mrb[0].mxu0
        %v522 = vadd.f32 0.0, %v521
        %v523 = vpop.f32.mrb[0].mxu0
        %524 = vmatprep.mubr.f32.mxu0 0.0
        %525 = vmatmul.mubr.f32.gmra.mrb[0].mxu0 %v401
        %v526 = vpop.f32.mrb[0].mxu0
        %v527 = vadd.f32 0.0, %v526
        %v528 = vpop.f32.mrb[0].mxu0
        %529 = vmatprep.mubr.f32.mxu0 0.0
        %530 = vmatmul.mubr.f32.gmra.mrb[0].mxu0 %v404
        %v531 = vpop.f32.mrb[0].mxu0
        %v532 = vadd.f32 0.0, %v531
        %v533 = vpop.f32.mrb[0].mxu0
        %534 = vmatprep.mubr.f32.mxu0 0.0
        %535 = vmatmul.mubr.f32.gmra.mrb[0].mxu0 %v407
        %v536 = vpop.f32.mrb[0].mxu0
        %v537 = vadd.f32 0.0, %v536
        %v538 = vpop.f32.mrb[0].mxu0
        %539 = vmatprep.mubr.f32.mxu0 0.0
        %540 = vmatmul.mubr.f32.gmra.mrb[0].mxu0 %v410
        %v541 = vpop.f32.mrb[0].mxu0
        %v542 = vadd.f32 0.0, %v541
        %v543 = vpop.f32.mrb[0].mxu0
        %544 = vmatprep.mubr.f32.mxu0 0.0
        %545 = vmatmul.mubr.f32.gmra.mrb[0].mxu0 %v413
        %v546 = vpop.f32.mrb[0].mxu0
        %v547 = vadd.f32 0.0, %v546
        %v548 = vpop.f32.mrb[0].mxu0
        %549 = vmatprep.mubr.f32.mxu0 0.0
        %550 = vmatmul.mubr.f32.gmra.mrb[0].mxu0 %v416
        %v551 = vpop.f32.mrb[0].mxu0
        %v552 = vadd.f32 0.0, %v551
        %v553 = vpop.f32.mrb[0].mxu0
        %554 = vmatprep.mubr.f32.mxu0 0.0
        %555 = vmatmul.mubr.f32.gmra.mrb[0].mxu0 %v419
        %v556 = vpop.f32.mrb[0].mxu0
        %v557 = vadd.f32 0.0, %v556
        %v558 = vpop.f32.mrb[0].mxu0
        %559 = vmatprep.mubr.f32.mxu0 0.0
        %560 = vmatmul.mubr.f32.gmra.mrb[0].mxu0 %v422
        %v561 = vpop.f32.mrb[0].mxu0
        %v562 = vadd.f32 0.0, %v561
        %v563 = vpop.f32.mrb[0].mxu0
        %564 = vmatprep.mubr.f32.mxu0 0.0
        %565 = vmatmul.mubr.f32.gmra.mrb[0].mxu0 %v425
        %v566 = vpop.f32.mrb[0].mxu0
        %v567 = vadd.f32 0.0, %v566
        %v568 = vpop.f32.mrb[0].mxu0
        %569 = vmatprep.mubr.f32.mxu0 0.0
        %570 = vmatmul.mubr.f32.gmra.mrb[0].mxu0 %v428
        %v571 = vpop.f32.mrb[0].mxu0
        %v572 = vadd.f32 0.0, %v571
        %v573 = vpop.f32.mrb[0].mxu0
        %574 = vdwg.mxu0
        %v575 = vld [vmem:[%s4] sm:$0x1]
        %v577 = vlaneseq
        %v578 = vshrl.u32 %v577, 7
        %v579 = vsub.s32 0, %v578
        %v580 = vrot.slane %v575, %v579
        %v582 = vmul.f32 %v497, %v580
        %v583 = vmul.f32 %v502, %v580
        %v584 = vmul.f32 %v507, %v580
        %v585 = vmul.f32 %v512, %v580
        %v586 = vmul.f32 %v517, %v580
        %v587 = vmul.f32 %v522, %v580
        %v588 = vmul.f32 %v527, %v580
        %v589 = vmul.f32 %v532, %v580
        %v590 = vmul.f32 %v537, %v580
        %v591 = vmul.f32 %v542, %v580
        %v592 = vmul.f32 %v547, %v580
        %v593 = vmul.f32 %v552, %v580
        %v594 = vmul.f32 %v557, %v580
        %v595 = vmul.f32 %v562, %v580
        %v596 = vmul.f32 %v567, %v580
        %v597 = vmul.f32 %v572, %v580
        %v598 = vld [vmem:[%s5] sm:$0x1]
        %v600 = vlaneseq
        %v601 = vshrl.u32 %v600, 7
        %v602 = vsub.s32 0, %v601
        %v603 = vrot.slane %v598, %v602
        %v605 = vadd.f32 %v582, %v603
        %v606 = vadd.f32 %v583, %v603
        %v607 = vadd.f32 %v584, %v603
        %v608 = vadd.f32 %v585, %v603
        %v609 = vadd.f32 %v586, %v603
        %v610 = vadd.f32 %v587, %v603
        %v611 = vadd.f32 %v588, %v603
        %v612 = vadd.f32 %v589, %v603
        %v613 = vadd.f32 %v590, %v603
        %v614 = vadd.f32 %v591, %v603
        %v615 = vadd.f32 %v592, %v603
        %v616 = vadd.f32 %v593, %v603
        %v617 = vadd.f32 %v594, %v603
        %v618 = vadd.f32 %v595, %v603
        %v619 = vadd.f32 %v596, %v603
        %v620 = vadd.f32 %v597, %v603
        %v621 = vmax.f32 %v605, 0.0
        %v622 = vmax.f32 %v606, 0.0
        %v623 = vmax.f32 %v607, 0.0
        %v624 = vmax.f32 %v608, 0.0
        %v625 = vmax.f32 %v609, 0.0
        %v626 = vmax.f32 %v610, 0.0
        %v627 = vmax.f32 %v611, 0.0
        %v628 = vmax.f32 %v612, 0.0
        %v629 = vmax.f32 %v613, 0.0
        %v630 = vmax.f32 %v614, 0.0
        %v631 = vmax.f32 %v615, 0.0
        %v632 = vmax.f32 %v616, 0.0
        %v633 = vmax.f32 %v617, 0.0
        %v634 = vmax.f32 %v618, 0.0
        %v635 = vmax.f32 %v619, 0.0
        %v636 = vmax.f32 %v620, 0.0
        %v637 = vld [vmem:[%s3] sm:$0xff]
        %v638 = vld [vmem:[%s3 + $0x8] sm:$0xff]
        %v639 = vld [vmem:[%s3 + $0x10] sm:$0xff]
        %v640 = vld [vmem:[%s3 + $0x18] sm:$0xff]
        %v641 = vld [vmem:[%s3 + $0x20] sm:$0xff]
        %v642 = vld [vmem:[%s3 + $0x28] sm:$0xff]
        %v643 = vld [vmem:[%s3 + $0x30] sm:$0xff]
        %v644 = vld [vmem:[%s3 + $0x38] sm:$0xff]
        %v645 = vld [vmem:[%s3 + $0x40] sm:$0xff]
        %v646 = vld [vmem:[%s3 + $0x48] sm:$0xff]
        %v647 = vld [vmem:[%s3 + $0x50] sm:$0xff]
        %v648 = vld [vmem:[%s3 + $0x58] sm:$0xff]
        %v649 = vld [vmem:[%s3 + $0x60] sm:$0xff]
        %v650 = vld [vmem:[%s3 + $0x68] sm:$0xff]
        %v651 = vld [vmem:[%s3 + $0x70] sm:$0xff]
        %v652 = vld [vmem:[%s3 + $0x78] sm:$0xff]
        %s653 = sadd.s32 %s360, 12
        %s654 = smul.u32 %s653, 56
        %s655 = scalar_lea.vmem %s355, %s654
        %v656 = vld [vmem:[%s655 + $0xc] sm:$0xff]
        %v657 = vld [vmem:[%s655 + $0x14] sm:$0xff]
        %v658 = vld [vmem:[%s655 + $0x44] sm:$0xff]
        %v659 = vld [vmem:[%s655 + $0x4c] sm:$0xff]
        %v660 = vld [vmem:[%s655 + $0x7c] sm:$0xff]
        %v661 = vld [vmem:[%s655 + $0x84] sm:$0xff]
        %v662 = vld [vmem:[%s655 + $0xb4] sm:$0xff]
        %v663 = vld [vmem:[%s655 + $0xbc] sm:$0xff]
        %v664 = vld [vmem:[%s655 + $0xec] sm:$0xff]
        %v665 = vld [vmem:[%s655 + $0xf4] sm:$0xff]
        %v666 = vld [vmem:[%s655 + $0x124] sm:$0xff]
        %v667 = vld [vmem:[%s655 + $0x12c] sm:$0xff]
        %v668 = vld [vmem:[%s655 + $0x15c] sm:$0xff]
        %v669 = vld [vmem:[%s655 + $0x164] sm:$0xff]
        %v670 = vld [vmem:[%s655 + $0x194] sm:$0xff]
        %v671 = vld [vmem:[%s655 + $0x19c] sm:$0xff]
        %v672 = vld [vmem:[%s2] sm:$0xff]
        %v673 = vld [vmem:[%s655 + $0x12] sm:$0xff]
        %v674 = vld [vmem:[%s655 + $0x1a] sm:$0xff]
        %v675 = vld [vmem:[%s655 + $0x4a] sm:$0xff]
        %v676 = vld [vmem:[%s655 + $0x52] sm:$0xff]
        %v677 = vld [vmem:[%s655 + $0x82] sm:$0xff]
        %v678 = vld [vmem:[%s655 + $0x8a] sm:$0xff]
        %v679 = vld [vmem:[%s655 + $0xba] sm:$0xff]
        %v680 = vld [vmem:[%s655 + $0xc2] sm:$0xff]
        %v681 = vld [vmem:[%s655 + $0xf2] sm:$0xff]
        %v682 = vld [vmem:[%s655 + $0xfa] sm:$0xff]
        %v683 = vld [vmem:[%s655 + $0x12a] sm:$0xff]
        %v684 = vld [vmem:[%s655 + $0x132] sm:$0xff]
        %v685 = vld [vmem:[%s655 + $0x162] sm:$0xff]
        %v686 = vld [vmem:[%s655 + $0x16a] sm:$0xff]
        %v687 = vld [vmem:[%s655 + $0x19a] sm:$0xff]
        %v688 = vld [vmem:[%s655 + $0x1a2] sm:$0xff]
        %s689 = scalar_lea.vmem %s2, 8
        %v690 = vld [vmem:[%s689] sm:$0xff]
        %v692 = vsel %vm381, %v673, 0
        %v695 = vsel %vm381, %v674, 0
        %v698 = vsel %vm381, %v675, 0
        %v701 = vsel %vm381, %v676, 0
        %v704 = vsel %vm381, %v677, 0
        %v707 = vsel %vm381, %v678, 0
        %v710 = vsel %vm381, %v679, 0
        %v713 = vsel %vm381, %v680, 0
        %v716 = vsel %vm381, %v681, 0
        %v719 = vsel %vm381, %v682, 0
        %v722 = vsel %vm381, %v683, 0
        %v725 = vsel %vm381, %v684, 0
        %v728 = vsel %vm381, %v685, 0
        %v731 = vsel %vm381, %v686, 0
        %v734 = vsel %vm381, %v687, 0
        %v737 = vsel %vm381, %v688, 0
        %739 = vmatprep.subr.mxu0 0.0
        %740 = vmatpush1.msra.mxu0 %v690
        %741 = vmatprep.subr.mxu0 0.0
        %742 = vmatpush1.msra.mxu0 0.0
        %743 = vmatprep.subr.mxu0 0.0
        %744 = vmatpush1.msra.mxu0 0.0
        %745 = vmatprep.subr.mxu0 0.0
        %746 = vmatpush1.msra.mxu0 0.0
        %747 = vmatprep.subr.mxu0 0.0
        %748 = vmatpush1.msra.mxu0 0.0
        %749 = vmatprep.subr.mxu0 0.0
        %750 = vmatpush1.msra.mxu0 0.0
        %751 = vmatprep.subr.mxu0 0.0
        %752 = vmatpush1.msra.mxu0 0.0
        %753 = vmatprep.subr.mxu0 0.0
        %754 = vmatpush1.msra.mxu0 0.0
        %755 = vmatprep.subr.mxu0 0.0
        %756 = vmatpush1.msra.mxu0 0.0
        %757 = vmatprep.subr.mxu0 0.0
        %758 = vmatpush1.msra.mxu0 0.0
        %759 = vmatprep.subr.mxu0 0.0
        %760 = vmatpush1.msra.mxu0 0.0
        %761 = vmatprep.subr.mxu0 0.0
        %762 = vmatpush1.msra.mxu0 0.0
        %763 = vmatprep.subr.mxu0 0.0
        %764 = vmatpush1.msra.mxu0 0.0
        %765 = vmatprep.subr.mxu0 0.0
        %766 = vmatpush1.msra.mxu0 0.0
        %767 = vmatprep.subr.mxu0 0.0
        %768 = vmatpush1.msra.mxu0 0.0
        %769 = vmatprep.subr.mxu0 0.0
        %770 = vmatpush1.msra.mxu0 0.0
        %771 = vmatprep.subr.mxu0 0.0
        %772 = vmatpush1.msra.mxu0 0.0
        %773 = vmatprep.subr.mxu0 0.0
        %774 = vmatpush1.msra.mxu0 0.0
        %775 = vmatprep.subr.mxu0 0.0
        %776 = vmatpush1.msra.mxu0 0.0
        %777 = vmatprep.subr.mxu0 0.0
        %778 = vmatpush1.msra.mxu0 0.0
        %779 = vmatprep.subr.mxu0 0.0
        %780 = vmatpush1.msra.mxu0 0.0
        %781 = vmatprep.subr.mxu0 0.0
        %782 = vmatpush1.msra.mxu0 0.0
        %783 = vmatprep.subr.mxu0 0.0
        %784 = vmatpush1.msra.mxu0 0.0
        %785 = vmatprep.subr.mxu0 0.0
        %786 = vmatpush1.msra.mxu0 0.0
        %787 = vmatprep.subr.mxu0 0.0
        %788 = vmatpush1.msra.mxu0 0.0
        %789 = vmatprep.subr.mxu0 0.0
        %790 = vmatpush1.msra.mxu0 0.0
        %791 = vmatprep.subr.mxu0 0.0
        %792 = vmatpush1.msra.mxu0 0.0
        %793 = vmatprep.subr.mxu0 0.0
        %794 = vmatpush1.msra.mxu0 0.0
        %795 = vmatprep.subr.mxu0 0.0
        %796 = vmatpush1.msra.mxu0 0.0
        %797 = vmatprep.subr.mxu0 0.0
        %798 = vmatpush1.msra.mxu0 0.0
        %799 = vmatprep.subr.mxu0 0.0
        %800 = vmatpush1.msra.mxu0 0.0
        %801 = vmatprep.subr.mxu0 0.0
        %802 = vmatpush1.msra.mxu0 0.0
        %803 = vmatprep.mubr.f32.mxu0 0.0
        %804 = vmatmul.mubr.f32.gmra.mrb[0].mxu0 %v692
        %v805 = vpop.f32.mrb[0].mxu0
        %v806 = vadd.f32 0.0, %v805
        %v807 = vpop.f32.mrb[0].mxu0
        %808 = vmatprep.mubr.f32.mxu0 0.0
        %809 = vmatmul.mubr.f32.gmra.mrb[0].mxu0 %v695
        %v810 = vpop.f32.mrb[0].mxu0
        %v811 = vadd.f32 0.0, %v810
        %v812 = vpop.f32.mrb[0].mxu0
        %813 = vmatprep.mubr.f32.mxu0 0.0
        %814 = vmatmul.mubr.f32.gmra.mrb[0].mxu0 %v698
        %v815 = vpop.f32.mrb[0].mxu0
        %v816 = vadd.f32 0.0, %v815
        %v817 = vpop.f32.mrb[0].mxu0
        %818 = vmatprep.mubr.f32.mxu0 0.0
        %819 = vmatmul.mubr.f32.gmra.mrb[0].mxu0 %v701
        %v820 = vpop.f32.mrb[0].mxu0
        %v821 = vadd.f32 0.0, %v820
        %v822 = vpop.f32.mrb[0].mxu0
        %823 = vmatprep.mubr.f32.mxu0 0.0
        %824 = vmatmul.mubr.f32.gmra.mrb[0].mxu0 %v704
        %v825 = vpop.f32.mrb[0].mxu0
        %v826 = vadd.f32 0.0, %v825
        %v827 = vpop.f32.mrb[0].mxu0
        %828 = vmatprep.mubr.f32.mxu0 0.0
        %829 = vmatmul.mubr.f32.gmra.mrb[0].mxu0 %v707
        %v830 = vpop.f32.mrb[0].mxu0
        %v831 = vadd.f32 0.0, %v830
        %v832 = vpop.f32.mrb[0].mxu0
        %833 = vmatprep.mubr.f32.mxu0 0.0
        %834 = vmatmul.mubr.f32.gmra.mrb[0].mxu0 %v710
        %v835 = vpop.f32.mrb[0].mxu0
        %v836 = vadd.f32 0.0, %v835
        %v837 = vpop.f32.mrb[0].mxu0
        %838 = vmatprep.mubr.f32.mxu0 0.0
        %839 = vmatmul.mubr.f32.gmra.mrb[0].mxu0 %v713
        %v840 = vpop.f32.mrb[0].mxu0
        %v841 = vadd.f32 0.0, %v840
        %v842 = vpop.f32.mrb[0].mxu0
        %843 = vmatprep.mubr.f32.mxu0 0.0
        %844 = vmatmul.mubr.f32.gmra.mrb[0].mxu0 %v716
        %v845 = vpop.f32.mrb[0].mxu0
        %v846 = vadd.f32 0.0, %v845
        %v847 = vpop.f32.mrb[0].mxu0
        %848 = vmatprep.mubr.f32.mxu0 0.0
        %849 = vmatmul.mubr.f32.gmra.mrb[0].mxu0 %v719
        %v850 = vpop.f32.mrb[0].mxu0
        %v851 = vadd.f32 0.0, %v850
        %v852 = vpop.f32.mrb[0].mxu0
        %853 = vmatprep.mubr.f32.mxu0 0.0
        %854 = vmatmul.mubr.f32.gmra.mrb[0].mxu0 %v722
        %v855 = vpop.f32.mrb[0].mxu0
        %v856 = vadd.f32 0.0, %v855
        %v857 = vpop.f32.mrb[0].mxu0
        %858 = vmatprep.mubr.f32.mxu0 0.0
        %859 = vmatmul.mubr.f32.gmra.mrb[0].mxu0 %v725
        %v860 = vpop.f32.mrb[0].mxu0
        %v861 = vadd.f32 0.0, %v860
        %v862 = vpop.f32.mrb[0].mxu0
        %863 = vmatprep.mubr.f32.mxu0 0.0
        %864 = vmatmul.mubr.f32.gmra.mrb[0].mxu0 %v728
        %v865 = vpop.f32.mrb[0].mxu0
        %v866 = vadd.f32 0.0, %v865
        %v867 = vpop.f32.mrb[0].mxu0
        %868 = vmatprep.mubr.f32.mxu0 0.0
        %869 = vmatmul.mubr.f32.gmra.mrb[0].mxu0 %v731
        %v870 = vpop.f32.mrb[0].mxu0
        %v871 = vadd.f32 0.0, %v870
        %v872 = vpop.f32.mrb[0].mxu0
        %873 = vmatprep.mubr.f32.mxu0 0.0
        %874 = vmatmul.mubr.f32.gmra.mrb[0].mxu0 %v734
        %v875 = vpop.f32.mrb[0].mxu0
        %v876 = vadd.f32 0.0, %v875
        %v877 = vpop.f32.mrb[0].mxu0
        %878 = vmatprep.mubr.f32.mxu0 0.0
        %879 = vmatmul.mubr.f32.gmra.mrb[0].mxu0 %v737
        %v880 = vpop.f32.mrb[0].mxu0
        %v881 = vadd.f32 0.0, %v880
        %v882 = vpop.f32.mrb[0].mxu0
        %883 = vdwg.mxu0
        %v885 = vsel %vm381, %v656, 0
        %v888 = vsel %vm381, %v657, 0
        %v891 = vsel %vm381, %v658, 0
        %v894 = vsel %vm381, %v659, 0
        %v897 = vsel %vm381, %v660, 0
        %v900 = vsel %vm381, %v661, 0
        %v903 = vsel %vm381, %v662, 0
        %v906 = vsel %vm381, %v663, 0
        %v909 = vsel %vm381, %v664, 0
        %v912 = vsel %vm381, %v665, 0
        %v915 = vsel %vm381, %v666, 0
        %v918 = vsel %vm381, %v667, 0
        %v921 = vsel %vm381, %v668, 0
        %v924 = vsel %vm381, %v669, 0
        %v927 = vsel %vm381, %v670, 0
        %v930 = vsel %vm381, %v671, 0
        %932 = vmatprep.subr.mxu0 0.0
        %933 = vmatpush1.msra.mxu0 %v672
        %934 = vmatprep.subr.mxu0 0.0
        %935 = vmatpush1.msra.mxu0 0.0
        %936 = vmatprep.subr.mxu0 0.0
        %937 = vmatpush1.msra.mxu0 0.0
        %938 = vmatprep.subr.mxu0 0.0
        %939 = vmatpush1.msra.mxu0 0.0
        %940 = vmatprep.subr.mxu0 0.0
        %941 = vmatpush1.msra.mxu0 0.0
        %942 = vmatprep.subr.mxu0 0.0
        %943 = vmatpush1.msra.mxu0 0.0
        %944 = vmatprep.subr.mxu0 0.0
        %945 = vmatpush1.msra.mxu0 0.0
        %946 = vmatprep.subr.mxu0 0.0
        %947 = vmatpush1.msra.mxu0 0.0
        %948 = vmatprep.subr.mxu0 0.0
        %949 = vmatpush1.msra.mxu0 0.0
        %950 = vmatprep.subr.mxu0 0.0
        %951 = vmatpush1.msra.mxu0 0.0
        %952 = vmatprep.subr.mxu0 0.0
        %953 = vmatpush1.msra.mxu0 0.0
        %954 = vmatprep.subr.mxu0 0.0
        %955 = vmatpush1.msra.mxu0 0.0
        %956 = vmatprep.subr.mxu0 0.0
        %957 = vmatpush1.msra.mxu0 0.0
        %958 = vmatprep.subr.mxu0 0.0
        %959 = vmatpush1.msra.mxu0 0.0
        %960 = vmatprep.subr.mxu0 0.0
        %961 = vmatpush1.msra.mxu0 0.0
        %962 = vmatprep.subr.mxu0 0.0
        %963 = vmatpush1.msra.mxu0 0.0
        %964 = vmatprep.subr.mxu0 0.0
        %965 = vmatpush1.msra.mxu0 0.0
        %966 = vmatprep.subr.mxu0 0.0
        %967 = vmatpush1.msra.mxu0 0.0
        %968 = vmatprep.subr.mxu0 0.0
        %969 = vmatpush1.msra.mxu0 0.0
        %970 = vmatprep.subr.mxu0 0.0
        %971 = vmatpush1.msra.mxu0 0.0
        %972 = vmatprep.subr.mxu0 0.0
        %973 = vmatpush1.msra.mxu0 0.0
        %974 = vmatprep.subr.mxu0 0.0
        %975 = vmatpush1.msra.mxu0 0.0
        %976 = vmatprep.subr.mxu0 0.0
        %977 = vmatpush1.msra.mxu0 0.0
        %978 = vmatprep.subr.mxu0 0.0
        %979 = vmatpush1.msra.mxu0 0.0
        %980 = vmatprep.subr.mxu0 0.0
        %981 = vmatpush1.msra.mxu0 0.0
        %982 = vmatprep.subr.mxu0 0.0
        %983 = vmatpush1.msra.mxu0 0.0
        %984 = vmatprep.subr.mxu0 0.0
        %985 = vmatpush1.msra.mxu0 0.0
        %986 = vmatprep.subr.mxu0 0.0
        %987 = vmatpush1.msra.mxu0 0.0
        %988 = vmatprep.subr.mxu0 0.0
        %989 = vmatpush1.msra.mxu0 0.0
        %990 = vmatprep.subr.mxu0 0.0
        %991 = vmatpush1.msra.mxu0 0.0
        %992 = vmatprep.subr.mxu0 0.0
        %993 = vmatpush1.msra.mxu0 0.0
        %994 = vmatprep.subr.mxu0 0.0
        %995 = vmatpush1.msra.mxu0 0.0
        %996 = vmatprep.mubr.f32.mxu0 0.0
        %997 = vmatmul.mubr.f32.gmra.mrb[0].mxu0 %v885
        %v998 = vpop.f32.mrb[0].mxu0
        %v999 = vadd.f32 %v806, %v998
        %v1000 = vpop.f32.mrb[0].mxu0
        %1001 = vmatprep.mubr.f32.mxu0 0.0
        %1002 = vmatmul.mubr.f32.gmra.mrb[0].mxu0 %v888
        %v1003 = vpop.f32.mrb[0].mxu0
        %v1004 = vadd.f32 %v811, %v1003
        %v1005 = vpop.f32.mrb[0].mxu0
        %1006 = vmatprep.mubr.f32.mxu0 0.0
        %1007 = vmatmul.mubr.f32.gmra.mrb[0].mxu0 %v891
        %v1008 = vpop.f32.mrb[0].mxu0
        %v1009 = vadd.f32 %v816, %v1008
        %v1010 = vpop.f32.mrb[0].mxu0
        %1011 = vmatprep.mubr.f32.mxu0 0.0
        %1012 = vmatmul.mubr.f32.gmra.mrb[0].mxu0 %v894
        %v1013 = vpop.f32.mrb[0].mxu0
        %v1014 = vadd.f32 %v821, %v1013
        %v1015 = vpop.f32.mrb[0].mxu0
        %1016 = vmatprep.mubr.f32.mxu0 0.0
        %1017 = vmatmul.mubr.f32.gmra.mrb[0].mxu0 %v897
        %v1018 = vpop.f32.mrb[0].mxu0
        %v1019 = vadd.f32 %v826, %v1018
        %v1020 = vpop.f32.mrb[0].mxu0
        %1021 = vmatprep.mubr.f32.mxu0 0.0
        %1022 = vmatmul.mubr.f32.gmra.mrb[0].mxu0 %v900
        %v1023 = vpop.f32.mrb[0].mxu0
        %v1024 = vadd.f32 %v831, %v1023
        %v1025 = vpop.f32.mrb[0].mxu0
        %1026 = vmatprep.mubr.f32.mxu0 0.0
        %1027 = vmatmul.mubr.f32.gmra.mrb[0].mxu0 %v903
        %v1028 = vpop.f32.mrb[0].mxu0
        %v1029 = vadd.f32 %v836, %v1028
        %v1030 = vpop.f32.mrb[0].mxu0
        %1031 = vmatprep.mubr.f32.mxu0 0.0
        %1032 = vmatmul.mubr.f32.gmra.mrb[0].mxu0 %v906
        %v1033 = vpop.f32.mrb[0].mxu0
        %v1034 = vadd.f32 %v841, %v1033
        %v1035 = vpop.f32.mrb[0].mxu0
        %1036 = vmatprep.mubr.f32.mxu0 0.0
        %1037 = vmatmul.mubr.f32.gmra.mrb[0].mxu0 %v909
        %v1038 = vpop.f32.mrb[0].mxu0
        %v1039 = vadd.f32 %v846, %v1038
        %v1040 = vpop.f32.mrb[0].mxu0
        %1041 = vmatprep.mubr.f32.mxu0 0.0
        %1042 = vmatmul.mubr.f32.gmra.mrb[0].mxu0 %v912
        %v1043 = vpop.f32.mrb[0].mxu0
        %v1044 = vadd.f32 %v851, %v1043
        %v1045 = vpop.f32.mrb[0].mxu0
        %1046 = vmatprep.mubr.f32.mxu0 0.0
        %1047 = vmatmul.mubr.f32.gmra.mrb[0].mxu0 %v915
        %v1048 = vpop.f32.mrb[0].mxu0
        %v1049 = vadd.f32 %v856, %v1048
        %v1050 = vpop.f32.mrb[0].mxu0
        %1051 = vmatprep.mubr.f32.mxu0 0.0
        %1052 = vmatmul.mubr.f32.gmra.mrb[0].mxu0 %v918
        %v1053 = vpop.f32.mrb[0].mxu0
        %v1054 = vadd.f32 %v861, %v1053
        %v1055 = vpop.f32.mrb[0].mxu0
        %1056 = vmatprep.mubr.f32.mxu0 0.0
        %1057 = vmatmul.mubr.f32.gmra.mrb[0].mxu0 %v921
        %v1058 = vpop.f32.mrb[0].mxu0
        %v1059 = vadd.f32 %v866, %v1058
        %v1060 = vpop.f32.mrb[0].mxu0
        %1061 = vmatprep.mubr.f32.mxu0 0.0
        %1062 = vmatmul.mubr.f32.gmra.mrb[0].mxu0 %v924
        %v1063 = vpop.f32.mrb[0].mxu0
        %v1064 = vadd.f32 %v871, %v1063
        %v1065 = vpop.f32.mrb[0].mxu0
        %1066 = vmatprep.mubr.f32.mxu0 0.0
        %1067 = vmatmul.mubr.f32.gmra.mrb[0].mxu0 %v927
        %v1068 = vpop.f32.mrb[0].mxu0
        %v1069 = vadd.f32 %v876, %v1068
        %v1070 = vpop.f32.mrb[0].mxu0
        %1071 = vmatprep.mubr.f32.mxu0 0.0
        %1072 = vmatmul.mubr.f32.gmra.mrb[0].mxu0 %v930
        %v1073 = vpop.f32.mrb[0].mxu0
        %v1074 = vadd.f32 %v881, %v1073
        %v1075 = vpop.f32.mrb[0].mxu0
        %1076 = vdwg.mxu0
        %v1077 = vld [vmem:[%s655 + $0x18] sm:$0xff]
        %v1078 = vld [vmem:[%s655 + $0x20] sm:$0xff]
        %v1079 = vld [vmem:[%s655 + $0x50] sm:$0xff]
        %v1080 = vld [vmem:[%s655 + $0x58] sm:$0xff]
        %v1081 = vld [vmem:[%s655 + $0x88] sm:$0xff]
        %v1082 = vld [vmem:[%s655 + $0x90] sm:$0xff]
        %v1083 = vld [vmem:[%s655 + $0xc0] sm:$0xff]
        %v1084 = vld [vmem:[%s655 + $0xc8] sm:$0xff]
        %v1085 = vld [vmem:[%s655 + $0xf8] sm:$0xff]
        %v1086 = vld [vmem:[%s655 + $0x100] sm:$0xff]
        %v1087 = vld [vmem:[%s655 + $0x130] sm:$0xff]
        %v1088 = vld [vmem:[%s655 + $0x138] sm:$0xff]
        %v1089 = vld [vmem:[%s655 + $0x168] sm:$0xff]
        %v1090 = vld [vmem:[%s655 + $0x170] sm:$0xff]
        %v1091 = vld [vmem:[%s655 + $0x1a0] sm:$0xff]
        %v1092 = vld [vmem:[%s655 + $0x1a8] sm:$0xff]
        %s1093 = scalar_lea.vmem %s2, 16
        %v1094 = vld [vmem:[%s1093] sm:$0xff]
        %v1096 = vsel %vm381, %v1077, 0
        %v1099 = vsel %vm381, %v1078, 0
        %v1102 = vsel %vm381, %v1079, 0
        %v1105 = vsel %vm381, %v1080, 0
        %v1108 = vsel %vm381, %v1081, 0
        %v1111 = vsel %vm381, %v1082, 0
        %v1114 = vsel %vm381, %v1083, 0
        %v1117 = vsel %vm381, %v1084, 0
        %v1120 = vsel %vm381, %v1085, 0
        %v1123 = vsel %vm381, %v1086, 0
        %v1126 = vsel %vm381, %v1087, 0
        %v1129 = vsel %vm381, %v1088, 0
        %v1132 = vsel %vm381, %v1089, 0
        %v1135 = vsel %vm381, %v1090, 0
        %v1138 = vsel %vm381, %v1091, 0
        %v1141 = vsel %vm381, %v1092, 0
        %1143 = vmatprep.subr.mxu0 0.0
        %1144 = vmatpush1.msra.mxu0 %v1094
        %1145 = vmatprep.subr.mxu0 0.0
        %1146 = vmatpush1.msra.mxu0 0.0
        %1147 = vmatprep.subr.mxu0 0.0
        %1148 = vmatpush1.msra.mxu0 0.0
        %1149 = vmatprep.subr.mxu0 0.0
        %1150 = vmatpush1.msra.mxu0 0.0
        %1151 = vmatprep.subr.mxu0 0.0
        %1152 = vmatpush1.msra.mxu0 0.0
        %1153 = vmatprep.subr.mxu0 0.0
        %1154 = vmatpush1.msra.mxu0 0.0
        %1155 = vmatprep.subr.mxu0 0.0
        %1156 = vmatpush1.msra.mxu0 0.0
        %1157 = vmatprep.subr.mxu0 0.0
        %1158 = vmatpush1.msra.mxu0 0.0
        %1159 = vmatprep.subr.mxu0 0.0
        %1160 = vmatpush1.msra.mxu0 0.0
        %1161 = vmatprep.subr.mxu0 0.0
        %1162 = vmatpush1.msra.mxu0 0.0
        %1163 = vmatprep.subr.mxu0 0.0
        %1164 = vmatpush1.msra.mxu0 0.0
        %1165 = vmatprep.subr.mxu0 0.0
        %1166 = vmatpush1.msra.mxu0 0.0
        %1167 = vmatprep.subr.mxu0 0.0
        %1168 = vmatpush1.msra.mxu0 0.0
        %1169 = vmatprep.subr.mxu0 0.0
        %1170 = vmatpush1.msra.mxu0 0.0
        %1171 = vmatprep.subr.mxu0 0.0
        %1172 = vmatpush1.msra.mxu0 0.0
        %1173 = vmatprep.subr.mxu0 0.0
        %1174 = vmatpush1.msra.mxu0 0.0
        %1175 = vmatprep.subr.mxu0 0.0
        %1176 = vmatpush1.msra.mxu0 0.0
        %1177 = vmatprep.subr.mxu0 0.0
        %1178 = vmatpush1.msra.mxu0 0.0
        %1179 = vmatprep.subr.mxu0 0.0
        %1180 = vmatpush1.msra.mxu0 0.0
        %1181 = vmatprep.subr.mxu0 0.0
        %1182 = vmatpush1.msra.mxu0 0.0
        %1183 = vmatprep.subr.mxu0 0.0
        %1184 = vmatpush1.msra.mxu0 0.0
        %1185 = vmatprep.subr.mxu0 0.0
        %1186 = vmatpush1.msra.mxu0 0.0
        %1187 = vmatprep.subr.mxu0 0.0
        %1188 = vmatpush1.msra.mxu0 0.0
        %1189 = vmatprep.subr.mxu0 0.0
        %1190 = vmatpush1.msra.mxu0 0.0
        %1191 = vmatprep.subr.mxu0 0.0
        %1192 = vmatpush1.msra.mxu0 0.0
        %1193 = vmatprep.subr.mxu0 0.0
        %1194 = vmatpush1.msra.mxu0 0.0
        %1195 = vmatprep.subr.mxu0 0.0
        %1196 = vmatpush1.msra.mxu0 0.0
        %1197 = vmatprep.subr.mxu0 0.0
        %1198 = vmatpush1.msra.mxu0 0.0
        %1199 = vmatprep.subr.mxu0 0.0
        %1200 = vmatpush1.msra.mxu0 0.0
        %1201 = vmatprep.subr.mxu0 0.0
        %1202 = vmatpush1.msra.mxu0 0.0
        %1203 = vmatprep.subr.mxu0 0.0
        %1204 = vmatpush1.msra.mxu0 0.0
        %1205 = vmatprep.subr.mxu0 0.0
        %1206 = vmatpush1.msra.mxu0 0.0
        %1207 = vmatprep.mubr.f32.mxu0 0.0
        %1208 = vmatmul.mubr.f32.gmra.mrb[0].mxu0 %v1096
        %v1209 = vpop.f32.mrb[0].mxu0
        %v1210 = vadd.f32 0.0, %v1209
        %v1211 = vpop.f32.mrb[0].mxu0
        %1212 = vmatprep.mubr.f32.mxu0 0.0
        %1213 = vmatmul.mubr.f32.gmra.mrb[0].mxu0 %v1099
        %v1214 = vpop.f32.mrb[0].mxu0
        %v1215 = vadd.f32 0.0, %v1214
        %v1216 = vpop.f32.mrb[0].mxu0
        %1217 = vmatprep.mubr.f32.mxu0 0.0
        %1218 = vmatmul.mubr.f32.gmra.mrb[0].mxu0 %v1102
        %v1219 = vpop.f32.mrb[0].mxu0
        %v1220 = vadd.f32 0.0, %v1219
        %v1221 = vpop.f32.mrb[0].mxu0
        %1222 = vmatprep.mubr.f32.mxu0 0.0
        %1223 = vmatmul.mubr.f32.gmra.mrb[0].mxu0 %v1105
        %v1224 = vpop.f32.mrb[0].mxu0
        %v1225 = vadd.f32 0.0, %v1224
        %v1226 = vpop.f32.mrb[0].mxu0
        %1227 = vmatprep.mubr.f32.mxu0 0.0
        %1228 = vmatmul.mubr.f32.gmra.mrb[0].mxu0 %v1108
        %v1229 = vpop.f32.mrb[0].mxu0
        %v1230 = vadd.f32 0.0, %v1229
        %v1231 = vpop.f32.mrb[0].mxu0
        %1232 = vmatprep.mubr.f32.mxu0 0.0
        %1233 = vmatmul.mubr.f32.gmra.mrb[0].mxu0 %v1111
        %v1234 = vpop.f32.mrb[0].mxu0
        %v1235 = vadd.f32 0.0, %v1234
        %v1236 = vpop.f32.mrb[0].mxu0
        %1237 = vmatprep.mubr.f32.mxu0 0.0
        %1238 = vmatmul.mubr.f32.gmra.mrb[0].mxu0 %v1114
        %v1239 = vpop.f32.mrb[0].mxu0
        %v1240 = vadd.f32 0.0, %v1239
        %v1241 = vpop.f32.mrb[0].mxu0
        %1242 = vmatprep.mubr.f32.mxu0 0.0
        %1243 = vmatmul.mubr.f32.gmra.mrb[0].mxu0 %v1117
        %v1244 = vpop.f32.mrb[0].mxu0
        %v1245 = vadd.f32 0.0, %v1244
        %v1246 = vpop.f32.mrb[0].mxu0
        %1247 = vmatprep.mubr.f32.mxu0 0.0
        %1248 = vmatmul.mubr.f32.gmra.mrb[0].mxu0 %v1120
        %v1249 = vpop.f32.mrb[0].mxu0
        %v1250 = vadd.f32 0.0, %v1249
        %v1251 = vpop.f32.mrb[0].mxu0
        %1252 = vmatprep.mubr.f32.mxu0 0.0
        %1253 = vmatmul.mubr.f32.gmra.mrb[0].mxu0 %v1123
        %v1254 = vpop.f32.mrb[0].mxu0
        %v1255 = vadd.f32 0.0, %v1254
        %v1256 = vpop.f32.mrb[0].mxu0
        %1257 = vmatprep.mubr.f32.mxu0 0.0
        %1258 = vmatmul.mubr.f32.gmra.mrb[0].mxu0 %v1126
        %v1259 = vpop.f32.mrb[0].mxu0
        %v1260 = vadd.f32 0.0, %v1259
        %v1261 = vpop.f32.mrb[0].mxu0
        %1262 = vmatprep.mubr.f32.mxu0 0.0
        %1263 = vmatmul.mubr.f32.gmra.mrb[0].mxu0 %v1129
        %v1264 = vpop.f32.mrb[0].mxu0
        %v1265 = vadd.f32 0.0, %v1264
        %v1266 = vpop.f32.mrb[0].mxu0
        %1267 = vmatprep.mubr.f32.mxu0 0.0
        %1268 = vmatmul.mubr.f32.gmra.mrb[0].mxu0 %v1132
        %v1269 = vpop.f32.mrb[0].mxu0
        %v1270 = vadd.f32 0.0, %v1269
        %v1271 = vpop.f32.mrb[0].mxu0
        %1272 = vmatprep.mubr.f32.mxu0 0.0
        %1273 = vmatmul.mubr.f32.gmra.mrb[0].mxu0 %v1135
        %v1274 = vpop.f32.mrb[0].mxu0
        %v1275 = vadd.f32 0.0, %v1274
        %v1276 = vpop.f32.mrb[0].mxu0
        %1277 = vmatprep.mubr.f32.mxu0 0.0
        %1278 = vmatmul.mubr.f32.gmra.mrb[0].mxu0 %v1138
        %v1279 = vpop.f32.mrb[0].mxu0
        %v1280 = vadd.f32 0.0, %v1279
        %v1281 = vpop.f32.mrb[0].mxu0
        %1282 = vmatprep.mubr.f32.mxu0 0.0
        %1283 = vmatmul.mubr.f32.gmra.mrb[0].mxu0 %v1141
        %v1284 = vpop.f32.mrb[0].mxu0
        %v1285 = vadd.f32 0.0, %v1284
        %v1286 = vpop.f32.mrb[0].mxu0
        %1287 = vdwg.mxu0
        %v1288 = vadd.f32 %v999, %v1210
        %v1289 = vadd.f32 %v1004, %v1215
        %v1290 = vadd.f32 %v1009, %v1220
        %v1291 = vadd.f32 %v1014, %v1225
        %v1292 = vadd.f32 %v1019, %v1230
        %v1293 = vadd.f32 %v1024, %v1235
        %v1294 = vadd.f32 %v1029, %v1240
        %v1295 = vadd.f32 %v1034, %v1245
        %v1296 = vadd.f32 %v1039, %v1250
        %v1297 = vadd.f32 %v1044, %v1255
        %v1298 = vadd.f32 %v1049, %v1260
        %v1299 = vadd.f32 %v1054, %v1265
        %v1300 = vadd.f32 %v1059, %v1270
        %v1301 = vadd.f32 %v1064, %v1275
        %v1302 = vadd.f32 %v1069, %v1280
        %v1303 = vadd.f32 %v1074, %v1285
        %v1304 = vld [vmem:[%s363 + $0xc] sm:$0xff]
        %v1305 = vld [vmem:[%s363 + $0x14] sm:$0xff]
        %v1306 = vld [vmem:[%s363 + $0x44] sm:$0xff]
        %v1307 = vld [vmem:[%s363 + $0x4c] sm:$0xff]
        %v1308 = vld [vmem:[%s363 + $0x7c] sm:$0xff]
        %v1309 = vld [vmem:[%s363 + $0x84] sm:$0xff]
        %v1310 = vld [vmem:[%s363 + $0xb4] sm:$0xff]
        %v1311 = vld [vmem:[%s363 + $0xbc] sm:$0xff]
        %v1312 = vld [vmem:[%s363 + $0xec] sm:$0xff]
        %v1313 = vld [vmem:[%s363 + $0xf4] sm:$0xff]
        %v1314 = vld [vmem:[%s363 + $0x124] sm:$0xff]
        %v1315 = vld [vmem:[%s363 + $0x12c] sm:$0xff]
        %v1316 = vld [vmem:[%s363 + $0x15c] sm:$0xff]
        %v1317 = vld [vmem:[%s363 + $0x164] sm:$0xff]
        %v1318 = vld [vmem:[%s363 + $0x194] sm:$0xff]
        %v1319 = vld [vmem:[%s363 + $0x19c] sm:$0xff]
        %s1320 = scalar_lea.vmem %s2, 24
        %v1321 = vld [vmem:[%s1320] sm:$0xff]
        %v1323 = vsel %vm381, %v1304, 0
        %v1326 = vsel %vm381, %v1305, 0
        %v1329 = vsel %vm381, %v1306, 0
        %v1332 = vsel %vm381, %v1307, 0
        %v1335 = vsel %vm381, %v1308, 0
        %v1338 = vsel %vm381, %v1309, 0
        %v1341 = vsel %vm381, %v1310, 0
        %v1344 = vsel %vm381, %v1311, 0
        %v1347 = vsel %vm381, %v1312, 0
        %v1350 = vsel %vm381, %v1313, 0
        %v1353 = vsel %vm381, %v1314, 0
        %v1356 = vsel %vm381, %v1315, 0
        %v1359 = vsel %vm381, %v1316, 0
        %v1362 = vsel %vm381, %v1317, 0
        %v1365 = vsel %vm381, %v1318, 0
        %v1368 = vsel %vm381, %v1319, 0
        %1370 = vmatprep.subr.mxu0 0.0
        %1371 = vmatpush1.msra.mxu0 %v1321
        %1372 = vmatprep.subr.mxu0 0.0
        %1373 = vmatpush1.msra.mxu0 0.0
        %1374 = vmatprep.subr.mxu0 0.0
        %1375 = vmatpush1.msra.mxu0 0.0
        %1376 = vmatprep.subr.mxu0 0.0
        %1377 = vmatpush1.msra.mxu0 0.0
        %1378 = vmatprep.subr.mxu0 0.0
        %1379 = vmatpush1.msra.mxu0 0.0
        %1380 = vmatprep.subr.mxu0 0.0
        %1381 = vmatpush1.msra.mxu0 0.0
        %1382 = vmatprep.subr.mxu0 0.0
        %1383 = vmatpush1.msra.mxu0 0.0
        %1384 = vmatprep.subr.mxu0 0.0
        %1385 = vmatpush1.msra.mxu0 0.0
        %1386 = vmatprep.subr.mxu0 0.0
        %1387 = vmatpush1.msra.mxu0 0.0
        %1388 = vmatprep.subr.mxu0 0.0
        %1389 = vmatpush1.msra.mxu0 0.0
        %1390 = vmatprep.subr.mxu0 0.0
        %1391 = vmatpush1.msra.mxu0 0.0
        %1392 = vmatprep.subr.mxu0 0.0
        %1393 = vmatpush1.msra.mxu0 0.0
        %1394 = vmatprep.subr.mxu0 0.0
        %1395 = vmatpush1.msra.mxu0 0.0
        %1396 = vmatprep.subr.mxu0 0.0
        %1397 = vmatpush1.msra.mxu0 0.0
        %1398 = vmatprep.subr.mxu0 0.0
        %1399 = vmatpush1.msra.mxu0 0.0
        %1400 = vmatprep.subr.mxu0 0.0
        %1401 = vmatpush1.msra.mxu0 0.0
        %1402 = vmatprep.subr.mxu0 0.0
        %1403 = vmatpush1.msra.mxu0 0.0
        %1404 = vmatprep.subr.mxu0 0.0
        %1405 = vmatpush1.msra.mxu0 0.0
        %1406 = vmatprep.subr.mxu0 0.0
        %1407 = vmatpush1.msra.mxu0 0.0
        %1408 = vmatprep.subr.mxu0 0.0
        %1409 = vmatpush1.msra.mxu0 0.0
        %1410 = vmatprep.subr.mxu0 0.0
        %1411 = vmatpush1.msra.mxu0 0.0
        %1412 = vmatprep.subr.mxu0 0.0
        %1413 = vmatpush1.msra.mxu0 0.0
        %1414 = vmatprep.subr.mxu0 0.0
        %1415 = vmatpush1.msra.mxu0 0.0
        %1416 = vmatprep.subr.mxu0 0.0
        %1417 = vmatpush1.msra.mxu0 0.0
        %1418 = vmatprep.subr.mxu0 0.0
        %1419 = vmatpush1.msra.mxu0 0.0
        %1420 = vmatprep.subr.mxu0 0.0
        %1421 = vmatpush1.msra.mxu0 0.0
        %1422 = vmatprep.subr.mxu0 0.0
        %1423 = vmatpush1.msra.mxu0 0.0
        %1424 = vmatprep.subr.mxu0 0.0
        %1425 = vmatpush1.msra.mxu0 0.0
        %1426 = vmatprep.subr.mxu0 0.0
        %1427 = vmatpush1.msra.mxu0 0.0
        %1428 = vmatprep.subr.mxu0 0.0
        %1429 = vmatpush1.msra.mxu0 0.0
        %1430 = vmatprep.subr.mxu0 0.0
        %1431 = vmatpush1.msra.mxu0 0.0
        %1432 = vmatprep.subr.mxu0 0.0
        %1433 = vmatpush1.msra.mxu0 0.0
        %1434 = vmatprep.mubr.f32.mxu0 0.0
        %1435 = vmatmul.mubr.f32.gmra.mrb[0].mxu0 %v1323
        %v1436 = vpop.f32.mrb[0].mxu0
        %v1437 = vadd.f32 0.0, %v1436
        %v1438 = vpop.f32.mrb[0].mxu0
        %1439 = vmatprep.mubr.f32.mxu0 0.0
        %1440 = vmatmul.mubr.f32.gmra.mrb[0].mxu0 %v1326
        %v1441 = vpop.f32.mrb[0].mxu0
        %v1442 = vadd.f32 0.0, %v1441
        %v1443 = vpop.f32.mrb[0].mxu0
        %1444 = vmatprep.mubr.f32.mxu0 0.0
        %1445 = vmatmul.mubr.f32.gmra.mrb[0].mxu0 %v1329
        %v1446 = vpop.f32.mrb[0].mxu0
        %v1447 = vadd.f32 0.0, %v1446
        %v1448 = vpop.f32.mrb[0].mxu0
        %1449 = vmatprep.mubr.f32.mxu0 0.0
        %1450 = vmatmul.mubr.f32.gmra.mrb[0].mxu0 %v1332
        %v1451 = vpop.f32.mrb[0].mxu0
        %v1452 = vadd.f32 0.0, %v1451
        %v1453 = vpop.f32.mrb[0].mxu0
        %1454 = vmatprep.mubr.f32.mxu0 0.0
        %1455 = vmatmul.mubr.f32.gmra.mrb[0].mxu0 %v1335
        %v1456 = vpop.f32.mrb[0].mxu0
        %v1457 = vadd.f32 0.0, %v1456
        %v1458 = vpop.f32.mrb[0].mxu0
        %1459 = vmatprep.mubr.f32.mxu0 0.0
        %1460 = vmatmul.mubr.f32.gmra.mrb[0].mxu0 %v1338
        %v1461 = vpop.f32.mrb[0].mxu0
        %v1462 = vadd.f32 0.0, %v1461
        %v1463 = vpop.f32.mrb[0].mxu0
        %1464 = vmatprep.mubr.f32.mxu0 0.0
        %1465 = vmatmul.mubr.f32.gmra.mrb[0].mxu0 %v1341
        %v1466 = vpop.f32.mrb[0].mxu0
        %v1467 = vadd.f32 0.0, %v1466
        %v1468 = vpop.f32.mrb[0].mxu0
        %1469 = vmatprep.mubr.f32.mxu0 0.0
        %1470 = vmatmul.mubr.f32.gmra.mrb[0].mxu0 %v1344
        %v1471 = vpop.f32.mrb[0].mxu0
        %v1472 = vadd.f32 0.0, %v1471
        %v1473 = vpop.f32.mrb[0].mxu0
        %1474 = vmatprep.mubr.f32.mxu0 0.0
        %1475 = vmatmul.mubr.f32.gmra.mrb[0].mxu0 %v1347
        %v1476 = vpop.f32.mrb[0].mxu0
        %v1477 = vadd.f32 0.0, %v1476
        %v1478 = vpop.f32.mrb[0].mxu0
        %1479 = vmatprep.mubr.f32.mxu0 0.0
        %1480 = vmatmul.mubr.f32.gmra.mrb[0].mxu0 %v1350
        %v1481 = vpop.f32.mrb[0].mxu0
        %v1482 = vadd.f32 0.0, %v1481
        %v1483 = vpop.f32.mrb[0].mxu0
        %1484 = vmatprep.mubr.f32.mxu0 0.0
        %1485 = vmatmul.mubr.f32.gmra.mrb[0].mxu0 %v1353
        %v1486 = vpop.f32.mrb[0].mxu0
        %v1487 = vadd.f32 0.0, %v1486
        %v1488 = vpop.f32.mrb[0].mxu0
        %1489 = vmatprep.mubr.f32.mxu0 0.0
        %1490 = vmatmul.mubr.f32.gmra.mrb[0].mxu0 %v1356
        %v1491 = vpop.f32.mrb[0].mxu0
        %v1492 = vadd.f32 0.0, %v1491
        %v1493 = vpop.f32.mrb[0].mxu0
        %1494 = vmatprep.mubr.f32.mxu0 0.0
        %1495 = vmatmul.mubr.f32.gmra.mrb[0].mxu0 %v1359
        %v1496 = vpop.f32.mrb[0].mxu0
        %v1497 = vadd.f32 0.0, %v1496
        %v1498 = vpop.f32.mrb[0].mxu0
        %1499 = vmatprep.mubr.f32.mxu0 0.0
        %1500 = vmatmul.mubr.f32.gmra.mrb[0].mxu0 %v1362
        %v1501 = vpop.f32.mrb[0].mxu0
        %v1502 = vadd.f32 0.0, %v1501
        %v1503 = vpop.f32.mrb[0].mxu0
        %1504 = vmatprep.mubr.f32.mxu0 0.0
        %1505 = vmatmul.mubr.f32.gmra.mrb[0].mxu0 %v1365
        %v1506 = vpop.f32.mrb[0].mxu0
        %v1507 = vadd.f32 0.0, %v1506
        %v1508 = vpop.f32.mrb[0].mxu0
        %1509 = vmatprep.mubr.f32.mxu0 0.0
        %1510 = vmatmul.mubr.f32.gmra.mrb[0].mxu0 %v1368
        %v1511 = vpop.f32.mrb[0].mxu0
        %v1512 = vadd.f32 0.0, %v1511
        %v1513 = vpop.f32.mrb[0].mxu0
        %1514 = vdwg.mxu0
        %v1515 = vadd.f32 %v1288, %v1437
        %v1516 = vadd.f32 %v1289, %v1442
        %v1517 = vadd.f32 %v1290, %v1447
        %v1518 = vadd.f32 %v1291, %v1452
        %v1519 = vadd.f32 %v1292, %v1457
        %v1520 = vadd.f32 %v1293, %v1462
        %v1521 = vadd.f32 %v1294, %v1467
        %v1522 = vadd.f32 %v1295, %v1472
        %v1523 = vadd.f32 %v1296, %v1477
        %v1524 = vadd.f32 %v1297, %v1482
        %v1525 = vadd.f32 %v1298, %v1487
        %v1526 = vadd.f32 %v1299, %v1492
        %v1527 = vadd.f32 %v1300, %v1497
        %v1528 = vadd.f32 %v1301, %v1502
        %v1529 = vadd.f32 %v1302, %v1507
        %v1530 = vadd.f32 %v1303, %v1512
        %s1531 = scalar_lea.vmem %s2, 32
        %v1532 = vld [vmem:[%s1531] sm:$0xff]
        %1533 = vmatprep.subr.mxu0 0.0
        %1534 = vmatpush1.msra.mxu0 %v1532
        %1535 = vmatprep.subr.mxu0 0.0
        %1536 = vmatpush1.msra.mxu0 0.0
        %1537 = vmatprep.subr.mxu0 0.0
        %1538 = vmatpush1.msra.mxu0 0.0
        %1539 = vmatprep.subr.mxu0 0.0
        %1540 = vmatpush1.msra.mxu0 0.0
        %1541 = vmatprep.subr.mxu0 0.0
        %1542 = vmatpush1.msra.mxu0 0.0
        %1543 = vmatprep.subr.mxu0 0.0
        %1544 = vmatpush1.msra.mxu0 0.0
        %1545 = vmatprep.subr.mxu0 0.0
        %1546 = vmatpush1.msra.mxu0 0.0
        %1547 = vmatprep.subr.mxu0 0.0
        %1548 = vmatpush1.msra.mxu0 0.0
        %1549 = vmatprep.subr.mxu0 0.0
        %1550 = vmatpush1.msra.mxu0 0.0
        %1551 = vmatprep.subr.mxu0 0.0
        %1552 = vmatpush1.msra.mxu0 0.0
        %1553 = vmatprep.subr.mxu0 0.0
        %1554 = vmatpush1.msra.mxu0 0.0
        %1555 = vmatprep.subr.mxu0 0.0
        %1556 = vmatpush1.msra.mxu0 0.0
        %1557 = vmatprep.subr.mxu0 0.0
        %1558 = vmatpush1.msra.mxu0 0.0
        %1559 = vmatprep.subr.mxu0 0.0
        %1560 = vmatpush1.msra.mxu0 0.0
        %1561 = vmatprep.subr.mxu0 0.0
        %1562 = vmatpush1.msra.mxu0 0.0
        %1563 = vmatprep.subr.mxu0 0.0
        %1564 = vmatpush1.msra.mxu0 0.0
        %1565 = vmatprep.subr.mxu0 0.0
        %1566 = vmatpush1.msra.mxu0 0.0
        %1567 = vmatprep.subr.mxu0 0.0
        %1568 = vmatpush1.msra.mxu0 0.0
        %1569 = vmatprep.subr.mxu0 0.0
        %1570 = vmatpush1.msra.mxu0 0.0
        %1571 = vmatprep.subr.mxu0 0.0
        %1572 = vmatpush1.msra.mxu0 0.0
        %1573 = vmatprep.subr.mxu0 0.0
        %1574 = vmatpush1.msra.mxu0 0.0
        %1575 = vmatprep.subr.mxu0 0.0
        %1576 = vmatpush1.msra.mxu0 0.0
        %1577 = vmatprep.subr.mxu0 0.0
        %1578 = vmatpush1.msra.mxu0 0.0
        %1579 = vmatprep.subr.mxu0 0.0
        %1580 = vmatpush1.msra.mxu0 0.0
        %1581 = vmatprep.subr.mxu0 0.0
        %1582 = vmatpush1.msra.mxu0 0.0
        %1583 = vmatprep.subr.mxu0 0.0
        %1584 = vmatpush1.msra.mxu0 0.0
        %1585 = vmatprep.subr.mxu0 0.0
        %1586 = vmatpush1.msra.mxu0 0.0
        %1587 = vmatprep.subr.mxu0 0.0
        %1588 = vmatpush1.msra.mxu0 0.0
        %1589 = vmatprep.subr.mxu0 0.0
        %1590 = vmatpush1.msra.mxu0 0.0
        %1591 = vmatprep.subr.mxu0 0.0
        %1592 = vmatpush1.msra.mxu0 0.0
        %1593 = vmatprep.subr.mxu0 0.0
        %1594 = vmatpush1.msra.mxu0 0.0
        %1595 = vmatprep.subr.mxu0 0.0
        %1596 = vmatpush1.msra.mxu0 0.0
        %1597 = vmatprep.mubr.f32.mxu0 0.0
        %1598 = vmatmul.mubr.f32.gmra.mrb[0].mxu0 %v383
        %v1599 = vpop.f32.mrb[0].mxu0
        %v1600 = vadd.f32 0.0, %v1599
        %v1601 = vpop.f32.mrb[0].mxu0
        %1602 = vmatprep.mubr.f32.mxu0 0.0
        %1603 = vmatmul.mubr.f32.gmra.mrb[0].mxu0 %v386
        %v1604 = vpop.f32.mrb[0].mxu0
        %v1605 = vadd.f32 0.0, %v1604
        %v1606 = vpop.f32.mrb[0].mxu0
        %1607 = vmatprep.mubr.f32.mxu0 0.0
        %1608 = vmatmul.mubr.f32.gmra.mrb[0].mxu0 %v389
        %v1609 = vpop.f32.mrb[0].mxu0
        %v1610 = vadd.f32 0.0, %v1609
        %v1611 = vpop.f32.mrb[0].mxu0
        %1612 = vmatprep.mubr.f32.mxu0 0.0
        %1613 = vmatmul.mubr.f32.gmra.mrb[0].mxu0 %v392
        %v1614 = vpop.f32.mrb[0].mxu0
        %v1615 = vadd.f32 0.0, %v1614
        %v1616 = vpop.f32.mrb[0].mxu0
        %1617 = vmatprep.mubr.f32.mxu0 0.0
        %1618 = vmatmul.mubr.f32.gmra.mrb[0].mxu0 %v395
        %v1619 = vpop.f32.mrb[0].mxu0
        %v1620 = vadd.f32 0.0, %v1619
        %v1621 = vpop.f32.mrb[0].mxu0
        %1622 = vmatprep.mubr.f32.mxu0 0.0
        %1623 = vmatmul.mubr.f32.gmra.mrb[0].mxu0 %v398
        %v1624 = vpop.f32.mrb[0].mxu0
        %v1625 = vadd.f32 0.0, %v1624
        %v1626 = vpop.f32.mrb[0].mxu0
        %1627 = vmatprep.mubr.f32.mxu0 0.0
        %1628 = vmatmul.mubr.f32.gmra.mrb[0].mxu0 %v401
        %v1629 = vpop.f32.mrb[0].mxu0
        %v1630 = vadd.f32 0.0, %v1629
        %v1631 = vpop.f32.mrb[0].mxu0
        %1632 = vmatprep.mubr.f32.mxu0 0.0
        %1633 = vmatmul.mubr.f32.gmra.mrb[0].mxu0 %v404
        %v1634 = vpop.f32.mrb[0].mxu0
        %v1635 = vadd.f32 0.0, %v1634
        %v1636 = vpop.f32.mrb[0].mxu0
        %1637 = vmatprep.mubr.f32.mxu0 0.0
        %1638 = vmatmul.mubr.f32.gmra.mrb[0].mxu0 %v407
        %v1639 = vpop.f32.mrb[0].mxu0
        %v1640 = vadd.f32 0.0, %v1639
        %v1641 = vpop.f32.mrb[0].mxu0
        %1642 = vmatprep.mubr.f32.mxu0 0.0
        %1643 = vmatmul.mubr.f32.gmra.mrb[0].mxu0 %v410
        %v1644 = vpop.f32.mrb[0].mxu0
        %v1645 = vadd.f32 0.0, %v1644
        %v1646 = vpop.f32.mrb[0].mxu0
        %1647 = vmatprep.mubr.f32.mxu0 0.0
        %1648 = vmatmul.mubr.f32.gmra.mrb[0].mxu0 %v413
        %v1649 = vpop.f32.mrb[0].mxu0
        %v1650 = vadd.f32 0.0, %v1649
        %v1651 = vpop.f32.mrb[0].mxu0
        %1652 = vmatprep.mubr.f32.mxu0 0.0
        %1653 = vmatmul.mubr.f32.gmra.mrb[0].mxu0 %v416
        %v1654 = vpop.f32.mrb[0].mxu0
        %v1655 = vadd.f32 0.0, %v1654
        %v1656 = vpop.f32.mrb[0].mxu0
        %1657 = vmatprep.mubr.f32.mxu0 0.0
        %1658 = vmatmul.mubr.f32.gmra.mrb[0].mxu0 %v419
        %v1659 = vpop.f32.mrb[0].mxu0
        %v1660 = vadd.f32 0.0, %v1659
        %v1661 = vpop.f32.mrb[0].mxu0
        %1662 = vmatprep.mubr.f32.mxu0 0.0
        %1663 = vmatmul.mubr.f32.gmra.mrb[0].mxu0 %v422
        %v1664 = vpop.f32.mrb[0].mxu0
        %v1665 = vadd.f32 0.0, %v1664
        %v1666 = vpop.f32.mrb[0].mxu0
        %1667 = vmatprep.mubr.f32.mxu0 0.0
        %1668 = vmatmul.mubr.f32.gmra.mrb[0].mxu0 %v425
        %v1669 = vpop.f32.mrb[0].mxu0
        %v1670 = vadd.f32 0.0, %v1669
        %v1671 = vpop.f32.mrb[0].mxu0
        %1672 = vmatprep.mubr.f32.mxu0 0.0
        %1673 = vmatmul.mubr.f32.gmra.mrb[0].mxu0 %v428
        %v1674 = vpop.f32.mrb[0].mxu0
        %v1675 = vadd.f32 0.0, %v1674
        %v1676 = vpop.f32.mrb[0].mxu0
        %1677 = vdwg.mxu0
        %v1678 = vadd.f32 %v1515, %v1600
        %v1679 = vadd.f32 %v1516, %v1605
        %v1680 = vadd.f32 %v1517, %v1610
        %v1681 = vadd.f32 %v1518, %v1615
        %v1682 = vadd.f32 %v1519, %v1620
        %v1683 = vadd.f32 %v1520, %v1625
        %v1684 = vadd.f32 %v1521, %v1630
        %v1685 = vadd.f32 %v1522, %v1635
        %v1686 = vadd.f32 %v1523, %v1640
        %v1687 = vadd.f32 %v1524, %v1645
        %v1688 = vadd.f32 %v1525, %v1650
        %v1689 = vadd.f32 %v1526, %v1655
        %v1690 = vadd.f32 %v1527, %v1660
        %v1691 = vadd.f32 %v1528, %v1665
        %v1692 = vadd.f32 %v1529, %v1670
        %v1693 = vadd.f32 %v1530, %v1675
        %v1694 = vld [vmem:[%s363 + $0x18] sm:$0xff]
        %v1695 = vld [vmem:[%s363 + $0x20] sm:$0xff]
        %v1696 = vld [vmem:[%s363 + $0x50] sm:$0xff]
        %v1697 = vld [vmem:[%s363 + $0x58] sm:$0xff]
        %v1698 = vld [vmem:[%s363 + $0x88] sm:$0xff]
        %v1699 = vld [vmem:[%s363 + $0x90] sm:$0xff]
        %v1700 = vld [vmem:[%s363 + $0xc0] sm:$0xff]
        %v1701 = vld [vmem:[%s363 + $0xc8] sm:$0xff]
        %v1702 = vld [vmem:[%s363 + $0xf8] sm:$0xff]
        %v1703 = vld [vmem:[%s363 + $0x100] sm:$0xff]
        %v1704 = vld [vmem:[%s363 + $0x130] sm:$0xff]
        %v1705 = vld [vmem:[%s363 + $0x138] sm:$0xff]
        %v1706 = vld [vmem:[%s363 + $0x168] sm:$0xff]
        %v1707 = vld [vmem:[%s363 + $0x170] sm:$0xff]
        %v1708 = vld [vmem:[%s363 + $0x1a0] sm:$0xff]
        %v1709 = vld [vmem:[%s363 + $0x1a8] sm:$0xff]
        %s1710 = scalar_lea.vmem %s2, 40
        %v1711 = vld [vmem:[%s1710] sm:$0xff]
        %v1713 = vsel %vm381, %v1694, 0
        %v1716 = vsel %vm381, %v1695, 0
        %v1719 = vsel %vm381, %v1696, 0
        %v1722 = vsel %vm381, %v1697, 0
        %v1725 = vsel %vm381, %v1698, 0
        %v1728 = vsel %vm381, %v1699, 0
        %v1731 = vsel %vm381, %v1700, 0
        %v1734 = vsel %vm381, %v1701, 0
        %v1737 = vsel %vm381, %v1702, 0
        %v1740 = vsel %vm381, %v1703, 0
        %v1743 = vsel %vm381, %v1704, 0
        %v1746 = vsel %vm381, %v1705, 0
        %v1749 = vsel %vm381, %v1706, 0
        %v1752 = vsel %vm381, %v1707, 0
        %v1755 = vsel %vm381, %v1708, 0
        %v1758 = vsel %vm381, %v1709, 0
        %1760 = vmatprep.subr.mxu0 0.0
        %1761 = vmatpush1.msra.mxu0 %v1711
        %1762 = vmatprep.subr.mxu0 0.0
        %1763 = vmatpush1.msra.mxu0 0.0
        %1764 = vmatprep.subr.mxu0 0.0
        %1765 = vmatpush1.msra.mxu0 0.0
        %1766 = vmatprep.subr.mxu0 0.0
        %1767 = vmatpush1.msra.mxu0 0.0
        %1768 = vmatprep.subr.mxu0 0.0
        %1769 = vmatpush1.msra.mxu0 0.0
        %1770 = vmatprep.subr.mxu0 0.0
        %1771 = vmatpush1.msra.mxu0 0.0
        %1772 = vmatprep.subr.mxu0 0.0
        %1773 = vmatpush1.msra.mxu0 0.0
        %1774 = vmatprep.subr.mxu0 0.0
        %1775 = vmatpush1.msra.mxu0 0.0
        %1776 = vmatprep.subr.mxu0 0.0
        %1777 = vmatpush1.msra.mxu0 0.0
        %1778 = vmatprep.subr.mxu0 0.0
        %1779 = vmatpush1.msra.mxu0 0.0
        %1780 = vmatprep.subr.mxu0 0.0
        %1781 = vmatpush1.msra.mxu0 0.0
        %1782 = vmatprep.subr.mxu0 0.0
        %1783 = vmatpush1.msra.mxu0 0.0
        %1784 = vmatprep.subr.mxu0 0.0
        %1785 = vmatpush1.msra.mxu0 0.0
        %1786 = vmatprep.subr.mxu0 0.0
        %1787 = vmatpush1.msra.mxu0 0.0
        %1788 = vmatprep.subr.mxu0 0.0
        %1789 = vmatpush1.msra.mxu0 0.0
        %1790 = vmatprep.subr.mxu0 0.0
        %1791 = vmatpush1.msra.mxu0 0.0
        %1792 = vmatprep.subr.mxu0 0.0
        %1793 = vmatpush1.msra.mxu0 0.0
        %1794 = vmatprep.subr.mxu0 0.0
        %1795 = vmatpush1.msra.mxu0 0.0
        %1796 = vmatprep.subr.mxu0 0.0
        %1797 = vmatpush1.msra.mxu0 0.0
        %1798 = vmatprep.subr.mxu0 0.0
        %1799 = vmatpush1.msra.mxu0 0.0
        %1800 = vmatprep.subr.mxu0 0.0
        %1801 = vmatpush1.msra.mxu0 0.0
        %1802 = vmatprep.subr.mxu0 0.0
        %1803 = vmatpush1.msra.mxu0 0.0
        %1804 = vmatprep.subr.mxu0 0.0
        %1805 = vmatpush1.msra.mxu0 0.0
        %1806 = vmatprep.subr.mxu0 0.0
        %1807 = vmatpush1.msra.mxu0 0.0
        %1808 = vmatprep.subr.mxu0 0.0
        %1809 = vmatpush1.msra.mxu0 0.0
        %1810 = vmatprep.subr.mxu0 0.0
        %1811 = vmatpush1.msra.mxu0 0.0
        %1812 = vmatprep.subr.mxu0 0.0
        %1813 = vmatpush1.msra.mxu0 0.0
        %1814 = vmatprep.subr.mxu0 0.0
        %1815 = vmatpush1.msra.mxu0 0.0
        %1816 = vmatprep.subr.mxu0 0.0
        %1817 = vmatpush1.msra.mxu0 0.0
        %1818 = vmatprep.subr.mxu0 0.0
        %1819 = vmatpush1.msra.mxu0 0.0
        %1820 = vmatprep.subr.mxu0 0.0
        %1821 = vmatpush1.msra.mxu0 0.0
        %1822 = vmatprep.subr.mxu0 0.0
        %1823 = vmatpush1.msra.mxu0 0.0
        %1824 = vmatprep.mubr.f32.mxu0 0.0
        %1825 = vmatmul.mubr.f32.gmra.mrb[0].mxu0 %v1713
        %v1826 = vpop.f32.mrb[0].mxu0
        %v1827 = vadd.f32 0.0, %v1826
        %v1828 = vpop.f32.mrb[0].mxu0
        %1829 = vmatprep.mubr.f32.mxu0 0.0
        %1830 = vmatmul.mubr.f32.gmra.mrb[0].mxu0 %v1716
        %v1831 = vpop.f32.mrb[0].mxu0
        %v1832 = vadd.f32 0.0, %v1831
        %v1833 = vpop.f32.mrb[0].mxu0
        %1834 = vmatprep.mubr.f32.mxu0 0.0
        %1835 = vmatmul.mubr.f32.gmra.mrb[0].mxu0 %v1719
        %v1836 = vpop.f32.mrb[0].mxu0
        %v1837 = vadd.f32 0.0, %v1836
        %v1838 = vpop.f32.mrb[0].mxu0
        %1839 = vmatprep.mubr.f32.mxu0 0.0
        %1840 = vmatmul.mubr.f32.gmra.mrb[0].mxu0 %v1722
        %v1841 = vpop.f32.mrb[0].mxu0
        %v1842 = vadd.f32 0.0, %v1841
        %v1843 = vpop.f32.mrb[0].mxu0
        %1844 = vmatprep.mubr.f32.mxu0 0.0
        %1845 = vmatmul.mubr.f32.gmra.mrb[0].mxu0 %v1725
        %v1846 = vpop.f32.mrb[0].mxu0
        %v1847 = vadd.f32 0.0, %v1846
        %v1848 = vpop.f32.mrb[0].mxu0
        %1849 = vmatprep.mubr.f32.mxu0 0.0
        %1850 = vmatmul.mubr.f32.gmra.mrb[0].mxu0 %v1728
        %v1851 = vpop.f32.mrb[0].mxu0
        %v1852 = vadd.f32 0.0, %v1851
        %v1853 = vpop.f32.mrb[0].mxu0
        %1854 = vmatprep.mubr.f32.mxu0 0.0
        %1855 = vmatmul.mubr.f32.gmra.mrb[0].mxu0 %v1731
        %v1856 = vpop.f32.mrb[0].mxu0
        %v1857 = vadd.f32 0.0, %v1856
        %v1858 = vpop.f32.mrb[0].mxu0
        %1859 = vmatprep.mubr.f32.mxu0 0.0
        %1860 = vmatmul.mubr.f32.gmra.mrb[0].mxu0 %v1734
        %v1861 = vpop.f32.mrb[0].mxu0
        %v1862 = vadd.f32 0.0, %v1861
        %v1863 = vpop.f32.mrb[0].mxu0
        %1864 = vmatprep.mubr.f32.mxu0 0.0
        %1865 = vmatmul.mubr.f32.gmra.mrb[0].mxu0 %v1737
        %v1866 = vpop.f32.mrb[0].mxu0
        %v1867 = vadd.f32 0.0, %v1866
        %v1868 = vpop.f32.mrb[0].mxu0
        %1869 = vmatprep.mubr.f32.mxu0 0.0
        %1870 = vmatmul.mubr.f32.gmra.mrb[0].mxu0 %v1740
        %v1871 = vpop.f32.mrb[0].mxu0
        %v1872 = vadd.f32 0.0, %v1871
        %v1873 = vpop.f32.mrb[0].mxu0
        %1874 = vmatprep.mubr.f32.mxu0 0.0
        %1875 = vmatmul.mubr.f32.gmra.mrb[0].mxu0 %v1743
        %v1876 = vpop.f32.mrb[0].mxu0
        %v1877 = vadd.f32 0.0, %v1876
        %v1878 = vpop.f32.mrb[0].mxu0
        %1879 = vmatprep.mubr.f32.mxu0 0.0
        %1880 = vmatmul.mubr.f32.gmra.mrb[0].mxu0 %v1746
        %v1881 = vpop.f32.mrb[0].mxu0
        %v1882 = vadd.f32 0.0, %v1881
        %v1883 = vpop.f32.mrb[0].mxu0
        %1884 = vmatprep.mubr.f32.mxu0 0.0
        %1885 = vmatmul.mubr.f32.gmra.mrb[0].mxu0 %v1749
        %v1886 = vpop.f32.mrb[0].mxu0
        %v1887 = vadd.f32 0.0, %v1886
        %v1888 = vpop.f32.mrb[0].mxu0
        %1889 = vmatprep.mubr.f32.mxu0 0.0
        %1890 = vmatmul.mubr.f32.gmra.mrb[0].mxu0 %v1752
        %v1891 = vpop.f32.mrb[0].mxu0
        %v1892 = vadd.f32 0.0, %v1891
        %v1893 = vpop.f32.mrb[0].mxu0
        %1894 = vmatprep.mubr.f32.mxu0 0.0
        %1895 = vmatmul.mubr.f32.gmra.mrb[0].mxu0 %v1755
        %v1896 = vpop.f32.mrb[0].mxu0
        %v1897 = vadd.f32 0.0, %v1896
        %v1898 = vpop.f32.mrb[0].mxu0
        %1899 = vmatprep.mubr.f32.mxu0 0.0
        %1900 = vmatmul.mubr.f32.gmra.mrb[0].mxu0 %v1758
        %v1901 = vpop.f32.mrb[0].mxu0
        %v1902 = vadd.f32 0.0, %v1901
        %v1903 = vpop.f32.mrb[0].mxu0
        %1904 = vdwg.mxu0
        %v1905 = vadd.f32 %v1678, %v1827
        %v1906 = vadd.f32 %v1679, %v1832
        %v1907 = vadd.f32 %v1680, %v1837
        %v1908 = vadd.f32 %v1681, %v1842
        %v1909 = vadd.f32 %v1682, %v1847
        %v1910 = vadd.f32 %v1683, %v1852
        %v1911 = vadd.f32 %v1684, %v1857
        %v1912 = vadd.f32 %v1685, %v1862
        %v1913 = vadd.f32 %v1686, %v1867
        %v1914 = vadd.f32 %v1687, %v1872
        %v1915 = vadd.f32 %v1688, %v1877
        %v1916 = vadd.f32 %v1689, %v1882
        %v1917 = vadd.f32 %v1690, %v1887
        %v1918 = vadd.f32 %v1691, %v1892
        %v1919 = vadd.f32 %v1692, %v1897
        %v1920 = vadd.f32 %v1693, %v1902
        %s1921 = sadd.s32 %s360, 24
        %s1922 = smul.u32 %s1921, 56
        %s1923 = scalar_lea.vmem %s355, %s1922
        %v1924 = vld [vmem:[%s1923 + $0xc] sm:$0xff]
        %v1925 = vld [vmem:[%s1923 + $0x14] sm:$0xff]
        %v1926 = vld [vmem:[%s1923 + $0x44] sm:$0xff]
        %v1927 = vld [vmem:[%s1923 + $0x4c] sm:$0xff]
        %v1928 = vld [vmem:[%s1923 + $0x7c] sm:$0xff]
        %v1929 = vld [vmem:[%s1923 + $0x84] sm:$0xff]
        %v1930 = vld [vmem:[%s1923 + $0xb4] sm:$0xff]
        %v1931 = vld [vmem:[%s1923 + $0xbc] sm:$0xff]
        %v1932 = vld [vmem:[%s1923 + $0xec] sm:$0xff]
        %v1933 = vld [vmem:[%s1923 + $0xf4] sm:$0xff]
        %v1934 = vld [vmem:[%s1923 + $0x124] sm:$0xff]
        %v1935 = vld [vmem:[%s1923 + $0x12c] sm:$0xff]
        %v1936 = vld [vmem:[%s1923 + $0x15c] sm:$0xff]
        %v1937 = vld [vmem:[%s1923 + $0x164] sm:$0xff]
        %v1938 = vld [vmem:[%s1923 + $0x194] sm:$0xff]
        %v1939 = vld [vmem:[%s1923 + $0x19c] sm:$0xff]
        %s1940 = scalar_lea.vmem %s2, 48
        %v1941 = vld [vmem:[%s1940] sm:$0xff]
        %v1943 = vsel %vm381, %v1924, 0
        %v1946 = vsel %vm381, %v1925, 0
        %v1949 = vsel %vm381, %v1926, 0
        %v1952 = vsel %vm381, %v1927, 0
        %v1955 = vsel %vm381, %v1928, 0
        %v1958 = vsel %vm381, %v1929, 0
        %v1961 = vsel %vm381, %v1930, 0
        %v1964 = vsel %vm381, %v1931, 0
        %v1967 = vsel %vm381, %v1932, 0
        %v1970 = vsel %vm381, %v1933, 0
        %v1973 = vsel %vm381, %v1934, 0
        %v1976 = vsel %vm381, %v1935, 0
        %v1979 = vsel %vm381, %v1936, 0
        %v1982 = vsel %vm381, %v1937, 0
        %v1985 = vsel %vm381, %v1938, 0
        %v1988 = vsel %vm381, %v1939, 0
        %1990 = vmatprep.subr.mxu0 0.0
        %1991 = vmatpush1.msra.mxu0 %v1941
        %1992 = vmatprep.subr.mxu0 0.0
        %1993 = vmatpush1.msra.mxu0 0.0
        %1994 = vmatprep.subr.mxu0 0.0
        %1995 = vmatpush1.msra.mxu0 0.0
        %1996 = vmatprep.subr.mxu0 0.0
        %1997 = vmatpush1.msra.mxu0 0.0
        %1998 = vmatprep.subr.mxu0 0.0
        %1999 = vmatpush1.msra.mxu0 0.0
        %2000 = vmatprep.subr.mxu0 0.0
        %2001 = vmatpush1.msra.mxu0 0.0
        %2002 = vmatprep.subr.mxu0 0.0
        %2003 = vmatpush1.msra.mxu0 0.0
        %2004 = vmatprep.subr.mxu0 0.0
        %2005 = vmatpush1.msra.mxu0 0.0
        %2006 = vmatprep.subr.mxu0 0.0
        %2007 = vmatpush1.msra.mxu0 0.0
        %2008 = vmatprep.subr.mxu0 0.0
        %2009 = vmatpush1.msra.mxu0 0.0
        %2010 = vmatprep.subr.mxu0 0.0
        %2011 = vmatpush1.msra.mxu0 0.0
        %2012 = vmatprep.subr.mxu0 0.0
        %2013 = vmatpush1.msra.mxu0 0.0
        %2014 = vmatprep.subr.mxu0 0.0
        %2015 = vmatpush1.msra.mxu0 0.0
        %2016 = vmatprep.subr.mxu0 0.0
        %2017 = vmatpush1.msra.mxu0 0.0
        %2018 = vmatprep.subr.mxu0 0.0
        %2019 = vmatpush1.msra.mxu0 0.0
        %2020 = vmatprep.subr.mxu0 0.0
        %2021 = vmatpush1.msra.mxu0 0.0
        %2022 = vmatprep.subr.mxu0 0.0
        %2023 = vmatpush1.msra.mxu0 0.0
        %2024 = vmatprep.subr.mxu0 0.0
        %2025 = vmatpush1.msra.mxu0 0.0
        %2026 = vmatprep.subr.mxu0 0.0
        %2027 = vmatpush1.msra.mxu0 0.0
        %2028 = vmatprep.subr.mxu0 0.0
        %2029 = vmatpush1.msra.mxu0 0.0
        %2030 = vmatprep.subr.mxu0 0.0
        %2031 = vmatpush1.msra.mxu0 0.0
        %2032 = vmatprep.subr.mxu0 0.0
        %2033 = vmatpush1.msra.mxu0 0.0
        %2034 = vmatprep.subr.mxu0 0.0
        %2035 = vmatpush1.msra.mxu0 0.0
        %2036 = vmatprep.subr.mxu0 0.0
        %2037 = vmatpush1.msra.mxu0 0.0
        %2038 = vmatprep.subr.mxu0 0.0
        %2039 = vmatpush1.msra.mxu0 0.0
        %2040 = vmatprep.subr.mxu0 0.0
        %2041 = vmatpush1.msra.mxu0 0.0
        %2042 = vmatprep.subr.mxu0 0.0
        %2043 = vmatpush1.msra.mxu0 0.0
        %2044 = vmatprep.subr.mxu0 0.0
        %2045 = vmatpush1.msra.mxu0 0.0
        %2046 = vmatprep.subr.mxu0 0.0
        %2047 = vmatpush1.msra.mxu0 0.0
        %2048 = vmatprep.subr.mxu0 0.0
        %2049 = vmatpush1.msra.mxu0 0.0
        %2050 = vmatprep.subr.mxu0 0.0
        %2051 = vmatpush1.msra.mxu0 0.0
        %2052 = vmatprep.subr.mxu0 0.0
        %2053 = vmatpush1.msra.mxu0 0.0
        %2054 = vmatprep.mubr.f32.mxu0 0.0
        %2055 = vmatmul.mubr.f32.gmra.mrb[0].mxu0 %v1943
        %v2056 = vpop.f32.mrb[0].mxu0
        %v2057 = vadd.f32 0.0, %v2056
        %v2058 = vpop.f32.mrb[0].mxu0
        %2059 = vmatprep.mubr.f32.mxu0 0.0
        %2060 = vmatmul.mubr.f32.gmra.mrb[0].mxu0 %v1946
        %v2061 = vpop.f32.mrb[0].mxu0
        %v2062 = vadd.f32 0.0, %v2061
        %v2063 = vpop.f32.mrb[0].mxu0
        %2064 = vmatprep.mubr.f32.mxu0 0.0
        %2065 = vmatmul.mubr.f32.gmra.mrb[0].mxu0 %v1949
        %v2066 = vpop.f32.mrb[0].mxu0
        %v2067 = vadd.f32 0.0, %v2066
        %v2068 = vpop.f32.mrb[0].mxu0
        %2069 = vmatprep.mubr.f32.mxu0 0.0
        %2070 = vmatmul.mubr.f32.gmra.mrb[0].mxu0 %v1952
        %v2071 = vpop.f32.mrb[0].mxu0
        %v2072 = vadd.f32 0.0, %v2071
        %v2073 = vpop.f32.mrb[0].mxu0
        %2074 = vmatprep.mubr.f32.mxu0 0.0
        %2075 = vmatmul.mubr.f32.gmra.mrb[0].mxu0 %v1955
        %v2076 = vpop.f32.mrb[0].mxu0
        %v2077 = vadd.f32 0.0, %v2076
        %v2078 = vpop.f32.mrb[0].mxu0
        %2079 = vmatprep.mubr.f32.mxu0 0.0
        %2080 = vmatmul.mubr.f32.gmra.mrb[0].mxu0 %v1958
        %v2081 = vpop.f32.mrb[0].mxu0
        %v2082 = vadd.f32 0.0, %v2081
        %v2083 = vpop.f32.mrb[0].mxu0
        %2084 = vmatprep.mubr.f32.mxu0 0.0
        %2085 = vmatmul.mubr.f32.gmra.mrb[0].mxu0 %v1961
        %v2086 = vpop.f32.mrb[0].mxu0
        %v2087 = vadd.f32 0.0, %v2086
        %v2088 = vpop.f32.mrb[0].mxu0
        %2089 = vmatprep.mubr.f32.mxu0 0.0
        %2090 = vmatmul.mubr.f32.gmra.mrb[0].mxu0 %v1964
        %v2091 = vpop.f32.mrb[0].mxu0
        %v2092 = vadd.f32 0.0, %v2091
        %v2093 = vpop.f32.mrb[0].mxu0
        %2094 = vmatprep.mubr.f32.mxu0 0.0
        %2095 = vmatmul.mubr.f32.gmra.mrb[0].mxu0 %v1967
        %v2096 = vpop.f32.mrb[0].mxu0
        %v2097 = vadd.f32 0.0, %v2096
        %v2098 = vpop.f32.mrb[0].mxu0
        %2099 = vmatprep.mubr.f32.mxu0 0.0
        %2100 = vmatmul.mubr.f32.gmra.mrb[0].mxu0 %v1970
        %v2101 = vpop.f32.mrb[0].mxu0
        %v2102 = vadd.f32 0.0, %v2101
        %v2103 = vpop.f32.mrb[0].mxu0
        %2104 = vmatprep.mubr.f32.mxu0 0.0
        %2105 = vmatmul.mubr.f32.gmra.mrb[0].mxu0 %v1973
        %v2106 = vpop.f32.mrb[0].mxu0
        %v2107 = vadd.f32 0.0, %v2106
        %v2108 = vpop.f32.mrb[0].mxu0
        %2109 = vmatprep.mubr.f32.mxu0 0.0
        %2110 = vmatmul.mubr.f32.gmra.mrb[0].mxu0 %v1976
        %v2111 = vpop.f32.mrb[0].mxu0
        %v2112 = vadd.f32 0.0, %v2111
        %v2113 = vpop.f32.mrb[0].mxu0
        %2114 = vmatprep.mubr.f32.mxu0 0.0
        %2115 = vmatmul.mubr.f32.gmra.mrb[0].mxu0 %v1979
        %v2116 = vpop.f32.mrb[0].mxu0
        %v2117 = vadd.f32 0.0, %v2116
        %v2118 = vpop.f32.mrb[0].mxu0
        %2119 = vmatprep.mubr.f32.mxu0 0.0
        %2120 = vmatmul.mubr.f32.gmra.mrb[0].mxu0 %v1982
        %v2121 = vpop.f32.mrb[0].mxu0
        %v2122 = vadd.f32 0.0, %v2121
        %v2123 = vpop.f32.mrb[0].mxu0
        %2124 = vmatprep.mubr.f32.mxu0 0.0
        %2125 = vmatmul.mubr.f32.gmra.mrb[0].mxu0 %v1985
        %v2126 = vpop.f32.mrb[0].mxu0
        %v2127 = vadd.f32 0.0, %v2126
        %v2128 = vpop.f32.mrb[0].mxu0
        %2129 = vmatprep.mubr.f32.mxu0 0.0
        %2130 = vmatmul.mubr.f32.gmra.mrb[0].mxu0 %v1988
        %v2131 = vpop.f32.mrb[0].mxu0
        %v2132 = vadd.f32 0.0, %v2131
        %v2133 = vpop.f32.mrb[0].mxu0
        %2134 = vdwg.mxu0
        %v2135 = vadd.f32 %v1905, %v2057
        %v2136 = vadd.f32 %v1906, %v2062
        %v2137 = vadd.f32 %v1907, %v2067
        %v2138 = vadd.f32 %v1908, %v2072
        %v2139 = vadd.f32 %v1909, %v2077
        %v2140 = vadd.f32 %v1910, %v2082
        %v2141 = vadd.f32 %v1911, %v2087
        %v2142 = vadd.f32 %v1912, %v2092
        %v2143 = vadd.f32 %v1913, %v2097
        %v2144 = vadd.f32 %v1914, %v2102
        %v2145 = vadd.f32 %v1915, %v2107
        %v2146 = vadd.f32 %v1916, %v2112
        %v2147 = vadd.f32 %v1917, %v2117
        %v2148 = vadd.f32 %v1918, %v2122
        %v2149 = vadd.f32 %v1919, %v2127
        %v2150 = vadd.f32 %v1920, %v2132
        %v2151 = vld [vmem:[%s1923 + $0x12] sm:$0xff]
        %v2152 = vld [vmem:[%s1923 + $0x1a] sm:$0xff]
        %v2153 = vld [vmem:[%s1923 + $0x4a] sm:$0xff]
        %v2154 = vld [vmem:[%s1923 + $0x52] sm:$0xff]
        %v2155 = vld [vmem:[%s1923 + $0x82] sm:$0xff]
        %v2156 = vld [vmem:[%s1923 + $0x8a] sm:$0xff]
        %v2157 = vld [vmem:[%s1923 + $0xba] sm:$0xff]
        %v2158 = vld [vmem:[%s1923 + $0xc2] sm:$0xff]
        %v2159 = vld [vmem:[%s1923 + $0xf2] sm:$0xff]
        %v2160 = vld [vmem:[%s1923 + $0xfa] sm:$0xff]
        %v2161 = vld [vmem:[%s1923 + $0x12a] sm:$0xff]
        %v2162 = vld [vmem:[%s1923 + $0x132] sm:$0xff]
        %v2163 = vld [vmem:[%s1923 + $0x162] sm:$0xff]
        %v2164 = vld [vmem:[%s1923 + $0x16a] sm:$0xff]
        %v2165 = vld [vmem:[%s1923 + $0x19a] sm:$0xff]
        %v2166 = vld [vmem:[%s1923 + $0x1a2] sm:$0xff]
        %s2167 = scalar_lea.vmem %s2, 56
        %v2168 = vld [vmem:[%s2167] sm:$0xff]
        %v2170 = vsel %vm381, %v2151, 0
        %v2173 = vsel %vm381, %v2152, 0
        %v2176 = vsel %vm381, %v2153, 0
        %v2179 = vsel %vm381, %v2154, 0
        %v2182 = vsel %vm381, %v2155, 0
        %v2185 = vsel %vm381, %v2156, 0
        %v2188 = vsel %vm381, %v2157, 0
        %v2191 = vsel %vm381, %v2158, 0
        %v2194 = vsel %vm381, %v2159, 0
        %v2197 = vsel %vm381, %v2160, 0
        %v2200 = vsel %vm381, %v2161, 0
        %v2203 = vsel %vm381, %v2162, 0
        %v2206 = vsel %vm381, %v2163, 0
        %v2209 = vsel %vm381, %v2164, 0
        %v2212 = vsel %vm381, %v2165, 0
        %v2215 = vsel %vm381, %v2166, 0
        %2217 = vmatprep.subr.mxu0 0.0
        %2218 = vmatpush1.msra.mxu0 %v2168
        %2219 = vmatprep.subr.mxu0 0.0
        %2220 = vmatpush1.msra.mxu0 0.0
        %2221 = vmatprep.subr.mxu0 0.0
        %2222 = vmatpush1.msra.mxu0 0.0
        %2223 = vmatprep.subr.mxu0 0.0
        %2224 = vmatpush1.msra.mxu0 0.0
        %2225 = vmatprep.subr.mxu0 0.0
        %2226 = vmatpush1.msra.mxu0 0.0
        %2227 = vmatprep.subr.mxu0 0.0
        %2228 = vmatpush1.msra.mxu0 0.0
        %2229 = vmatprep.subr.mxu0 0.0
        %2230 = vmatpush1.msra.mxu0 0.0
        %2231 = vmatprep.subr.mxu0 0.0
        %2232 = vmatpush1.msra.mxu0 0.0
        %2233 = vmatprep.subr.mxu0 0.0
        %2234 = vmatpush1.msra.mxu0 0.0
        %2235 = vmatprep.subr.mxu0 0.0
        %2236 = vmatpush1.msra.mxu0 0.0
        %2237 = vmatprep.subr.mxu0 0.0
        %2238 = vmatpush1.msra.mxu0 0.0
        %2239 = vmatprep.subr.mxu0 0.0
        %2240 = vmatpush1.msra.mxu0 0.0
        %2241 = vmatprep.subr.mxu0 0.0
        %2242 = vmatpush1.msra.mxu0 0.0
        %2243 = vmatprep.subr.mxu0 0.0
        %2244 = vmatpush1.msra.mxu0 0.0
        %2245 = vmatprep.subr.mxu0 0.0
        %2246 = vmatpush1.msra.mxu0 0.0
        %2247 = vmatprep.subr.mxu0 0.0
        %2248 = vmatpush1.msra.mxu0 0.0
        %2249 = vmatprep.subr.mxu0 0.0
        %2250 = vmatpush1.msra.mxu0 0.0
        %2251 = vmatprep.subr.mxu0 0.0
        %2252 = vmatpush1.msra.mxu0 0.0
        %2253 = vmatprep.subr.mxu0 0.0
        %2254 = vmatpush1.msra.mxu0 0.0
        %2255 = vmatprep.subr.mxu0 0.0
        %2256 = vmatpush1.msra.mxu0 0.0
        %2257 = vmatprep.subr.mxu0 0.0
        %2258 = vmatpush1.msra.mxu0 0.0
        %2259 = vmatprep.subr.mxu0 0.0
        %2260 = vmatpush1.msra.mxu0 0.0
        %2261 = vmatprep.subr.mxu0 0.0
        %2262 = vmatpush1.msra.mxu0 0.0
        %2263 = vmatprep.subr.mxu0 0.0
        %2264 = vmatpush1.msra.mxu0 0.0
        %2265 = vmatprep.subr.mxu0 0.0
        %2266 = vmatpush1.msra.mxu0 0.0
        %2267 = vmatprep.subr.mxu0 0.0
        %2268 = vmatpush1.msra.mxu0 0.0
        %2269 = vmatprep.subr.mxu0 0.0
        %2270 = vmatpush1.msra.mxu0 0.0
        %2271 = vmatprep.subr.mxu0 0.0
        %2272 = vmatpush1.msra.mxu0 0.0
        %2273 = vmatprep.subr.mxu0 0.0
        %2274 = vmatpush1.msra.mxu0 0.0
        %2275 = vmatprep.subr.mxu0 0.0
        %2276 = vmatpush1.msra.mxu0 0.0
        %2277 = vmatprep.subr.mxu0 0.0
        %2278 = vmatpush1.msra.mxu0 0.0
        %2279 = vmatprep.subr.mxu0 0.0
        %2280 = vmatpush1.msra.mxu0 0.0
        %2281 = vmatprep.mubr.f32.mxu0 0.0
        %2282 = vmatmul.mubr.f32.gmra.mrb[0].mxu0 %v2170
        %v2283 = vpop.f32.mrb[0].mxu0
        %v2284 = vadd.f32 0.0, %v2283
        %v2285 = vpop.f32.mrb[0].mxu0
        %2286 = vmatprep.mubr.f32.mxu0 0.0
        %2287 = vmatmul.mubr.f32.gmra.mrb[0].mxu0 %v2173
        %v2288 = vpop.f32.mrb[0].mxu0
        %v2289 = vadd.f32 0.0, %v2288
        %v2290 = vpop.f32.mrb[0].mxu0
        %2291 = vmatprep.mubr.f32.mxu0 0.0
        %2292 = vmatmul.mubr.f32.gmra.mrb[0].mxu0 %v2176
        %v2293 = vpop.f32.mrb[0].mxu0
        %v2294 = vadd.f32 0.0, %v2293
        %v2295 = vpop.f32.mrb[0].mxu0
        %2296 = vmatprep.mubr.f32.mxu0 0.0
        %2297 = vmatmul.mubr.f32.gmra.mrb[0].mxu0 %v2179
        %v2298 = vpop.f32.mrb[0].mxu0
        %v2299 = vadd.f32 0.0, %v2298
        %v2300 = vpop.f32.mrb[0].mxu0
        %2301 = vmatprep.mubr.f32.mxu0 0.0
        %2302 = vmatmul.mubr.f32.gmra.mrb[0].mxu0 %v2182
        %v2303 = vpop.f32.mrb[0].mxu0
        %v2304 = vadd.f32 0.0, %v2303
        %v2305 = vpop.f32.mrb[0].mxu0
        %2306 = vmatprep.mubr.f32.mxu0 0.0
        %2307 = vmatmul.mubr.f32.gmra.mrb[0].mxu0 %v2185
        %v2308 = vpop.f32.mrb[0].mxu0
        %v2309 = vadd.f32 0.0, %v2308
        %v2310 = vpop.f32.mrb[0].mxu0
        %2311 = vmatprep.mubr.f32.mxu0 0.0
        %2312 = vmatmul.mubr.f32.gmra.mrb[0].mxu0 %v2188
        %v2313 = vpop.f32.mrb[0].mxu0
        %v2314 = vadd.f32 0.0, %v2313
        %v2315 = vpop.f32.mrb[0].mxu0
        %2316 = vmatprep.mubr.f32.mxu0 0.0
        %2317 = vmatmul.mubr.f32.gmra.mrb[0].mxu0 %v2191
        %v2318 = vpop.f32.mrb[0].mxu0
        %v2319 = vadd.f32 0.0, %v2318
        %v2320 = vpop.f32.mrb[0].mxu0
        %2321 = vmatprep.mubr.f32.mxu0 0.0
        %2322 = vmatmul.mubr.f32.gmra.mrb[0].mxu0 %v2194
        %v2323 = vpop.f32.mrb[0].mxu0
        %v2324 = vadd.f32 0.0, %v2323
        %v2325 = vpop.f32.mrb[0].mxu0
        %2326 = vmatprep.mubr.f32.mxu0 0.0
        %2327 = vmatmul.mubr.f32.gmra.mrb[0].mxu0 %v2197
        %v2328 = vpop.f32.mrb[0].mxu0
        %v2329 = vadd.f32 0.0, %v2328
        %v2330 = vpop.f32.mrb[0].mxu0
        %2331 = vmatprep.mubr.f32.mxu0 0.0
        %2332 = vmatmul.mubr.f32.gmra.mrb[0].mxu0 %v2200
        %v2333 = vpop.f32.mrb[0].mxu0
        %v2334 = vadd.f32 0.0, %v2333
        %v2335 = vpop.f32.mrb[0].mxu0
        %2336 = vmatprep.mubr.f32.mxu0 0.0
        %2337 = vmatmul.mubr.f32.gmra.mrb[0].mxu0 %v2203
        %v2338 = vpop.f32.mrb[0].mxu0
        %v2339 = vadd.f32 0.0, %v2338
        %v2340 = vpop.f32.mrb[0].mxu0
        %2341 = vmatprep.mubr.f32.mxu0 0.0
        %2342 = vmatmul.mubr.f32.gmra.mrb[0].mxu0 %v2206
        %v2343 = vpop.f32.mrb[0].mxu0
        %v2344 = vadd.f32 0.0, %v2343
        %v2345 = vpop.f32.mrb[0].mxu0
        %2346 = vmatprep.mubr.f32.mxu0 0.0
        %2347 = vmatmul.mubr.f32.gmra.mrb[0].mxu0 %v2209
        %v2348 = vpop.f32.mrb[0].mxu0
        %v2349 = vadd.f32 0.0, %v2348
        %v2350 = vpop.f32.mrb[0].mxu0
        %2351 = vmatprep.mubr.f32.mxu0 0.0
        %2352 = vmatmul.mubr.f32.gmra.mrb[0].mxu0 %v2212
        %v2353 = vpop.f32.mrb[0].mxu0
        %v2354 = vadd.f32 0.0, %v2353
        %v2355 = vpop.f32.mrb[0].mxu0
        %2356 = vmatprep.mubr.f32.mxu0 0.0
        %2357 = vmatmul.mubr.f32.gmra.mrb[0].mxu0 %v2215
        %v2358 = vpop.f32.mrb[0].mxu0
        %v2359 = vadd.f32 0.0, %v2358
        %v2360 = vpop.f32.mrb[0].mxu0
        %2361 = vdwg.mxu0
        %v2362 = vadd.f32 %v2135, %v2284
        %v2363 = vadd.f32 %v2136, %v2289
        %v2364 = vadd.f32 %v2137, %v2294
        %v2365 = vadd.f32 %v2138, %v2299
        %v2366 = vadd.f32 %v2139, %v2304
        %v2367 = vadd.f32 %v2140, %v2309
        %v2368 = vadd.f32 %v2141, %v2314
        %v2369 = vadd.f32 %v2142, %v2319
        %v2370 = vadd.f32 %v2143, %v2324
        %v2371 = vadd.f32 %v2144, %v2329
        %v2372 = vadd.f32 %v2145, %v2334
        %v2373 = vadd.f32 %v2146, %v2339
        %v2374 = vadd.f32 %v2147, %v2344
        %v2375 = vadd.f32 %v2148, %v2349
        %v2376 = vadd.f32 %v2149, %v2354
        %v2377 = vadd.f32 %v2150, %v2359
        %v2378 = vld [vmem:[%s1923 + $0x18] sm:$0xff]
        %v2379 = vld [vmem:[%s1923 + $0x20] sm:$0xff]
        %v2380 = vld [vmem:[%s1923 + $0x50] sm:$0xff]
        %v2381 = vld [vmem:[%s1923 + $0x58] sm:$0xff]
        %v2382 = vld [vmem:[%s1923 + $0x88] sm:$0xff]
        %v2383 = vld [vmem:[%s1923 + $0x90] sm:$0xff]
        %v2384 = vld [vmem:[%s1923 + $0xc0] sm:$0xff]
        %v2385 = vld [vmem:[%s1923 + $0xc8] sm:$0xff]
        %v2386 = vld [vmem:[%s1923 + $0xf8] sm:$0xff]
        %v2387 = vld [vmem:[%s1923 + $0x100] sm:$0xff]
        %v2388 = vld [vmem:[%s1923 + $0x130] sm:$0xff]
        %v2389 = vld [vmem:[%s1923 + $0x138] sm:$0xff]
        %v2390 = vld [vmem:[%s1923 + $0x168] sm:$0xff]
        %v2391 = vld [vmem:[%s1923 + $0x170] sm:$0xff]
        %v2392 = vld [vmem:[%s1923 + $0x1a0] sm:$0xff]
        %v2393 = vld [vmem:[%s1923 + $0x1a8] sm:$0xff]
        %s2394 = scalar_lea.vmem %s2, 64
        %v2395 = vld [vmem:[%s2394] sm:$0xff]
        %v2397 = vsel %vm381, %v2378, 0
        %v2400 = vsel %vm381, %v2379, 0
        %v2403 = vsel %vm381, %v2380, 0
        %v2406 = vsel %vm381, %v2381, 0
        %v2409 = vsel %vm381, %v2382, 0
        %v2412 = vsel %vm381, %v2383, 0
        %v2415 = vsel %vm381, %v2384, 0
        %v2418 = vsel %vm381, %v2385, 0
        %v2421 = vsel %vm381, %v2386, 0
        %v2424 = vsel %vm381, %v2387, 0
        %v2427 = vsel %vm381, %v2388, 0
        %v2430 = vsel %vm381, %v2389, 0
        %v2433 = vsel %vm381, %v2390, 0
        %v2436 = vsel %vm381, %v2391, 0
        %v2439 = vsel %vm381, %v2392, 0
        %v2442 = vsel %vm381, %v2393, 0
        %2444 = vmatprep.subr.mxu0 0.0
        %2445 = vmatpush1.msra.mxu0 %v2395
        %2446 = vmatprep.subr.mxu0 0.0
        %2447 = vmatpush1.msra.mxu0 0.0
        %2448 = vmatprep.subr.mxu0 0.0
        %2449 = vmatpush1.msra.mxu0 0.0
        %2450 = vmatprep.subr.mxu0 0.0
        %2451 = vmatpush1.msra.mxu0 0.0
        %2452 = vmatprep.subr.mxu0 0.0
        %2453 = vmatpush1.msra.mxu0 0.0
        %2454 = vmatprep.subr.mxu0 0.0
        %2455 = vmatpush1.msra.mxu0 0.0
        %2456 = vmatprep.subr.mxu0 0.0
        %2457 = vmatpush1.msra.mxu0 0.0
        %2458 = vmatprep.subr.mxu0 0.0
        %2459 = vmatpush1.msra.mxu0 0.0
        %2460 = vmatprep.subr.mxu0 0.0
        %2461 = vmatpush1.msra.mxu0 0.0
        %2462 = vmatprep.subr.mxu0 0.0
        %2463 = vmatpush1.msra.mxu0 0.0
        %2464 = vmatprep.subr.mxu0 0.0
        %2465 = vmatpush1.msra.mxu0 0.0
        %2466 = vmatprep.subr.mxu0 0.0
        %2467 = vmatpush1.msra.mxu0 0.0
        %2468 = vmatprep.subr.mxu0 0.0
        %2469 = vmatpush1.msra.mxu0 0.0
        %2470 = vmatprep.subr.mxu0 0.0
        %2471 = vmatpush1.msra.mxu0 0.0
        %2472 = vmatprep.subr.mxu0 0.0
        %2473 = vmatpush1.msra.mxu0 0.0
        %2474 = vmatprep.subr.mxu0 0.0
        %2475 = vmatpush1.msra.mxu0 0.0
        %2476 = vmatprep.subr.mxu0 0.0
        %2477 = vmatpush1.msra.mxu0 0.0
        %2478 = vmatprep.subr.mxu0 0.0
        %2479 = vmatpush1.msra.mxu0 0.0
        %2480 = vmatprep.subr.mxu0 0.0
        %2481 = vmatpush1.msra.mxu0 0.0
        %2482 = vmatprep.subr.mxu0 0.0
        %2483 = vmatpush1.msra.mxu0 0.0
        %2484 = vmatprep.subr.mxu0 0.0
        %2485 = vmatpush1.msra.mxu0 0.0
        %2486 = vmatprep.subr.mxu0 0.0
        %2487 = vmatpush1.msra.mxu0 0.0
        %2488 = vmatprep.subr.mxu0 0.0
        %2489 = vmatpush1.msra.mxu0 0.0
        %2490 = vmatprep.subr.mxu0 0.0
        %2491 = vmatpush1.msra.mxu0 0.0
        %2492 = vmatprep.subr.mxu0 0.0
        %2493 = vmatpush1.msra.mxu0 0.0
        %2494 = vmatprep.subr.mxu0 0.0
        %2495 = vmatpush1.msra.mxu0 0.0
        %2496 = vmatprep.subr.mxu0 0.0
        %2497 = vmatpush1.msra.mxu0 0.0
        %2498 = vmatprep.subr.mxu0 0.0
        %2499 = vmatpush1.msra.mxu0 0.0
        %2500 = vmatprep.subr.mxu0 0.0
        %2501 = vmatpush1.msra.mxu0 0.0
        %2502 = vmatprep.subr.mxu0 0.0
        %2503 = vmatpush1.msra.mxu0 0.0
        %2504 = vmatprep.subr.mxu0 0.0
        %2505 = vmatpush1.msra.mxu0 0.0
        %2506 = vmatprep.subr.mxu0 0.0
        %2507 = vmatpush1.msra.mxu0 0.0
        %2508 = vmatprep.mubr.f32.mxu0 0.0
        %2509 = vmatmul.mubr.f32.gmra.mrb[0].mxu0 %v2397
        %v2510 = vpop.f32.mrb[0].mxu0
        %v2511 = vadd.f32 0.0, %v2510
        %v2512 = vpop.f32.mrb[0].mxu0
        %2513 = vmatprep.mubr.f32.mxu0 0.0
        %2514 = vmatmul.mubr.f32.gmra.mrb[0].mxu0 %v2400
        %v2515 = vpop.f32.mrb[0].mxu0
        %v2516 = vadd.f32 0.0, %v2515
        %v2517 = vpop.f32.mrb[0].mxu0
        %2518 = vmatprep.mubr.f32.mxu0 0.0
        %2519 = vmatmul.mubr.f32.gmra.mrb[0].mxu0 %v2403
        %v2520 = vpop.f32.mrb[0].mxu0
        %v2521 = vadd.f32 0.0, %v2520
        %v2522 = vpop.f32.mrb[0].mxu0
        %2523 = vmatprep.mubr.f32.mxu0 0.0
        %2524 = vmatmul.mubr.f32.gmra.mrb[0].mxu0 %v2406
        %v2525 = vpop.f32.mrb[0].mxu0
        %v2526 = vadd.f32 0.0, %v2525
        %v2527 = vpop.f32.mrb[0].mxu0
        %2528 = vmatprep.mubr.f32.mxu0 0.0
        %2529 = vmatmul.mubr.f32.gmra.mrb[0].mxu0 %v2409
        %v2530 = vpop.f32.mrb[0].mxu0
        %v2531 = vadd.f32 0.0, %v2530
        %v2532 = vpop.f32.mrb[0].mxu0
        %2533 = vmatprep.mubr.f32.mxu0 0.0
        %2534 = vmatmul.mubr.f32.gmra.mrb[0].mxu0 %v2412
        %v2535 = vpop.f32.mrb[0].mxu0
        %v2536 = vadd.f32 0.0, %v2535
        %v2537 = vpop.f32.mrb[0].mxu0
        %2538 = vmatprep.mubr.f32.mxu0 0.0
        %2539 = vmatmul.mubr.f32.gmra.mrb[0].mxu0 %v2415
        %v2540 = vpop.f32.mrb[0].mxu0
        %v2541 = vadd.f32 0.0, %v2540
        %v2542 = vpop.f32.mrb[0].mxu0
        %2543 = vmatprep.mubr.f32.mxu0 0.0
        %2544 = vmatmul.mubr.f32.gmra.mrb[0].mxu0 %v2418
        %v2545 = vpop.f32.mrb[0].mxu0
        %v2546 = vadd.f32 0.0, %v2545
        %v2547 = vpop.f32.mrb[0].mxu0
        %2548 = vmatprep.mubr.f32.mxu0 0.0
        %2549 = vmatmul.mubr.f32.gmra.mrb[0].mxu0 %v2421
        %v2550 = vpop.f32.mrb[0].mxu0
        %v2551 = vadd.f32 0.0, %v2550
        %v2552 = vpop.f32.mrb[0].mxu0
        %2553 = vmatprep.mubr.f32.mxu0 0.0
        %2554 = vmatmul.mubr.f32.gmra.mrb[0].mxu0 %v2424
        %v2555 = vpop.f32.mrb[0].mxu0
        %v2556 = vadd.f32 0.0, %v2555
        %v2557 = vpop.f32.mrb[0].mxu0
        %2558 = vmatprep.mubr.f32.mxu0 0.0
        %2559 = vmatmul.mubr.f32.gmra.mrb[0].mxu0 %v2427
        %v2560 = vpop.f32.mrb[0].mxu0
        %v2561 = vadd.f32 0.0, %v2560
        %v2562 = vpop.f32.mrb[0].mxu0
        %2563 = vmatprep.mubr.f32.mxu0 0.0
        %2564 = vmatmul.mubr.f32.gmra.mrb[0].mxu0 %v2430
        %v2565 = vpop.f32.mrb[0].mxu0
        %v2566 = vadd.f32 0.0, %v2565
        %v2567 = vpop.f32.mrb[0].mxu0
        %2568 = vmatprep.mubr.f32.mxu0 0.0
        %2569 = vmatmul.mubr.f32.gmra.mrb[0].mxu0 %v2433
        %v2570 = vpop.f32.mrb[0].mxu0
        %v2571 = vadd.f32 0.0, %v2570
        %v2572 = vpop.f32.mrb[0].mxu0
        %2573 = vmatprep.mubr.f32.mxu0 0.0
        %2574 = vmatmul.mubr.f32.gmra.mrb[0].mxu0 %v2436
        %v2575 = vpop.f32.mrb[0].mxu0
        %v2576 = vadd.f32 0.0, %v2575
        %v2577 = vpop.f32.mrb[0].mxu0
        %2578 = vmatprep.mubr.f32.mxu0 0.0
        %2579 = vmatmul.mubr.f32.gmra.mrb[0].mxu0 %v2439
        %v2580 = vpop.f32.mrb[0].mxu0
        %v2581 = vadd.f32 0.0, %v2580
        %v2582 = vpop.f32.mrb[0].mxu0
        %2583 = vmatprep.mubr.f32.mxu0 0.0
        %2584 = vmatmul.mubr.f32.gmra.mrb[0].mxu0 %v2442
        %v2585 = vpop.f32.mrb[0].mxu0
        %v2586 = vadd.f32 0.0, %v2585
        %v2587 = vpop.f32.mrb[0].mxu0
        %2588 = vdwg.mxu0
        %v2589 = vadd.f32 %v2362, %v2511
        %v2590 = vadd.f32 %v2363, %v2516
        %v2591 = vadd.f32 %v2364, %v2521
        %v2592 = vadd.f32 %v2365, %v2526
        %v2593 = vadd.f32 %v2366, %v2531
        %v2594 = vadd.f32 %v2367, %v2536
        %v2595 = vadd.f32 %v2368, %v2541
        %v2596 = vadd.f32 %v2369, %v2546
        %v2597 = vadd.f32 %v2370, %v2551
        %v2598 = vadd.f32 %v2371, %v2556
        %v2599 = vadd.f32 %v2372, %v2561
        %v2600 = vadd.f32 %v2373, %v2566
        %v2601 = vadd.f32 %v2374, %v2571
        %v2602 = vadd.f32 %v2375, %v2576
        %v2603 = vadd.f32 %v2376, %v2581
        %v2604 = vadd.f32 %v2377, %v2586
        %s2605 = scalar_lea.vmem %s4, 1
        %v2606 = vld [vmem:[%s2605] sm:$0x1]
        %v2608 = vlaneseq
        %v2609 = vshrl.u32 %v2608, 7
        %v2610 = vsub.s32 0, %v2609
        %v2611 = vrot.slane %v2606, %v2610
        %v2613 = vmul.f32 %v2589, %v2611
        %v2614 = vmul.f32 %v2590, %v2611
        %v2615 = vmul.f32 %v2591, %v2611
        %v2616 = vmul.f32 %v2592, %v2611
        %v2617 = vmul.f32 %v2593, %v2611
        %v2618 = vmul.f32 %v2594, %v2611
        %v2619 = vmul.f32 %v2595, %v2611
        %v2620 = vmul.f32 %v2596, %v2611
        %v2621 = vmul.f32 %v2597, %v2611
        %v2622 = vmul.f32 %v2598, %v2611
        %v2623 = vmul.f32 %v2599, %v2611
        %v2624 = vmul.f32 %v2600, %v2611
        %v2625 = vmul.f32 %v2601, %v2611
        %v2626 = vmul.f32 %v2602, %v2611
        %v2627 = vmul.f32 %v2603, %v2611
        %v2628 = vmul.f32 %v2604, %v2611
        %s2629 = scalar_lea.vmem %s5, 1
        %v2630 = vld [vmem:[%s2629] sm:$0x1]
        %v2632 = vlaneseq
        %v2633 = vshrl.u32 %v2632, 7
        %v2634 = vsub.s32 0, %v2633
        %v2635 = vrot.slane %v2630, %v2634
        %v2637 = vadd.f32 %v2613, %v2635
        %v2638 = vadd.f32 %v2614, %v2635
        %v2639 = vadd.f32 %v2615, %v2635
        %v2640 = vadd.f32 %v2616, %v2635
        %v2641 = vadd.f32 %v2617, %v2635
        %v2642 = vadd.f32 %v2618, %v2635
        %v2643 = vadd.f32 %v2619, %v2635
        %v2644 = vadd.f32 %v2620, %v2635
        %v2645 = vadd.f32 %v2621, %v2635
        %v2646 = vadd.f32 %v2622, %v2635
        %v2647 = vadd.f32 %v2623, %v2635
        %v2648 = vadd.f32 %v2624, %v2635
        %v2649 = vadd.f32 %v2625, %v2635
        %v2650 = vadd.f32 %v2626, %v2635
        %v2651 = vadd.f32 %v2627, %v2635
        %v2652 = vadd.f32 %v2628, %v2635
        %v2653 = vmax.f32 %v2637, 0.0
        %v2654 = vmax.f32 %v2638, 0.0
        %v2655 = vmax.f32 %v2639, 0.0
        %v2656 = vmax.f32 %v2640, 0.0
        %v2657 = vmax.f32 %v2641, 0.0
        %v2658 = vmax.f32 %v2642, 0.0
        %v2659 = vmax.f32 %v2643, 0.0
        %v2660 = vmax.f32 %v2644, 0.0
        %v2661 = vmax.f32 %v2645, 0.0
        %v2662 = vmax.f32 %v2646, 0.0
        %v2663 = vmax.f32 %v2647, 0.0
        %v2664 = vmax.f32 %v2648, 0.0
        %v2665 = vmax.f32 %v2649, 0.0
        %v2666 = vmax.f32 %v2650, 0.0
        %v2667 = vmax.f32 %v2651, 0.0
        %v2668 = vmax.f32 %v2652, 0.0
        %s2669 = scalar_lea.vmem %s3, 128
        %v2670 = vld [vmem:[%s2669] sm:$0xff]
        %v2671 = vld [vmem:[%s2669 + $0x8] sm:$0xff]
        %v2672 = vld [vmem:[%s2669 + $0x10] sm:$0xff]
        %v2673 = vld [vmem:[%s2669 + $0x18] sm:$0xff]
        %v2674 = vld [vmem:[%s2669 + $0x20] sm:$0xff]
        %v2675 = vld [vmem:[%s2669 + $0x28] sm:$0xff]
        %v2676 = vld [vmem:[%s2669 + $0x30] sm:$0xff]
        %v2677 = vld [vmem:[%s2669 + $0x38] sm:$0xff]
        %v2678 = vld [vmem:[%s2669 + $0x40] sm:$0xff]
        %v2679 = vld [vmem:[%s2669 + $0x48] sm:$0xff]
        %v2680 = vld [vmem:[%s2669 + $0x50] sm:$0xff]
        %v2681 = vld [vmem:[%s2669 + $0x58] sm:$0xff]
        %v2682 = vld [vmem:[%s2669 + $0x60] sm:$0xff]
        %v2683 = vld [vmem:[%s2669 + $0x68] sm:$0xff]
        %v2684 = vld [vmem:[%s2669 + $0x70] sm:$0xff]
        %v2685 = vld [vmem:[%s2669 + $0x78] sm:$0xff]
        %2686 = vmatprep.subr.mxu0 0.0
        %2687 = vmatpush1.msra.mxu0 %v2670
        %2688 = vmatprep.subr.mxu0 0.0
        %2689 = vmatpush1.msra.mxu0 %v2671
        %2690 = vmatprep.subr.mxu0 0.0
        %2691 = vmatpush1.msra.mxu0 %v2672
        %2692 = vmatprep.subr.mxu0 0.0
        %2693 = vmatpush1.msra.mxu0 %v2673
        %2694 = vmatprep.subr.mxu0 0.0
        %2695 = vmatpush1.msra.mxu0 %v2674
        %2696 = vmatprep.subr.mxu0 0.0
        %2697 = vmatpush1.msra.mxu0 %v2675
        %2698 = vmatprep.subr.mxu0 0.0
        %2699 = vmatpush1.msra.mxu0 %v2676
        %2700 = vmatprep.subr.mxu0 0.0
        %2701 = vmatpush1.msra.mxu0 %v2677
        %2702 = vmatprep.subr.mxu0 0.0
        %2703 = vmatpush1.msra.mxu0 %v2678
        %2704 = vmatprep.subr.mxu0 0.0
        %2705 = vmatpush1.msra.mxu0 %v2679
        %2706 = vmatprep.subr.mxu0 0.0
        %2707 = vmatpush1.msra.mxu0 %v2680
        %2708 = vmatprep.subr.mxu0 0.0
        %2709 = vmatpush1.msra.mxu0 %v2681
        %2710 = vmatprep.subr.mxu0 0.0
        %2711 = vmatpush1.msra.mxu0 %v2682
        %2712 = vmatprep.subr.mxu0 0.0
        %2713 = vmatpush1.msra.mxu0 %v2683
        %2714 = vmatprep.subr.mxu0 0.0
        %2715 = vmatpush1.msra.mxu0 %v2684
        %2716 = vmatprep.subr.mxu0 0.0
        %2717 = vmatpush1.msra.mxu0 %v2685
        %2718 = vmatprep.subr.mxu0 0.0
        %2719 = vmatpush1.msra.mxu0 0.0
        %2720 = vmatprep.subr.mxu0 0.0
        %2721 = vmatpush1.msra.mxu0 0.0
        %2722 = vmatprep.subr.mxu0 0.0
        %2723 = vmatpush1.msra.mxu0 0.0
        %2724 = vmatprep.subr.mxu0 0.0
        %2725 = vmatpush1.msra.mxu0 0.0
        %2726 = vmatprep.subr.mxu0 0.0
        %2727 = vmatpush1.msra.mxu0 0.0
        %2728 = vmatprep.subr.mxu0 0.0
        %2729 = vmatpush1.msra.mxu0 0.0
        %2730 = vmatprep.subr.mxu0 0.0
        %2731 = vmatpush1.msra.mxu0 0.0
        %2732 = vmatprep.subr.mxu0 0.0
        %2733 = vmatpush1.msra.mxu0 0.0
        %2734 = vmatprep.subr.mxu0 0.0
        %2735 = vmatpush1.msra.mxu0 0.0
        %2736 = vmatprep.subr.mxu0 0.0
        %2737 = vmatpush1.msra.mxu0 0.0
        %2738 = vmatprep.subr.mxu0 0.0
        %2739 = vmatpush1.msra.mxu0 0.0
        %2740 = vmatprep.subr.mxu0 0.0
        %2741 = vmatpush1.msra.mxu0 0.0
        %2742 = vmatprep.subr.mxu0 0.0
        %2743 = vmatpush1.msra.mxu0 0.0
        %2744 = vmatprep.subr.mxu0 0.0
        %2745 = vmatpush1.msra.mxu0 0.0
        %2746 = vmatprep.subr.mxu0 0.0
        %2747 = vmatpush1.msra.mxu0 0.0
        %2748 = vmatprep.subr.mxu0 0.0
        %2749 = vmatpush1.msra.mxu0 0.0
        %2750 = vmatprep.mubr.f32.mxu0 0.0
        %2751 = vmatmul.mubr.f32.gmra.mrb[0].mxu0 %v2653
        %v2752 = vpop.f32.mrb[0].mxu0
        %v2753 = vadd.f32 0.0, %v2752
        %v2754 = vpop.f32.mrb[0].mxu0
        %2755 = vmatprep.mubr.f32.mxu0 0.0
        %2756 = vmatmul.mubr.f32.gmra.mrb[0].mxu0 %v2654
        %v2757 = vpop.f32.mrb[0].mxu0
        %v2758 = vadd.f32 0.0, %v2757
        %v2759 = vpop.f32.mrb[0].mxu0
        %2760 = vmatprep.mubr.f32.mxu0 0.0
        %2761 = vmatmul.mubr.f32.gmra.mrb[0].mxu0 %v2655
        %v2762 = vpop.f32.mrb[0].mxu0
        %v2763 = vadd.f32 0.0, %v2762
        %v2764 = vpop.f32.mrb[0].mxu0
        %2765 = vmatprep.mubr.f32.mxu0 0.0
        %2766 = vmatmul.mubr.f32.gmra.mrb[0].mxu0 %v2656
        %v2767 = vpop.f32.mrb[0].mxu0
        %v2768 = vadd.f32 0.0, %v2767
        %v2769 = vpop.f32.mrb[0].mxu0
        %2770 = vmatprep.mubr.f32.mxu0 0.0
        %2771 = vmatmul.mubr.f32.gmra.mrb[0].mxu0 %v2657
        %v2772 = vpop.f32.mrb[0].mxu0
        %v2773 = vadd.f32 0.0, %v2772
        %v2774 = vpop.f32.mrb[0].mxu0
        %2775 = vmatprep.mubr.f32.mxu0 0.0
        %2776 = vmatmul.mubr.f32.gmra.mrb[0].mxu0 %v2658
        %v2777 = vpop.f32.mrb[0].mxu0
        %v2778 = vadd.f32 0.0, %v2777
        %v2779 = vpop.f32.mrb[0].mxu0
        %2780 = vmatprep.mubr.f32.mxu0 0.0
        %2781 = vmatmul.mubr.f32.gmra.mrb[0].mxu0 %v2659
        %v2782 = vpop.f32.mrb[0].mxu0
        %v2783 = vadd.f32 0.0, %v2782
        %v2784 = vpop.f32.mrb[0].mxu0
        %2785 = vmatprep.mubr.f32.mxu0 0.0
        %2786 = vmatmul.mubr.f32.gmra.mrb[0].mxu0 %v2660
        %v2787 = vpop.f32.mrb[0].mxu0
        %v2788 = vadd.f32 0.0, %v2787
        %v2789 = vpop.f32.mrb[0].mxu0
        %2790 = vmatprep.mubr.f32.mxu0 0.0
        %2791 = vmatmul.mubr.f32.gmra.mrb[0].mxu0 %v2661
        %v2792 = vpop.f32.mrb[0].mxu0
        %v2793 = vadd.f32 0.0, %v2792
        %v2794 = vpop.f32.mrb[0].mxu0
        %2795 = vmatprep.mubr.f32.mxu0 0.0
        %2796 = vmatmul.mubr.f32.gmra.mrb[0].mxu0 %v2662
        %v2797 = vpop.f32.mrb[0].mxu0
        %v2798 = vadd.f32 0.0, %v2797
        %v2799 = vpop.f32.mrb[0].mxu0
        %2800 = vmatprep.mubr.f32.mxu0 0.0
        %2801 = vmatmul.mubr.f32.gmra.mrb[0].mxu0 %v2663
        %v2802 = vpop.f32.mrb[0].mxu0
        %v2803 = vadd.f32 0.0, %v2802
        %v2804 = vpop.f32.mrb[0].mxu0
        %2805 = vmatprep.mubr.f32.mxu0 0.0
        %2806 = vmatmul.mubr.f32.gmra.mrb[0].mxu0 %v2664
        %v2807 = vpop.f32.mrb[0].mxu0
        %v2808 = vadd.f32 0.0, %v2807
        %v2809 = vpop.f32.mrb[0].mxu0
        %2810 = vmatprep.mubr.f32.mxu0 0.0
        %2811 = vmatmul.mubr.f32.gmra.mrb[0].mxu0 %v2665
        %v2812 = vpop.f32.mrb[0].mxu0
        %v2813 = vadd.f32 0.0, %v2812
        %v2814 = vpop.f32.mrb[0].mxu0
        %2815 = vmatprep.mubr.f32.mxu0 0.0
        %2816 = vmatmul.mubr.f32.gmra.mrb[0].mxu0 %v2666
        %v2817 = vpop.f32.mrb[0].mxu0
        %v2818 = vadd.f32 0.0, %v2817
        %v2819 = vpop.f32.mrb[0].mxu0
        %2820 = vmatprep.mubr.f32.mxu0 0.0
        %2821 = vmatmul.mubr.f32.gmra.mrb[0].mxu0 %v2667
        %v2822 = vpop.f32.mrb[0].mxu0
        %v2823 = vadd.f32 0.0, %v2822
        %v2824 = vpop.f32.mrb[0].mxu0
        %2825 = vmatprep.mubr.f32.mxu0 0.0
        %2826 = vmatmul.mubr.f32.gmra.mrb[0].mxu0 %v2668
        %v2827 = vpop.f32.mrb[0].mxu0
        %v2828 = vadd.f32 0.0, %v2827
        %v2829 = vpop.f32.mrb[0].mxu0
        %2830 = vdwg.mxu0
        %2831 = vmatprep.subr.mxu0 0.0
        %2832 = vmatpush1.msra.mxu0 %v637
        %2833 = vmatprep.subr.mxu0 0.0
        %2834 = vmatpush1.msra.mxu0 %v638
        %2835 = vmatprep.subr.mxu0 0.0
        %2836 = vmatpush1.msra.mxu0 %v639
        %2837 = vmatprep.subr.mxu0 0.0
        %2838 = vmatpush1.msra.mxu0 %v640
        %2839 = vmatprep.subr.mxu0 0.0
        %2840 = vmatpush1.msra.mxu0 %v641
        %2841 = vmatprep.subr.mxu0 0.0
        %2842 = vmatpush1.msra.mxu0 %v642
        %2843 = vmatprep.subr.mxu0 0.0
        %2844 = vmatpush1.msra.mxu0 %v643
        %2845 = vmatprep.subr.mxu0 0.0
        %2846 = vmatpush1.msra.mxu0 %v644
        %2847 = vmatprep.subr.mxu0 0.0
        %2848 = vmatpush1.msra.mxu0 %v645
        %2849 = vmatprep.subr.mxu0 0.0
        %2850 = vmatpush1.msra.mxu0 %v646
        %2851 = vmatprep.subr.mxu0 0.0
        %2852 = vmatpush1.msra.mxu0 %v647
        %2853 = vmatprep.subr.mxu0 0.0
        %2854 = vmatpush1.msra.mxu0 %v648
        %2855 = vmatprep.subr.mxu0 0.0
        %2856 = vmatpush1.msra.mxu0 %v649
        %2857 = vmatprep.subr.mxu0 0.0
        %2858 = vmatpush1.msra.mxu0 %v650
        %2859 = vmatprep.subr.mxu0 0.0
        %2860 = vmatpush1.msra.mxu0 %v651
        %2861 = vmatprep.subr.mxu0 0.0
        %2862 = vmatpush1.msra.mxu0 %v652
        %2863 = vmatprep.subr.mxu0 0.0
        %2864 = vmatpush1.msra.mxu0 0.0
        %2865 = vmatprep.subr.mxu0 0.0
        %2866 = vmatpush1.msra.mxu0 0.0
        %2867 = vmatprep.subr.mxu0 0.0
        %2868 = vmatpush1.msra.mxu0 0.0
        %2869 = vmatprep.subr.mxu0 0.0
        %2870 = vmatpush1.msra.mxu0 0.0
        %2871 = vmatprep.subr.mxu0 0.0
        %2872 = vmatpush1.msra.mxu0 0.0
        %2873 = vmatprep.subr.mxu0 0.0
        %2874 = vmatpush1.msra.mxu0 0.0
        %2875 = vmatprep.subr.mxu0 0.0
        %2876 = vmatpush1.msra.mxu0 0.0
        %2877 = vmatprep.subr.mxu0 0.0
        %2878 = vmatpush1.msra.mxu0 0.0
        %2879 = vmatprep.subr.mxu0 0.0
        %2880 = vmatpush1.msra.mxu0 0.0
        %2881 = vmatprep.subr.mxu0 0.0
        %2882 = vmatpush1.msra.mxu0 0.0
        %2883 = vmatprep.subr.mxu0 0.0
        %2884 = vmatpush1.msra.mxu0 0.0
        %2885 = vmatprep.subr.mxu0 0.0
        %2886 = vmatpush1.msra.mxu0 0.0
        %2887 = vmatprep.subr.mxu0 0.0
        %2888 = vmatpush1.msra.mxu0 0.0
        %2889 = vmatprep.subr.mxu0 0.0
        %2890 = vmatpush1.msra.mxu0 0.0
        %2891 = vmatprep.subr.mxu0 0.0
        %2892 = vmatpush1.msra.mxu0 0.0
        %2893 = vmatprep.subr.mxu0 0.0
        %2894 = vmatpush1.msra.mxu0 0.0
        %2895 = vmatprep.mubr.f32.mxu0 0.0
        %2896 = vmatmul.mubr.f32.gmra.mrb[0].mxu0 %v621
        %v2897 = vpop.f32.mrb[0].mxu0
        %v2898 = vadd.f32 %v2753, %v2897
        %v2899 = vpop.f32.mrb[0].mxu0
        %2900 = vmatprep.mubr.f32.mxu0 0.0
        %2901 = vmatmul.mubr.f32.gmra.mrb[0].mxu0 %v622
        %v2902 = vpop.f32.mrb[0].mxu0
        %v2903 = vadd.f32 %v2758, %v2902
        %v2904 = vpop.f32.mrb[0].mxu0
        %2905 = vmatprep.mubr.f32.mxu0 0.0
        %2906 = vmatmul.mubr.f32.gmra.mrb[0].mxu0 %v623
        %v2907 = vpop.f32.mrb[0].mxu0
        %v2908 = vadd.f32 %v2763, %v2907
        %v2909 = vpop.f32.mrb[0].mxu0
        %2910 = vmatprep.mubr.f32.mxu0 0.0
        %2911 = vmatmul.mubr.f32.gmra.mrb[0].mxu0 %v624
        %v2912 = vpop.f32.mrb[0].mxu0
        %v2913 = vadd.f32 %v2768, %v2912
        %v2914 = vpop.f32.mrb[0].mxu0
        %2915 = vmatprep.mubr.f32.mxu0 0.0
        %2916 = vmatmul.mubr.f32.gmra.mrb[0].mxu0 %v625
        %v2917 = vpop.f32.mrb[0].mxu0
        %v2918 = vadd.f32 %v2773, %v2917
        %v2919 = vpop.f32.mrb[0].mxu0
        %2920 = vmatprep.mubr.f32.mxu0 0.0
        %2921 = vmatmul.mubr.f32.gmra.mrb[0].mxu0 %v626
        %v2922 = vpop.f32.mrb[0].mxu0
        %v2923 = vadd.f32 %v2778, %v2922
        %v2924 = vpop.f32.mrb[0].mxu0
        %2925 = vmatprep.mubr.f32.mxu0 0.0
        %2926 = vmatmul.mubr.f32.gmra.mrb[0].mxu0 %v627
        %v2927 = vpop.f32.mrb[0].mxu0
        %v2928 = vadd.f32 %v2783, %v2927
        %v2929 = vpop.f32.mrb[0].mxu0
        %2930 = vmatprep.mubr.f32.mxu0 0.0
        %2931 = vmatmul.mubr.f32.gmra.mrb[0].mxu0 %v628
        %v2932 = vpop.f32.mrb[0].mxu0
        %v2933 = vadd.f32 %v2788, %v2932
        %v2934 = vpop.f32.mrb[0].mxu0
        %2935 = vmatprep.mubr.f32.mxu0 0.0
        %2936 = vmatmul.mubr.f32.gmra.mrb[0].mxu0 %v629
        %v2937 = vpop.f32.mrb[0].mxu0
        %v2938 = vadd.f32 %v2793, %v2937
        %v2939 = vpop.f32.mrb[0].mxu0
        %2940 = vmatprep.mubr.f32.mxu0 0.0
        %2941 = vmatmul.mubr.f32.gmra.mrb[0].mxu0 %v630
        %v2942 = vpop.f32.mrb[0].mxu0
        %v2943 = vadd.f32 %v2798, %v2942
        %v2944 = vpop.f32.mrb[0].mxu0
        %2945 = vmatprep.mubr.f32.mxu0 0.0
        %2946 = vmatmul.mubr.f32.gmra.mrb[0].mxu0 %v631
        %v2947 = vpop.f32.mrb[0].mxu0
        %v2948 = vadd.f32 %v2803, %v2947
        %v2949 = vpop.f32.mrb[0].mxu0
        %2950 = vmatprep.mubr.f32.mxu0 0.0
        %2951 = vmatmul.mubr.f32.gmra.mrb[0].mxu0 %v632
        %v2952 = vpop.f32.mrb[0].mxu0
        %v2953 = vadd.f32 %v2808, %v2952
        %v2954 = vpop.f32.mrb[0].mxu0
        %2955 = vmatprep.mubr.f32.mxu0 0.0
        %2956 = vmatmul.mubr.f32.gmra.mrb[0].mxu0 %v633
        %v2957 = vpop.f32.mrb[0].mxu0
        %v2958 = vadd.f32 %v2813, %v2957
        %v2959 = vpop.f32.mrb[0].mxu0
        %2960 = vmatprep.mubr.f32.mxu0 0.0
        %2961 = vmatmul.mubr.f32.gmra.mrb[0].mxu0 %v634
        %v2962 = vpop.f32.mrb[0].mxu0
        %v2963 = vadd.f32 %v2818, %v2962
        %v2964 = vpop.f32.mrb[0].mxu0
        %2965 = vmatprep.mubr.f32.mxu0 0.0
        %2966 = vmatmul.mubr.f32.gmra.mrb[0].mxu0 %v635
        %v2967 = vpop.f32.mrb[0].mxu0
        %v2968 = vadd.f32 %v2823, %v2967
        %v2969 = vpop.f32.mrb[0].mxu0
        %2970 = vmatprep.mubr.f32.mxu0 0.0
        %2971 = vmatmul.mubr.f32.gmra.mrb[0].mxu0 %v636
        %v2972 = vpop.f32.mrb[0].mxu0
        %v2973 = vadd.f32 %v2828, %v2972
        %v2974 = vpop.f32.mrb[0].mxu0
        %2975 = vdwg.mxu0
        %s2976 = sadd.s32 %s360, 6
        %s2977 = smul.u32 %s2976, 56
        %s2978 = scalar_lea.vmem %s355, %s2977
        %v2979 = vld [vmem:[%s2978 + $0x6] sm:$0xff]
        %v2980 = vld [vmem:[%s2978 + $0xe] sm:$0xff]
        %v2981 = vld [vmem:[%s2978 + $0x3e] sm:$0xff]
        %v2982 = vld [vmem:[%s2978 + $0x46] sm:$0xff]
        %v2983 = vld [vmem:[%s2978 + $0x76] sm:$0xff]
        %v2984 = vld [vmem:[%s2978 + $0x7e] sm:$0xff]
        %v2985 = vld [vmem:[%s2978 + $0xae] sm:$0xff]
        %v2986 = vld [vmem:[%s2978 + $0xb6] sm:$0xff]
        %v2987 = vld [vmem:[%s2978 + $0xe6] sm:$0xff]
        %v2988 = vld [vmem:[%s2978 + $0xee] sm:$0xff]
        %v2989 = vld [vmem:[%s2978 + $0x11e] sm:$0xff]
        %v2990 = vld [vmem:[%s2978 + $0x126] sm:$0xff]
        %v2991 = vld [vmem:[%s2978 + $0x156] sm:$0xff]
        %v2992 = vld [vmem:[%s2978 + $0x15e] sm:$0xff]
        %v2993 = vld [vmem:[%s2978 + $0x18e] sm:$0xff]
        %v2994 = vld [vmem:[%s2978 + $0x196] sm:$0xff]
        %s2995 = scalar_lea.vmem %s2, 72
        %v2996 = vld [vmem:[%s2995] sm:$0xff]
        %v2997 = vld [vmem:[%s2978 + $0x12] sm:$0xff]
        %v2998 = vld [vmem:[%s2978 + $0x1a] sm:$0xff]
        %v2999 = vld [vmem:[%s2978 + $0x4a] sm:$0xff]
        %v3000 = vld [vmem:[%s2978 + $0x52] sm:$0xff]
        %v3001 = vld [vmem:[%s2978 + $0x82] sm:$0xff]
        %v3002 = vld [vmem:[%s2978 + $0x8a] sm:$0xff]
        %v3003 = vld [vmem:[%s2978 + $0xba] sm:$0xff]
        %v3004 = vld [vmem:[%s2978 + $0xc2] sm:$0xff]
        %v3005 = vld [vmem:[%s2978 + $0xf2] sm:$0xff]
        %v3006 = vld [vmem:[%s2978 + $0xfa] sm:$0xff]
        %v3007 = vld [vmem:[%s2978 + $0x12a] sm:$0xff]
        %v3008 = vld [vmem:[%s2978 + $0x132] sm:$0xff]
        %v3009 = vld [vmem:[%s2978 + $0x162] sm:$0xff]
        %v3010 = vld [vmem:[%s2978 + $0x16a] sm:$0xff]
        %v3011 = vld [vmem:[%s2978 + $0x19a] sm:$0xff]
        %v3012 = vld [vmem:[%s2978 + $0x1a2] sm:$0xff]
        %s3013 = scalar_lea.vmem %s2, 80
        %v3014 = vld [vmem:[%s3013] sm:$0xff]
        %v3016 = vsel %vm381, %v2997, 0
        %v3019 = vsel %vm381, %v2998, 0
        %v3022 = vsel %vm381, %v2999, 0
        %v3025 = vsel %vm381, %v3000, 0
        %v3028 = vsel %vm381, %v3001, 0
        %v3031 = vsel %vm381, %v3002, 0
        %v3034 = vsel %vm381, %v3003, 0
        %v3037 = vsel %vm381, %v3004, 0
        %v3040 = vsel %vm381, %v3005, 0
        %v3043 = vsel %vm381, %v3006, 0
        %v3046 = vsel %vm381, %v3007, 0
        %v3049 = vsel %vm381, %v3008, 0
        %v3052 = vsel %vm381, %v3009, 0
        %v3055 = vsel %vm381, %v3010, 0
        %v3058 = vsel %vm381, %v3011, 0
        %v3061 = vsel %vm381, %v3012, 0
        %3063 = vmatprep.subr.mxu0 0.0
        %3064 = vmatpush1.msra.mxu0 %v3014
        %3065 = vmatprep.subr.mxu0 0.0
        %3066 = vmatpush1.msra.mxu0 0.0
        %3067 = vmatprep.subr.mxu0 0.0
        %3068 = vmatpush1.msra.mxu0 0.0
        %3069 = vmatprep.subr.mxu0 0.0
        %3070 = vmatpush1.msra.mxu0 0.0
        %3071 = vmatprep.subr.mxu0 0.0
        %3072 = vmatpush1.msra.mxu0 0.0
        %3073 = vmatprep.subr.mxu0 0.0
        %3074 = vmatpush1.msra.mxu0 0.0
        %3075 = vmatprep.subr.mxu0 0.0
        %3076 = vmatpush1.msra.mxu0 0.0
        %3077 = vmatprep.subr.mxu0 0.0
        %3078 = vmatpush1.msra.mxu0 0.0
        %3079 = vmatprep.subr.mxu0 0.0
        %3080 = vmatpush1.msra.mxu0 0.0
        %3081 = vmatprep.subr.mxu0 0.0
        %3082 = vmatpush1.msra.mxu0 0.0
        %3083 = vmatprep.subr.mxu0 0.0
        %3084 = vmatpush1.msra.mxu0 0.0
        %3085 = vmatprep.subr.mxu0 0.0
        %3086 = vmatpush1.msra.mxu0 0.0
        %3087 = vmatprep.subr.mxu0 0.0
        %3088 = vmatpush1.msra.mxu0 0.0
        %3089 = vmatprep.subr.mxu0 0.0
        %3090 = vmatpush1.msra.mxu0 0.0
        %3091 = vmatprep.subr.mxu0 0.0
        %3092 = vmatpush1.msra.mxu0 0.0
        %3093 = vmatprep.subr.mxu0 0.0
        %3094 = vmatpush1.msra.mxu0 0.0
        %3095 = vmatprep.subr.mxu0 0.0
        %3096 = vmatpush1.msra.mxu0 0.0
        %3097 = vmatprep.subr.mxu0 0.0
        %3098 = vmatpush1.msra.mxu0 0.0
        %3099 = vmatprep.subr.mxu0 0.0
        %3100 = vmatpush1.msra.mxu0 0.0
        %3101 = vmatprep.subr.mxu0 0.0
        %3102 = vmatpush1.msra.mxu0 0.0
        %3103 = vmatprep.subr.mxu0 0.0
        %3104 = vmatpush1.msra.mxu0 0.0
        %3105 = vmatprep.subr.mxu0 0.0
        %3106 = vmatpush1.msra.mxu0 0.0
        %3107 = vmatprep.subr.mxu0 0.0
        %3108 = vmatpush1.msra.mxu0 0.0
        %3109 = vmatprep.subr.mxu0 0.0
        %3110 = vmatpush1.msra.mxu0 0.0
        %3111 = vmatprep.subr.mxu0 0.0
        %3112 = vmatpush1.msra.mxu0 0.0
        %3113 = vmatprep.subr.mxu0 0.0
        %3114 = vmatpush1.msra.mxu0 0.0
        %3115 = vmatprep.subr.mxu0 0.0
        %3116 = vmatpush1.msra.mxu0 0.0
        %3117 = vmatprep.subr.mxu0 0.0
        %3118 = vmatpush1.msra.mxu0 0.0
        %3119 = vmatprep.subr.mxu0 0.0
        %3120 = vmatpush1.msra.mxu0 0.0
        %3121 = vmatprep.subr.mxu0 0.0
        %3122 = vmatpush1.msra.mxu0 0.0
        %3123 = vmatprep.subr.mxu0 0.0
        %3124 = vmatpush1.msra.mxu0 0.0
        %3125 = vmatprep.subr.mxu0 0.0
        %3126 = vmatpush1.msra.mxu0 0.0
        %3127 = vmatprep.mubr.f32.mxu0 0.0
        %3128 = vmatmul.mubr.f32.gmra.mrb[0].mxu0 %v3016
        %v3129 = vpop.f32.mrb[0].mxu0
        %v3130 = vadd.f32 0.0, %v3129
        %v3131 = vpop.f32.mrb[0].mxu0
        %3132 = vmatprep.mubr.f32.mxu0 0.0
        %3133 = vmatmul.mubr.f32.gmra.mrb[0].mxu0 %v3019
        %v3134 = vpop.f32.mrb[0].mxu0
        %v3135 = vadd.f32 0.0, %v3134
        %v3136 = vpop.f32.mrb[0].mxu0
        %3137 = vmatprep.mubr.f32.mxu0 0.0
        %3138 = vmatmul.mubr.f32.gmra.mrb[0].mxu0 %v3022
        %v3139 = vpop.f32.mrb[0].mxu0
        %v3140 = vadd.f32 0.0, %v3139
        %v3141 = vpop.f32.mrb[0].mxu0
        %3142 = vmatprep.mubr.f32.mxu0 0.0
        %3143 = vmatmul.mubr.f32.gmra.mrb[0].mxu0 %v3025
        %v3144 = vpop.f32.mrb[0].mxu0
        %v3145 = vadd.f32 0.0, %v3144
        %v3146 = vpop.f32.mrb[0].mxu0
        %3147 = vmatprep.mubr.f32.mxu0 0.0
        %3148 = vmatmul.mubr.f32.gmra.mrb[0].mxu0 %v3028
        %v3149 = vpop.f32.mrb[0].mxu0
        %v3150 = vadd.f32 0.0, %v3149
        %v3151 = vpop.f32.mrb[0].mxu0
        %3152 = vmatprep.mubr.f32.mxu0 0.0
        %3153 = vmatmul.mubr.f32.gmra.mrb[0].mxu0 %v3031
        %v3154 = vpop.f32.mrb[0].mxu0
        %v3155 = vadd.f32 0.0, %v3154
        %v3156 = vpop.f32.mrb[0].mxu0
        %3157 = vmatprep.mubr.f32.mxu0 0.0
        %3158 = vmatmul.mubr.f32.gmra.mrb[0].mxu0 %v3034
        %v3159 = vpop.f32.mrb[0].mxu0
        %v3160 = vadd.f32 0.0, %v3159
        %v3161 = vpop.f32.mrb[0].mxu0
        %3162 = vmatprep.mubr.f32.mxu0 0.0
        %3163 = vmatmul.mubr.f32.gmra.mrb[0].mxu0 %v3037
        %v3164 = vpop.f32.mrb[0].mxu0
        %v3165 = vadd.f32 0.0, %v3164
        %v3166 = vpop.f32.mrb[0].mxu0
        %3167 = vmatprep.mubr.f32.mxu0 0.0
        %3168 = vmatmul.mubr.f32.gmra.mrb[0].mxu0 %v3040
        %v3169 = vpop.f32.mrb[0].mxu0
        %v3170 = vadd.f32 0.0, %v3169
        %v3171 = vpop.f32.mrb[0].mxu0
        %3172 = vmatprep.mubr.f32.mxu0 0.0
        %3173 = vmatmul.mubr.f32.gmra.mrb[0].mxu0 %v3043
        %v3174 = vpop.f32.mrb[0].mxu0
        %v3175 = vadd.f32 0.0, %v3174
        %v3176 = vpop.f32.mrb[0].mxu0
        %3177 = vmatprep.mubr.f32.mxu0 0.0
        %3178 = vmatmul.mubr.f32.gmra.mrb[0].mxu0 %v3046
        %v3179 = vpop.f32.mrb[0].mxu0
        %v3180 = vadd.f32 0.0, %v3179
        %v3181 = vpop.f32.mrb[0].mxu0
        %3182 = vmatprep.mubr.f32.mxu0 0.0
        %3183 = vmatmul.mubr.f32.gmra.mrb[0].mxu0 %v3049
        %v3184 = vpop.f32.mrb[0].mxu0
        %v3185 = vadd.f32 0.0, %v3184
        %v3186 = vpop.f32.mrb[0].mxu0
        %3187 = vmatprep.mubr.f32.mxu0 0.0
        %3188 = vmatmul.mubr.f32.gmra.mrb[0].mxu0 %v3052
        %v3189 = vpop.f32.mrb[0].mxu0
        %v3190 = vadd.f32 0.0, %v3189
        %v3191 = vpop.f32.mrb[0].mxu0
        %3192 = vmatprep.mubr.f32.mxu0 0.0
        %3193 = vmatmul.mubr.f32.gmra.mrb[0].mxu0 %v3055
        %v3194 = vpop.f32.mrb[0].mxu0
        %v3195 = vadd.f32 0.0, %v3194
        %v3196 = vpop.f32.mrb[0].mxu0
        %3197 = vmatprep.mubr.f32.mxu0 0.0
        %3198 = vmatmul.mubr.f32.gmra.mrb[0].mxu0 %v3058
        %v3199 = vpop.f32.mrb[0].mxu0
        %v3200 = vadd.f32 0.0, %v3199
        %v3201 = vpop.f32.mrb[0].mxu0
        %3202 = vmatprep.mubr.f32.mxu0 0.0
        %3203 = vmatmul.mubr.f32.gmra.mrb[0].mxu0 %v3061
        %v3204 = vpop.f32.mrb[0].mxu0
        %v3205 = vadd.f32 0.0, %v3204
        %v3206 = vpop.f32.mrb[0].mxu0
        %3207 = vdwg.mxu0
        %v3209 = vsel %vm381, %v2979, 0
        %v3212 = vsel %vm381, %v2980, 0
        %v3215 = vsel %vm381, %v2981, 0
        %v3218 = vsel %vm381, %v2982, 0
        %v3221 = vsel %vm381, %v2983, 0
        %v3224 = vsel %vm381, %v2984, 0
        %v3227 = vsel %vm381, %v2985, 0
        %v3230 = vsel %vm381, %v2986, 0
        %v3233 = vsel %vm381, %v2987, 0
        %v3236 = vsel %vm381, %v2988, 0
        %v3239 = vsel %vm381, %v2989, 0
        %v3242 = vsel %vm381, %v2990, 0
        %v3245 = vsel %vm381, %v2991, 0
        %v3248 = vsel %vm381, %v2992, 0
        %v3251 = vsel %vm381, %v2993, 0
        %v3254 = vsel %vm381, %v2994, 0
        %3256 = vmatprep.subr.mxu0 0.0
        %3257 = vmatpush1.msra.mxu0 %v2996
        %3258 = vmatprep.subr.mxu0 0.0
        %3259 = vmatpush1.msra.mxu0 0.0
        %3260 = vmatprep.subr.mxu0 0.0
        %3261 = vmatpush1.msra.mxu0 0.0
        %3262 = vmatprep.subr.mxu0 0.0
        %3263 = vmatpush1.msra.mxu0 0.0
        %3264 = vmatprep.subr.mxu0 0.0
        %3265 = vmatpush1.msra.mxu0 0.0
        %3266 = vmatprep.subr.mxu0 0.0
        %3267 = vmatpush1.msra.mxu0 0.0
        %3268 = vmatprep.subr.mxu0 0.0
        %3269 = vmatpush1.msra.mxu0 0.0
        %3270 = vmatprep.subr.mxu0 0.0
        %3271 = vmatpush1.msra.mxu0 0.0
        %3272 = vmatprep.subr.mxu0 0.0
        %3273 = vmatpush1.msra.mxu0 0.0
        %3274 = vmatprep.subr.mxu0 0.0
        %3275 = vmatpush1.msra.mxu0 0.0
        %3276 = vmatprep.subr.mxu0 0.0
        %3277 = vmatpush1.msra.mxu0 0.0
        %3278 = vmatprep.subr.mxu0 0.0
        %3279 = vmatpush1.msra.mxu0 0.0
        %3280 = vmatprep.subr.mxu0 0.0
        %3281 = vmatpush1.msra.mxu0 0.0
        %3282 = vmatprep.subr.mxu0 0.0
        %3283 = vmatpush1.msra.mxu0 0.0
        %3284 = vmatprep.subr.mxu0 0.0
        %3285 = vmatpush1.msra.mxu0 0.0
        %3286 = vmatprep.subr.mxu0 0.0
        %3287 = vmatpush1.msra.mxu0 0.0
        %3288 = vmatprep.subr.mxu0 0.0
        %3289 = vmatpush1.msra.mxu0 0.0
        %3290 = vmatprep.subr.mxu0 0.0
        %3291 = vmatpush1.msra.mxu0 0.0
        %3292 = vmatprep.subr.mxu0 0.0
        %3293 = vmatpush1.msra.mxu0 0.0
        %3294 = vmatprep.subr.mxu0 0.0
        %3295 = vmatpush1.msra.mxu0 0.0
        %3296 = vmatprep.subr.mxu0 0.0
        %3297 = vmatpush1.msra.mxu0 0.0
        %3298 = vmatprep.subr.mxu0 0.0
        %3299 = vmatpush1.msra.mxu0 0.0
        %3300 = vmatprep.subr.mxu0 0.0
        %3301 = vmatpush1.msra.mxu0 0.0
        %3302 = vmatprep.subr.mxu0 0.0
        %3303 = vmatpush1.msra.mxu0 0.0
        %3304 = vmatprep.subr.mxu0 0.0
        %3305 = vmatpush1.msra.mxu0 0.0
        %3306 = vmatprep.subr.mxu0 0.0
        %3307 = vmatpush1.msra.mxu0 0.0
        %3308 = vmatprep.subr.mxu0 0.0
        %3309 = vmatpush1.msra.mxu0 0.0
        %3310 = vmatprep.subr.mxu0 0.0
        %3311 = vmatpush1.msra.mxu0 0.0
        %3312 = vmatprep.subr.mxu0 0.0
        %3313 = vmatpush1.msra.mxu0 0.0
        %3314 = vmatprep.subr.mxu0 0.0
        %3315 = vmatpush1.msra.mxu0 0.0
        %3316 = vmatprep.subr.mxu0 0.0
        %3317 = vmatpush1.msra.mxu0 0.0
        %3318 = vmatprep.subr.mxu0 0.0
        %3319 = vmatpush1.msra.mxu0 0.0
        %3320 = vmatprep.mubr.f32.mxu0 0.0
        %3321 = vmatmul.mubr.f32.gmra.mrb[0].mxu0 %v3209
        %v3322 = vpop.f32.mrb[0].mxu0
        %v3323 = vadd.f32 %v3130, %v3322
        %v3324 = vpop.f32.mrb[0].mxu0
        %3325 = vmatprep.mubr.f32.mxu0 0.0
        %3326 = vmatmul.mubr.f32.gmra.mrb[0].mxu0 %v3212
        %v3327 = vpop.f32.mrb[0].mxu0
        %v3328 = vadd.f32 %v3135, %v3327
        %v3329 = vpop.f32.mrb[0].mxu0
        %3330 = vmatprep.mubr.f32.mxu0 0.0
        %3331 = vmatmul.mubr.f32.gmra.mrb[0].mxu0 %v3215
        %v3332 = vpop.f32.mrb[0].mxu0
        %v3333 = vadd.f32 %v3140, %v3332
        %v3334 = vpop.f32.mrb[0].mxu0
        %3335 = vmatprep.mubr.f32.mxu0 0.0
        %3336 = vmatmul.mubr.f32.gmra.mrb[0].mxu0 %v3218
        %v3337 = vpop.f32.mrb[0].mxu0
        %v3338 = vadd.f32 %v3145, %v3337
        %v3339 = vpop.f32.mrb[0].mxu0
        %3340 = vmatprep.mubr.f32.mxu0 0.0
        %3341 = vmatmul.mubr.f32.gmra.mrb[0].mxu0 %v3221
        %v3342 = vpop.f32.mrb[0].mxu0
        %v3343 = vadd.f32 %v3150, %v3342
        %v3344 = vpop.f32.mrb[0].mxu0
        %3345 = vmatprep.mubr.f32.mxu0 0.0
        %3346 = vmatmul.mubr.f32.gmra.mrb[0].mxu0 %v3224
        %v3347 = vpop.f32.mrb[0].mxu0
        %v3348 = vadd.f32 %v3155, %v3347
        %v3349 = vpop.f32.mrb[0].mxu0
        %3350 = vmatprep.mubr.f32.mxu0 0.0
        %3351 = vmatmul.mubr.f32.gmra.mrb[0].mxu0 %v3227
        %v3352 = vpop.f32.mrb[0].mxu0
        %v3353 = vadd.f32 %v3160, %v3352
        %v3354 = vpop.f32.mrb[0].mxu0
        %3355 = vmatprep.mubr.f32.mxu0 0.0
        %3356 = vmatmul.mubr.f32.gmra.mrb[0].mxu0 %v3230
        %v3357 = vpop.f32.mrb[0].mxu0
        %v3358 = vadd.f32 %v3165, %v3357
        %v3359 = vpop.f32.mrb[0].mxu0
        %3360 = vmatprep.mubr.f32.mxu0 0.0
        %3361 = vmatmul.mubr.f32.gmra.mrb[0].mxu0 %v3233
        %v3362 = vpop.f32.mrb[0].mxu0
        %v3363 = vadd.f32 %v3170, %v3362
        %v3364 = vpop.f32.mrb[0].mxu0
        %3365 = vmatprep.mubr.f32.mxu0 0.0
        %3366 = vmatmul.mubr.f32.gmra.mrb[0].mxu0 %v3236
        %v3367 = vpop.f32.mrb[0].mxu0
        %v3368 = vadd.f32 %v3175, %v3367
        %v3369 = vpop.f32.mrb[0].mxu0
        %3370 = vmatprep.mubr.f32.mxu0 0.0
        %3371 = vmatmul.mubr.f32.gmra.mrb[0].mxu0 %v3239
        %v3372 = vpop.f32.mrb[0].mxu0
        %v3373 = vadd.f32 %v3180, %v3372
        %v3374 = vpop.f32.mrb[0].mxu0
        %3375 = vmatprep.mubr.f32.mxu0 0.0
        %3376 = vmatmul.mubr.f32.gmra.mrb[0].mxu0 %v3242
        %v3377 = vpop.f32.mrb[0].mxu0
        %v3378 = vadd.f32 %v3185, %v3377
        %v3379 = vpop.f32.mrb[0].mxu0
        %3380 = vmatprep.mubr.f32.mxu0 0.0
        %3381 = vmatmul.mubr.f32.gmra.mrb[0].mxu0 %v3245
        %v3382 = vpop.f32.mrb[0].mxu0
        %v3383 = vadd.f32 %v3190, %v3382
        %v3384 = vpop.f32.mrb[0].mxu0
        %3385 = vmatprep.mubr.f32.mxu0 0.0
        %3386 = vmatmul.mubr.f32.gmra.mrb[0].mxu0 %v3248
        %v3387 = vpop.f32.mrb[0].mxu0
        %v3388 = vadd.f32 %v3195, %v3387
        %v3389 = vpop.f32.mrb[0].mxu0
        %3390 = vmatprep.mubr.f32.mxu0 0.0
        %3391 = vmatmul.mubr.f32.gmra.mrb[0].mxu0 %v3251
        %v3392 = vpop.f32.mrb[0].mxu0
        %v3393 = vadd.f32 %v3200, %v3392
        %v3394 = vpop.f32.mrb[0].mxu0
        %3395 = vmatprep.mubr.f32.mxu0 0.0
        %3396 = vmatmul.mubr.f32.gmra.mrb[0].mxu0 %v3254
        %v3397 = vpop.f32.mrb[0].mxu0
        %v3398 = vadd.f32 %v3205, %v3397
        %v3399 = vpop.f32.mrb[0].mxu0
        %3400 = vdwg.mxu0
        %v3401 = vld [vmem:[%s2978 + $0x1e] sm:$0xff]
        %v3402 = vld [vmem:[%s2978 + $0x26] sm:$0xff]
        %v3403 = vld [vmem:[%s2978 + $0x56] sm:$0xff]
        %v3404 = vld [vmem:[%s2978 + $0x5e] sm:$0xff]
        %v3405 = vld [vmem:[%s2978 + $0x8e] sm:$0xff]
        %v3406 = vld [vmem:[%s2978 + $0x96] sm:$0xff]
        %v3407 = vld [vmem:[%s2978 + $0xc6] sm:$0xff]
        %v3408 = vld [vmem:[%s2978 + $0xce] sm:$0xff]
        %v3409 = vld [vmem:[%s2978 + $0xfe] sm:$0xff]
        %v3410 = vld [vmem:[%s2978 + $0x106] sm:$0xff]
        %v3411 = vld [vmem:[%s2978 + $0x136] sm:$0xff]
        %v3412 = vld [vmem:[%s2978 + $0x13e] sm:$0xff]
        %v3413 = vld [vmem:[%s2978 + $0x16e] sm:$0xff]
        %v3414 = vld [vmem:[%s2978 + $0x176] sm:$0xff]
        %v3415 = vld [vmem:[%s2978 + $0x1a6] sm:$0xff]
        %v3416 = vld [vmem:[%s2978 + $0x1ae] sm:$0xff]
        %s3417 = scalar_lea.vmem %s2, 88
        %v3418 = vld [vmem:[%s3417] sm:$0xff]
        %v3420 = vsel %vm381, %v3401, 0
        %v3423 = vsel %vm381, %v3402, 0
        %v3426 = vsel %vm381, %v3403, 0
        %v3429 = vsel %vm381, %v3404, 0
        %v3432 = vsel %vm381, %v3405, 0
        %v3435 = vsel %vm381, %v3406, 0
        %v3438 = vsel %vm381, %v3407, 0
        %v3441 = vsel %vm381, %v3408, 0
        %v3444 = vsel %vm381, %v3409, 0
        %v3447 = vsel %vm381, %v3410, 0
        %v3450 = vsel %vm381, %v3411, 0
        %v3453 = vsel %vm381, %v3412, 0
        %v3456 = vsel %vm381, %v3413, 0
        %v3459 = vsel %vm381, %v3414, 0
        %v3462 = vsel %vm381, %v3415, 0
        %v3465 = vsel %vm381, %v3416, 0
        %3467 = vmatprep.subr.mxu0 0.0
        %3468 = vmatpush1.msra.mxu0 %v3418
        %3469 = vmatprep.subr.mxu0 0.0
        %3470 = vmatpush1.msra.mxu0 0.0
        %3471 = vmatprep.subr.mxu0 0.0
        %3472 = vmatpush1.msra.mxu0 0.0
        %3473 = vmatprep.subr.mxu0 0.0
        %3474 = vmatpush1.msra.mxu0 0.0
        %3475 = vmatprep.subr.mxu0 0.0
        %3476 = vmatpush1.msra.mxu0 0.0
        %3477 = vmatprep.subr.mxu0 0.0
        %3478 = vmatpush1.msra.mxu0 0.0
        %3479 = vmatprep.subr.mxu0 0.0
        %3480 = vmatpush1.msra.mxu0 0.0
        %3481 = vmatprep.subr.mxu0 0.0
        %3482 = vmatpush1.msra.mxu0 0.0
        %3483 = vmatprep.subr.mxu0 0.0
        %3484 = vmatpush1.msra.mxu0 0.0
        %3485 = vmatprep.subr.mxu0 0.0
        %3486 = vmatpush1.msra.mxu0 0.0
        %3487 = vmatprep.subr.mxu0 0.0
        %3488 = vmatpush1.msra.mxu0 0.0
        %3489 = vmatprep.subr.mxu0 0.0
        %3490 = vmatpush1.msra.mxu0 0.0
        %3491 = vmatprep.subr.mxu0 0.0
        %3492 = vmatpush1.msra.mxu0 0.0
        %3493 = vmatprep.subr.mxu0 0.0
        %3494 = vmatpush1.msra.mxu0 0.0
        %3495 = vmatprep.subr.mxu0 0.0
        %3496 = vmatpush1.msra.mxu0 0.0
        %3497 = vmatprep.subr.mxu0 0.0
        %3498 = vmatpush1.msra.mxu0 0.0
        %3499 = vmatprep.subr.mxu0 0.0
        %3500 = vmatpush1.msra.mxu0 0.0
        %3501 = vmatprep.subr.mxu0 0.0
        %3502 = vmatpush1.msra.mxu0 0.0
        %3503 = vmatprep.subr.mxu0 0.0
        %3504 = vmatpush1.msra.mxu0 0.0
        %3505 = vmatprep.subr.mxu0 0.0
        %3506 = vmatpush1.msra.mxu0 0.0
        %3507 = vmatprep.subr.mxu0 0.0
        %3508 = vmatpush1.msra.mxu0 0.0
        %3509 = vmatprep.subr.mxu0 0.0
        %3510 = vmatpush1.msra.mxu0 0.0
        %3511 = vmatprep.subr.mxu0 0.0
        %3512 = vmatpush1.msra.mxu0 0.0
        %3513 = vmatprep.subr.mxu0 0.0
        %3514 = vmatpush1.msra.mxu0 0.0
        %3515 = vmatprep.subr.mxu0 0.0
        %3516 = vmatpush1.msra.mxu0 0.0
        %3517 = vmatprep.subr.mxu0 0.0
        %3518 = vmatpush1.msra.mxu0 0.0
        %3519 = vmatprep.subr.mxu0 0.0
        %3520 = vmatpush1.msra.mxu0 0.0
        %3521 = vmatprep.subr.mxu0 0.0
        %3522 = vmatpush1.msra.mxu0 0.0
        %3523 = vmatprep.subr.mxu0 0.0
        %3524 = vmatpush1.msra.mxu0 0.0
        %3525 = vmatprep.subr.mxu0 0.0
        %3526 = vmatpush1.msra.mxu0 0.0
        %3527 = vmatprep.subr.mxu0 0.0
        %3528 = vmatpush1.msra.mxu0 0.0
        %3529 = vmatprep.subr.mxu0 0.0
        %3530 = vmatpush1.msra.mxu0 0.0
        %3531 = vmatprep.mubr.f32.mxu0 0.0
        %3532 = vmatmul.mubr.f32.gmra.mrb[0].mxu0 %v3420
        %v3533 = vpop.f32.mrb[0].mxu0
        %v3534 = vadd.f32 0.0, %v3533
        %v3535 = vpop.f32.mrb[0].mxu0
        %3536 = vmatprep.mubr.f32.mxu0 0.0
        %3537 = vmatmul.mubr.f32.gmra.mrb[0].mxu0 %v3423
        %v3538 = vpop.f32.mrb[0].mxu0
        %v3539 = vadd.f32 0.0, %v3538
        %v3540 = vpop.f32.mrb[0].mxu0
        %3541 = vmatprep.mubr.f32.mxu0 0.0
        %3542 = vmatmul.mubr.f32.gmra.mrb[0].mxu0 %v3426
        %v3543 = vpop.f32.mrb[0].mxu0
        %v3544 = vadd.f32 0.0, %v3543
        %v3545 = vpop.f32.mrb[0].mxu0
        %3546 = vmatprep.mubr.f32.mxu0 0.0
        %3547 = vmatmul.mubr.f32.gmra.mrb[0].mxu0 %v3429
        %v3548 = vpop.f32.mrb[0].mxu0
        %v3549 = vadd.f32 0.0, %v3548
        %v3550 = vpop.f32.mrb[0].mxu0
        %3551 = vmatprep.mubr.f32.mxu0 0.0
        %3552 = vmatmul.mubr.f32.gmra.mrb[0].mxu0 %v3432
        %v3553 = vpop.f32.mrb[0].mxu0
        %v3554 = vadd.f32 0.0, %v3553
        %v3555 = vpop.f32.mrb[0].mxu0
        %3556 = vmatprep.mubr.f32.mxu0 0.0
        %3557 = vmatmul.mubr.f32.gmra.mrb[0].mxu0 %v3435
        %v3558 = vpop.f32.mrb[0].mxu0
        %v3559 = vadd.f32 0.0, %v3558
        %v3560 = vpop.f32.mrb[0].mxu0
        %3561 = vmatprep.mubr.f32.mxu0 0.0
        %3562 = vmatmul.mubr.f32.gmra.mrb[0].mxu0 %v3438
        %v3563 = vpop.f32.mrb[0].mxu0
        %v3564 = vadd.f32 0.0, %v3563
        %v3565 = vpop.f32.mrb[0].mxu0
        %3566 = vmatprep.mubr.f32.mxu0 0.0
        %3567 = vmatmul.mubr.f32.gmra.mrb[0].mxu0 %v3441
        %v3568 = vpop.f32.mrb[0].mxu0
        %v3569 = vadd.f32 0.0, %v3568
        %v3570 = vpop.f32.mrb[0].mxu0
        %3571 = vmatprep.mubr.f32.mxu0 0.0
        %3572 = vmatmul.mubr.f32.gmra.mrb[0].mxu0 %v3444
        %v3573 = vpop.f32.mrb[0].mxu0
        %v3574 = vadd.f32 0.0, %v3573
        %v3575 = vpop.f32.mrb[0].mxu0
        %3576 = vmatprep.mubr.f32.mxu0 0.0
        %3577 = vmatmul.mubr.f32.gmra.mrb[0].mxu0 %v3447
        %v3578 = vpop.f32.mrb[0].mxu0
        %v3579 = vadd.f32 0.0, %v3578
        %v3580 = vpop.f32.mrb[0].mxu0
        %3581 = vmatprep.mubr.f32.mxu0 0.0
        %3582 = vmatmul.mubr.f32.gmra.mrb[0].mxu0 %v3450
        %v3583 = vpop.f32.mrb[0].mxu0
        %v3584 = vadd.f32 0.0, %v3583
        %v3585 = vpop.f32.mrb[0].mxu0
        %3586 = vmatprep.mubr.f32.mxu0 0.0
        %3587 = vmatmul.mubr.f32.gmra.mrb[0].mxu0 %v3453
        %v3588 = vpop.f32.mrb[0].mxu0
        %v3589 = vadd.f32 0.0, %v3588
        %v3590 = vpop.f32.mrb[0].mxu0
        %3591 = vmatprep.mubr.f32.mxu0 0.0
        %3592 = vmatmul.mubr.f32.gmra.mrb[0].mxu0 %v3456
        %v3593 = vpop.f32.mrb[0].mxu0
        %v3594 = vadd.f32 0.0, %v3593
        %v3595 = vpop.f32.mrb[0].mxu0
        %3596 = vmatprep.mubr.f32.mxu0 0.0
        %3597 = vmatmul.mubr.f32.gmra.mrb[0].mxu0 %v3459
        %v3598 = vpop.f32.mrb[0].mxu0
        %v3599 = vadd.f32 0.0, %v3598
        %v3600 = vpop.f32.mrb[0].mxu0
        %3601 = vmatprep.mubr.f32.mxu0 0.0
        %3602 = vmatmul.mubr.f32.gmra.mrb[0].mxu0 %v3462
        %v3603 = vpop.f32.mrb[0].mxu0
        %v3604 = vadd.f32 0.0, %v3603
        %v3605 = vpop.f32.mrb[0].mxu0
        %3606 = vmatprep.mubr.f32.mxu0 0.0
        %3607 = vmatmul.mubr.f32.gmra.mrb[0].mxu0 %v3465
        %v3608 = vpop.f32.mrb[0].mxu0
        %v3609 = vadd.f32 0.0, %v3608
        %v3610 = vpop.f32.mrb[0].mxu0
        %3611 = vdwg.mxu0
        %v3612 = vadd.f32 %v3323, %v3534
        %v3613 = vadd.f32 %v3328, %v3539
        %v3614 = vadd.f32 %v3333, %v3544
        %v3615 = vadd.f32 %v3338, %v3549
        %v3616 = vadd.f32 %v3343, %v3554
        %v3617 = vadd.f32 %v3348, %v3559
        %v3618 = vadd.f32 %v3353, %v3564
        %v3619 = vadd.f32 %v3358, %v3569
        %v3620 = vadd.f32 %v3363, %v3574
        %v3621 = vadd.f32 %v3368, %v3579
        %v3622 = vadd.f32 %v3373, %v3584
        %v3623 = vadd.f32 %v3378, %v3589
        %v3624 = vadd.f32 %v3383, %v3594
        %v3625 = vadd.f32 %v3388, %v3599
        %v3626 = vadd.f32 %v3393, %v3604
        %v3627 = vadd.f32 %v3398, %v3609
        %v3628 = vld [vmem:[%s363 + $0x6] sm:$0xff]
        %v3629 = vld [vmem:[%s363 + $0xe] sm:$0xff]
        %v3630 = vld [vmem:[%s363 + $0x3e] sm:$0xff]
        %v3631 = vld [vmem:[%s363 + $0x46] sm:$0xff]
        %v3632 = vld [vmem:[%s363 + $0x76] sm:$0xff]
        %v3633 = vld [vmem:[%s363 + $0x7e] sm:$0xff]
        %v3634 = vld [vmem:[%s363 + $0xae] sm:$0xff]
        %v3635 = vld [vmem:[%s363 + $0xb6] sm:$0xff]
        %v3636 = vld [vmem:[%s363 + $0xe6] sm:$0xff]
        %v3637 = vld [vmem:[%s363 + $0xee] sm:$0xff]
        %v3638 = vld [vmem:[%s363 + $0x11e] sm:$0xff]
        %v3639 = vld [vmem:[%s363 + $0x126] sm:$0xff]
        %v3640 = vld [vmem:[%s363 + $0x156] sm:$0xff]
        %v3641 = vld [vmem:[%s363 + $0x15e] sm:$0xff]
        %v3642 = vld [vmem:[%s363 + $0x18e] sm:$0xff]
        %v3643 = vld [vmem:[%s363 + $0x196] sm:$0xff]
        %s3644 = scalar_lea.vmem %s2, 96
        %v3645 = vld [vmem:[%s3644] sm:$0xff]
        %v3647 = vsel %vm381, %v3628, 0
        %v3650 = vsel %vm381, %v3629, 0
        %v3653 = vsel %vm381, %v3630, 0
        %v3656 = vsel %vm381, %v3631, 0
        %v3659 = vsel %vm381, %v3632, 0
        %v3662 = vsel %vm381, %v3633, 0
        %v3665 = vsel %vm381, %v3634, 0
        %v3668 = vsel %vm381, %v3635, 0
        %v3671 = vsel %vm381, %v3636, 0
        %v3674 = vsel %vm381, %v3637, 0
        %v3677 = vsel %vm381, %v3638, 0
        %v3680 = vsel %vm381, %v3639, 0
        %v3683 = vsel %vm381, %v3640, 0
        %v3686 = vsel %vm381, %v3641, 0
        %v3689 = vsel %vm381, %v3642, 0
        %v3692 = vsel %vm381, %v3643, 0
        %3694 = vmatprep.subr.mxu0 0.0
        %3695 = vmatpush1.msra.mxu0 %v3645
        %3696 = vmatprep.subr.mxu0 0.0
        %3697 = vmatpush1.msra.mxu0 0.0
        %3698 = vmatprep.subr.mxu0 0.0
        %3699 = vmatpush1.msra.mxu0 0.0
        %3700 = vmatprep.subr.mxu0 0.0
        %3701 = vmatpush1.msra.mxu0 0.0
        %3702 = vmatprep.subr.mxu0 0.0
        %3703 = vmatpush1.msra.mxu0 0.0
        %3704 = vmatprep.subr.mxu0 0.0
        %3705 = vmatpush1.msra.mxu0 0.0
        %3706 = vmatprep.subr.mxu0 0.0
        %3707 = vmatpush1.msra.mxu0 0.0
        %3708 = vmatprep.subr.mxu0 0.0
        %3709 = vmatpush1.msra.mxu0 0.0
        %3710 = vmatprep.subr.mxu0 0.0
        %3711 = vmatpush1.msra.mxu0 0.0
        %3712 = vmatprep.subr.mxu0 0.0
        %3713 = vmatpush1.msra.mxu0 0.0
        %3714 = vmatprep.subr.mxu0 0.0
        %3715 = vmatpush1.msra.mxu0 0.0
        %3716 = vmatprep.subr.mxu0 0.0
        %3717 = vmatpush1.msra.mxu0 0.0
        %3718 = vmatprep.subr.mxu0 0.0
        %3719 = vmatpush1.msra.mxu0 0.0
        %3720 = vmatprep.subr.mxu0 0.0
        %3721 = vmatpush1.msra.mxu0 0.0
        %3722 = vmatprep.subr.mxu0 0.0
        %3723 = vmatpush1.msra.mxu0 0.0
        %3724 = vmatprep.subr.mxu0 0.0
        %3725 = vmatpush1.msra.mxu0 0.0
        %3726 = vmatprep.subr.mxu0 0.0
        %3727 = vmatpush1.msra.mxu0 0.0
        %3728 = vmatprep.subr.mxu0 0.0
        %3729 = vmatpush1.msra.mxu0 0.0
        %3730 = vmatprep.subr.mxu0 0.0
        %3731 = vmatpush1.msra.mxu0 0.0
        %3732 = vmatprep.subr.mxu0 0.0
        %3733 = vmatpush1.msra.mxu0 0.0
        %3734 = vmatprep.subr.mxu0 0.0
        %3735 = vmatpush1.msra.mxu0 0.0
        %3736 = vmatprep.subr.mxu0 0.0
        %3737 = vmatpush1.msra.mxu0 0.0
        %3738 = vmatprep.subr.mxu0 0.0
        %3739 = vmatpush1.msra.mxu0 0.0
        %3740 = vmatprep.subr.mxu0 0.0
        %3741 = vmatpush1.msra.mxu0 0.0
        %3742 = vmatprep.subr.mxu0 0.0
        %3743 = vmatpush1.msra.mxu0 0.0
        %3744 = vmatprep.subr.mxu0 0.0
        %3745 = vmatpush1.msra.mxu0 0.0
        %3746 = vmatprep.subr.mxu0 0.0
        %3747 = vmatpush1.msra.mxu0 0.0
        %3748 = vmatprep.subr.mxu0 0.0
        %3749 = vmatpush1.msra.mxu0 0.0
        %3750 = vmatprep.subr.mxu0 0.0
        %3751 = vmatpush1.msra.mxu0 0.0
        %3752 = vmatprep.subr.mxu0 0.0
        %3753 = vmatpush1.msra.mxu0 0.0
        %3754 = vmatprep.subr.mxu0 0.0
        %3755 = vmatpush1.msra.mxu0 0.0
        %3756 = vmatprep.subr.mxu0 0.0
        %3757 = vmatpush1.msra.mxu0 0.0
        %3758 = vmatprep.mubr.f32.mxu0 0.0
        %3759 = vmatmul.mubr.f32.gmra.mrb[0].mxu0 %v3647
        %v3760 = vpop.f32.mrb[0].mxu0
        %v3761 = vadd.f32 0.0, %v3760
        %v3762 = vpop.f32.mrb[0].mxu0
        %3763 = vmatprep.mubr.f32.mxu0 0.0
        %3764 = vmatmul.mubr.f32.gmra.mrb[0].mxu0 %v3650
        %v3765 = vpop.f32.mrb[0].mxu0
        %v3766 = vadd.f32 0.0, %v3765
        %v3767 = vpop.f32.mrb[0].mxu0
        %3768 = vmatprep.mubr.f32.mxu0 0.0
        %3769 = vmatmul.mubr.f32.gmra.mrb[0].mxu0 %v3653
        %v3770 = vpop.f32.mrb[0].mxu0
        %v3771 = vadd.f32 0.0, %v3770
        %v3772 = vpop.f32.mrb[0].mxu0
        %3773 = vmatprep.mubr.f32.mxu0 0.0
        %3774 = vmatmul.mubr.f32.gmra.mrb[0].mxu0 %v3656
        %v3775 = vpop.f32.mrb[0].mxu0
        %v3776 = vadd.f32 0.0, %v3775
        %v3777 = vpop.f32.mrb[0].mxu0
        %3778 = vmatprep.mubr.f32.mxu0 0.0
        %3779 = vmatmul.mubr.f32.gmra.mrb[0].mxu0 %v3659
        %v3780 = vpop.f32.mrb[0].mxu0
        %v3781 = vadd.f32 0.0, %v3780
        %v3782 = vpop.f32.mrb[0].mxu0
        %3783 = vmatprep.mubr.f32.mxu0 0.0
        %3784 = vmatmul.mubr.f32.gmra.mrb[0].mxu0 %v3662
        %v3785 = vpop.f32.mrb[0].mxu0
        %v3786 = vadd.f32 0.0, %v3785
        %v3787 = vpop.f32.mrb[0].mxu0
        %3788 = vmatprep.mubr.f32.mxu0 0.0
        %3789 = vmatmul.mubr.f32.gmra.mrb[0].mxu0 %v3665
        %v3790 = vpop.f32.mrb[0].mxu0
        %v3791 = vadd.f32 0.0, %v3790
        %v3792 = vpop.f32.mrb[0].mxu0
        %3793 = vmatprep.mubr.f32.mxu0 0.0
        %3794 = vmatmul.mubr.f32.gmra.mrb[0].mxu0 %v3668
        %v3795 = vpop.f32.mrb[0].mxu0
        %v3796 = vadd.f32 0.0, %v3795
        %v3797 = vpop.f32.mrb[0].mxu0
        %3798 = vmatprep.mubr.f32.mxu0 0.0
        %3799 = vmatmul.mubr.f32.gmra.mrb[0].mxu0 %v3671
        %v3800 = vpop.f32.mrb[0].mxu0
        %v3801 = vadd.f32 0.0, %v3800
        %v3802 = vpop.f32.mrb[0].mxu0
        %3803 = vmatprep.mubr.f32.mxu0 0.0
        %3804 = vmatmul.mubr.f32.gmra.mrb[0].mxu0 %v3674
        %v3805 = vpop.f32.mrb[0].mxu0
        %v3806 = vadd.f32 0.0, %v3805
        %v3807 = vpop.f32.mrb[0].mxu0
        %3808 = vmatprep.mubr.f32.mxu0 0.0
        %3809 = vmatmul.mubr.f32.gmra.mrb[0].mxu0 %v3677
        %v3810 = vpop.f32.mrb[0].mxu0
        %v3811 = vadd.f32 0.0, %v3810
        %v3812 = vpop.f32.mrb[0].mxu0
        %3813 = vmatprep.mubr.f32.mxu0 0.0
        %3814 = vmatmul.mubr.f32.gmra.mrb[0].mxu0 %v3680
        %v3815 = vpop.f32.mrb[0].mxu0
        %v3816 = vadd.f32 0.0, %v3815
        %v3817 = vpop.f32.mrb[0].mxu0
        %3818 = vmatprep.mubr.f32.mxu0 0.0
        %3819 = vmatmul.mubr.f32.gmra.mrb[0].mxu0 %v3683
        %v3820 = vpop.f32.mrb[0].mxu0
        %v3821 = vadd.f32 0.0, %v3820
        %v3822 = vpop.f32.mrb[0].mxu0
        %3823 = vmatprep.mubr.f32.mxu0 0.0
        %3824 = vmatmul.mubr.f32.gmra.mrb[0].mxu0 %v3686
        %v3825 = vpop.f32.mrb[0].mxu0
        %v3826 = vadd.f32 0.0, %v3825
        %v3827 = vpop.f32.mrb[0].mxu0
        %3828 = vmatprep.mubr.f32.mxu0 0.0
        %3829 = vmatmul.mubr.f32.gmra.mrb[0].mxu0 %v3689
        %v3830 = vpop.f32.mrb[0].mxu0
        %v3831 = vadd.f32 0.0, %v3830
        %v3832 = vpop.f32.mrb[0].mxu0
        %3833 = vmatprep.mubr.f32.mxu0 0.0
        %3834 = vmatmul.mubr.f32.gmra.mrb[0].mxu0 %v3692
        %v3835 = vpop.f32.mrb[0].mxu0
        %v3836 = vadd.f32 0.0, %v3835
        %v3837 = vpop.f32.mrb[0].mxu0
        %3838 = vdwg.mxu0
        %v3839 = vadd.f32 %v3612, %v3761
        %v3840 = vadd.f32 %v3613, %v3766
        %v3841 = vadd.f32 %v3614, %v3771
        %v3842 = vadd.f32 %v3615, %v3776
        %v3843 = vadd.f32 %v3616, %v3781
        %v3844 = vadd.f32 %v3617, %v3786
        %v3845 = vadd.f32 %v3618, %v3791
        %v3846 = vadd.f32 %v3619, %v3796
        %v3847 = vadd.f32 %v3620, %v3801
        %v3848 = vadd.f32 %v3621, %v3806
        %v3849 = vadd.f32 %v3622, %v3811
        %v3850 = vadd.f32 %v3623, %v3816
        %v3851 = vadd.f32 %v3624, %v3821
        %v3852 = vadd.f32 %v3625, %v3826
        %v3853 = vadd.f32 %v3626, %v3831
        %v3854 = vadd.f32 %v3627, %v3836
        %s3855 = scalar_lea.vmem %s2, 104
        %v3856 = vld [vmem:[%s3855] sm:$0xff]
        %3857 = vmatprep.subr.mxu0 0.0
        %3858 = vmatpush1.msra.mxu0 %v3856
        %3859 = vmatprep.subr.mxu0 0.0
        %3860 = vmatpush1.msra.mxu0 0.0
        %3861 = vmatprep.subr.mxu0 0.0
        %3862 = vmatpush1.msra.mxu0 0.0
        %3863 = vmatprep.subr.mxu0 0.0
        %3864 = vmatpush1.msra.mxu0 0.0
        %3865 = vmatprep.subr.mxu0 0.0
        %3866 = vmatpush1.msra.mxu0 0.0
        %3867 = vmatprep.subr.mxu0 0.0
        %3868 = vmatpush1.msra.mxu0 0.0
        %3869 = vmatprep.subr.mxu0 0.0
        %3870 = vmatpush1.msra.mxu0 0.0
        %3871 = vmatprep.subr.mxu0 0.0
        %3872 = vmatpush1.msra.mxu0 0.0
        %3873 = vmatprep.subr.mxu0 0.0
        %3874 = vmatpush1.msra.mxu0 0.0
        %3875 = vmatprep.subr.mxu0 0.0
        %3876 = vmatpush1.msra.mxu0 0.0
        %3877 = vmatprep.subr.mxu0 0.0
        %3878 = vmatpush1.msra.mxu0 0.0
        %3879 = vmatprep.subr.mxu0 0.0
        %3880 = vmatpush1.msra.mxu0 0.0
        %3881 = vmatprep.subr.mxu0 0.0
        %3882 = vmatpush1.msra.mxu0 0.0
        %3883 = vmatprep.subr.mxu0 0.0
        %3884 = vmatpush1.msra.mxu0 0.0
        %3885 = vmatprep.subr.mxu0 0.0
        %3886 = vmatpush1.msra.mxu0 0.0
        %3887 = vmatprep.subr.mxu0 0.0
        %3888 = vmatpush1.msra.mxu0 0.0
        %3889 = vmatprep.subr.mxu0 0.0
        %3890 = vmatpush1.msra.mxu0 0.0
        %3891 = vmatprep.subr.mxu0 0.0
        %3892 = vmatpush1.msra.mxu0 0.0
        %3893 = vmatprep.subr.mxu0 0.0
        %3894 = vmatpush1.msra.mxu0 0.0
        %3895 = vmatprep.subr.mxu0 0.0
        %3896 = vmatpush1.msra.mxu0 0.0
        %3897 = vmatprep.subr.mxu0 0.0
        %3898 = vmatpush1.msra.mxu0 0.0
        %3899 = vmatprep.subr.mxu0 0.0
        %3900 = vmatpush1.msra.mxu0 0.0
        %3901 = vmatprep.subr.mxu0 0.0
        %3902 = vmatpush1.msra.mxu0 0.0
        %3903 = vmatprep.subr.mxu0 0.0
        %3904 = vmatpush1.msra.mxu0 0.0
        %3905 = vmatprep.subr.mxu0 0.0
        %3906 = vmatpush1.msra.mxu0 0.0
        %3907 = vmatprep.subr.mxu0 0.0
        %3908 = vmatpush1.msra.mxu0 0.0
        %3909 = vmatprep.subr.mxu0 0.0
        %3910 = vmatpush1.msra.mxu0 0.0
        %3911 = vmatprep.subr.mxu0 0.0
        %3912 = vmatpush1.msra.mxu0 0.0
        %3913 = vmatprep.subr.mxu0 0.0
        %3914 = vmatpush1.msra.mxu0 0.0
        %3915 = vmatprep.subr.mxu0 0.0
        %3916 = vmatpush1.msra.mxu0 0.0
        %3917 = vmatprep.subr.mxu0 0.0
        %3918 = vmatpush1.msra.mxu0 0.0
        %3919 = vmatprep.subr.mxu0 0.0
        %3920 = vmatpush1.msra.mxu0 0.0
        %3921 = vmatprep.mubr.f32.mxu0 0.0
        %3922 = vmatmul.mubr.f32.gmra.mrb[0].mxu0 %v383
        %v3923 = vpop.f32.mrb[0].mxu0
        %v3924 = vadd.f32 0.0, %v3923
        %v3925 = vpop.f32.mrb[0].mxu0
        %3926 = vmatprep.mubr.f32.mxu0 0.0
        %3927 = vmatmul.mubr.f32.gmra.mrb[0].mxu0 %v386
        %v3928 = vpop.f32.mrb[0].mxu0
        %v3929 = vadd.f32 0.0, %v3928
        %v3930 = vpop.f32.mrb[0].mxu0
        %3931 = vmatprep.mubr.f32.mxu0 0.0
        %3932 = vmatmul.mubr.f32.gmra.mrb[0].mxu0 %v389
        %v3933 = vpop.f32.mrb[0].mxu0
        %v3934 = vadd.f32 0.0, %v3933
        %v3935 = vpop.f32.mrb[0].mxu0
        %3936 = vmatprep.mubr.f32.mxu0 0.0
        %3937 = vmatmul.mubr.f32.gmra.mrb[0].mxu0 %v392
        %v3938 = vpop.f32.mrb[0].mxu0
        %v3939 = vadd.f32 0.0, %v3938
        %v3940 = vpop.f32.mrb[0].mxu0
        %3941 = vmatprep.mubr.f32.mxu0 0.0
        %3942 = vmatmul.mubr.f32.gmra.mrb[0].mxu0 %v395
        %v3943 = vpop.f32.mrb[0].mxu0
        %v3944 = vadd.f32 0.0, %v3943
        %v3945 = vpop.f32.mrb[0].mxu0
        %3946 = vmatprep.mubr.f32.mxu0 0.0
        %3947 = vmatmul.mubr.f32.gmra.mrb[0].mxu0 %v398
        %v3948 = vpop.f32.mrb[0].mxu0
        %v3949 = vadd.f32 0.0, %v3948
        %v3950 = vpop.f32.mrb[0].mxu0
        %3951 = vmatprep.mubr.f32.mxu0 0.0
        %3952 = vmatmul.mubr.f32.gmra.mrb[0].mxu0 %v401
        %v3953 = vpop.f32.mrb[0].mxu0
        %v3954 = vadd.f32 0.0, %v3953
        %v3955 = vpop.f32.mrb[0].mxu0
        %3956 = vmatprep.mubr.f32.mxu0 0.0
        %3957 = vmatmul.mubr.f32.gmra.mrb[0].mxu0 %v404
        %v3958 = vpop.f32.mrb[0].mxu0
        %v3959 = vadd.f32 0.0, %v3958
        %v3960 = vpop.f32.mrb[0].mxu0
        %3961 = vmatprep.mubr.f32.mxu0 0.0
        %3962 = vmatmul.mubr.f32.gmra.mrb[0].mxu0 %v407
        %v3963 = vpop.f32.mrb[0].mxu0
        %v3964 = vadd.f32 0.0, %v3963
        %v3965 = vpop.f32.mrb[0].mxu0
        %3966 = vmatprep.mubr.f32.mxu0 0.0
        %3967 = vmatmul.mubr.f32.gmra.mrb[0].mxu0 %v410
        %v3968 = vpop.f32.mrb[0].mxu0
        %v3969 = vadd.f32 0.0, %v3968
        %v3970 = vpop.f32.mrb[0].mxu0
        %3971 = vmatprep.mubr.f32.mxu0 0.0
        %3972 = vmatmul.mubr.f32.gmra.mrb[0].mxu0 %v413
        %v3973 = vpop.f32.mrb[0].mxu0
        %v3974 = vadd.f32 0.0, %v3973
        %v3975 = vpop.f32.mrb[0].mxu0
        %3976 = vmatprep.mubr.f32.mxu0 0.0
        %3977 = vmatmul.mubr.f32.gmra.mrb[0].mxu0 %v416
        %v3978 = vpop.f32.mrb[0].mxu0
        %v3979 = vadd.f32 0.0, %v3978
        %v3980 = vpop.f32.mrb[0].mxu0
        %3981 = vmatprep.mubr.f32.mxu0 0.0
        %3982 = vmatmul.mubr.f32.gmra.mrb[0].mxu0 %v419
        %v3983 = vpop.f32.mrb[0].mxu0
        %v3984 = vadd.f32 0.0, %v3983
        %v3985 = vpop.f32.mrb[0].mxu0
        %3986 = vmatprep.mubr.f32.mxu0 0.0
        %3987 = vmatmul.mubr.f32.gmra.mrb[0].mxu0 %v422
        %v3988 = vpop.f32.mrb[0].mxu0
        %v3989 = vadd.f32 0.0, %v3988
        %v3990 = vpop.f32.mrb[0].mxu0
        %3991 = vmatprep.mubr.f32.mxu0 0.0
        %3992 = vmatmul.mubr.f32.gmra.mrb[0].mxu0 %v425
        %v3993 = vpop.f32.mrb[0].mxu0
        %v3994 = vadd.f32 0.0, %v3993
        %v3995 = vpop.f32.mrb[0].mxu0
        %3996 = vmatprep.mubr.f32.mxu0 0.0
        %3997 = vmatmul.mubr.f32.gmra.mrb[0].mxu0 %v428
        %v3998 = vpop.f32.mrb[0].mxu0
        %v3999 = vadd.f32 0.0, %v3998
        %v4000 = vpop.f32.mrb[0].mxu0
        %4001 = vdwg.mxu0
        %v4002 = vadd.f32 %v3839, %v3924
        %v4003 = vadd.f32 %v3840, %v3929
        %v4004 = vadd.f32 %v3841, %v3934
        %v4005 = vadd.f32 %v3842, %v3939
        %v4006 = vadd.f32 %v3843, %v3944
        %v4007 = vadd.f32 %v3844, %v3949
        %v4008 = vadd.f32 %v3845, %v3954
        %v4009 = vadd.f32 %v3846, %v3959
        %v4010 = vadd.f32 %v3847, %v3964
        %v4011 = vadd.f32 %v3848, %v3969
        %v4012 = vadd.f32 %v3849, %v3974
        %v4013 = vadd.f32 %v3850, %v3979
        %v4014 = vadd.f32 %v3851, %v3984
        %v4015 = vadd.f32 %v3852, %v3989
        %v4016 = vadd.f32 %v3853, %v3994
        %v4017 = vadd.f32 %v3854, %v3999
        %v4018 = vld [vmem:[%s363 + $0x1e] sm:$0xff]
        %v4019 = vld [vmem:[%s363 + $0x26] sm:$0xff]
        %v4020 = vld [vmem:[%s363 + $0x56] sm:$0xff]
        %v4021 = vld [vmem:[%s363 + $0x5e] sm:$0xff]
        %v4022 = vld [vmem:[%s363 + $0x8e] sm:$0xff]
        %v4023 = vld [vmem:[%s363 + $0x96] sm:$0xff]
        %v4024 = vld [vmem:[%s363 + $0xc6] sm:$0xff]
        %v4025 = vld [vmem:[%s363 + $0xce] sm:$0xff]
        %v4026 = vld [vmem:[%s363 + $0xfe] sm:$0xff]
        %v4027 = vld [vmem:[%s363 + $0x106] sm:$0xff]
        %v4028 = vld [vmem:[%s363 + $0x136] sm:$0xff]
        %v4029 = vld [vmem:[%s363 + $0x13e] sm:$0xff]
        %v4030 = vld [vmem:[%s363 + $0x16e] sm:$0xff]
        %v4031 = vld [vmem:[%s363 + $0x176] sm:$0xff]
        %v4032 = vld [vmem:[%s363 + $0x1a6] sm:$0xff]
        %v4033 = vld [vmem:[%s363 + $0x1ae] sm:$0xff]
        %s4034 = scalar_lea.vmem %s2, 112
        %v4035 = vld [vmem:[%s4034] sm:$0xff]
        %v4037 = vsel %vm381, %v4018, 0
        %v4040 = vsel %vm381, %v4019, 0
        %v4043 = vsel %vm381, %v4020, 0
        %v4046 = vsel %vm381, %v4021, 0
        %v4049 = vsel %vm381, %v4022, 0
        %v4052 = vsel %vm381, %v4023, 0
        %v4055 = vsel %vm381, %v4024, 0
        %v4058 = vsel %vm381, %v4025, 0
        %v4061 = vsel %vm381, %v4026, 0
        %v4064 = vsel %vm381, %v4027, 0
        %v4067 = vsel %vm381, %v4028, 0
        %v4070 = vsel %vm381, %v4029, 0
        %v4073 = vsel %vm381, %v4030, 0
        %v4076 = vsel %vm381, %v4031, 0
        %v4079 = vsel %vm381, %v4032, 0
        %v4082 = vsel %vm381, %v4033, 0
        %4084 = vmatprep.subr.mxu0 0.0
        %4085 = vmatpush1.msra.mxu0 %v4035
        %4086 = vmatprep.subr.mxu0 0.0
        %4087 = vmatpush1.msra.mxu0 0.0
        %4088 = vmatprep.subr.mxu0 0.0
        %4089 = vmatpush1.msra.mxu0 0.0
        %4090 = vmatprep.subr.mxu0 0.0
        %4091 = vmatpush1.msra.mxu0 0.0
        %4092 = vmatprep.subr.mxu0 0.0
        %4093 = vmatpush1.msra.mxu0 0.0
        %4094 = vmatprep.subr.mxu0 0.0
        %4095 = vmatpush1.msra.mxu0 0.0
        %4096 = vmatprep.subr.mxu0 0.0
        %4097 = vmatpush1.msra.mxu0 0.0
        %4098 = vmatprep.subr.mxu0 0.0
        %4099 = vmatpush1.msra.mxu0 0.0
        %4100 = vmatprep.subr.mxu0 0.0
        %4101 = vmatpush1.msra.mxu0 0.0
        %4102 = vmatprep.subr.mxu0 0.0
        %4103 = vmatpush1.msra.mxu0 0.0
        %4104 = vmatprep.subr.mxu0 0.0
        %4105 = vmatpush1.msra.mxu0 0.0
        %4106 = vmatprep.subr.mxu0 0.0
        %4107 = vmatpush1.msra.mxu0 0.0
        %4108 = vmatprep.subr.mxu0 0.0
        %4109 = vmatpush1.msra.mxu0 0.0
        %4110 = vmatprep.subr.mxu0 0.0
        %4111 = vmatpush1.msra.mxu0 0.0
        %4112 = vmatprep.subr.mxu0 0.0
        %4113 = vmatpush1.msra.mxu0 0.0
        %4114 = vmatprep.subr.mxu0 0.0
        %4115 = vmatpush1.msra.mxu0 0.0
        %4116 = vmatprep.subr.mxu0 0.0
        %4117 = vmatpush1.msra.mxu0 0.0
        %4118 = vmatprep.subr.mxu0 0.0
        %4119 = vmatpush1.msra.mxu0 0.0
        %4120 = vmatprep.subr.mxu0 0.0
        %4121 = vmatpush1.msra.mxu0 0.0
        %4122 = vmatprep.subr.mxu0 0.0
        %4123 = vmatpush1.msra.mxu0 0.0
        %4124 = vmatprep.subr.mxu0 0.0
        %4125 = vmatpush1.msra.mxu0 0.0
        %4126 = vmatprep.subr.mxu0 0.0
        %4127 = vmatpush1.msra.mxu0 0.0
        %4128 = vmatprep.subr.mxu0 0.0
        %4129 = vmatpush1.msra.mxu0 0.0
        %4130 = vmatprep.subr.mxu0 0.0
        %4131 = vmatpush1.msra.mxu0 0.0
        %4132 = vmatprep.subr.mxu0 0.0
        %4133 = vmatpush1.msra.mxu0 0.0
        %4134 = vmatprep.subr.mxu0 0.0
        %4135 = vmatpush1.msra.mxu0 0.0
        %4136 = vmatprep.subr.mxu0 0.0
        %4137 = vmatpush1.msra.mxu0 0.0
        %4138 = vmatprep.subr.mxu0 0.0
        %4139 = vmatpush1.msra.mxu0 0.0
        %4140 = vmatprep.subr.mxu0 0.0
        %4141 = vmatpush1.msra.mxu0 0.0
        %4142 = vmatprep.subr.mxu0 0.0
        %4143 = vmatpush1.msra.mxu0 0.0
        %4144 = vmatprep.subr.mxu0 0.0
        %4145 = vmatpush1.msra.mxu0 0.0
        %4146 = vmatprep.subr.mxu0 0.0
        %4147 = vmatpush1.msra.mxu0 0.0
        %4148 = vmatprep.mubr.f32.mxu0 0.0
        %4149 = vmatmul.mubr.f32.gmra.mrb[0].mxu0 %v4037
        %v4150 = vpop.f32.mrb[0].mxu0
        %v4151 = vadd.f32 0.0, %v4150
        %v4152 = vpop.f32.mrb[0].mxu0
        %4153 = vmatprep.mubr.f32.mxu0 0.0
        %4154 = vmatmul.mubr.f32.gmra.mrb[0].mxu0 %v4040
        %v4155 = vpop.f32.mrb[0].mxu0
        %v4156 = vadd.f32 0.0, %v4155
        %v4157 = vpop.f32.mrb[0].mxu0
        %4158 = vmatprep.mubr.f32.mxu0 0.0
        %4159 = vmatmul.mubr.f32.gmra.mrb[0].mxu0 %v4043
        %v4160 = vpop.f32.mrb[0].mxu0
        %v4161 = vadd.f32 0.0, %v4160
        %v4162 = vpop.f32.mrb[0].mxu0
        %4163 = vmatprep.mubr.f32.mxu0 0.0
        %4164 = vmatmul.mubr.f32.gmra.mrb[0].mxu0 %v4046
        %v4165 = vpop.f32.mrb[0].mxu0
        %v4166 = vadd.f32 0.0, %v4165
        %v4167 = vpop.f32.mrb[0].mxu0
        %4168 = vmatprep.mubr.f32.mxu0 0.0
        %4169 = vmatmul.mubr.f32.gmra.mrb[0].mxu0 %v4049
        %v4170 = vpop.f32.mrb[0].mxu0
        %v4171 = vadd.f32 0.0, %v4170
        %v4172 = vpop.f32.mrb[0].mxu0
        %4173 = vmatprep.mubr.f32.mxu0 0.0
        %4174 = vmatmul.mubr.f32.gmra.mrb[0].mxu0 %v4052
        %v4175 = vpop.f32.mrb[0].mxu0
        %v4176 = vadd.f32 0.0, %v4175
        %v4177 = vpop.f32.mrb[0].mxu0
        %4178 = vmatprep.mubr.f32.mxu0 0.0
        %4179 = vmatmul.mubr.f32.gmra.mrb[0].mxu0 %v4055
        %v4180 = vpop.f32.mrb[0].mxu0
        %v4181 = vadd.f32 0.0, %v4180
        %v4182 = vpop.f32.mrb[0].mxu0
        %4183 = vmatprep.mubr.f32.mxu0 0.0
        %4184 = vmatmul.mubr.f32.gmra.mrb[0].mxu0 %v4058
        %v4185 = vpop.f32.mrb[0].mxu0
        %v4186 = vadd.f32 0.0, %v4185
        %v4187 = vpop.f32.mrb[0].mxu0
        %4188 = vmatprep.mubr.f32.mxu0 0.0
        %4189 = vmatmul.mubr.f32.gmra.mrb[0].mxu0 %v4061
        %v4190 = vpop.f32.mrb[0].mxu0
        %v4191 = vadd.f32 0.0, %v4190
        %v4192 = vpop.f32.mrb[0].mxu0
        %4193 = vmatprep.mubr.f32.mxu0 0.0
        %4194 = vmatmul.mubr.f32.gmra.mrb[0].mxu0 %v4064
        %v4195 = vpop.f32.mrb[0].mxu0
        %v4196 = vadd.f32 0.0, %v4195
        %v4197 = vpop.f32.mrb[0].mxu0
        %4198 = vmatprep.mubr.f32.mxu0 0.0
        %4199 = vmatmul.mubr.f32.gmra.mrb[0].mxu0 %v4067
        %v4200 = vpop.f32.mrb[0].mxu0
        %v4201 = vadd.f32 0.0, %v4200
        %v4202 = vpop.f32.mrb[0].mxu0
        %4203 = vmatprep.mubr.f32.mxu0 0.0
        %4204 = vmatmul.mubr.f32.gmra.mrb[0].mxu0 %v4070
        %v4205 = vpop.f32.mrb[0].mxu0
        %v4206 = vadd.f32 0.0, %v4205
        %v4207 = vpop.f32.mrb[0].mxu0
        %4208 = vmatprep.mubr.f32.mxu0 0.0
        %4209 = vmatmul.mubr.f32.gmra.mrb[0].mxu0 %v4073
        %v4210 = vpop.f32.mrb[0].mxu0
        %v4211 = vadd.f32 0.0, %v4210
        %v4212 = vpop.f32.mrb[0].mxu0
        %4213 = vmatprep.mubr.f32.mxu0 0.0
        %4214 = vmatmul.mubr.f32.gmra.mrb[0].mxu0 %v4076
        %v4215 = vpop.f32.mrb[0].mxu0
        %v4216 = vadd.f32 0.0, %v4215
        %v4217 = vpop.f32.mrb[0].mxu0
        %4218 = vmatprep.mubr.f32.mxu0 0.0
        %4219 = vmatmul.mubr.f32.gmra.mrb[0].mxu0 %v4079
        %v4220 = vpop.f32.mrb[0].mxu0
        %v4221 = vadd.f32 0.0, %v4220
        %v4222 = vpop.f32.mrb[0].mxu0
        %4223 = vmatprep.mubr.f32.mxu0 0.0
        %4224 = vmatmul.mubr.f32.gmra.mrb[0].mxu0 %v4082
        %v4225 = vpop.f32.mrb[0].mxu0
        %v4226 = vadd.f32 0.0, %v4225
        %v4227 = vpop.f32.mrb[0].mxu0
        %4228 = vdwg.mxu0
        %v4229 = vadd.f32 %v4002, %v4151
        %v4230 = vadd.f32 %v4003, %v4156
        %v4231 = vadd.f32 %v4004, %v4161
        %v4232 = vadd.f32 %v4005, %v4166
        %v4233 = vadd.f32 %v4006, %v4171
        %v4234 = vadd.f32 %v4007, %v4176
        %v4235 = vadd.f32 %v4008, %v4181
        %v4236 = vadd.f32 %v4009, %v4186
        %v4237 = vadd.f32 %v4010, %v4191
        %v4238 = vadd.f32 %v4011, %v4196
        %v4239 = vadd.f32 %v4012, %v4201
        %v4240 = vadd.f32 %v4013, %v4206
        %v4241 = vadd.f32 %v4014, %v4211
        %v4242 = vadd.f32 %v4015, %v4216
        %v4243 = vadd.f32 %v4016, %v4221
        %v4244 = vadd.f32 %v4017, %v4226
        %s4245 = sadd.s32 %s360, 30
        %s4246 = smul.u32 %s4245, 56
        %s4247 = scalar_lea.vmem %s355, %s4246
        %v4248 = vld [vmem:[%s4247 + $0x6] sm:$0xff]
        %v4249 = vld [vmem:[%s4247 + $0xe] sm:$0xff]
        %v4250 = vld [vmem:[%s4247 + $0x3e] sm:$0xff]
        %v4251 = vld [vmem:[%s4247 + $0x46] sm:$0xff]
        %v4252 = vld [vmem:[%s4247 + $0x76] sm:$0xff]
        %v4253 = vld [vmem:[%s4247 + $0x7e] sm:$0xff]
        %v4254 = vld [vmem:[%s4247 + $0xae] sm:$0xff]
        %v4255 = vld [vmem:[%s4247 + $0xb6] sm:$0xff]
        %v4256 = vld [vmem:[%s4247 + $0xe6] sm:$0xff]
        %v4257 = vld [vmem:[%s4247 + $0xee] sm:$0xff]
        %v4258 = vld [vmem:[%s4247 + $0x11e] sm:$0xff]
        %v4259 = vld [vmem:[%s4247 + $0x126] sm:$0xff]
        %v4260 = vld [vmem:[%s4247 + $0x156] sm:$0xff]
        %v4261 = vld [vmem:[%s4247 + $0x15e] sm:$0xff]
        %v4262 = vld [vmem:[%s4247 + $0x18e] sm:$0xff]
        %v4263 = vld [vmem:[%s4247 + $0x196] sm:$0xff]
        %s4264 = scalar_lea.vmem %s2, 120
        %v4265 = vld [vmem:[%s4264] sm:$0xff]
        %v4267 = vsel %vm381, %v4248, 0
        %v4270 = vsel %vm381, %v4249, 0
        %v4273 = vsel %vm381, %v4250, 0
        %v4276 = vsel %vm381, %v4251, 0
        %v4279 = vsel %vm381, %v4252, 0
        %v4282 = vsel %vm381, %v4253, 0
        %v4285 = vsel %vm381, %v4254, 0
        %v4288 = vsel %vm381, %v4255, 0
        %v4291 = vsel %vm381, %v4256, 0
        %v4294 = vsel %vm381, %v4257, 0
        %v4297 = vsel %vm381, %v4258, 0
        %v4300 = vsel %vm381, %v4259, 0
        %v4303 = vsel %vm381, %v4260, 0
        %v4306 = vsel %vm381, %v4261, 0
        %v4309 = vsel %vm381, %v4262, 0
        %v4312 = vsel %vm381, %v4263, 0
        %4314 = vmatprep.subr.mxu0 0.0
        %4315 = vmatpush1.msra.mxu0 %v4265
        %4316 = vmatprep.subr.mxu0 0.0
        %4317 = vmatpush1.msra.mxu0 0.0
        %4318 = vmatprep.subr.mxu0 0.0
        %4319 = vmatpush1.msra.mxu0 0.0
        %4320 = vmatprep.subr.mxu0 0.0
        %4321 = vmatpush1.msra.mxu0 0.0
        %4322 = vmatprep.subr.mxu0 0.0
        %4323 = vmatpush1.msra.mxu0 0.0
        %4324 = vmatprep.subr.mxu0 0.0
        %4325 = vmatpush1.msra.mxu0 0.0
        %4326 = vmatprep.subr.mxu0 0.0
        %4327 = vmatpush1.msra.mxu0 0.0
        %4328 = vmatprep.subr.mxu0 0.0
        %4329 = vmatpush1.msra.mxu0 0.0
        %4330 = vmatprep.subr.mxu0 0.0
        %4331 = vmatpush1.msra.mxu0 0.0
        %4332 = vmatprep.subr.mxu0 0.0
        %4333 = vmatpush1.msra.mxu0 0.0
        %4334 = vmatprep.subr.mxu0 0.0
        %4335 = vmatpush1.msra.mxu0 0.0
        %4336 = vmatprep.subr.mxu0 0.0
        %4337 = vmatpush1.msra.mxu0 0.0
        %4338 = vmatprep.subr.mxu0 0.0
        %4339 = vmatpush1.msra.mxu0 0.0
        %4340 = vmatprep.subr.mxu0 0.0
        %4341 = vmatpush1.msra.mxu0 0.0
        %4342 = vmatprep.subr.mxu0 0.0
        %4343 = vmatpush1.msra.mxu0 0.0
        %4344 = vmatprep.subr.mxu0 0.0
        %4345 = vmatpush1.msra.mxu0 0.0
        %4346 = vmatprep.subr.mxu0 0.0
        %4347 = vmatpush1.msra.mxu0 0.0
        %4348 = vmatprep.subr.mxu0 0.0
        %4349 = vmatpush1.msra.mxu0 0.0
        %4350 = vmatprep.subr.mxu0 0.0
        %4351 = vmatpush1.msra.mxu0 0.0
        %4352 = vmatprep.subr.mxu0 0.0
        %4353 = vmatpush1.msra.mxu0 0.0
        %4354 = vmatprep.subr.mxu0 0.0
        %4355 = vmatpush1.msra.mxu0 0.0
        %4356 = vmatprep.subr.mxu0 0.0
        %4357 = vmatpush1.msra.mxu0 0.0
        %4358 = vmatprep.subr.mxu0 0.0
        %4359 = vmatpush1.msra.mxu0 0.0
        %4360 = vmatprep.subr.mxu0 0.0
        %4361 = vmatpush1.msra.mxu0 0.0
        %4362 = vmatprep.subr.mxu0 0.0
        %4363 = vmatpush1.msra.mxu0 0.0
        %4364 = vmatprep.subr.mxu0 0.0
        %4365 = vmatpush1.msra.mxu0 0.0
        %4366 = vmatprep.subr.mxu0 0.0
        %4367 = vmatpush1.msra.mxu0 0.0
        %4368 = vmatprep.subr.mxu0 0.0
        %4369 = vmatpush1.msra.mxu0 0.0
        %4370 = vmatprep.subr.mxu0 0.0
        %4371 = vmatpush1.msra.mxu0 0.0
        %4372 = vmatprep.subr.mxu0 0.0
        %4373 = vmatpush1.msra.mxu0 0.0
        %4374 = vmatprep.subr.mxu0 0.0
        %4375 = vmatpush1.msra.mxu0 0.0
        %4376 = vmatprep.subr.mxu0 0.0
        %4377 = vmatpush1.msra.mxu0 0.0
        %4378 = vmatprep.mubr.f32.mxu0 0.0
        %4379 = vmatmul.mubr.f32.gmra.mrb[0].mxu0 %v4267
        %v4380 = vpop.f32.mrb[0].mxu0
        %v4381 = vadd.f32 0.0, %v4380
        %v4382 = vpop.f32.mrb[0].mxu0
        %4383 = vmatprep.mubr.f32.mxu0 0.0
        %4384 = vmatmul.mubr.f32.gmra.mrb[0].mxu0 %v4270
        %v4385 = vpop.f32.mrb[0].mxu0
        %v4386 = vadd.f32 0.0, %v4385
        %v4387 = vpop.f32.mrb[0].mxu0
        %4388 = vmatprep.mubr.f32.mxu0 0.0
        %4389 = vmatmul.mubr.f32.gmra.mrb[0].mxu0 %v4273
        %v4390 = vpop.f32.mrb[0].mxu0
        %v4391 = vadd.f32 0.0, %v4390
        %v4392 = vpop.f32.mrb[0].mxu0
        %4393 = vmatprep.mubr.f32.mxu0 0.0
        %4394 = vmatmul.mubr.f32.gmra.mrb[0].mxu0 %v4276
        %v4395 = vpop.f32.mrb[0].mxu0
        %v4396 = vadd.f32 0.0, %v4395
        %v4397 = vpop.f32.mrb[0].mxu0
        %4398 = vmatprep.mubr.f32.mxu0 0.0
        %4399 = vmatmul.mubr.f32.gmra.mrb[0].mxu0 %v4279
        %v4400 = vpop.f32.mrb[0].mxu0
        %v4401 = vadd.f32 0.0, %v4400
        %v4402 = vpop.f32.mrb[0].mxu0
        %4403 = vmatprep.mubr.f32.mxu0 0.0
        %4404 = vmatmul.mubr.f32.gmra.mrb[0].mxu0 %v4282
        %v4405 = vpop.f32.mrb[0].mxu0
        %v4406 = vadd.f32 0.0, %v4405
        %v4407 = vpop.f32.mrb[0].mxu0
        %4408 = vmatprep.mubr.f32.mxu0 0.0
        %4409 = vmatmul.mubr.f32.gmra.mrb[0].mxu0 %v4285
        %v4410 = vpop.f32.mrb[0].mxu0
        %v4411 = vadd.f32 0.0, %v4410
        %v4412 = vpop.f32.mrb[0].mxu0
        %4413 = vmatprep.mubr.f32.mxu0 0.0
        %4414 = vmatmul.mubr.f32.gmra.mrb[0].mxu0 %v4288
        %v4415 = vpop.f32.mrb[0].mxu0
        %v4416 = vadd.f32 0.0, %v4415
        %v4417 = vpop.f32.mrb[0].mxu0
        %4418 = vmatprep.mubr.f32.mxu0 0.0
        %4419 = vmatmul.mubr.f32.gmra.mrb[0].mxu0 %v4291
        %v4420 = vpop.f32.mrb[0].mxu0
        %v4421 = vadd.f32 0.0, %v4420
        %v4422 = vpop.f32.mrb[0].mxu0
        %4423 = vmatprep.mubr.f32.mxu0 0.0
        %4424 = vmatmul.mubr.f32.gmra.mrb[0].mxu0 %v4294
        %v4425 = vpop.f32.mrb[0].mxu0
        %v4426 = vadd.f32 0.0, %v4425
        %v4427 = vpop.f32.mrb[0].mxu0
        %4428 = vmatprep.mubr.f32.mxu0 0.0
        %4429 = vmatmul.mubr.f32.gmra.mrb[0].mxu0 %v4297
        %v4430 = vpop.f32.mrb[0].mxu0
        %v4431 = vadd.f32 0.0, %v4430
        %v4432 = vpop.f32.mrb[0].mxu0
        %4433 = vmatprep.mubr.f32.mxu0 0.0
        %4434 = vmatmul.mubr.f32.gmra.mrb[0].mxu0 %v4300
        %v4435 = vpop.f32.mrb[0].mxu0
        %v4436 = vadd.f32 0.0, %v4435
        %v4437 = vpop.f32.mrb[0].mxu0
        %4438 = vmatprep.mubr.f32.mxu0 0.0
        %4439 = vmatmul.mubr.f32.gmra.mrb[0].mxu0 %v4303
        %v4440 = vpop.f32.mrb[0].mxu0
        %v4441 = vadd.f32 0.0, %v4440
        %v4442 = vpop.f32.mrb[0].mxu0
        %4443 = vmatprep.mubr.f32.mxu0 0.0
        %4444 = vmatmul.mubr.f32.gmra.mrb[0].mxu0 %v4306
        %v4445 = vpop.f32.mrb[0].mxu0
        %v4446 = vadd.f32 0.0, %v4445
        %v4447 = vpop.f32.mrb[0].mxu0
        %4448 = vmatprep.mubr.f32.mxu0 0.0
        %4449 = vmatmul.mubr.f32.gmra.mrb[0].mxu0 %v4309
        %v4450 = vpop.f32.mrb[0].mxu0
        %v4451 = vadd.f32 0.0, %v4450
        %v4452 = vpop.f32.mrb[0].mxu0
        %4453 = vmatprep.mubr.f32.mxu0 0.0
        %4454 = vmatmul.mubr.f32.gmra.mrb[0].mxu0 %v4312
        %v4455 = vpop.f32.mrb[0].mxu0
        %v4456 = vadd.f32 0.0, %v4455
        %v4457 = vpop.f32.mrb[0].mxu0
        %4458 = vdwg.mxu0
        %v4459 = vadd.f32 %v4229, %v4381
        %v4460 = vadd.f32 %v4230, %v4386
        %v4461 = vadd.f32 %v4231, %v4391
        %v4462 = vadd.f32 %v4232, %v4396
        %v4463 = vadd.f32 %v4233, %v4401
        %v4464 = vadd.f32 %v4234, %v4406
        %v4465 = vadd.f32 %v4235, %v4411
        %v4466 = vadd.f32 %v4236, %v4416
        %v4467 = vadd.f32 %v4237, %v4421
        %v4468 = vadd.f32 %v4238, %v4426
        %v4469 = vadd.f32 %v4239, %v4431
        %v4470 = vadd.f32 %v4240, %v4436
        %v4471 = vadd.f32 %v4241, %v4441
        %v4472 = vadd.f32 %v4242, %v4446
        %v4473 = vadd.f32 %v4243, %v4451
        %v4474 = vadd.f32 %v4244, %v4456
        %v4475 = vld [vmem:[%s4247 + $0x12] sm:$0xff]
        %v4476 = vld [vmem:[%s4247 + $0x1a] sm:$0xff]
        %v4477 = vld [vmem:[%s4247 + $0x4a] sm:$0xff]
        %v4478 = vld [vmem:[%s4247 + $0x52] sm:$0xff]
        %v4479 = vld [vmem:[%s4247 + $0x82] sm:$0xff]
        %v4480 = vld [vmem:[%s4247 + $0x8a] sm:$0xff]
        %v4481 = vld [vmem:[%s4247 + $0xba] sm:$0xff]
        %v4482 = vld [vmem:[%s4247 + $0xc2] sm:$0xff]
        %v4483 = vld [vmem:[%s4247 + $0xf2] sm:$0xff]
        %v4484 = vld [vmem:[%s4247 + $0xfa] sm:$0xff]
        %v4485 = vld [vmem:[%s4247 + $0x12a] sm:$0xff]
        %v4486 = vld [vmem:[%s4247 + $0x132] sm:$0xff]
        %v4487 = vld [vmem:[%s4247 + $0x162] sm:$0xff]
        %v4488 = vld [vmem:[%s4247 + $0x16a] sm:$0xff]
        %v4489 = vld [vmem:[%s4247 + $0x19a] sm:$0xff]
        %v4490 = vld [vmem:[%s4247 + $0x1a2] sm:$0xff]
        %s4491 = scalar_lea.vmem %s2, 128
        %v4492 = vld [vmem:[%s4491] sm:$0xff]
        %v4494 = vsel %vm381, %v4475, 0
        %v4497 = vsel %vm381, %v4476, 0
        %v4500 = vsel %vm381, %v4477, 0
        %v4503 = vsel %vm381, %v4478, 0
        %v4506 = vsel %vm381, %v4479, 0
        %v4509 = vsel %vm381, %v4480, 0
        %v4512 = vsel %vm381, %v4481, 0
        %v4515 = vsel %vm381, %v4482, 0
        %v4518 = vsel %vm381, %v4483, 0
        %v4521 = vsel %vm381, %v4484, 0
        %v4524 = vsel %vm381, %v4485, 0
        %v4527 = vsel %vm381, %v4486, 0
        %v4530 = vsel %vm381, %v4487, 0
        %v4533 = vsel %vm381, %v4488, 0
        %v4536 = vsel %vm381, %v4489, 0
        %v4539 = vsel %vm381, %v4490, 0
        %4541 = vmatprep.subr.mxu0 0.0
        %4542 = vmatpush1.msra.mxu0 %v4492
        %4543 = vmatprep.subr.mxu0 0.0
        %4544 = vmatpush1.msra.mxu0 0.0
        %4545 = vmatprep.subr.mxu0 0.0
        %4546 = vmatpush1.msra.mxu0 0.0
        %4547 = vmatprep.subr.mxu0 0.0
        %4548 = vmatpush1.msra.mxu0 0.0
        %4549 = vmatprep.subr.mxu0 0.0
        %4550 = vmatpush1.msra.mxu0 0.0
        %4551 = vmatprep.subr.mxu0 0.0
        %4552 = vmatpush1.msra.mxu0 0.0
        %4553 = vmatprep.subr.mxu0 0.0
        %4554 = vmatpush1.msra.mxu0 0.0
        %4555 = vmatprep.subr.mxu0 0.0
        %4556 = vmatpush1.msra.mxu0 0.0
        %4557 = vmatprep.subr.mxu0 0.0
        %4558 = vmatpush1.msra.mxu0 0.0
        %4559 = vmatprep.subr.mxu0 0.0
        %4560 = vmatpush1.msra.mxu0 0.0
        %4561 = vmatprep.subr.mxu0 0.0
        %4562 = vmatpush1.msra.mxu0 0.0
        %4563 = vmatprep.subr.mxu0 0.0
        %4564 = vmatpush1.msra.mxu0 0.0
        %4565 = vmatprep.subr.mxu0 0.0
        %4566 = vmatpush1.msra.mxu0 0.0
        %4567 = vmatprep.subr.mxu0 0.0
        %4568 = vmatpush1.msra.mxu0 0.0
        %4569 = vmatprep.subr.mxu0 0.0
        %4570 = vmatpush1.msra.mxu0 0.0
        %4571 = vmatprep.subr.mxu0 0.0
        %4572 = vmatpush1.msra.mxu0 0.0
        %4573 = vmatprep.subr.mxu0 0.0
        %4574 = vmatpush1.msra.mxu0 0.0
        %4575 = vmatprep.subr.mxu0 0.0
        %4576 = vmatpush1.msra.mxu0 0.0
        %4577 = vmatprep.subr.mxu0 0.0
        %4578 = vmatpush1.msra.mxu0 0.0
        %4579 = vmatprep.subr.mxu0 0.0
        %4580 = vmatpush1.msra.mxu0 0.0
        %4581 = vmatprep.subr.mxu0 0.0
        %4582 = vmatpush1.msra.mxu0 0.0
        %4583 = vmatprep.subr.mxu0 0.0
        %4584 = vmatpush1.msra.mxu0 0.0
        %4585 = vmatprep.subr.mxu0 0.0
        %4586 = vmatpush1.msra.mxu0 0.0
        %4587 = vmatprep.subr.mxu0 0.0
        %4588 = vmatpush1.msra.mxu0 0.0
        %4589 = vmatprep.subr.mxu0 0.0
        %4590 = vmatpush1.msra.mxu0 0.0
        %4591 = vmatprep.subr.mxu0 0.0
        %4592 = vmatpush1.msra.mxu0 0.0
        %4593 = vmatprep.subr.mxu0 0.0
        %4594 = vmatpush1.msra.mxu0 0.0
        %4595 = vmatprep.subr.mxu0 0.0
        %4596 = vmatpush1.msra.mxu0 0.0
        %4597 = vmatprep.subr.mxu0 0.0
        %4598 = vmatpush1.msra.mxu0 0.0
        %4599 = vmatprep.subr.mxu0 0.0
        %4600 = vmatpush1.msra.mxu0 0.0
        %4601 = vmatprep.subr.mxu0 0.0
        %4602 = vmatpush1.msra.mxu0 0.0
        %4603 = vmatprep.subr.mxu0 0.0
        %4604 = vmatpush1.msra.mxu0 0.0
        %4605 = vmatprep.mubr.f32.mxu0 0.0
        %4606 = vmatmul.mubr.f32.gmra.mrb[0].mxu0 %v4494
        %v4607 = vpop.f32.mrb[0].mxu0
        %v4608 = vadd.f32 0.0, %v4607
        %v4609 = vpop.f32.mrb[0].mxu0
        %4610 = vmatprep.mubr.f32.mxu0 0.0
        %4611 = vmatmul.mubr.f32.gmra.mrb[0].mxu0 %v4497
        %v4612 = vpop.f32.mrb[0].mxu0
        %v4613 = vadd.f32 0.0, %v4612
        %v4614 = vpop.f32.mrb[0].mxu0
        %4615 = vmatprep.mubr.f32.mxu0 0.0
        %4616 = vmatmul.mubr.f32.gmra.mrb[0].mxu0 %v4500
        %v4617 = vpop.f32.mrb[0].mxu0
        %v4618 = vadd.f32 0.0, %v4617
        %v4619 = vpop.f32.mrb[0].mxu0
        %4620 = vmatprep.mubr.f32.mxu0 0.0
        %4621 = vmatmul.mubr.f32.gmra.mrb[0].mxu0 %v4503
        %v4622 = vpop.f32.mrb[0].mxu0
        %v4623 = vadd.f32 0.0, %v4622
        %v4624 = vpop.f32.mrb[0].mxu0
        %4625 = vmatprep.mubr.f32.mxu0 0.0
        %4626 = vmatmul.mubr.f32.gmra.mrb[0].mxu0 %v4506
        %v4627 = vpop.f32.mrb[0].mxu0
        %v4628 = vadd.f32 0.0, %v4627
        %v4629 = vpop.f32.mrb[0].mxu0
        %4630 = vmatprep.mubr.f32.mxu0 0.0
        %4631 = vmatmul.mubr.f32.gmra.mrb[0].mxu0 %v4509
        %v4632 = vpop.f32.mrb[0].mxu0
        %v4633 = vadd.f32 0.0, %v4632
        %v4634 = vpop.f32.mrb[0].mxu0
        %4635 = vmatprep.mubr.f32.mxu0 0.0
        %4636 = vmatmul.mubr.f32.gmra.mrb[0].mxu0 %v4512
        %v4637 = vpop.f32.mrb[0].mxu0
        %v4638 = vadd.f32 0.0, %v4637
        %v4639 = vpop.f32.mrb[0].mxu0
        %4640 = vmatprep.mubr.f32.mxu0 0.0
        %4641 = vmatmul.mubr.f32.gmra.mrb[0].mxu0 %v4515
        %v4642 = vpop.f32.mrb[0].mxu0
        %v4643 = vadd.f32 0.0, %v4642
        %v4644 = vpop.f32.mrb[0].mxu0
        %4645 = vmatprep.mubr.f32.mxu0 0.0
        %4646 = vmatmul.mubr.f32.gmra.mrb[0].mxu0 %v4518
        %v4647 = vpop.f32.mrb[0].mxu0
        %v4648 = vadd.f32 0.0, %v4647
        %v4649 = vpop.f32.mrb[0].mxu0
        %4650 = vmatprep.mubr.f32.mxu0 0.0
        %4651 = vmatmul.mubr.f32.gmra.mrb[0].mxu0 %v4521
        %v4652 = vpop.f32.mrb[0].mxu0
        %v4653 = vadd.f32 0.0, %v4652
        %v4654 = vpop.f32.mrb[0].mxu0
        %4655 = vmatprep.mubr.f32.mxu0 0.0
        %4656 = vmatmul.mubr.f32.gmra.mrb[0].mxu0 %v4524
        %v4657 = vpop.f32.mrb[0].mxu0
        %v4658 = vadd.f32 0.0, %v4657
        %v4659 = vpop.f32.mrb[0].mxu0
        %4660 = vmatprep.mubr.f32.mxu0 0.0
        %4661 = vmatmul.mubr.f32.gmra.mrb[0].mxu0 %v4527
        %v4662 = vpop.f32.mrb[0].mxu0
        %v4663 = vadd.f32 0.0, %v4662
        %v4664 = vpop.f32.mrb[0].mxu0
        %4665 = vmatprep.mubr.f32.mxu0 0.0
        %4666 = vmatmul.mubr.f32.gmra.mrb[0].mxu0 %v4530
        %v4667 = vpop.f32.mrb[0].mxu0
        %v4668 = vadd.f32 0.0, %v4667
        %v4669 = vpop.f32.mrb[0].mxu0
        %4670 = vmatprep.mubr.f32.mxu0 0.0
        %4671 = vmatmul.mubr.f32.gmra.mrb[0].mxu0 %v4533
        %v4672 = vpop.f32.mrb[0].mxu0
        %v4673 = vadd.f32 0.0, %v4672
        %v4674 = vpop.f32.mrb[0].mxu0
        %4675 = vmatprep.mubr.f32.mxu0 0.0
        %4676 = vmatmul.mubr.f32.gmra.mrb[0].mxu0 %v4536
        %v4677 = vpop.f32.mrb[0].mxu0
        %v4678 = vadd.f32 0.0, %v4677
        %v4679 = vpop.f32.mrb[0].mxu0
        %4680 = vmatprep.mubr.f32.mxu0 0.0
        %4681 = vmatmul.mubr.f32.gmra.mrb[0].mxu0 %v4539
        %v4682 = vpop.f32.mrb[0].mxu0
        %v4683 = vadd.f32 0.0, %v4682
        %v4684 = vpop.f32.mrb[0].mxu0
        %4685 = vdwg.mxu0
        %v4686 = vadd.f32 %v4459, %v4608
        %v4687 = vadd.f32 %v4460, %v4613
        %v4688 = vadd.f32 %v4461, %v4618
        %v4689 = vadd.f32 %v4462, %v4623
        %v4690 = vadd.f32 %v4463, %v4628
        %v4691 = vadd.f32 %v4464, %v4633
        %v4692 = vadd.f32 %v4465, %v4638
        %v4693 = vadd.f32 %v4466, %v4643
        %v4694 = vadd.f32 %v4467, %v4648
        %v4695 = vadd.f32 %v4468, %v4653
        %v4696 = vadd.f32 %v4469, %v4658
        %v4697 = vadd.f32 %v4470, %v4663
        %v4698 = vadd.f32 %v4471, %v4668
        %v4699 = vadd.f32 %v4472, %v4673
        %v4700 = vadd.f32 %v4473, %v4678
        %v4701 = vadd.f32 %v4474, %v4683
        %v4702 = vld [vmem:[%s4247 + $0x1e] sm:$0xff]
        %v4703 = vld [vmem:[%s4247 + $0x26] sm:$0xff]
        %v4704 = vld [vmem:[%s4247 + $0x56] sm:$0xff]
        %v4705 = vld [vmem:[%s4247 + $0x5e] sm:$0xff]
        %v4706 = vld [vmem:[%s4247 + $0x8e] sm:$0xff]
        %v4707 = vld [vmem:[%s4247 + $0x96] sm:$0xff]
        %v4708 = vld [vmem:[%s4247 + $0xc6] sm:$0xff]
        %v4709 = vld [vmem:[%s4247 + $0xce] sm:$0xff]
        %v4710 = vld [vmem:[%s4247 + $0xfe] sm:$0xff]
        %v4711 = vld [vmem:[%s4247 + $0x106] sm:$0xff]
        %v4712 = vld [vmem:[%s4247 + $0x136] sm:$0xff]
        %v4713 = vld [vmem:[%s4247 + $0x13e] sm:$0xff]
        %v4714 = vld [vmem:[%s4247 + $0x16e] sm:$0xff]
        %v4715 = vld [vmem:[%s4247 + $0x176] sm:$0xff]
        %v4716 = vld [vmem:[%s4247 + $0x1a6] sm:$0xff]
        %v4717 = vld [vmem:[%s4247 + $0x1ae] sm:$0xff]
        %s4718 = scalar_lea.vmem %s2, 136
        %v4719 = vld [vmem:[%s4718] sm:$0xff]
        %v4721 = vsel %vm381, %v4702, 0
        %v4724 = vsel %vm381, %v4703, 0
        %v4727 = vsel %vm381, %v4704, 0
        %v4730 = vsel %vm381, %v4705, 0
        %v4733 = vsel %vm381, %v4706, 0
        %v4736 = vsel %vm381, %v4707, 0
        %v4739 = vsel %vm381, %v4708, 0
        %v4742 = vsel %vm381, %v4709, 0
        %v4745 = vsel %vm381, %v4710, 0
        %v4748 = vsel %vm381, %v4711, 0
        %v4751 = vsel %vm381, %v4712, 0
        %v4754 = vsel %vm381, %v4713, 0
        %v4757 = vsel %vm381, %v4714, 0
        %v4760 = vsel %vm381, %v4715, 0
        %v4763 = vsel %vm381, %v4716, 0
        %v4766 = vsel %vm381, %v4717, 0
        %4768 = vmatprep.subr.mxu0 0.0
        %4769 = vmatpush1.msra.mxu0 %v4719
        %4770 = vmatprep.subr.mxu0 0.0
        %4771 = vmatpush1.msra.mxu0 0.0
        %4772 = vmatprep.subr.mxu0 0.0
        %4773 = vmatpush1.msra.mxu0 0.0
        %4774 = vmatprep.subr.mxu0 0.0
        %4775 = vmatpush1.msra.mxu0 0.0
        %4776 = vmatprep.subr.mxu0 0.0
        %4777 = vmatpush1.msra.mxu0 0.0
        %4778 = vmatprep.subr.mxu0 0.0
        %4779 = vmatpush1.msra.mxu0 0.0
        %4780 = vmatprep.subr.mxu0 0.0
        %4781 = vmatpush1.msra.mxu0 0.0
        %4782 = vmatprep.subr.mxu0 0.0
        %4783 = vmatpush1.msra.mxu0 0.0
        %4784 = vmatprep.subr.mxu0 0.0
        %4785 = vmatpush1.msra.mxu0 0.0
        %4786 = vmatprep.subr.mxu0 0.0
        %4787 = vmatpush1.msra.mxu0 0.0
        %4788 = vmatprep.subr.mxu0 0.0
        %4789 = vmatpush1.msra.mxu0 0.0
        %4790 = vmatprep.subr.mxu0 0.0
        %4791 = vmatpush1.msra.mxu0 0.0
        %4792 = vmatprep.subr.mxu0 0.0
        %4793 = vmatpush1.msra.mxu0 0.0
        %4794 = vmatprep.subr.mxu0 0.0
        %4795 = vmatpush1.msra.mxu0 0.0
        %4796 = vmatprep.subr.mxu0 0.0
        %4797 = vmatpush1.msra.mxu0 0.0
        %4798 = vmatprep.subr.mxu0 0.0
        %4799 = vmatpush1.msra.mxu0 0.0
        %4800 = vmatprep.subr.mxu0 0.0
        %4801 = vmatpush1.msra.mxu0 0.0
        %4802 = vmatprep.subr.mxu0 0.0
        %4803 = vmatpush1.msra.mxu0 0.0
        %4804 = vmatprep.subr.mxu0 0.0
        %4805 = vmatpush1.msra.mxu0 0.0
        %4806 = vmatprep.subr.mxu0 0.0
        %4807 = vmatpush1.msra.mxu0 0.0
        %4808 = vmatprep.subr.mxu0 0.0
        %4809 = vmatpush1.msra.mxu0 0.0
        %4810 = vmatprep.subr.mxu0 0.0
        %4811 = vmatpush1.msra.mxu0 0.0
        %4812 = vmatprep.subr.mxu0 0.0
        %4813 = vmatpush1.msra.mxu0 0.0
        %4814 = vmatprep.subr.mxu0 0.0
        %4815 = vmatpush1.msra.mxu0 0.0
        %4816 = vmatprep.subr.mxu0 0.0
        %4817 = vmatpush1.msra.mxu0 0.0
        %4818 = vmatprep.subr.mxu0 0.0
        %4819 = vmatpush1.msra.mxu0 0.0
        %4820 = vmatprep.subr.mxu0 0.0
        %4821 = vmatpush1.msra.mxu0 0.0
        %4822 = vmatprep.subr.mxu0 0.0
        %4823 = vmatpush1.msra.mxu0 0.0
        %4824 = vmatprep.subr.mxu0 0.0
        %4825 = vmatpush1.msra.mxu0 0.0
        %4826 = vmatprep.subr.mxu0 0.0
        %4827 = vmatpush1.msra.mxu0 0.0
        %4828 = vmatprep.subr.mxu0 0.0
        %4829 = vmatpush1.msra.mxu0 0.0
        %4830 = vmatprep.subr.mxu0 0.0
        %4831 = vmatpush1.msra.mxu0 0.0
        %4832 = vmatprep.mubr.f32.mxu0 0.0
        %4833 = vmatmul.mubr.f32.gmra.mrb[0].mxu0 %v4721
        %v4834 = vpop.f32.mrb[0].mxu0
        %v4835 = vadd.f32 0.0, %v4834
        %v4836 = vpop.f32.mrb[0].mxu0
        %4837 = vmatprep.mubr.f32.mxu0 0.0
        %4838 = vmatmul.mubr.f32.gmra.mrb[0].mxu0 %v4724
        %v4839 = vpop.f32.mrb[0].mxu0
        %v4840 = vadd.f32 0.0, %v4839
        %v4841 = vpop.f32.mrb[0].mxu0
        %4842 = vmatprep.mubr.f32.mxu0 0.0
        %4843 = vmatmul.mubr.f32.gmra.mrb[0].mxu0 %v4727
        %v4844 = vpop.f32.mrb[0].mxu0
        %v4845 = vadd.f32 0.0, %v4844
        %v4846 = vpop.f32.mrb[0].mxu0
        %4847 = vmatprep.mubr.f32.mxu0 0.0
        %4848 = vmatmul.mubr.f32.gmra.mrb[0].mxu0 %v4730
        %v4849 = vpop.f32.mrb[0].mxu0
        %v4850 = vadd.f32 0.0, %v4849
        %v4851 = vpop.f32.mrb[0].mxu0
        %4852 = vmatprep.mubr.f32.mxu0 0.0
        %4853 = vmatmul.mubr.f32.gmra.mrb[0].mxu0 %v4733
        %v4854 = vpop.f32.mrb[0].mxu0
        %v4855 = vadd.f32 0.0, %v4854
        %v4856 = vpop.f32.mrb[0].mxu0
        %4857 = vmatprep.mubr.f32.mxu0 0.0
        %4858 = vmatmul.mubr.f32.gmra.mrb[0].mxu0 %v4736
        %v4859 = vpop.f32.mrb[0].mxu0
        %v4860 = vadd.f32 0.0, %v4859
        %v4861 = vpop.f32.mrb[0].mxu0
        %4862 = vmatprep.mubr.f32.mxu0 0.0
        %4863 = vmatmul.mubr.f32.gmra.mrb[0].mxu0 %v4739
        %v4864 = vpop.f32.mrb[0].mxu0
        %v4865 = vadd.f32 0.0, %v4864
        %v4866 = vpop.f32.mrb[0].mxu0
        %4867 = vmatprep.mubr.f32.mxu0 0.0
        %4868 = vmatmul.mubr.f32.gmra.mrb[0].mxu0 %v4742
        %v4869 = vpop.f32.mrb[0].mxu0
        %v4870 = vadd.f32 0.0, %v4869
        %v4871 = vpop.f32.mrb[0].mxu0
        %4872 = vmatprep.mubr.f32.mxu0 0.0
        %4873 = vmatmul.mubr.f32.gmra.mrb[0].mxu0 %v4745
        %v4874 = vpop.f32.mrb[0].mxu0
        %v4875 = vadd.f32 0.0, %v4874
        %v4876 = vpop.f32.mrb[0].mxu0
        %4877 = vmatprep.mubr.f32.mxu0 0.0
        %4878 = vmatmul.mubr.f32.gmra.mrb[0].mxu0 %v4748
        %v4879 = vpop.f32.mrb[0].mxu0
        %v4880 = vadd.f32 0.0, %v4879
        %v4881 = vpop.f32.mrb[0].mxu0
        %4882 = vmatprep.mubr.f32.mxu0 0.0
        %4883 = vmatmul.mubr.f32.gmra.mrb[0].mxu0 %v4751
        %v4884 = vpop.f32.mrb[0].mxu0
        %v4885 = vadd.f32 0.0, %v4884
        %v4886 = vpop.f32.mrb[0].mxu0
        %4887 = vmatprep.mubr.f32.mxu0 0.0
        %4888 = vmatmul.mubr.f32.gmra.mrb[0].mxu0 %v4754
        %v4889 = vpop.f32.mrb[0].mxu0
        %v4890 = vadd.f32 0.0, %v4889
        %v4891 = vpop.f32.mrb[0].mxu0
        %4892 = vmatprep.mubr.f32.mxu0 0.0
        %4893 = vmatmul.mubr.f32.gmra.mrb[0].mxu0 %v4757
        %v4894 = vpop.f32.mrb[0].mxu0
        %v4895 = vadd.f32 0.0, %v4894
        %v4896 = vpop.f32.mrb[0].mxu0
        %4897 = vmatprep.mubr.f32.mxu0 0.0
        %4898 = vmatmul.mubr.f32.gmra.mrb[0].mxu0 %v4760
        %v4899 = vpop.f32.mrb[0].mxu0
        %v4900 = vadd.f32 0.0, %v4899
        %v4901 = vpop.f32.mrb[0].mxu0
        %4902 = vmatprep.mubr.f32.mxu0 0.0
        %4903 = vmatmul.mubr.f32.gmra.mrb[0].mxu0 %v4763
        %v4904 = vpop.f32.mrb[0].mxu0
        %v4905 = vadd.f32 0.0, %v4904
        %v4906 = vpop.f32.mrb[0].mxu0
        %4907 = vmatprep.mubr.f32.mxu0 0.0
        %4908 = vmatmul.mubr.f32.gmra.mrb[0].mxu0 %v4766
        %v4909 = vpop.f32.mrb[0].mxu0
        %v4910 = vadd.f32 0.0, %v4909
        %v4911 = vpop.f32.mrb[0].mxu0
        %4912 = vdwg.mxu0
        %v4913 = vadd.f32 %v4686, %v4835
        %v4914 = vadd.f32 %v4687, %v4840
        %v4915 = vadd.f32 %v4688, %v4845
        %v4916 = vadd.f32 %v4689, %v4850
        %v4917 = vadd.f32 %v4690, %v4855
        %v4918 = vadd.f32 %v4691, %v4860
        %v4919 = vadd.f32 %v4692, %v4865
        %v4920 = vadd.f32 %v4693, %v4870
        %v4921 = vadd.f32 %v4694, %v4875
        %v4922 = vadd.f32 %v4695, %v4880
        %v4923 = vadd.f32 %v4696, %v4885
        %v4924 = vadd.f32 %v4697, %v4890
        %v4925 = vadd.f32 %v4698, %v4895
        %v4926 = vadd.f32 %v4699, %v4900
        %v4927 = vadd.f32 %v4700, %v4905
        %v4928 = vadd.f32 %v4701, %v4910
        %s4929 = scalar_lea.vmem %s4, 2
        %v4930 = vld [vmem:[%s4929] sm:$0x1]
        %v4932 = vlaneseq
        %v4933 = vshrl.u32 %v4932, 7
        %v4934 = vsub.s32 0, %v4933
        %v4935 = vrot.slane %v4930, %v4934
        %v4937 = vmul.f32 %v4913, %v4935
        %v4938 = vmul.f32 %v4914, %v4935
        %v4939 = vmul.f32 %v4915, %v4935
        %v4940 = vmul.f32 %v4916, %v4935
        %v4941 = vmul.f32 %v4917, %v4935
        %v4942 = vmul.f32 %v4918, %v4935
        %v4943 = vmul.f32 %v4919, %v4935
        %v4944 = vmul.f32 %v4920, %v4935
        %v4945 = vmul.f32 %v4921, %v4935
        %v4946 = vmul.f32 %v4922, %v4935
        %v4947 = vmul.f32 %v4923, %v4935
        %v4948 = vmul.f32 %v4924, %v4935
        %v4949 = vmul.f32 %v4925, %v4935
        %v4950 = vmul.f32 %v4926, %v4935
        %v4951 = vmul.f32 %v4927, %v4935
        %v4952 = vmul.f32 %v4928, %v4935
        %s4953 = scalar_lea.vmem %s5, 2
        %v4954 = vld [vmem:[%s4953] sm:$0x1]
        %v4956 = vlaneseq
        %v4957 = vshrl.u32 %v4956, 7
        %v4958 = vsub.s32 0, %v4957
        %v4959 = vrot.slane %v4954, %v4958
        %v4961 = vadd.f32 %v4937, %v4959
        %v4962 = vadd.f32 %v4938, %v4959
        %v4963 = vadd.f32 %v4939, %v4959
        %v4964 = vadd.f32 %v4940, %v4959
        %v4965 = vadd.f32 %v4941, %v4959
        %v4966 = vadd.f32 %v4942, %v4959
        %v4967 = vadd.f32 %v4943, %v4959
        %v4968 = vadd.f32 %v4944, %v4959
        %v4969 = vadd.f32 %v4945, %v4959
        %v4970 = vadd.f32 %v4946, %v4959
        %v4971 = vadd.f32 %v4947, %v4959
        %v4972 = vadd.f32 %v4948, %v4959
        %v4973 = vadd.f32 %v4949, %v4959
        %v4974 = vadd.f32 %v4950, %v4959
        %v4975 = vadd.f32 %v4951, %v4959
        %v4976 = vadd.f32 %v4952, %v4959
        %v4977 = vmax.f32 %v4961, 0.0
        %v4978 = vmax.f32 %v4962, 0.0
        %v4979 = vmax.f32 %v4963, 0.0
        %v4980 = vmax.f32 %v4964, 0.0
        %v4981 = vmax.f32 %v4965, 0.0
        %v4982 = vmax.f32 %v4966, 0.0
        %v4983 = vmax.f32 %v4967, 0.0
        %v4984 = vmax.f32 %v4968, 0.0
        %v4985 = vmax.f32 %v4969, 0.0
        %v4986 = vmax.f32 %v4970, 0.0
        %v4987 = vmax.f32 %v4971, 0.0
        %v4988 = vmax.f32 %v4972, 0.0
        %v4989 = vmax.f32 %v4973, 0.0
        %v4990 = vmax.f32 %v4974, 0.0
        %v4991 = vmax.f32 %v4975, 0.0
        %v4992 = vmax.f32 %v4976, 0.0
        %s4993 = scalar_lea.vmem %s3, 256
        %v4994 = vld [vmem:[%s4993] sm:$0xff]
        %v4995 = vld [vmem:[%s4993 + $0x8] sm:$0xff]
        %v4996 = vld [vmem:[%s4993 + $0x10] sm:$0xff]
        %v4997 = vld [vmem:[%s4993 + $0x18] sm:$0xff]
        %v4998 = vld [vmem:[%s4993 + $0x20] sm:$0xff]
        %v4999 = vld [vmem:[%s4993 + $0x28] sm:$0xff]
        %v5000 = vld [vmem:[%s4993 + $0x30] sm:$0xff]
        %v5001 = vld [vmem:[%s4993 + $0x38] sm:$0xff]
        %v5002 = vld [vmem:[%s4993 + $0x40] sm:$0xff]
        %v5003 = vld [vmem:[%s4993 + $0x48] sm:$0xff]
        %v5004 = vld [vmem:[%s4993 + $0x50] sm:$0xff]
        %v5005 = vld [vmem:[%s4993 + $0x58] sm:$0xff]
        %v5006 = vld [vmem:[%s4993 + $0x60] sm:$0xff]
        %v5007 = vld [vmem:[%s4993 + $0x68] sm:$0xff]
        %v5008 = vld [vmem:[%s4993 + $0x70] sm:$0xff]
        %v5009 = vld [vmem:[%s4993 + $0x78] sm:$0xff]
        %5010 = vmatprep.subr.mxu0 0.0
        %5011 = vmatpush1.msra.mxu0 %v4994
        %5012 = vmatprep.subr.mxu0 0.0
        %5013 = vmatpush1.msra.mxu0 %v4995
        %5014 = vmatprep.subr.mxu0 0.0
        %5015 = vmatpush1.msra.mxu0 %v4996
        %5016 = vmatprep.subr.mxu0 0.0
        %5017 = vmatpush1.msra.mxu0 %v4997
        %5018 = vmatprep.subr.mxu0 0.0
        %5019 = vmatpush1.msra.mxu0 %v4998
        %5020 = vmatprep.subr.mxu0 0.0
        %5021 = vmatpush1.msra.mxu0 %v4999
        %5022 = vmatprep.subr.mxu0 0.0
        %5023 = vmatpush1.msra.mxu0 %v5000
        %5024 = vmatprep.subr.mxu0 0.0
        %5025 = vmatpush1.msra.mxu0 %v5001
        %5026 = vmatprep.subr.mxu0 0.0
        %5027 = vmatpush1.msra.mxu0 %v5002
        %5028 = vmatprep.subr.mxu0 0.0
        %5029 = vmatpush1.msra.mxu0 %v5003
        %5030 = vmatprep.subr.mxu0 0.0
        %5031 = vmatpush1.msra.mxu0 %v5004
        %5032 = vmatprep.subr.mxu0 0.0
        %5033 = vmatpush1.msra.mxu0 %v5005
        %5034 = vmatprep.subr.mxu0 0.0
        %5035 = vmatpush1.msra.mxu0 %v5006
        %5036 = vmatprep.subr.mxu0 0.0
        %5037 = vmatpush1.msra.mxu0 %v5007
        %5038 = vmatprep.subr.mxu0 0.0
        %5039 = vmatpush1.msra.mxu0 %v5008
        %5040 = vmatprep.subr.mxu0 0.0
        %5041 = vmatpush1.msra.mxu0 %v5009
        %5042 = vmatprep.subr.mxu0 0.0
        %5043 = vmatpush1.msra.mxu0 0.0
        %5044 = vmatprep.subr.mxu0 0.0
        %5045 = vmatpush1.msra.mxu0 0.0
        %5046 = vmatprep.subr.mxu0 0.0
        %5047 = vmatpush1.msra.mxu0 0.0
        %5048 = vmatprep.subr.mxu0 0.0
        %5049 = vmatpush1.msra.mxu0 0.0
        %5050 = vmatprep.subr.mxu0 0.0
        %5051 = vmatpush1.msra.mxu0 0.0
        %5052 = vmatprep.subr.mxu0 0.0
        %5053 = vmatpush1.msra.mxu0 0.0
        %5054 = vmatprep.subr.mxu0 0.0
        %5055 = vmatpush1.msra.mxu0 0.0
        %5056 = vmatprep.subr.mxu0 0.0
        %5057 = vmatpush1.msra.mxu0 0.0
        %5058 = vmatprep.subr.mxu0 0.0
        %5059 = vmatpush1.msra.mxu0 0.0
        %5060 = vmatprep.subr.mxu0 0.0
        %5061 = vmatpush1.msra.mxu0 0.0
        %5062 = vmatprep.subr.mxu0 0.0
        %5063 = vmatpush1.msra.mxu0 0.0
        %5064 = vmatprep.subr.mxu0 0.0
        %5065 = vmatpush1.msra.mxu0 0.0
        %5066 = vmatprep.subr.mxu0 0.0
        %5067 = vmatpush1.msra.mxu0 0.0
        %5068 = vmatprep.subr.mxu0 0.0
        %5069 = vmatpush1.msra.mxu0 0.0
        %5070 = vmatprep.subr.mxu0 0.0
        %5071 = vmatpush1.msra.mxu0 0.0
        %5072 = vmatprep.subr.mxu0 0.0
        %5073 = vmatpush1.msra.mxu0 0.0
        %5074 = vmatprep.mubr.f32.mxu0 0.0
        %5075 = vmatmul.mubr.f32.gmra.mrb[0].mxu0 %v4977
        %v5076 = vpop.f32.mrb[0].mxu0
        %v5077 = vadd.f32 0.0, %v5076
        %v5078 = vpop.f32.mrb[0].mxu0
        %5079 = vmatprep.mubr.f32.mxu0 0.0
        %5080 = vmatmul.mubr.f32.gmra.mrb[0].mxu0 %v4978
        %v5081 = vpop.f32.mrb[0].mxu0
        %v5082 = vadd.f32 0.0, %v5081
        %v5083 = vpop.f32.mrb[0].mxu0
        %5084 = vmatprep.mubr.f32.mxu0 0.0
        %5085 = vmatmul.mubr.f32.gmra.mrb[0].mxu0 %v4979
        %v5086 = vpop.f32.mrb[0].mxu0
        %v5087 = vadd.f32 0.0, %v5086
        %v5088 = vpop.f32.mrb[0].mxu0
        %5089 = vmatprep.mubr.f32.mxu0 0.0
        %5090 = vmatmul.mubr.f32.gmra.mrb[0].mxu0 %v4980
        %v5091 = vpop.f32.mrb[0].mxu0
        %v5092 = vadd.f32 0.0, %v5091
        %v5093 = vpop.f32.mrb[0].mxu0
        %5094 = vmatprep.mubr.f32.mxu0 0.0
        %5095 = vmatmul.mubr.f32.gmra.mrb[0].mxu0 %v4981
        %v5096 = vpop.f32.mrb[0].mxu0
        %v5097 = vadd.f32 0.0, %v5096
        %v5098 = vpop.f32.mrb[0].mxu0
        %5099 = vmatprep.mubr.f32.mxu0 0.0
        %5100 = vmatmul.mubr.f32.gmra.mrb[0].mxu0 %v4982
        %v5101 = vpop.f32.mrb[0].mxu0
        %v5102 = vadd.f32 0.0, %v5101
        %v5103 = vpop.f32.mrb[0].mxu0
        %5104 = vmatprep.mubr.f32.mxu0 0.0
        %5105 = vmatmul.mubr.f32.gmra.mrb[0].mxu0 %v4983
        %v5106 = vpop.f32.mrb[0].mxu0
        %v5107 = vadd.f32 0.0, %v5106
        %v5108 = vpop.f32.mrb[0].mxu0
        %5109 = vmatprep.mubr.f32.mxu0 0.0
        %5110 = vmatmul.mubr.f32.gmra.mrb[0].mxu0 %v4984
        %v5111 = vpop.f32.mrb[0].mxu0
        %v5112 = vadd.f32 0.0, %v5111
        %v5113 = vpop.f32.mrb[0].mxu0
        %5114 = vmatprep.mubr.f32.mxu0 0.0
        %5115 = vmatmul.mubr.f32.gmra.mrb[0].mxu0 %v4985
        %v5116 = vpop.f32.mrb[0].mxu0
        %v5117 = vadd.f32 0.0, %v5116
        %v5118 = vpop.f32.mrb[0].mxu0
        %5119 = vmatprep.mubr.f32.mxu0 0.0
        %5120 = vmatmul.mubr.f32.gmra.mrb[0].mxu0 %v4986
        %v5121 = vpop.f32.mrb[0].mxu0
        %v5122 = vadd.f32 0.0, %v5121
        %v5123 = vpop.f32.mrb[0].mxu0
        %5124 = vmatprep.mubr.f32.mxu0 0.0
        %5125 = vmatmul.mubr.f32.gmra.mrb[0].mxu0 %v4987
        %v5126 = vpop.f32.mrb[0].mxu0
        %v5127 = vadd.f32 0.0, %v5126
        %v5128 = vpop.f32.mrb[0].mxu0
        %5129 = vmatprep.mubr.f32.mxu0 0.0
        %5130 = vmatmul.mubr.f32.gmra.mrb[0].mxu0 %v4988
        %v5131 = vpop.f32.mrb[0].mxu0
        %v5132 = vadd.f32 0.0, %v5131
        %v5133 = vpop.f32.mrb[0].mxu0
        %5134 = vmatprep.mubr.f32.mxu0 0.0
        %5135 = vmatmul.mubr.f32.gmra.mrb[0].mxu0 %v4989
        %v5136 = vpop.f32.mrb[0].mxu0
        %v5137 = vadd.f32 0.0, %v5136
        %v5138 = vpop.f32.mrb[0].mxu0
        %5139 = vmatprep.mubr.f32.mxu0 0.0
        %5140 = vmatmul.mubr.f32.gmra.mrb[0].mxu0 %v4990
        %v5141 = vpop.f32.mrb[0].mxu0
        %v5142 = vadd.f32 0.0, %v5141
        %v5143 = vpop.f32.mrb[0].mxu0
        %5144 = vmatprep.mubr.f32.mxu0 0.0
        %5145 = vmatmul.mubr.f32.gmra.mrb[0].mxu0 %v4991
        %v5146 = vpop.f32.mrb[0].mxu0
        %v5147 = vadd.f32 0.0, %v5146
        %v5148 = vpop.f32.mrb[0].mxu0
        %5149 = vmatprep.mubr.f32.mxu0 0.0
        %5150 = vmatmul.mubr.f32.gmra.mrb[0].mxu0 %v4992
        %v5151 = vpop.f32.mrb[0].mxu0
        %v5152 = vadd.f32 0.0, %v5151
        %v5153 = vpop.f32.mrb[0].mxu0
        %5154 = vdwg.mxu0
        %v5155 = vadd.f32 %v2898, %v5077
        %v5156 = vadd.f32 %v2903, %v5082
        %v5157 = vadd.f32 %v2908, %v5087
        %v5158 = vadd.f32 %v2913, %v5092
        %v5159 = vadd.f32 %v2918, %v5097
        %v5160 = vadd.f32 %v2923, %v5102
        %v5161 = vadd.f32 %v2928, %v5107
        %v5162 = vadd.f32 %v2933, %v5112
        %v5163 = vadd.f32 %v2938, %v5117
        %v5164 = vadd.f32 %v2943, %v5122
        %v5165 = vadd.f32 %v2948, %v5127
        %v5166 = vadd.f32 %v2953, %v5132
        %v5167 = vadd.f32 %v2958, %v5137
        %v5168 = vadd.f32 %v2963, %v5142
        %v5169 = vadd.f32 %v2968, %v5147
        %v5170 = vadd.f32 %v2973, %v5152
        %s5171 = smul.u32 %s360, 56
        %s5172 = scalar_lea.vmem %s355, %s5171
        %v5173 = vld [vmem:[%s5172] sm:$0xff]
        %v5174 = vld [vmem:[%s5172 + $0x8] sm:$0xff]
        %v5175 = vld [vmem:[%s5172 + $0x38] sm:$0xff]
        %v5176 = vld [vmem:[%s5172 + $0x40] sm:$0xff]
        %v5177 = vld [vmem:[%s5172 + $0x70] sm:$0xff]
        %v5178 = vld [vmem:[%s5172 + $0x78] sm:$0xff]
        %v5179 = vld [vmem:[%s5172 + $0xa8] sm:$0xff]
        %v5180 = vld [vmem:[%s5172 + $0xb0] sm:$0xff]
        %v5181 = vld [vmem:[%s5172 + $0xe0] sm:$0xff]
        %v5182 = vld [vmem:[%s5172 + $0xe8] sm:$0xff]
        %v5183 = vld [vmem:[%s5172 + $0x118] sm:$0xff]
        %v5184 = vld [vmem:[%s5172 + $0x120] sm:$0xff]
        %v5185 = vld [vmem:[%s5172 + $0x150] sm:$0xff]
        %v5186 = vld [vmem:[%s5172 + $0x158] sm:$0xff]
        %v5187 = vld [vmem:[%s5172 + $0x188] sm:$0xff]
        %v5188 = vld [vmem:[%s5172 + $0x190] sm:$0xff]
        %s5189 = scalar_lea.vmem %s2, 144
        %v5190 = vld [vmem:[%s5189] sm:$0xff]
        %v5191 = vld [vmem:[%s5172 + $0x12] sm:$0xff]
        %v5192 = vld [vmem:[%s5172 + $0x1a] sm:$0xff]
        %v5193 = vld [vmem:[%s5172 + $0x4a] sm:$0xff]
        %v5194 = vld [vmem:[%s5172 + $0x52] sm:$0xff]
        %v5195 = vld [vmem:[%s5172 + $0x82] sm:$0xff]
        %v5196 = vld [vmem:[%s5172 + $0x8a] sm:$0xff]
        %v5197 = vld [vmem:[%s5172 + $0xba] sm:$0xff]
        %v5198 = vld [vmem:[%s5172 + $0xc2] sm:$0xff]
        %v5199 = vld [vmem:[%s5172 + $0xf2] sm:$0xff]
        %v5200 = vld [vmem:[%s5172 + $0xfa] sm:$0xff]
        %v5201 = vld [vmem:[%s5172 + $0x12a] sm:$0xff]
        %v5202 = vld [vmem:[%s5172 + $0x132] sm:$0xff]
        %v5203 = vld [vmem:[%s5172 + $0x162] sm:$0xff]
        %v5204 = vld [vmem:[%s5172 + $0x16a] sm:$0xff]
        %v5205 = vld [vmem:[%s5172 + $0x19a] sm:$0xff]
        %v5206 = vld [vmem:[%s5172 + $0x1a2] sm:$0xff]
        %s5207 = scalar_lea.vmem %s2, 152
        %v5208 = vld [vmem:[%s5207] sm:$0xff]
        %v5210 = vsel %vm381, %v5191, 0
        %v5213 = vsel %vm381, %v5192, 0
        %v5216 = vsel %vm381, %v5193, 0
        %v5219 = vsel %vm381, %v5194, 0
        %v5222 = vsel %vm381, %v5195, 0
        %v5225 = vsel %vm381, %v5196, 0
        %v5228 = vsel %vm381, %v5197, 0
        %v5231 = vsel %vm381, %v5198, 0
        %v5234 = vsel %vm381, %v5199, 0
        %v5237 = vsel %vm381, %v5200, 0
        %v5240 = vsel %vm381, %v5201, 0
        %v5243 = vsel %vm381, %v5202, 0
        %v5246 = vsel %vm381, %v5203, 0
        %v5249 = vsel %vm381, %v5204, 0
        %v5252 = vsel %vm381, %v5205, 0
        %v5255 = vsel %vm381, %v5206, 0
        %5257 = vmatprep.subr.mxu0 0.0
        %5258 = vmatpush1.msra.mxu0 %v5208
        %5259 = vmatprep.subr.mxu0 0.0
        %5260 = vmatpush1.msra.mxu0 0.0
        %5261 = vmatprep.subr.mxu0 0.0
        %5262 = vmatpush1.msra.mxu0 0.0
        %5263 = vmatprep.subr.mxu0 0.0
        %5264 = vmatpush1.msra.mxu0 0.0
        %5265 = vmatprep.subr.mxu0 0.0
        %5266 = vmatpush1.msra.mxu0 0.0
        %5267 = vmatprep.subr.mxu0 0.0
        %5268 = vmatpush1.msra.mxu0 0.0
        %5269 = vmatprep.subr.mxu0 0.0
        %5270 = vmatpush1.msra.mxu0 0.0
        %5271 = vmatprep.subr.mxu0 0.0
        %5272 = vmatpush1.msra.mxu0 0.0
        %5273 = vmatprep.subr.mxu0 0.0
        %5274 = vmatpush1.msra.mxu0 0.0
        %5275 = vmatprep.subr.mxu0 0.0
        %5276 = vmatpush1.msra.mxu0 0.0
        %5277 = vmatprep.subr.mxu0 0.0
        %5278 = vmatpush1.msra.mxu0 0.0
        %5279 = vmatprep.subr.mxu0 0.0
        %5280 = vmatpush1.msra.mxu0 0.0
        %5281 = vmatprep.subr.mxu0 0.0
        %5282 = vmatpush1.msra.mxu0 0.0
        %5283 = vmatprep.subr.mxu0 0.0
        %5284 = vmatpush1.msra.mxu0 0.0
        %5285 = vmatprep.subr.mxu0 0.0
        %5286 = vmatpush1.msra.mxu0 0.0
        %5287 = vmatprep.subr.mxu0 0.0
        %5288 = vmatpush1.msra.mxu0 0.0
        %5289 = vmatprep.subr.mxu0 0.0
        %5290 = vmatpush1.msra.mxu0 0.0
        %5291 = vmatprep.subr.mxu0 0.0
        %5292 = vmatpush1.msra.mxu0 0.0
        %5293 = vmatprep.subr.mxu0 0.0
        %5294 = vmatpush1.msra.mxu0 0.0
        %5295 = vmatprep.subr.mxu0 0.0
        %5296 = vmatpush1.msra.mxu0 0.0
        %5297 = vmatprep.subr.mxu0 0.0
        %5298 = vmatpush1.msra.mxu0 0.0
        %5299 = vmatprep.subr.mxu0 0.0
        %5300 = vmatpush1.msra.mxu0 0.0
        %5301 = vmatprep.subr.mxu0 0.0
        %5302 = vmatpush1.msra.mxu0 0.0
        %5303 = vmatprep.subr.mxu0 0.0
        %5304 = vmatpush1.msra.mxu0 0.0
        %5305 = vmatprep.subr.mxu0 0.0
        %5306 = vmatpush1.msra.mxu0 0.0
        %5307 = vmatprep.subr.mxu0 0.0
        %5308 = vmatpush1.msra.mxu0 0.0
        %5309 = vmatprep.subr.mxu0 0.0
        %5310 = vmatpush1.msra.mxu0 0.0
        %5311 = vmatprep.subr.mxu0 0.0
        %5312 = vmatpush1.msra.mxu0 0.0
        %5313 = vmatprep.subr.mxu0 0.0
        %5314 = vmatpush1.msra.mxu0 0.0
        %5315 = vmatprep.subr.mxu0 0.0
        %5316 = vmatpush1.msra.mxu0 0.0
        %5317 = vmatprep.subr.mxu0 0.0
        %5318 = vmatpush1.msra.mxu0 0.0
        %5319 = vmatprep.subr.mxu0 0.0
        %5320 = vmatpush1.msra.mxu0 0.0
        %5321 = vmatprep.mubr.f32.mxu0 0.0
        %5322 = vmatmul.mubr.f32.gmra.mrb[0].mxu0 %v5210
        %v5323 = vpop.f32.mrb[0].mxu0
        %v5324 = vadd.f32 0.0, %v5323
        %v5325 = vpop.f32.mrb[0].mxu0
        %5326 = vmatprep.mubr.f32.mxu0 0.0
        %5327 = vmatmul.mubr.f32.gmra.mrb[0].mxu0 %v5213
        %v5328 = vpop.f32.mrb[0].mxu0
        %v5329 = vadd.f32 0.0, %v5328
        %v5330 = vpop.f32.mrb[0].mxu0
        %5331 = vmatprep.mubr.f32.mxu0 0.0
        %5332 = vmatmul.mubr.f32.gmra.mrb[0].mxu0 %v5216
        %v5333 = vpop.f32.mrb[0].mxu0
        %v5334 = vadd.f32 0.0, %v5333
        %v5335 = vpop.f32.mrb[0].mxu0
        %5336 = vmatprep.mubr.f32.mxu0 0.0
        %5337 = vmatmul.mubr.f32.gmra.mrb[0].mxu0 %v5219
        %v5338 = vpop.f32.mrb[0].mxu0
        %v5339 = vadd.f32 0.0, %v5338
        %v5340 = vpop.f32.mrb[0].mxu0
        %5341 = vmatprep.mubr.f32.mxu0 0.0
        %5342 = vmatmul.mubr.f32.gmra.mrb[0].mxu0 %v5222
        %v5343 = vpop.f32.mrb[0].mxu0
        %v5344 = vadd.f32 0.0, %v5343
        %v5345 = vpop.f32.mrb[0].mxu0
        %5346 = vmatprep.mubr.f32.mxu0 0.0
        %5347 = vmatmul.mubr.f32.gmra.mrb[0].mxu0 %v5225
        %v5348 = vpop.f32.mrb[0].mxu0
        %v5349 = vadd.f32 0.0, %v5348
        %v5350 = vpop.f32.mrb[0].mxu0
        %5351 = vmatprep.mubr.f32.mxu0 0.0
        %5352 = vmatmul.mubr.f32.gmra.mrb[0].mxu0 %v5228
        %v5353 = vpop.f32.mrb[0].mxu0
        %v5354 = vadd.f32 0.0, %v5353
        %v5355 = vpop.f32.mrb[0].mxu0
        %5356 = vmatprep.mubr.f32.mxu0 0.0
        %5357 = vmatmul.mubr.f32.gmra.mrb[0].mxu0 %v5231
        %v5358 = vpop.f32.mrb[0].mxu0
        %v5359 = vadd.f32 0.0, %v5358
        %v5360 = vpop.f32.mrb[0].mxu0
        %5361 = vmatprep.mubr.f32.mxu0 0.0
        %5362 = vmatmul.mubr.f32.gmra.mrb[0].mxu0 %v5234
        %v5363 = vpop.f32.mrb[0].mxu0
        %v5364 = vadd.f32 0.0, %v5363
        %v5365 = vpop.f32.mrb[0].mxu0
        %5366 = vmatprep.mubr.f32.mxu0 0.0
        %5367 = vmatmul.mubr.f32.gmra.mrb[0].mxu0 %v5237
        %v5368 = vpop.f32.mrb[0].mxu0
        %v5369 = vadd.f32 0.0, %v5368
        %v5370 = vpop.f32.mrb[0].mxu0
        %5371 = vmatprep.mubr.f32.mxu0 0.0
        %5372 = vmatmul.mubr.f32.gmra.mrb[0].mxu0 %v5240
        %v5373 = vpop.f32.mrb[0].mxu0
        %v5374 = vadd.f32 0.0, %v5373
        %v5375 = vpop.f32.mrb[0].mxu0
        %5376 = vmatprep.mubr.f32.mxu0 0.0
        %5377 = vmatmul.mubr.f32.gmra.mrb[0].mxu0 %v5243
        %v5378 = vpop.f32.mrb[0].mxu0
        %v5379 = vadd.f32 0.0, %v5378
        %v5380 = vpop.f32.mrb[0].mxu0
        %5381 = vmatprep.mubr.f32.mxu0 0.0
        %5382 = vmatmul.mubr.f32.gmra.mrb[0].mxu0 %v5246
        %v5383 = vpop.f32.mrb[0].mxu0
        %v5384 = vadd.f32 0.0, %v5383
        %v5385 = vpop.f32.mrb[0].mxu0
        %5386 = vmatprep.mubr.f32.mxu0 0.0
        %5387 = vmatmul.mubr.f32.gmra.mrb[0].mxu0 %v5249
        %v5388 = vpop.f32.mrb[0].mxu0
        %v5389 = vadd.f32 0.0, %v5388
        %v5390 = vpop.f32.mrb[0].mxu0
        %5391 = vmatprep.mubr.f32.mxu0 0.0
        %5392 = vmatmul.mubr.f32.gmra.mrb[0].mxu0 %v5252
        %v5393 = vpop.f32.mrb[0].mxu0
        %v5394 = vadd.f32 0.0, %v5393
        %v5395 = vpop.f32.mrb[0].mxu0
        %5396 = vmatprep.mubr.f32.mxu0 0.0
        %5397 = vmatmul.mubr.f32.gmra.mrb[0].mxu0 %v5255
        %v5398 = vpop.f32.mrb[0].mxu0
        %v5399 = vadd.f32 0.0, %v5398
        %v5400 = vpop.f32.mrb[0].mxu0
        %5401 = vdwg.mxu0
        %v5403 = vsel %vm381, %v5173, 0
        %v5406 = vsel %vm381, %v5174, 0
        %v5409 = vsel %vm381, %v5175, 0
        %v5412 = vsel %vm381, %v5176, 0
        %v5415 = vsel %vm381, %v5177, 0
        %v5418 = vsel %vm381, %v5178, 0
        %v5421 = vsel %vm381, %v5179, 0
        %v5424 = vsel %vm381, %v5180, 0
        %v5427 = vsel %vm381, %v5181, 0
        %v5430 = vsel %vm381, %v5182, 0
        %v5433 = vsel %vm381, %v5183, 0
        %v5436 = vsel %vm381, %v5184, 0
        %v5439 = vsel %vm381, %v5185, 0
        %v5442 = vsel %vm381, %v5186, 0
        %v5445 = vsel %vm381, %v5187, 0
        %v5448 = vsel %vm381, %v5188, 0
        %5450 = vmatprep.subr.mxu0 0.0
        %5451 = vmatpush1.msra.mxu0 %v5190
        %5452 = vmatprep.subr.mxu0 0.0
        %5453 = vmatpush1.msra.mxu0 0.0
        %5454 = vmatprep.subr.mxu0 0.0
        %5455 = vmatpush1.msra.mxu0 0.0
        %5456 = vmatprep.subr.mxu0 0.0
        %5457 = vmatpush1.msra.mxu0 0.0
        %5458 = vmatprep.subr.mxu0 0.0
        %5459 = vmatpush1.msra.mxu0 0.0
        %5460 = vmatprep.subr.mxu0 0.0
        %5461 = vmatpush1.msra.mxu0 0.0
        %5462 = vmatprep.subr.mxu0 0.0
        %5463 = vmatpush1.msra.mxu0 0.0
        %5464 = vmatprep.subr.mxu0 0.0
        %5465 = vmatpush1.msra.mxu0 0.0
        %5466 = vmatprep.subr.mxu0 0.0
        %5467 = vmatpush1.msra.mxu0 0.0
        %5468 = vmatprep.subr.mxu0 0.0
        %5469 = vmatpush1.msra.mxu0 0.0
        %5470 = vmatprep.subr.mxu0 0.0
        %5471 = vmatpush1.msra.mxu0 0.0
        %5472 = vmatprep.subr.mxu0 0.0
        %5473 = vmatpush1.msra.mxu0 0.0
        %5474 = vmatprep.subr.mxu0 0.0
        %5475 = vmatpush1.msra.mxu0 0.0
        %5476 = vmatprep.subr.mxu0 0.0
        %5477 = vmatpush1.msra.mxu0 0.0
        %5478 = vmatprep.subr.mxu0 0.0
        %5479 = vmatpush1.msra.mxu0 0.0
        %5480 = vmatprep.subr.mxu0 0.0
        %5481 = vmatpush1.msra.mxu0 0.0
        %5482 = vmatprep.subr.mxu0 0.0
        %5483 = vmatpush1.msra.mxu0 0.0
        %5484 = vmatprep.subr.mxu0 0.0
        %5485 = vmatpush1.msra.mxu0 0.0
        %5486 = vmatprep.subr.mxu0 0.0
        %5487 = vmatpush1.msra.mxu0 0.0
        %5488 = vmatprep.subr.mxu0 0.0
        %5489 = vmatpush1.msra.mxu0 0.0
        %5490 = vmatprep.subr.mxu0 0.0
        %5491 = vmatpush1.msra.mxu0 0.0
        %5492 = vmatprep.subr.mxu0 0.0
        %5493 = vmatpush1.msra.mxu0 0.0
        %5494 = vmatprep.subr.mxu0 0.0
        %5495 = vmatpush1.msra.mxu0 0.0
        %5496 = vmatprep.subr.mxu0 0.0
        %5497 = vmatpush1.msra.mxu0 0.0
        %5498 = vmatprep.subr.mxu0 0.0
        %5499 = vmatpush1.msra.mxu0 0.0
        %5500 = vmatprep.subr.mxu0 0.0
        %5501 = vmatpush1.msra.mxu0 0.0
        %5502 = vmatprep.subr.mxu0 0.0
        %5503 = vmatpush1.msra.mxu0 0.0
        %5504 = vmatprep.subr.mxu0 0.0
        %5505 = vmatpush1.msra.mxu0 0.0
        %5506 = vmatprep.subr.mxu0 0.0
        %5507 = vmatpush1.msra.mxu0 0.0
        %5508 = vmatprep.subr.mxu0 0.0
        %5509 = vmatpush1.msra.mxu0 0.0
        %5510 = vmatprep.subr.mxu0 0.0
        %5511 = vmatpush1.msra.mxu0 0.0
        %5512 = vmatprep.subr.mxu0 0.0
        %5513 = vmatpush1.msra.mxu0 0.0
        %5514 = vmatprep.mubr.f32.mxu0 0.0
        %5515 = vmatmul.mubr.f32.gmra.mrb[0].mxu0 %v5403
        %v5516 = vpop.f32.mrb[0].mxu0
        %v5517 = vadd.f32 %v5324, %v5516
        %v5518 = vpop.f32.mrb[0].mxu0
        %5519 = vmatprep.mubr.f32.mxu0 0.0
        %5520 = vmatmul.mubr.f32.gmra.mrb[0].mxu0 %v5406
        %v5521 = vpop.f32.mrb[0].mxu0
        %v5522 = vadd.f32 %v5329, %v5521
        %v5523 = vpop.f32.mrb[0].mxu0
        %5524 = vmatprep.mubr.f32.mxu0 0.0
        %5525 = vmatmul.mubr.f32.gmra.mrb[0].mxu0 %v5409
        %v5526 = vpop.f32.mrb[0].mxu0
        %v5527 = vadd.f32 %v5334, %v5526
        %v5528 = vpop.f32.mrb[0].mxu0
        %5529 = vmatprep.mubr.f32.mxu0 0.0
        %5530 = vmatmul.mubr.f32.gmra.mrb[0].mxu0 %v5412
        %v5531 = vpop.f32.mrb[0].mxu0
        %v5532 = vadd.f32 %v5339, %v5531
        %v5533 = vpop.f32.mrb[0].mxu0
        %5534 = vmatprep.mubr.f32.mxu0 0.0
        %5535 = vmatmul.mubr.f32.gmra.mrb[0].mxu0 %v5415
        %v5536 = vpop.f32.mrb[0].mxu0
        %v5537 = vadd.f32 %v5344, %v5536
        %v5538 = vpop.f32.mrb[0].mxu0
        %5539 = vmatprep.mubr.f32.mxu0 0.0
        %5540 = vmatmul.mubr.f32.gmra.mrb[0].mxu0 %v5418
        %v5541 = vpop.f32.mrb[0].mxu0
        %v5542 = vadd.f32 %v5349, %v5541
        %v5543 = vpop.f32.mrb[0].mxu0
        %5544 = vmatprep.mubr.f32.mxu0 0.0
        %5545 = vmatmul.mubr.f32.gmra.mrb[0].mxu0 %v5421
        %v5546 = vpop.f32.mrb[0].mxu0
        %v5547 = vadd.f32 %v5354, %v5546
        %v5548 = vpop.f32.mrb[0].mxu0
        %5549 = vmatprep.mubr.f32.mxu0 0.0
        %5550 = vmatmul.mubr.f32.gmra.mrb[0].mxu0 %v5424
        %v5551 = vpop.f32.mrb[0].mxu0
        %v5552 = vadd.f32 %v5359, %v5551
        %v5553 = vpop.f32.mrb[0].mxu0
        %5554 = vmatprep.mubr.f32.mxu0 0.0
        %5555 = vmatmul.mubr.f32.gmra.mrb[0].mxu0 %v5427
        %v5556 = vpop.f32.mrb[0].mxu0
        %v5557 = vadd.f32 %v5364, %v5556
        %v5558 = vpop.f32.mrb[0].mxu0
        %5559 = vmatprep.mubr.f32.mxu0 0.0
        %5560 = vmatmul.mubr.f32.gmra.mrb[0].mxu0 %v5430
        %v5561 = vpop.f32.mrb[0].mxu0
        %v5562 = vadd.f32 %v5369, %v5561
        %v5563 = vpop.f32.mrb[0].mxu0
        %5564 = vmatprep.mubr.f32.mxu0 0.0
        %5565 = vmatmul.mubr.f32.gmra.mrb[0].mxu0 %v5433
        %v5566 = vpop.f32.mrb[0].mxu0
        %v5567 = vadd.f32 %v5374, %v5566
        %v5568 = vpop.f32.mrb[0].mxu0
        %5569 = vmatprep.mubr.f32.mxu0 0.0
        %5570 = vmatmul.mubr.f32.gmra.mrb[0].mxu0 %v5436
        %v5571 = vpop.f32.mrb[0].mxu0
        %v5572 = vadd.f32 %v5379, %v5571
        %v5573 = vpop.f32.mrb[0].mxu0
        %5574 = vmatprep.mubr.f32.mxu0 0.0
        %5575 = vmatmul.mubr.f32.gmra.mrb[0].mxu0 %v5439
        %v5576 = vpop.f32.mrb[0].mxu0
        %v5577 = vadd.f32 %v5384, %v5576
        %v5578 = vpop.f32.mrb[0].mxu0
        %5579 = vmatprep.mubr.f32.mxu0 0.0
        %5580 = vmatmul.mubr.f32.gmra.mrb[0].mxu0 %v5442
        %v5581 = vpop.f32.mrb[0].mxu0
        %v5582 = vadd.f32 %v5389, %v5581
        %v5583 = vpop.f32.mrb[0].mxu0
        %5584 = vmatprep.mubr.f32.mxu0 0.0
        %5585 = vmatmul.mubr.f32.gmra.mrb[0].mxu0 %v5445
        %v5586 = vpop.f32.mrb[0].mxu0
        %v5587 = vadd.f32 %v5394, %v5586
        %v5588 = vpop.f32.mrb[0].mxu0
        %5589 = vmatprep.mubr.f32.mxu0 0.0
        %5590 = vmatmul.mubr.f32.gmra.mrb[0].mxu0 %v5448
        %v5591 = vpop.f32.mrb[0].mxu0
        %v5592 = vadd.f32 %v5399, %v5591
        %v5593 = vpop.f32.mrb[0].mxu0
        %5594 = vdwg.mxu0
        %v5595 = vld [vmem:[%s5172 + $0x24] sm:$0xff]
        %v5596 = vld [vmem:[%s5172 + $0x2c] sm:$0xff]
        %v5597 = vld [vmem:[%s5172 + $0x5c] sm:$0xff]
        %v5598 = vld [vmem:[%s5172 + $0x64] sm:$0xff]
        %v5599 = vld [vmem:[%s5172 + $0x94] sm:$0xff]
        %v5600 = vld [vmem:[%s5172 + $0x9c] sm:$0xff]
        %v5601 = vld [vmem:[%s5172 + $0xcc] sm:$0xff]
        %v5602 = vld [vmem:[%s5172 + $0xd4] sm:$0xff]
        %v5603 = vld [vmem:[%s5172 + $0x104] sm:$0xff]
        %v5604 = vld [vmem:[%s5172 + $0x10c] sm:$0xff]
        %v5605 = vld [vmem:[%s5172 + $0x13c] sm:$0xff]
        %v5606 = vld [vmem:[%s5172 + $0x144] sm:$0xff]
        %v5607 = vld [vmem:[%s5172 + $0x174] sm:$0xff]
        %v5608 = vld [vmem:[%s5172 + $0x17c] sm:$0xff]
        %v5609 = vld [vmem:[%s5172 + $0x1ac] sm:$0xff]
        %v5610 = vld [vmem:[%s5172 + $0x1b4] sm:$0xff]
        %s5611 = scalar_lea.vmem %s2, 160
        %v5612 = vld [vmem:[%s5611] sm:$0xff]
        %v5614 = vsel %vm381, %v5595, 0
        %v5617 = vsel %vm381, %v5596, 0
        %v5620 = vsel %vm381, %v5597, 0
        %v5623 = vsel %vm381, %v5598, 0
        %v5626 = vsel %vm381, %v5599, 0
        %v5629 = vsel %vm381, %v5600, 0
        %v5632 = vsel %vm381, %v5601, 0
        %v5635 = vsel %vm381, %v5602, 0
        %v5638 = vsel %vm381, %v5603, 0
        %v5641 = vsel %vm381, %v5604, 0
        %v5644 = vsel %vm381, %v5605, 0
        %v5647 = vsel %vm381, %v5606, 0
        %v5650 = vsel %vm381, %v5607, 0
        %v5653 = vsel %vm381, %v5608, 0
        %v5656 = vsel %vm381, %v5609, 0
        %v5659 = vsel %vm381, %v5610, 0
        %5661 = vmatprep.subr.mxu0 0.0
        %5662 = vmatpush1.msra.mxu0 %v5612
        %5663 = vmatprep.subr.mxu0 0.0
        %5664 = vmatpush1.msra.mxu0 0.0
        %5665 = vmatprep.subr.mxu0 0.0
        %5666 = vmatpush1.msra.mxu0 0.0
        %5667 = vmatprep.subr.mxu0 0.0
        %5668 = vmatpush1.msra.mxu0 0.0
        %5669 = vmatprep.subr.mxu0 0.0
        %5670 = vmatpush1.msra.mxu0 0.0
        %5671 = vmatprep.subr.mxu0 0.0
        %5672 = vmatpush1.msra.mxu0 0.0
        %5673 = vmatprep.subr.mxu0 0.0
        %5674 = vmatpush1.msra.mxu0 0.0
        %5675 = vmatprep.subr.mxu0 0.0
        %5676 = vmatpush1.msra.mxu0 0.0
        %5677 = vmatprep.subr.mxu0 0.0
        %5678 = vmatpush1.msra.mxu0 0.0
        %5679 = vmatprep.subr.mxu0 0.0
        %5680 = vmatpush1.msra.mxu0 0.0
        %5681 = vmatprep.subr.mxu0 0.0
        %5682 = vmatpush1.msra.mxu0 0.0
        %5683 = vmatprep.subr.mxu0 0.0
        %5684 = vmatpush1.msra.mxu0 0.0
        %5685 = vmatprep.subr.mxu0 0.0
        %5686 = vmatpush1.msra.mxu0 0.0
        %5687 = vmatprep.subr.mxu0 0.0
        %5688 = vmatpush1.msra.mxu0 0.0
        %5689 = vmatprep.subr.mxu0 0.0
        %5690 = vmatpush1.msra.mxu0 0.0
        %5691 = vmatprep.subr.mxu0 0.0
        %5692 = vmatpush1.msra.mxu0 0.0
        %5693 = vmatprep.subr.mxu0 0.0
        %5694 = vmatpush1.msra.mxu0 0.0
        %5695 = vmatprep.subr.mxu0 0.0
        %5696 = vmatpush1.msra.mxu0 0.0
        %5697 = vmatprep.subr.mxu0 0.0
        %5698 = vmatpush1.msra.mxu0 0.0
        %5699 = vmatprep.subr.mxu0 0.0
        %5700 = vmatpush1.msra.mxu0 0.0
        %5701 = vmatprep.subr.mxu0 0.0
        %5702 = vmatpush1.msra.mxu0 0.0
        %5703 = vmatprep.subr.mxu0 0.0
        %5704 = vmatpush1.msra.mxu0 0.0
        %5705 = vmatprep.subr.mxu0 0.0
        %5706 = vmatpush1.msra.mxu0 0.0
        %5707 = vmatprep.subr.mxu0 0.0
        %5708 = vmatpush1.msra.mxu0 0.0
        %5709 = vmatprep.subr.mxu0 0.0
        %5710 = vmatpush1.msra.mxu0 0.0
        %5711 = vmatprep.subr.mxu0 0.0
        %5712 = vmatpush1.msra.mxu0 0.0
        %5713 = vmatprep.subr.mxu0 0.0
        %5714 = vmatpush1.msra.mxu0 0.0
        %5715 = vmatprep.subr.mxu0 0.0
        %5716 = vmatpush1.msra.mxu0 0.0
        %5717 = vmatprep.subr.mxu0 0.0
        %5718 = vmatpush1.msra.mxu0 0.0
        %5719 = vmatprep.subr.mxu0 0.0
        %5720 = vmatpush1.msra.mxu0 0.0
        %5721 = vmatprep.subr.mxu0 0.0
        %5722 = vmatpush1.msra.mxu0 0.0
        %5723 = vmatprep.subr.mxu0 0.0
        %5724 = vmatpush1.msra.mxu0 0.0
        %5725 = vmatprep.mubr.f32.mxu0 0.0
        %5726 = vmatmul.mubr.f32.gmra.mrb[0].mxu0 %v5614
        %v5727 = vpop.f32.mrb[0].mxu0
        %v5728 = vadd.f32 0.0, %v5727
        %v5729 = vpop.f32.mrb[0].mxu0
        %5730 = vmatprep.mubr.f32.mxu0 0.0
        %5731 = vmatmul.mubr.f32.gmra.mrb[0].mxu0 %v5617
        %v5732 = vpop.f32.mrb[0].mxu0
        %v5733 = vadd.f32 0.0, %v5732
        %v5734 = vpop.f32.mrb[0].mxu0
        %5735 = vmatprep.mubr.f32.mxu0 0.0
        %5736 = vmatmul.mubr.f32.gmra.mrb[0].mxu0 %v5620
        %v5737 = vpop.f32.mrb[0].mxu0
        %v5738 = vadd.f32 0.0, %v5737
        %v5739 = vpop.f32.mrb[0].mxu0
        %5740 = vmatprep.mubr.f32.mxu0 0.0
        %5741 = vmatmul.mubr.f32.gmra.mrb[0].mxu0 %v5623
        %v5742 = vpop.f32.mrb[0].mxu0
        %v5743 = vadd.f32 0.0, %v5742
        %v5744 = vpop.f32.mrb[0].mxu0
        %5745 = vmatprep.mubr.f32.mxu0 0.0
        %5746 = vmatmul.mubr.f32.gmra.mrb[0].mxu0 %v5626
        %v5747 = vpop.f32.mrb[0].mxu0
        %v5748 = vadd.f32 0.0, %v5747
        %v5749 = vpop.f32.mrb[0].mxu0
        %5750 = vmatprep.mubr.f32.mxu0 0.0
        %5751 = vmatmul.mubr.f32.gmra.mrb[0].mxu0 %v5629
        %v5752 = vpop.f32.mrb[0].mxu0
        %v5753 = vadd.f32 0.0, %v5752
        %v5754 = vpop.f32.mrb[0].mxu0
        %5755 = vmatprep.mubr.f32.mxu0 0.0
        %5756 = vmatmul.mubr.f32.gmra.mrb[0].mxu0 %v5632
        %v5757 = vpop.f32.mrb[0].mxu0
        %v5758 = vadd.f32 0.0, %v5757
        %v5759 = vpop.f32.mrb[0].mxu0
        %5760 = vmatprep.mubr.f32.mxu0 0.0
        %5761 = vmatmul.mubr.f32.gmra.mrb[0].mxu0 %v5635
        %v5762 = vpop.f32.mrb[0].mxu0
        %v5763 = vadd.f32 0.0, %v5762
        %v5764 = vpop.f32.mrb[0].mxu0
        %5765 = vmatprep.mubr.f32.mxu0 0.0
        %5766 = vmatmul.mubr.f32.gmra.mrb[0].mxu0 %v5638
        %v5767 = vpop.f32.mrb[0].mxu0
        %v5768 = vadd.f32 0.0, %v5767
        %v5769 = vpop.f32.mrb[0].mxu0
        %5770 = vmatprep.mubr.f32.mxu0 0.0
        %5771 = vmatmul.mubr.f32.gmra.mrb[0].mxu0 %v5641
        %v5772 = vpop.f32.mrb[0].mxu0
        %v5773 = vadd.f32 0.0, %v5772
        %v5774 = vpop.f32.mrb[0].mxu0
        %5775 = vmatprep.mubr.f32.mxu0 0.0
        %5776 = vmatmul.mubr.f32.gmra.mrb[0].mxu0 %v5644
        %v5777 = vpop.f32.mrb[0].mxu0
        %v5778 = vadd.f32 0.0, %v5777
        %v5779 = vpop.f32.mrb[0].mxu0
        %5780 = vmatprep.mubr.f32.mxu0 0.0
        %5781 = vmatmul.mubr.f32.gmra.mrb[0].mxu0 %v5647
        %v5782 = vpop.f32.mrb[0].mxu0
        %v5783 = vadd.f32 0.0, %v5782
        %v5784 = vpop.f32.mrb[0].mxu0
        %5785 = vmatprep.mubr.f32.mxu0 0.0
        %5786 = vmatmul.mubr.f32.gmra.mrb[0].mxu0 %v5650
        %v5787 = vpop.f32.mrb[0].mxu0
        %v5788 = vadd.f32 0.0, %v5787
        %v5789 = vpop.f32.mrb[0].mxu0
        %5790 = vmatprep.mubr.f32.mxu0 0.0
        %5791 = vmatmul.mubr.f32.gmra.mrb[0].mxu0 %v5653
        %v5792 = vpop.f32.mrb[0].mxu0
        %v5793 = vadd.f32 0.0, %v5792
        %v5794 = vpop.f32.mrb[0].mxu0
        %5795 = vmatprep.mubr.f32.mxu0 0.0
        %5796 = vmatmul.mubr.f32.gmra.mrb[0].mxu0 %v5656
        %v5797 = vpop.f32.mrb[0].mxu0
        %v5798 = vadd.f32 0.0, %v5797
        %v5799 = vpop.f32.mrb[0].mxu0
        %5800 = vmatprep.mubr.f32.mxu0 0.0
        %5801 = vmatmul.mubr.f32.gmra.mrb[0].mxu0 %v5659
        %v5802 = vpop.f32.mrb[0].mxu0
        %v5803 = vadd.f32 0.0, %v5802
        %v5804 = vpop.f32.mrb[0].mxu0
        %5805 = vdwg.mxu0
        %v5806 = vadd.f32 %v5517, %v5728
        %v5807 = vadd.f32 %v5522, %v5733
        %v5808 = vadd.f32 %v5527, %v5738
        %v5809 = vadd.f32 %v5532, %v5743
        %v5810 = vadd.f32 %v5537, %v5748
        %v5811 = vadd.f32 %v5542, %v5753
        %v5812 = vadd.f32 %v5547, %v5758
        %v5813 = vadd.f32 %v5552, %v5763
        %v5814 = vadd.f32 %v5557, %v5768
        %v5815 = vadd.f32 %v5562, %v5773
        %v5816 = vadd.f32 %v5567, %v5778
        %v5817 = vadd.f32 %v5572, %v5783
        %v5818 = vadd.f32 %v5577, %v5788
        %v5819 = vadd.f32 %v5582, %v5793
        %v5820 = vadd.f32 %v5587, %v5798
        %v5821 = vadd.f32 %v5592, %v5803
        %v5822 = vld [vmem:[%s363] sm:$0xff]
        %v5823 = vld [vmem:[%s363 + $0x8] sm:$0xff]
        %v5824 = vld [vmem:[%s363 + $0x38] sm:$0xff]
        %v5825 = vld [vmem:[%s363 + $0x40] sm:$0xff]
        %v5826 = vld [vmem:[%s363 + $0x70] sm:$0xff]
        %v5827 = vld [vmem:[%s363 + $0x78] sm:$0xff]
        %v5828 = vld [vmem:[%s363 + $0xa8] sm:$0xff]
        %v5829 = vld [vmem:[%s363 + $0xb0] sm:$0xff]
        %v5830 = vld [vmem:[%s363 + $0xe0] sm:$0xff]
        %v5831 = vld [vmem:[%s363 + $0xe8] sm:$0xff]
        %v5832 = vld [vmem:[%s363 + $0x118] sm:$0xff]
        %v5833 = vld [vmem:[%s363 + $0x120] sm:$0xff]
        %v5834 = vld [vmem:[%s363 + $0x150] sm:$0xff]
        %v5835 = vld [vmem:[%s363 + $0x158] sm:$0xff]
        %v5836 = vld [vmem:[%s363 + $0x188] sm:$0xff]
        %v5837 = vld [vmem:[%s363 + $0x190] sm:$0xff]
        %s5838 = scalar_lea.vmem %s2, 168
        %v5839 = vld [vmem:[%s5838] sm:$0xff]
        %v5841 = vsel %vm381, %v5822, 0
        %v5844 = vsel %vm381, %v5823, 0
        %v5847 = vsel %vm381, %v5824, 0
        %v5850 = vsel %vm381, %v5825, 0
        %v5853 = vsel %vm381, %v5826, 0
        %v5856 = vsel %vm381, %v5827, 0
        %v5859 = vsel %vm381, %v5828, 0
        %v5862 = vsel %vm381, %v5829, 0
        %v5865 = vsel %vm381, %v5830, 0
        %v5868 = vsel %vm381, %v5831, 0
        %v5871 = vsel %vm381, %v5832, 0
        %v5874 = vsel %vm381, %v5833, 0
        %v5877 = vsel %vm381, %v5834, 0
        %v5880 = vsel %vm381, %v5835, 0
        %v5883 = vsel %vm381, %v5836, 0
        %v5886 = vsel %vm381, %v5837, 0
        %5888 = vmatprep.subr.mxu0 0.0
        %5889 = vmatpush1.msra.mxu0 %v5839
        %5890 = vmatprep.subr.mxu0 0.0
        %5891 = vmatpush1.msra.mxu0 0.0
        %5892 = vmatprep.subr.mxu0 0.0
        %5893 = vmatpush1.msra.mxu0 0.0
        %5894 = vmatprep.subr.mxu0 0.0
        %5895 = vmatpush1.msra.mxu0 0.0
        %5896 = vmatprep.subr.mxu0 0.0
        %5897 = vmatpush1.msra.mxu0 0.0
        %5898 = vmatprep.subr.mxu0 0.0
        %5899 = vmatpush1.msra.mxu0 0.0
        %5900 = vmatprep.subr.mxu0 0.0
        %5901 = vmatpush1.msra.mxu0 0.0
        %5902 = vmatprep.subr.mxu0 0.0
        %5903 = vmatpush1.msra.mxu0 0.0
        %5904 = vmatprep.subr.mxu0 0.0
        %5905 = vmatpush1.msra.mxu0 0.0
        %5906 = vmatprep.subr.mxu0 0.0
        %5907 = vmatpush1.msra.mxu0 0.0
        %5908 = vmatprep.subr.mxu0 0.0
        %5909 = vmatpush1.msra.mxu0 0.0
        %5910 = vmatprep.subr.mxu0 0.0
        %5911 = vmatpush1.msra.mxu0 0.0
        %5912 = vmatprep.subr.mxu0 0.0
        %5913 = vmatpush1.msra.mxu0 0.0
        %5914 = vmatprep.subr.mxu0 0.0
        %5915 = vmatpush1.msra.mxu0 0.0
        %5916 = vmatprep.subr.mxu0 0.0
        %5917 = vmatpush1.msra.mxu0 0.0
        %5918 = vmatprep.subr.mxu0 0.0
        %5919 = vmatpush1.msra.mxu0 0.0
        %5920 = vmatprep.subr.mxu0 0.0
        %5921 = vmatpush1.msra.mxu0 0.0
        %5922 = vmatprep.subr.mxu0 0.0
        %5923 = vmatpush1.msra.mxu0 0.0
        %5924 = vmatprep.subr.mxu0 0.0
        %5925 = vmatpush1.msra.mxu0 0.0
        %5926 = vmatprep.subr.mxu0 0.0
        %5927 = vmatpush1.msra.mxu0 0.0
        %5928 = vmatprep.subr.mxu0 0.0
        %5929 = vmatpush1.msra.mxu0 0.0
        %5930 = vmatprep.subr.mxu0 0.0
        %5931 = vmatpush1.msra.mxu0 0.0
        %5932 = vmatprep.subr.mxu0 0.0
        %5933 = vmatpush1.msra.mxu0 0.0
        %5934 = vmatprep.subr.mxu0 0.0
        %5935 = vmatpush1.msra.mxu0 0.0
        %5936 = vmatprep.subr.mxu0 0.0
        %5937 = vmatpush1.msra.mxu0 0.0
        %5938 = vmatprep.subr.mxu0 0.0
        %5939 = vmatpush1.msra.mxu0 0.0
        %5940 = vmatprep.subr.mxu0 0.0
        %5941 = vmatpush1.msra.mxu0 0.0
        %5942 = vmatprep.subr.mxu0 0.0
        %5943 = vmatpush1.msra.mxu0 0.0
        %5944 = vmatprep.subr.mxu0 0.0
        %5945 = vmatpush1.msra.mxu0 0.0
        %5946 = vmatprep.subr.mxu0 0.0
        %5947 = vmatpush1.msra.mxu0 0.0
        %5948 = vmatprep.subr.mxu0 0.0
        %5949 = vmatpush1.msra.mxu0 0.0
        %5950 = vmatprep.subr.mxu0 0.0
        %5951 = vmatpush1.msra.mxu0 0.0
        %5952 = vmatprep.mubr.f32.mxu0 0.0
        %5953 = vmatmul.mubr.f32.gmra.mrb[0].mxu0 %v5841
        %v5954 = vpop.f32.mrb[0].mxu0
        %v5955 = vadd.f32 0.0, %v5954
        %v5956 = vpop.f32.mrb[0].mxu0
        %5957 = vmatprep.mubr.f32.mxu0 0.0
        %5958 = vmatmul.mubr.f32.gmra.mrb[0].mxu0 %v5844
        %v5959 = vpop.f32.mrb[0].mxu0
        %v5960 = vadd.f32 0.0, %v5959
        %v5961 = vpop.f32.mrb[0].mxu0
        %5962 = vmatprep.mubr.f32.mxu0 0.0
        %5963 = vmatmul.mubr.f32.gmra.mrb[0].mxu0 %v5847
        %v5964 = vpop.f32.mrb[0].mxu0
        %v5965 = vadd.f32 0.0, %v5964
        %v5966 = vpop.f32.mrb[0].mxu0
        %5967 = vmatprep.mubr.f32.mxu0 0.0
        %5968 = vmatmul.mubr.f32.gmra.mrb[0].mxu0 %v5850
        %v5969 = vpop.f32.mrb[0].mxu0
        %v5970 = vadd.f32 0.0, %v5969
        %v5971 = vpop.f32.mrb[0].mxu0
        %5972 = vmatprep.mubr.f32.mxu0 0.0
        %5973 = vmatmul.mubr.f32.gmra.mrb[0].mxu0 %v5853
        %v5974 = vpop.f32.mrb[0].mxu0
        %v5975 = vadd.f32 0.0, %v5974
        %v5976 = vpop.f32.mrb[0].mxu0
        %5977 = vmatprep.mubr.f32.mxu0 0.0
        %5978 = vmatmul.mubr.f32.gmra.mrb[0].mxu0 %v5856
        %v5979 = vpop.f32.mrb[0].mxu0
        %v5980 = vadd.f32 0.0, %v5979
        %v5981 = vpop.f32.mrb[0].mxu0
        %5982 = vmatprep.mubr.f32.mxu0 0.0
        %5983 = vmatmul.mubr.f32.gmra.mrb[0].mxu0 %v5859
        %v5984 = vpop.f32.mrb[0].mxu0
        %v5985 = vadd.f32 0.0, %v5984
        %v5986 = vpop.f32.mrb[0].mxu0
        %5987 = vmatprep.mubr.f32.mxu0 0.0
        %5988 = vmatmul.mubr.f32.gmra.mrb[0].mxu0 %v5862
        %v5989 = vpop.f32.mrb[0].mxu0
        %v5990 = vadd.f32 0.0, %v5989
        %v5991 = vpop.f32.mrb[0].mxu0
        %5992 = vmatprep.mubr.f32.mxu0 0.0
        %5993 = vmatmul.mubr.f32.gmra.mrb[0].mxu0 %v5865
        %v5994 = vpop.f32.mrb[0].mxu0
        %v5995 = vadd.f32 0.0, %v5994
        %v5996 = vpop.f32.mrb[0].mxu0
        %5997 = vmatprep.mubr.f32.mxu0 0.0
        %5998 = vmatmul.mubr.f32.gmra.mrb[0].mxu0 %v5868
        %v5999 = vpop.f32.mrb[0].mxu0
        %v6000 = vadd.f32 0.0, %v5999
        %v6001 = vpop.f32.mrb[0].mxu0
        %6002 = vmatprep.mubr.f32.mxu0 0.0
        %6003 = vmatmul.mubr.f32.gmra.mrb[0].mxu0 %v5871
        %v6004 = vpop.f32.mrb[0].mxu0
        %v6005 = vadd.f32 0.0, %v6004
        %v6006 = vpop.f32.mrb[0].mxu0
        %6007 = vmatprep.mubr.f32.mxu0 0.0
        %6008 = vmatmul.mubr.f32.gmra.mrb[0].mxu0 %v5874
        %v6009 = vpop.f32.mrb[0].mxu0
        %v6010 = vadd.f32 0.0, %v6009
        %v6011 = vpop.f32.mrb[0].mxu0
        %6012 = vmatprep.mubr.f32.mxu0 0.0
        %6013 = vmatmul.mubr.f32.gmra.mrb[0].mxu0 %v5877
        %v6014 = vpop.f32.mrb[0].mxu0
        %v6015 = vadd.f32 0.0, %v6014
        %v6016 = vpop.f32.mrb[0].mxu0
        %6017 = vmatprep.mubr.f32.mxu0 0.0
        %6018 = vmatmul.mubr.f32.gmra.mrb[0].mxu0 %v5880
        %v6019 = vpop.f32.mrb[0].mxu0
        %v6020 = vadd.f32 0.0, %v6019
        %v6021 = vpop.f32.mrb[0].mxu0
        %6022 = vmatprep.mubr.f32.mxu0 0.0
        %6023 = vmatmul.mubr.f32.gmra.mrb[0].mxu0 %v5883
        %v6024 = vpop.f32.mrb[0].mxu0
        %v6025 = vadd.f32 0.0, %v6024
        %v6026 = vpop.f32.mrb[0].mxu0
        %6027 = vmatprep.mubr.f32.mxu0 0.0
        %6028 = vmatmul.mubr.f32.gmra.mrb[0].mxu0 %v5886
        %v6029 = vpop.f32.mrb[0].mxu0
        %v6030 = vadd.f32 0.0, %v6029
        %v6031 = vpop.f32.mrb[0].mxu0
        %6032 = vdwg.mxu0
        %v6033 = vadd.f32 %v5806, %v5955
        %v6034 = vadd.f32 %v5807, %v5960
        %v6035 = vadd.f32 %v5808, %v5965
        %v6036 = vadd.f32 %v5809, %v5970
        %v6037 = vadd.f32 %v5810, %v5975
        %v6038 = vadd.f32 %v5811, %v5980
        %v6039 = vadd.f32 %v5812, %v5985
        %v6040 = vadd.f32 %v5813, %v5990
        %v6041 = vadd.f32 %v5814, %v5995
        %v6042 = vadd.f32 %v5815, %v6000
        %v6043 = vadd.f32 %v5816, %v6005
        %v6044 = vadd.f32 %v5817, %v6010
        %v6045 = vadd.f32 %v5818, %v6015
        %v6046 = vadd.f32 %v5819, %v6020
        %v6047 = vadd.f32 %v5820, %v6025
        %v6048 = vadd.f32 %v5821, %v6030
        %s6049 = scalar_lea.vmem %s2, 176
        %v6050 = vld [vmem:[%s6049] sm:$0xff]
        %6051 = vmatprep.subr.mxu0 0.0
        %6052 = vmatpush1.msra.mxu0 %v6050
        %6053 = vmatprep.subr.mxu0 0.0
        %6054 = vmatpush1.msra.mxu0 0.0
        %6055 = vmatprep.subr.mxu0 0.0
        %6056 = vmatpush1.msra.mxu0 0.0
        %6057 = vmatprep.subr.mxu0 0.0
        %6058 = vmatpush1.msra.mxu0 0.0
        %6059 = vmatprep.subr.mxu0 0.0
        %6060 = vmatpush1.msra.mxu0 0.0
        %6061 = vmatprep.subr.mxu0 0.0
        %6062 = vmatpush1.msra.mxu0 0.0
        %6063 = vmatprep.subr.mxu0 0.0
        %6064 = vmatpush1.msra.mxu0 0.0
        %6065 = vmatprep.subr.mxu0 0.0
        %6066 = vmatpush1.msra.mxu0 0.0
        %6067 = vmatprep.subr.mxu0 0.0
        %6068 = vmatpush1.msra.mxu0 0.0
        %6069 = vmatprep.subr.mxu0 0.0
        %6070 = vmatpush1.msra.mxu0 0.0
        %6071 = vmatprep.subr.mxu0 0.0
        %6072 = vmatpush1.msra.mxu0 0.0
        %6073 = vmatprep.subr.mxu0 0.0
        %6074 = vmatpush1.msra.mxu0 0.0
        %6075 = vmatprep.subr.mxu0 0.0
        %6076 = vmatpush1.msra.mxu0 0.0
        %6077 = vmatprep.subr.mxu0 0.0
        %6078 = vmatpush1.msra.mxu0 0.0
        %6079 = vmatprep.subr.mxu0 0.0
        %6080 = vmatpush1.msra.mxu0 0.0
        %6081 = vmatprep.subr.mxu0 0.0
        %6082 = vmatpush1.msra.mxu0 0.0
        %6083 = vmatprep.subr.mxu0 0.0
        %6084 = vmatpush1.msra.mxu0 0.0
        %6085 = vmatprep.subr.mxu0 0.0
        %6086 = vmatpush1.msra.mxu0 0.0
        %6087 = vmatprep.subr.mxu0 0.0
        %6088 = vmatpush1.msra.mxu0 0.0
        %6089 = vmatprep.subr.mxu0 0.0
        %6090 = vmatpush1.msra.mxu0 0.0
        %6091 = vmatprep.subr.mxu0 0.0
        %6092 = vmatpush1.msra.mxu0 0.0
        %6093 = vmatprep.subr.mxu0 0.0
        %6094 = vmatpush1.msra.mxu0 0.0
        %6095 = vmatprep.subr.mxu0 0.0
        %6096 = vmatpush1.msra.mxu0 0.0
        %6097 = vmatprep.subr.mxu0 0.0
        %6098 = vmatpush1.msra.mxu0 0.0
        %6099 = vmatprep.subr.mxu0 0.0
        %6100 = vmatpush1.msra.mxu0 0.0
        %6101 = vmatprep.subr.mxu0 0.0
        %6102 = vmatpush1.msra.mxu0 0.0
        %6103 = vmatprep.subr.mxu0 0.0
        %6104 = vmatpush1.msra.mxu0 0.0
        %6105 = vmatprep.subr.mxu0 0.0
        %6106 = vmatpush1.msra.mxu0 0.0
        %6107 = vmatprep.subr.mxu0 0.0
        %6108 = vmatpush1.msra.mxu0 0.0
        %6109 = vmatprep.subr.mxu0 0.0
        %6110 = vmatpush1.msra.mxu0 0.0
        %6111 = vmatprep.subr.mxu0 0.0
        %6112 = vmatpush1.msra.mxu0 0.0
        %6113 = vmatprep.subr.mxu0 0.0
        %6114 = vmatpush1.msra.mxu0 0.0
        %6115 = vmatprep.mubr.f32.mxu0 0.0
        %6116 = vmatmul.mubr.f32.gmra.mrb[0].mxu0 %v383
        %v6117 = vpop.f32.mrb[0].mxu0
        %v6118 = vadd.f32 0.0, %v6117
        %v6119 = vpop.f32.mrb[0].mxu0
        %6120 = vmatprep.mubr.f32.mxu0 0.0
        %6121 = vmatmul.mubr.f32.gmra.mrb[0].mxu0 %v386
        %v6122 = vpop.f32.mrb[0].mxu0
        %v6123 = vadd.f32 0.0, %v6122
        %v6124 = vpop.f32.mrb[0].mxu0
        %6125 = vmatprep.mubr.f32.mxu0 0.0
        %6126 = vmatmul.mubr.f32.gmra.mrb[0].mxu0 %v389
        %v6127 = vpop.f32.mrb[0].mxu0
        %v6128 = vadd.f32 0.0, %v6127
        %v6129 = vpop.f32.mrb[0].mxu0
        %6130 = vmatprep.mubr.f32.mxu0 0.0
        %6131 = vmatmul.mubr.f32.gmra.mrb[0].mxu0 %v392
        %v6132 = vpop.f32.mrb[0].mxu0
        %v6133 = vadd.f32 0.0, %v6132
        %v6134 = vpop.f32.mrb[0].mxu0
        %6135 = vmatprep.mubr.f32.mxu0 0.0
        %6136 = vmatmul.mubr.f32.gmra.mrb[0].mxu0 %v395
        %v6137 = vpop.f32.mrb[0].mxu0
        %v6138 = vadd.f32 0.0, %v6137
        %v6139 = vpop.f32.mrb[0].mxu0
        %6140 = vmatprep.mubr.f32.mxu0 0.0
        %6141 = vmatmul.mubr.f32.gmra.mrb[0].mxu0 %v398
        %v6142 = vpop.f32.mrb[0].mxu0
        %v6143 = vadd.f32 0.0, %v6142
        %v6144 = vpop.f32.mrb[0].mxu0
        %6145 = vmatprep.mubr.f32.mxu0 0.0
        %6146 = vmatmul.mubr.f32.gmra.mrb[0].mxu0 %v401
        %v6147 = vpop.f32.mrb[0].mxu0
        %v6148 = vadd.f32 0.0, %v6147
        %v6149 = vpop.f32.mrb[0].mxu0
        %6150 = vmatprep.mubr.f32.mxu0 0.0
        %6151 = vmatmul.mubr.f32.gmra.mrb[0].mxu0 %v404
        %v6152 = vpop.f32.mrb[0].mxu0
        %v6153 = vadd.f32 0.0, %v6152
        %v6154 = vpop.f32.mrb[0].mxu0
        %6155 = vmatprep.mubr.f32.mxu0 0.0
        %6156 = vmatmul.mubr.f32.gmra.mrb[0].mxu0 %v407
        %v6157 = vpop.f32.mrb[0].mxu0
        %v6158 = vadd.f32 0.0, %v6157
        %v6159 = vpop.f32.mrb[0].mxu0
        %6160 = vmatprep.mubr.f32.mxu0 0.0
        %6161 = vmatmul.mubr.f32.gmra.mrb[0].mxu0 %v410
        %v6162 = vpop.f32.mrb[0].mxu0
        %v6163 = vadd.f32 0.0, %v6162
        %v6164 = vpop.f32.mrb[0].mxu0
        %6165 = vmatprep.mubr.f32.mxu0 0.0
        %6166 = vmatmul.mubr.f32.gmra.mrb[0].mxu0 %v413
        %v6167 = vpop.f32.mrb[0].mxu0
        %v6168 = vadd.f32 0.0, %v6167
        %v6169 = vpop.f32.mrb[0].mxu0
        %6170 = vmatprep.mubr.f32.mxu0 0.0
        %6171 = vmatmul.mubr.f32.gmra.mrb[0].mxu0 %v416
        %v6172 = vpop.f32.mrb[0].mxu0
        %v6173 = vadd.f32 0.0, %v6172
        %v6174 = vpop.f32.mrb[0].mxu0
        %6175 = vmatprep.mubr.f32.mxu0 0.0
        %6176 = vmatmul.mubr.f32.gmra.mrb[0].mxu0 %v419
        %v6177 = vpop.f32.mrb[0].mxu0
        %v6178 = vadd.f32 0.0, %v6177
        %v6179 = vpop.f32.mrb[0].mxu0
        %6180 = vmatprep.mubr.f32.mxu0 0.0
        %6181 = vmatmul.mubr.f32.gmra.mrb[0].mxu0 %v422
        %v6182 = vpop.f32.mrb[0].mxu0
        %v6183 = vadd.f32 0.0, %v6182
        %v6184 = vpop.f32.mrb[0].mxu0
        %6185 = vmatprep.mubr.f32.mxu0 0.0
        %6186 = vmatmul.mubr.f32.gmra.mrb[0].mxu0 %v425
        %v6187 = vpop.f32.mrb[0].mxu0
        %v6188 = vadd.f32 0.0, %v6187
        %v6189 = vpop.f32.mrb[0].mxu0
        %6190 = vmatprep.mubr.f32.mxu0 0.0
        %6191 = vmatmul.mubr.f32.gmra.mrb[0].mxu0 %v428
        %v6192 = vpop.f32.mrb[0].mxu0
        %v6193 = vadd.f32 0.0, %v6192
        %v6194 = vpop.f32.mrb[0].mxu0
        %6195 = vdwg.mxu0
        %v6196 = vadd.f32 %v6033, %v6118
        %v6197 = vadd.f32 %v6034, %v6123
        %v6198 = vadd.f32 %v6035, %v6128
        %v6199 = vadd.f32 %v6036, %v6133
        %v6200 = vadd.f32 %v6037, %v6138
        %v6201 = vadd.f32 %v6038, %v6143
        %v6202 = vadd.f32 %v6039, %v6148
        %v6203 = vadd.f32 %v6040, %v6153
        %v6204 = vadd.f32 %v6041, %v6158
        %v6205 = vadd.f32 %v6042, %v6163
        %v6206 = vadd.f32 %v6043, %v6168
        %v6207 = vadd.f32 %v6044, %v6173
        %v6208 = vadd.f32 %v6045, %v6178
        %v6209 = vadd.f32 %v6046, %v6183
        %v6210 = vadd.f32 %v6047, %v6188
        %v6211 = vadd.f32 %v6048, %v6193
        %v6212 = vld [vmem:[%s363 + $0x24] sm:$0xff]
        %v6213 = vld [vmem:[%s363 + $0x2c] sm:$0xff]
        %v6214 = vld [vmem:[%s363 + $0x5c] sm:$0xff]
        %v6215 = vld [vmem:[%s363 + $0x64] sm:$0xff]
        %v6216 = vld [vmem:[%s363 + $0x94] sm:$0xff]
        %v6217 = vld [vmem:[%s363 + $0x9c] sm:$0xff]
        %v6218 = vld [vmem:[%s363 + $0xcc] sm:$0xff]
        %v6219 = vld [vmem:[%s363 + $0xd4] sm:$0xff]
        %v6220 = vld [vmem:[%s363 + $0x104] sm:$0xff]
        %v6221 = vld [vmem:[%s363 + $0x10c] sm:$0xff]
        %v6222 = vld [vmem:[%s363 + $0x13c] sm:$0xff]
        %v6223 = vld [vmem:[%s363 + $0x144] sm:$0xff]
        %v6224 = vld [vmem:[%s363 + $0x174] sm:$0xff]
        %v6225 = vld [vmem:[%s363 + $0x17c] sm:$0xff]
        %v6226 = vld [vmem:[%s363 + $0x1ac] sm:$0xff]
        %v6227 = vld [vmem:[%s363 + $0x1b4] sm:$0xff]
        %s6228 = scalar_lea.vmem %s2, 184
        %v6229 = vld [vmem:[%s6228] sm:$0xff]
        %v6231 = vsel %vm381, %v6212, 0
        %v6234 = vsel %vm381, %v6213, 0
        %v6237 = vsel %vm381, %v6214, 0
        %v6240 = vsel %vm381, %v6215, 0
        %v6243 = vsel %vm381, %v6216, 0
        %v6246 = vsel %vm381, %v6217, 0
        %v6249 = vsel %vm381, %v6218, 0
        %v6252 = vsel %vm381, %v6219, 0
        %v6255 = vsel %vm381, %v6220, 0
        %v6258 = vsel %vm381, %v6221, 0
        %v6261 = vsel %vm381, %v6222, 0
        %v6264 = vsel %vm381, %v6223, 0
        %v6267 = vsel %vm381, %v6224, 0
        %v6270 = vsel %vm381, %v6225, 0
        %v6273 = vsel %vm381, %v6226, 0
        %v6276 = vsel %vm381, %v6227, 0
        %6278 = vmatprep.subr.mxu0 0.0
        %6279 = vmatpush1.msra.mxu0 %v6229
        %6280 = vmatprep.subr.mxu0 0.0
        %6281 = vmatpush1.msra.mxu0 0.0
        %6282 = vmatprep.subr.mxu0 0.0
        %6283 = vmatpush1.msra.mxu0 0.0
        %6284 = vmatprep.subr.mxu0 0.0
        %6285 = vmatpush1.msra.mxu0 0.0
        %6286 = vmatprep.subr.mxu0 0.0
        %6287 = vmatpush1.msra.mxu0 0.0
        %6288 = vmatprep.subr.mxu0 0.0
        %6289 = vmatpush1.msra.mxu0 0.0
        %6290 = vmatprep.subr.mxu0 0.0
        %6291 = vmatpush1.msra.mxu0 0.0
        %6292 = vmatprep.subr.mxu0 0.0
        %6293 = vmatpush1.msra.mxu0 0.0
        %6294 = vmatprep.subr.mxu0 0.0
        %6295 = vmatpush1.msra.mxu0 0.0
        %6296 = vmatprep.subr.mxu0 0.0
        %6297 = vmatpush1.msra.mxu0 0.0
        %6298 = vmatprep.subr.mxu0 0.0
        %6299 = vmatpush1.msra.mxu0 0.0
        %6300 = vmatprep.subr.mxu0 0.0
        %6301 = vmatpush1.msra.mxu0 0.0
        %6302 = vmatprep.subr.mxu0 0.0
        %6303 = vmatpush1.msra.mxu0 0.0
        %6304 = vmatprep.subr.mxu0 0.0
        %6305 = vmatpush1.msra.mxu0 0.0
        %6306 = vmatprep.subr.mxu0 0.0
        %6307 = vmatpush1.msra.mxu0 0.0
        %6308 = vmatprep.subr.mxu0 0.0
        %6309 = vmatpush1.msra.mxu0 0.0
        %6310 = vmatprep.subr.mxu0 0.0
        %6311 = vmatpush1.msra.mxu0 0.0
        %6312 = vmatprep.subr.mxu0 0.0
        %6313 = vmatpush1.msra.mxu0 0.0
        %6314 = vmatprep.subr.mxu0 0.0
        %6315 = vmatpush1.msra.mxu0 0.0
        %6316 = vmatprep.subr.mxu0 0.0
        %6317 = vmatpush1.msra.mxu0 0.0
        %6318 = vmatprep.subr.mxu0 0.0
        %6319 = vmatpush1.msra.mxu0 0.0
        %6320 = vmatprep.subr.mxu0 0.0
        %6321 = vmatpush1.msra.mxu0 0.0
        %6322 = vmatprep.subr.mxu0 0.0
        %6323 = vmatpush1.msra.mxu0 0.0
        %6324 = vmatprep.subr.mxu0 0.0
        %6325 = vmatpush1.msra.mxu0 0.0
        %6326 = vmatprep.subr.mxu0 0.0
        %6327 = vmatpush1.msra.mxu0 0.0
        %6328 = vmatprep.subr.mxu0 0.0
        %6329 = vmatpush1.msra.mxu0 0.0
        %6330 = vmatprep.subr.mxu0 0.0
        %6331 = vmatpush1.msra.mxu0 0.0
        %6332 = vmatprep.subr.mxu0 0.0
        %6333 = vmatpush1.msra.mxu0 0.0
        %6334 = vmatprep.subr.mxu0 0.0
        %6335 = vmatpush1.msra.mxu0 0.0
        %6336 = vmatprep.subr.mxu0 0.0
        %6337 = vmatpush1.msra.mxu0 0.0
        %6338 = vmatprep.subr.mxu0 0.0
        %6339 = vmatpush1.msra.mxu0 0.0
        %6340 = vmatprep.subr.mxu0 0.0
        %6341 = vmatpush1.msra.mxu0 0.0
        %6342 = vmatprep.mubr.f32.mxu0 0.0
        %6343 = vmatmul.mubr.f32.gmra.mrb[0].mxu0 %v6231
        %v6344 = vpop.f32.mrb[0].mxu0
        %v6345 = vadd.f32 0.0, %v6344
        %v6346 = vpop.f32.mrb[0].mxu0
        %6347 = vmatprep.mubr.f32.mxu0 0.0
        %6348 = vmatmul.mubr.f32.gmra.mrb[0].mxu0 %v6234
        %v6349 = vpop.f32.mrb[0].mxu0
        %v6350 = vadd.f32 0.0, %v6349
        %v6351 = vpop.f32.mrb[0].mxu0
        %6352 = vmatprep.mubr.f32.mxu0 0.0
        %6353 = vmatmul.mubr.f32.gmra.mrb[0].mxu0 %v6237
        %v6354 = vpop.f32.mrb[0].mxu0
        %v6355 = vadd.f32 0.0, %v6354
        %v6356 = vpop.f32.mrb[0].mxu0
        %6357 = vmatprep.mubr.f32.mxu0 0.0
        %6358 = vmatmul.mubr.f32.gmra.mrb[0].mxu0 %v6240
        %v6359 = vpop.f32.mrb[0].mxu0
        %v6360 = vadd.f32 0.0, %v6359
        %v6361 = vpop.f32.mrb[0].mxu0
        %6362 = vmatprep.mubr.f32.mxu0 0.0
        %6363 = vmatmul.mubr.f32.gmra.mrb[0].mxu0 %v6243
        %v6364 = vpop.f32.mrb[0].mxu0
        %v6365 = vadd.f32 0.0, %v6364
        %v6366 = vpop.f32.mrb[0].mxu0
        %6367 = vmatprep.mubr.f32.mxu0 0.0
        %6368 = vmatmul.mubr.f32.gmra.mrb[0].mxu0 %v6246
        %v6369 = vpop.f32.mrb[0].mxu0
        %v6370 = vadd.f32 0.0, %v6369
        %v6371 = vpop.f32.mrb[0].mxu0
        %6372 = vmatprep.mubr.f32.mxu0 0.0
        %6373 = vmatmul.mubr.f32.gmra.mrb[0].mxu0 %v6249
        %v6374 = vpop.f32.mrb[0].mxu0
        %v6375 = vadd.f32 0.0, %v6374
        %v6376 = vpop.f32.mrb[0].mxu0
        %6377 = vmatprep.mubr.f32.mxu0 0.0
        %6378 = vmatmul.mubr.f32.gmra.mrb[0].mxu0 %v6252
        %v6379 = vpop.f32.mrb[0].mxu0
        %v6380 = vadd.f32 0.0, %v6379
        %v6381 = vpop.f32.mrb[0].mxu0
        %6382 = vmatprep.mubr.f32.mxu0 0.0
        %6383 = vmatmul.mubr.f32.gmra.mrb[0].mxu0 %v6255
        %v6384 = vpop.f32.mrb[0].mxu0
        %v6385 = vadd.f32 0.0, %v6384
        %v6386 = vpop.f32.mrb[0].mxu0
        %6387 = vmatprep.mubr.f32.mxu0 0.0
        %6388 = vmatmul.mubr.f32.gmra.mrb[0].mxu0 %v6258
        %v6389 = vpop.f32.mrb[0].mxu0
        %v6390 = vadd.f32 0.0, %v6389
        %v6391 = vpop.f32.mrb[0].mxu0
        %6392 = vmatprep.mubr.f32.mxu0 0.0
        %6393 = vmatmul.mubr.f32.gmra.mrb[0].mxu0 %v6261
        %v6394 = vpop.f32.mrb[0].mxu0
        %v6395 = vadd.f32 0.0, %v6394
        %v6396 = vpop.f32.mrb[0].mxu0
        %6397 = vmatprep.mubr.f32.mxu0 0.0
        %6398 = vmatmul.mubr.f32.gmra.mrb[0].mxu0 %v6264
        %v6399 = vpop.f32.mrb[0].mxu0
        %v6400 = vadd.f32 0.0, %v6399
        %v6401 = vpop.f32.mrb[0].mxu0
        %6402 = vmatprep.mubr.f32.mxu0 0.0
        %6403 = vmatmul.mubr.f32.gmra.mrb[0].mxu0 %v6267
        %v6404 = vpop.f32.mrb[0].mxu0
        %v6405 = vadd.f32 0.0, %v6404
        %v6406 = vpop.f32.mrb[0].mxu0
        %6407 = vmatprep.mubr.f32.mxu0 0.0
        %6408 = vmatmul.mubr.f32.gmra.mrb[0].mxu0 %v6270
        %v6409 = vpop.f32.mrb[0].mxu0
        %v6410 = vadd.f32 0.0, %v6409
        %v6411 = vpop.f32.mrb[0].mxu0
        %6412 = vmatprep.mubr.f32.mxu0 0.0
        %6413 = vmatmul.mubr.f32.gmra.mrb[0].mxu0 %v6273
        %v6414 = vpop.f32.mrb[0].mxu0
        %v6415 = vadd.f32 0.0, %v6414
        %v6416 = vpop.f32.mrb[0].mxu0
        %6417 = vmatprep.mubr.f32.mxu0 0.0
        %6418 = vmatmul.mubr.f32.gmra.mrb[0].mxu0 %v6276
        %v6419 = vpop.f32.mrb[0].mxu0
        %v6420 = vadd.f32 0.0, %v6419
        %v6421 = vpop.f32.mrb[0].mxu0
        %6422 = vdwg.mxu0
        %v6423 = vadd.f32 %v6196, %v6345
        %v6424 = vadd.f32 %v6197, %v6350
        %v6425 = vadd.f32 %v6198, %v6355
        %v6426 = vadd.f32 %v6199, %v6360
        %v6427 = vadd.f32 %v6200, %v6365
        %v6428 = vadd.f32 %v6201, %v6370
        %v6429 = vadd.f32 %v6202, %v6375
        %v6430 = vadd.f32 %v6203, %v6380
        %v6431 = vadd.f32 %v6204, %v6385
        %v6432 = vadd.f32 %v6205, %v6390
        %v6433 = vadd.f32 %v6206, %v6395
        %v6434 = vadd.f32 %v6207, %v6400
        %v6435 = vadd.f32 %v6208, %v6405
        %v6436 = vadd.f32 %v6209, %v6410
        %v6437 = vadd.f32 %v6210, %v6415
        %v6438 = vadd.f32 %v6211, %v6420
        %s6439 = sadd.s32 %s360, 36
        %s6440 = smul.u32 %s6439, 56
        %s6441 = scalar_lea.vmem %s355, %s6440
        %v6442 = vld [vmem:[%s6441] sm:$0xff]
        %v6443 = vld [vmem:[%s6441 + $0x8] sm:$0xff]
        %v6444 = vld [vmem:[%s6441 + $0x38] sm:$0xff]
        %v6445 = vld [vmem:[%s6441 + $0x40] sm:$0xff]
        %v6446 = vld [vmem:[%s6441 + $0x70] sm:$0xff]
        %v6447 = vld [vmem:[%s6441 + $0x78] sm:$0xff]
        %v6448 = vld [vmem:[%s6441 + $0xa8] sm:$0xff]
        %v6449 = vld [vmem:[%s6441 + $0xb0] sm:$0xff]
        %v6450 = vld [vmem:[%s6441 + $0xe0] sm:$0xff]
        %v6451 = vld [vmem:[%s6441 + $0xe8] sm:$0xff]
        %v6452 = vld [vmem:[%s6441 + $0x118] sm:$0xff]
        %v6453 = vld [vmem:[%s6441 + $0x120] sm:$0xff]
        %v6454 = vld [vmem:[%s6441 + $0x150] sm:$0xff]
        %v6455 = vld [vmem:[%s6441 + $0x158] sm:$0xff]
        %v6456 = vld [vmem:[%s6441 + $0x188] sm:$0xff]
        %v6457 = vld [vmem:[%s6441 + $0x190] sm:$0xff]
        %s6458 = scalar_lea.vmem %s2, 192
        %v6459 = vld [vmem:[%s6458] sm:$0xff]
        %v6461 = vsel %vm381, %v6442, 0
        %v6464 = vsel %vm381, %v6443, 0
        %v6467 = vsel %vm381, %v6444, 0
        %v6470 = vsel %vm381, %v6445, 0
        %v6473 = vsel %vm381, %v6446, 0
        %v6476 = vsel %vm381, %v6447, 0
        %v6479 = vsel %vm381, %v6448, 0
        %v6482 = vsel %vm381, %v6449, 0
        %v6485 = vsel %vm381, %v6450, 0
        %v6488 = vsel %vm381, %v6451, 0
        %v6491 = vsel %vm381, %v6452, 0
        %v6494 = vsel %vm381, %v6453, 0
        %v6497 = vsel %vm381, %v6454, 0
        %v6500 = vsel %vm381, %v6455, 0
        %v6503 = vsel %vm381, %v6456, 0
        %v6506 = vsel %vm381, %v6457, 0
        %6508 = vmatprep.subr.mxu0 0.0
        %6509 = vmatpush1.msra.mxu0 %v6459
        %6510 = vmatprep.subr.mxu0 0.0
        %6511 = vmatpush1.msra.mxu0 0.0
        %6512 = vmatprep.subr.mxu0 0.0
        %6513 = vmatpush1.msra.mxu0 0.0
        %6514 = vmatprep.subr.mxu0 0.0
        %6515 = vmatpush1.msra.mxu0 0.0
        %6516 = vmatprep.subr.mxu0 0.0
        %6517 = vmatpush1.msra.mxu0 0.0
        %6518 = vmatprep.subr.mxu0 0.0
        %6519 = vmatpush1.msra.mxu0 0.0
        %6520 = vmatprep.subr.mxu0 0.0
        %6521 = vmatpush1.msra.mxu0 0.0
        %6522 = vmatprep.subr.mxu0 0.0
        %6523 = vmatpush1.msra.mxu0 0.0
        %6524 = vmatprep.subr.mxu0 0.0
        %6525 = vmatpush1.msra.mxu0 0.0
        %6526 = vmatprep.subr.mxu0 0.0
        %6527 = vmatpush1.msra.mxu0 0.0
        %6528 = vmatprep.subr.mxu0 0.0
        %6529 = vmatpush1.msra.mxu0 0.0
        %6530 = vmatprep.subr.mxu0 0.0
        %6531 = vmatpush1.msra.mxu0 0.0
        %6532 = vmatprep.subr.mxu0 0.0
        %6533 = vmatpush1.msra.mxu0 0.0
        %6534 = vmatprep.subr.mxu0 0.0
        %6535 = vmatpush1.msra.mxu0 0.0
        %6536 = vmatprep.subr.mxu0 0.0
        %6537 = vmatpush1.msra.mxu0 0.0
        %6538 = vmatprep.subr.mxu0 0.0
        %6539 = vmatpush1.msra.mxu0 0.0
        %6540 = vmatprep.subr.mxu0 0.0
        %6541 = vmatpush1.msra.mxu0 0.0
        %6542 = vmatprep.subr.mxu0 0.0
        %6543 = vmatpush1.msra.mxu0 0.0
        %6544 = vmatprep.subr.mxu0 0.0
        %6545 = vmatpush1.msra.mxu0 0.0
        %6546 = vmatprep.subr.mxu0 0.0
        %6547 = vmatpush1.msra.mxu0 0.0
        %6548 = vmatprep.subr.mxu0 0.0
        %6549 = vmatpush1.msra.mxu0 0.0
        %6550 = vmatprep.subr.mxu0 0.0
        %6551 = vmatpush1.msra.mxu0 0.0
        %6552 = vmatprep.subr.mxu0 0.0
        %6553 = vmatpush1.msra.mxu0 0.0
        %6554 = vmatprep.subr.mxu0 0.0
        %6555 = vmatpush1.msra.mxu0 0.0
        %6556 = vmatprep.subr.mxu0 0.0
        %6557 = vmatpush1.msra.mxu0 0.0
        %6558 = vmatprep.subr.mxu0 0.0
        %6559 = vmatpush1.msra.mxu0 0.0
        %6560 = vmatprep.subr.mxu0 0.0
        %6561 = vmatpush1.msra.mxu0 0.0
        %6562 = vmatprep.subr.mxu0 0.0
        %6563 = vmatpush1.msra.mxu0 0.0
        %6564 = vmatprep.subr.mxu0 0.0
        %6565 = vmatpush1.msra.mxu0 0.0
        %6566 = vmatprep.subr.mxu0 0.0
        %6567 = vmatpush1.msra.mxu0 0.0
        %6568 = vmatprep.subr.mxu0 0.0
        %6569 = vmatpush1.msra.mxu0 0.0
        %6570 = vmatprep.subr.mxu0 0.0
        %6571 = vmatpush1.msra.mxu0 0.0
        %6572 = vmatprep.mubr.f32.mxu0 0.0
        %6573 = vmatmul.mubr.f32.gmra.mrb[0].mxu0 %v6461
        %v6574 = vpop.f32.mrb[0].mxu0
        %v6575 = vadd.f32 0.0, %v6574
        %v6576 = vpop.f32.mrb[0].mxu0
        %6577 = vmatprep.mubr.f32.mxu0 0.0
        %6578 = vmatmul.mubr.f32.gmra.mrb[0].mxu0 %v6464
        %v6579 = vpop.f32.mrb[0].mxu0
        %v6580 = vadd.f32 0.0, %v6579
        %v6581 = vpop.f32.mrb[0].mxu0
        %6582 = vmatprep.mubr.f32.mxu0 0.0
        %6583 = vmatmul.mubr.f32.gmra.mrb[0].mxu0 %v6467
        %v6584 = vpop.f32.mrb[0].mxu0
        %v6585 = vadd.f32 0.0, %v6584
        %v6586 = vpop.f32.mrb[0].mxu0
        %6587 = vmatprep.mubr.f32.mxu0 0.0
        %6588 = vmatmul.mubr.f32.gmra.mrb[0].mxu0 %v6470
        %v6589 = vpop.f32.mrb[0].mxu0
        %v6590 = vadd.f32 0.0, %v6589
        %v6591 = vpop.f32.mrb[0].mxu0
        %6592 = vmatprep.mubr.f32.mxu0 0.0
        %6593 = vmatmul.mubr.f32.gmra.mrb[0].mxu0 %v6473
        %v6594 = vpop.f32.mrb[0].mxu0
        %v6595 = vadd.f32 0.0, %v6594
        %v6596 = vpop.f32.mrb[0].mxu0
        %6597 = vmatprep.mubr.f32.mxu0 0.0
        %6598 = vmatmul.mubr.f32.gmra.mrb[0].mxu0 %v6476
        %v6599 = vpop.f32.mrb[0].mxu0
        %v6600 = vadd.f32 0.0, %v6599
        %v6601 = vpop.f32.mrb[0].mxu0
        %6602 = vmatprep.mubr.f32.mxu0 0.0
        %6603 = vmatmul.mubr.f32.gmra.mrb[0].mxu0 %v6479
        %v6604 = vpop.f32.mrb[0].mxu0
        %v6605 = vadd.f32 0.0, %v6604
        %v6606 = vpop.f32.mrb[0].mxu0
        %6607 = vmatprep.mubr.f32.mxu0 0.0
        %6608 = vmatmul.mubr.f32.gmra.mrb[0].mxu0 %v6482
        %v6609 = vpop.f32.mrb[0].mxu0
        %v6610 = vadd.f32 0.0, %v6609
        %v6611 = vpop.f32.mrb[0].mxu0
        %6612 = vmatprep.mubr.f32.mxu0 0.0
        %6613 = vmatmul.mubr.f32.gmra.mrb[0].mxu0 %v6485
        %v6614 = vpop.f32.mrb[0].mxu0
        %v6615 = vadd.f32 0.0, %v6614
        %v6616 = vpop.f32.mrb[0].mxu0
        %6617 = vmatprep.mubr.f32.mxu0 0.0
        %6618 = vmatmul.mubr.f32.gmra.mrb[0].mxu0 %v6488
        %v6619 = vpop.f32.mrb[0].mxu0
        %v6620 = vadd.f32 0.0, %v6619
        %v6621 = vpop.f32.mrb[0].mxu0
        %6622 = vmatprep.mubr.f32.mxu0 0.0
        %6623 = vmatmul.mubr.f32.gmra.mrb[0].mxu0 %v6491
        %v6624 = vpop.f32.mrb[0].mxu0
        %v6625 = vadd.f32 0.0, %v6624
        %v6626 = vpop.f32.mrb[0].mxu0
        %6627 = vmatprep.mubr.f32.mxu0 0.0
        %6628 = vmatmul.mubr.f32.gmra.mrb[0].mxu0 %v6494
        %v6629 = vpop.f32.mrb[0].mxu0
        %v6630 = vadd.f32 0.0, %v6629
        %v6631 = vpop.f32.mrb[0].mxu0
        %6632 = vmatprep.mubr.f32.mxu0 0.0
        %6633 = vmatmul.mubr.f32.gmra.mrb[0].mxu0 %v6497
        %v6634 = vpop.f32.mrb[0].mxu0
        %v6635 = vadd.f32 0.0, %v6634
        %v6636 = vpop.f32.mrb[0].mxu0
        %6637 = vmatprep.mubr.f32.mxu0 0.0
        %6638 = vmatmul.mubr.f32.gmra.mrb[0].mxu0 %v6500
        %v6639 = vpop.f32.mrb[0].mxu0
        %v6640 = vadd.f32 0.0, %v6639
        %v6641 = vpop.f32.mrb[0].mxu0
        %6642 = vmatprep.mubr.f32.mxu0 0.0
        %6643 = vmatmul.mubr.f32.gmra.mrb[0].mxu0 %v6503
        %v6644 = vpop.f32.mrb[0].mxu0
        %v6645 = vadd.f32 0.0, %v6644
        %v6646 = vpop.f32.mrb[0].mxu0
        %6647 = vmatprep.mubr.f32.mxu0 0.0
        %6648 = vmatmul.mubr.f32.gmra.mrb[0].mxu0 %v6506
        %v6649 = vpop.f32.mrb[0].mxu0
        %v6650 = vadd.f32 0.0, %v6649
        %v6651 = vpop.f32.mrb[0].mxu0
        %6652 = vdwg.mxu0
        %v6653 = vadd.f32 %v6423, %v6575
        %v6654 = vadd.f32 %v6424, %v6580
        %v6655 = vadd.f32 %v6425, %v6585
        %v6656 = vadd.f32 %v6426, %v6590
        %v6657 = vadd.f32 %v6427, %v6595
        %v6658 = vadd.f32 %v6428, %v6600
        %v6659 = vadd.f32 %v6429, %v6605
        %v6660 = vadd.f32 %v6430, %v6610
        %v6661 = vadd.f32 %v6431, %v6615
        %v6662 = vadd.f32 %v6432, %v6620
        %v6663 = vadd.f32 %v6433, %v6625
        %v6664 = vadd.f32 %v6434, %v6630
        %v6665 = vadd.f32 %v6435, %v6635
        %v6666 = vadd.f32 %v6436, %v6640
        %v6667 = vadd.f32 %v6437, %v6645
        %v6668 = vadd.f32 %v6438, %v6650
        %v6669 = vld [vmem:[%s6441 + $0x12] sm:$0xff]
        %v6670 = vld [vmem:[%s6441 + $0x1a] sm:$0xff]
        %v6671 = vld [vmem:[%s6441 + $0x4a] sm:$0xff]
        %v6672 = vld [vmem:[%s6441 + $0x52] sm:$0xff]
        %v6673 = vld [vmem:[%s6441 + $0x82] sm:$0xff]
        %v6674 = vld [vmem:[%s6441 + $0x8a] sm:$0xff]
        %v6675 = vld [vmem:[%s6441 + $0xba] sm:$0xff]
        %v6676 = vld [vmem:[%s6441 + $0xc2] sm:$0xff]
        %v6677 = vld [vmem:[%s6441 + $0xf2] sm:$0xff]
        %v6678 = vld [vmem:[%s6441 + $0xfa] sm:$0xff]
        %v6679 = vld [vmem:[%s6441 + $0x12a] sm:$0xff]
        %v6680 = vld [vmem:[%s6441 + $0x132] sm:$0xff]
        %v6681 = vld [vmem:[%s6441 + $0x162] sm:$0xff]
        %v6682 = vld [vmem:[%s6441 + $0x16a] sm:$0xff]
        %v6683 = vld [vmem:[%s6441 + $0x19a] sm:$0xff]
        %v6684 = vld [vmem:[%s6441 + $0x1a2] sm:$0xff]
        %s6685 = scalar_lea.vmem %s2, 200
        %v6686 = vld [vmem:[%s6685] sm:$0xff]
        %v6688 = vsel %vm381, %v6669, 0
        %v6691 = vsel %vm381, %v6670, 0
        %v6694 = vsel %vm381, %v6671, 0
        %v6697 = vsel %vm381, %v6672, 0
        %v6700 = vsel %vm381, %v6673, 0
        %v6703 = vsel %vm381, %v6674, 0
        %v6706 = vsel %vm381, %v6675, 0
        %v6709 = vsel %vm381, %v6676, 0
        %v6712 = vsel %vm381, %v6677, 0
        %v6715 = vsel %vm381, %v6678, 0
        %v6718 = vsel %vm381, %v6679, 0
        %v6721 = vsel %vm381, %v6680, 0
        %v6724 = vsel %vm381, %v6681, 0
        %v6727 = vsel %vm381, %v6682, 0
        %v6730 = vsel %vm381, %v6683, 0
        %v6733 = vsel %vm381, %v6684, 0
        %6735 = vmatprep.subr.mxu0 0.0
        %6736 = vmatpush1.msra.mxu0 %v6686
        %6737 = vmatprep.subr.mxu0 0.0
        %6738 = vmatpush1.msra.mxu0 0.0
        %6739 = vmatprep.subr.mxu0 0.0
        %6740 = vmatpush1.msra.mxu0 0.0
        %6741 = vmatprep.subr.mxu0 0.0
        %6742 = vmatpush1.msra.mxu0 0.0
        %6743 = vmatprep.subr.mxu0 0.0
        %6744 = vmatpush1.msra.mxu0 0.0
        %6745 = vmatprep.subr.mxu0 0.0
        %6746 = vmatpush1.msra.mxu0 0.0
        %6747 = vmatprep.subr.mxu0 0.0
        %6748 = vmatpush1.msra.mxu0 0.0
        %6749 = vmatprep.subr.mxu0 0.0
        %6750 = vmatpush1.msra.mxu0 0.0
        %6751 = vmatprep.subr.mxu0 0.0
        %6752 = vmatpush1.msra.mxu0 0.0
        %6753 = vmatprep.subr.mxu0 0.0
        %6754 = vmatpush1.msra.mxu0 0.0
        %6755 = vmatprep.subr.mxu0 0.0
        %6756 = vmatpush1.msra.mxu0 0.0
        %6757 = vmatprep.subr.mxu0 0.0
        %6758 = vmatpush1.msra.mxu0 0.0
        %6759 = vmatprep.subr.mxu0 0.0
        %6760 = vmatpush1.msra.mxu0 0.0
        %6761 = vmatprep.subr.mxu0 0.0
        %6762 = vmatpush1.msra.mxu0 0.0
        %6763 = vmatprep.subr.mxu0 0.0
        %6764 = vmatpush1.msra.mxu0 0.0
        %6765 = vmatprep.subr.mxu0 0.0
        %6766 = vmatpush1.msra.mxu0 0.0
        %6767 = vmatprep.subr.mxu0 0.0
        %6768 = vmatpush1.msra.mxu0 0.0
        %6769 = vmatprep.subr.mxu0 0.0
        %6770 = vmatpush1.msra.mxu0 0.0
        %6771 = vmatprep.subr.mxu0 0.0
        %6772 = vmatpush1.msra.mxu0 0.0
        %6773 = vmatprep.subr.mxu0 0.0
        %6774 = vmatpush1.msra.mxu0 0.0
        %6775 = vmatprep.subr.mxu0 0.0
        %6776 = vmatpush1.msra.mxu0 0.0
        %6777 = vmatprep.subr.mxu0 0.0
        %6778 = vmatpush1.msra.mxu0 0.0
        %6779 = vmatprep.subr.mxu0 0.0
        %6780 = vmatpush1.msra.mxu0 0.0
        %6781 = vmatprep.subr.mxu0 0.0
        %6782 = vmatpush1.msra.mxu0 0.0
        %6783 = vmatprep.subr.mxu0 0.0
        %6784 = vmatpush1.msra.mxu0 0.0
        %6785 = vmatprep.subr.mxu0 0.0
        %6786 = vmatpush1.msra.mxu0 0.0
        %6787 = vmatprep.subr.mxu0 0.0
        %6788 = vmatpush1.msra.mxu0 0.0
        %6789 = vmatprep.subr.mxu0 0.0
        %6790 = vmatpush1.msra.mxu0 0.0
        %6791 = vmatprep.subr.mxu0 0.0
        %6792 = vmatpush1.msra.mxu0 0.0
        %6793 = vmatprep.subr.mxu0 0.0
        %6794 = vmatpush1.msra.mxu0 0.0
        %6795 = vmatprep.subr.mxu0 0.0
        %6796 = vmatpush1.msra.mxu0 0.0
        %6797 = vmatprep.subr.mxu0 0.0
        %6798 = vmatpush1.msra.mxu0 0.0
        %6799 = vmatprep.mubr.f32.mxu0 0.0
        %6800 = vmatmul.mubr.f32.gmra.mrb[0].mxu0 %v6688
        %v6801 = vpop.f32.mrb[0].mxu0
        %v6802 = vadd.f32 0.0, %v6801
        %v6803 = vpop.f32.mrb[0].mxu0
        %6804 = vmatprep.mubr.f32.mxu0 0.0
        %6805 = vmatmul.mubr.f32.gmra.mrb[0].mxu0 %v6691
        %v6806 = vpop.f32.mrb[0].mxu0
        %v6807 = vadd.f32 0.0, %v6806
        %v6808 = vpop.f32.mrb[0].mxu0
        %6809 = vmatprep.mubr.f32.mxu0 0.0
        %6810 = vmatmul.mubr.f32.gmra.mrb[0].mxu0 %v6694
        %v6811 = vpop.f32.mrb[0].mxu0
        %v6812 = vadd.f32 0.0, %v6811
        %v6813 = vpop.f32.mrb[0].mxu0
        %6814 = vmatprep.mubr.f32.mxu0 0.0
        %6815 = vmatmul.mubr.f32.gmra.mrb[0].mxu0 %v6697
        %v6816 = vpop.f32.mrb[0].mxu0
        %v6817 = vadd.f32 0.0, %v6816
        %v6818 = vpop.f32.mrb[0].mxu0
        %6819 = vmatprep.mubr.f32.mxu0 0.0
        %6820 = vmatmul.mubr.f32.gmra.mrb[0].mxu0 %v6700
        %v6821 = vpop.f32.mrb[0].mxu0
        %v6822 = vadd.f32 0.0, %v6821
        %v6823 = vpop.f32.mrb[0].mxu0
        %6824 = vmatprep.mubr.f32.mxu0 0.0
        %6825 = vmatmul.mubr.f32.gmra.mrb[0].mxu0 %v6703
        %v6826 = vpop.f32.mrb[0].mxu0
        %v6827 = vadd.f32 0.0, %v6826
        %v6828 = vpop.f32.mrb[0].mxu0
        %6829 = vmatprep.mubr.f32.mxu0 0.0
        %6830 = vmatmul.mubr.f32.gmra.mrb[0].mxu0 %v6706
        %v6831 = vpop.f32.mrb[0].mxu0
        %v6832 = vadd.f32 0.0, %v6831
        %v6833 = vpop.f32.mrb[0].mxu0
        %6834 = vmatprep.mubr.f32.mxu0 0.0
        %6835 = vmatmul.mubr.f32.gmra.mrb[0].mxu0 %v6709
        %v6836 = vpop.f32.mrb[0].mxu0
        %v6837 = vadd.f32 0.0, %v6836
        %v6838 = vpop.f32.mrb[0].mxu0
        %6839 = vmatprep.mubr.f32.mxu0 0.0
        %6840 = vmatmul.mubr.f32.gmra.mrb[0].mxu0 %v6712
        %v6841 = vpop.f32.mrb[0].mxu0
        %v6842 = vadd.f32 0.0, %v6841
        %v6843 = vpop.f32.mrb[0].mxu0
        %6844 = vmatprep.mubr.f32.mxu0 0.0
        %6845 = vmatmul.mubr.f32.gmra.mrb[0].mxu0 %v6715
        %v6846 = vpop.f32.mrb[0].mxu0
        %v6847 = vadd.f32 0.0, %v6846
        %v6848 = vpop.f32.mrb[0].mxu0
        %6849 = vmatprep.mubr.f32.mxu0 0.0
        %6850 = vmatmul.mubr.f32.gmra.mrb[0].mxu0 %v6718
        %v6851 = vpop.f32.mrb[0].mxu0
        %v6852 = vadd.f32 0.0, %v6851
        %v6853 = vpop.f32.mrb[0].mxu0
        %6854 = vmatprep.mubr.f32.mxu0 0.0
        %6855 = vmatmul.mubr.f32.gmra.mrb[0].mxu0 %v6721
        %v6856 = vpop.f32.mrb[0].mxu0
        %v6857 = vadd.f32 0.0, %v6856
        %v6858 = vpop.f32.mrb[0].mxu0
        %6859 = vmatprep.mubr.f32.mxu0 0.0
        %6860 = vmatmul.mubr.f32.gmra.mrb[0].mxu0 %v6724
        %v6861 = vpop.f32.mrb[0].mxu0
        %v6862 = vadd.f32 0.0, %v6861
        %v6863 = vpop.f32.mrb[0].mxu0
        %6864 = vmatprep.mubr.f32.mxu0 0.0
        %6865 = vmatmul.mubr.f32.gmra.mrb[0].mxu0 %v6727
        %v6866 = vpop.f32.mrb[0].mxu0
        %v6867 = vadd.f32 0.0, %v6866
        %v6868 = vpop.f32.mrb[0].mxu0
        %6869 = vmatprep.mubr.f32.mxu0 0.0
        %6870 = vmatmul.mubr.f32.gmra.mrb[0].mxu0 %v6730
        %v6871 = vpop.f32.mrb[0].mxu0
        %v6872 = vadd.f32 0.0, %v6871
        %v6873 = vpop.f32.mrb[0].mxu0
        %6874 = vmatprep.mubr.f32.mxu0 0.0
        %6875 = vmatmul.mubr.f32.gmra.mrb[0].mxu0 %v6733
        %v6876 = vpop.f32.mrb[0].mxu0
        %v6877 = vadd.f32 0.0, %v6876
        %v6878 = vpop.f32.mrb[0].mxu0
        %6879 = vdwg.mxu0
        %v6880 = vadd.f32 %v6653, %v6802
        %v6881 = vadd.f32 %v6654, %v6807
        %v6882 = vadd.f32 %v6655, %v6812
        %v6883 = vadd.f32 %v6656, %v6817
        %v6884 = vadd.f32 %v6657, %v6822
        %v6885 = vadd.f32 %v6658, %v6827
        %v6886 = vadd.f32 %v6659, %v6832
        %v6887 = vadd.f32 %v6660, %v6837
        %v6888 = vadd.f32 %v6661, %v6842
        %v6889 = vadd.f32 %v6662, %v6847
        %v6890 = vadd.f32 %v6663, %v6852
        %v6891 = vadd.f32 %v6664, %v6857
        %v6892 = vadd.f32 %v6665, %v6862
        %v6893 = vadd.f32 %v6666, %v6867
        %v6894 = vadd.f32 %v6667, %v6872
        %v6895 = vadd.f32 %v6668, %v6877
        %v6896 = vld [vmem:[%s6441 + $0x24] sm:$0xff]
        %v6897 = vld [vmem:[%s6441 + $0x2c] sm:$0xff]
        %v6898 = vld [vmem:[%s6441 + $0x5c] sm:$0xff]
        %v6899 = vld [vmem:[%s6441 + $0x64] sm:$0xff]
        %v6900 = vld [vmem:[%s6441 + $0x94] sm:$0xff]
        %v6901 = vld [vmem:[%s6441 + $0x9c] sm:$0xff]
        %v6902 = vld [vmem:[%s6441 + $0xcc] sm:$0xff]
        %v6903 = vld [vmem:[%s6441 + $0xd4] sm:$0xff]
        %v6904 = vld [vmem:[%s6441 + $0x104] sm:$0xff]
        %v6905 = vld [vmem:[%s6441 + $0x10c] sm:$0xff]
        %v6906 = vld [vmem:[%s6441 + $0x13c] sm:$0xff]
        %v6907 = vld [vmem:[%s6441 + $0x144] sm:$0xff]
        %v6908 = vld [vmem:[%s6441 + $0x174] sm:$0xff]
        %v6909 = vld [vmem:[%s6441 + $0x17c] sm:$0xff]
        %v6910 = vld [vmem:[%s6441 + $0x1ac] sm:$0xff]
        %v6911 = vld [vmem:[%s6441 + $0x1b4] sm:$0xff]
        %s6912 = scalar_lea.vmem %s2, 208
        %v6913 = vld [vmem:[%s6912] sm:$0xff]
        %v6915 = vsel %vm381, %v6896, 0
        %v6918 = vsel %vm381, %v6897, 0
        %v6921 = vsel %vm381, %v6898, 0
        %v6924 = vsel %vm381, %v6899, 0
        %v6927 = vsel %vm381, %v6900, 0
        %v6930 = vsel %vm381, %v6901, 0
        %v6933 = vsel %vm381, %v6902, 0
        %v6936 = vsel %vm381, %v6903, 0
        %v6939 = vsel %vm381, %v6904, 0
        %v6942 = vsel %vm381, %v6905, 0
        %v6945 = vsel %vm381, %v6906, 0
        %v6948 = vsel %vm381, %v6907, 0
        %v6951 = vsel %vm381, %v6908, 0
        %v6954 = vsel %vm381, %v6909, 0
        %v6957 = vsel %vm381, %v6910, 0
        %v6960 = vsel %vm381, %v6911, 0
        %6962 = vmatprep.subr.mxu0 0.0
        %6963 = vmatpush1.msra.mxu0 %v6913
        %6964 = vmatprep.subr.mxu0 0.0
        %6965 = vmatpush1.msra.mxu0 0.0
        %6966 = vmatprep.subr.mxu0 0.0
        %6967 = vmatpush1.msra.mxu0 0.0
        %6968 = vmatprep.subr.mxu0 0.0
        %6969 = vmatpush1.msra.mxu0 0.0
        %6970 = vmatprep.subr.mxu0 0.0
        %6971 = vmatpush1.msra.mxu0 0.0
        %6972 = vmatprep.subr.mxu0 0.0
        %6973 = vmatpush1.msra.mxu0 0.0
        %6974 = vmatprep.subr.mxu0 0.0
        %6975 = vmatpush1.msra.mxu0 0.0
        %6976 = vmatprep.subr.mxu0 0.0
        %6977 = vmatpush1.msra.mxu0 0.0
        %6978 = vmatprep.subr.mxu0 0.0
        %6979 = vmatpush1.msra.mxu0 0.0
        %6980 = vmatprep.subr.mxu0 0.0
        %6981 = vmatpush1.msra.mxu0 0.0
        %6982 = vmatprep.subr.mxu0 0.0
        %6983 = vmatpush1.msra.mxu0 0.0
        %6984 = vmatprep.subr.mxu0 0.0
        %6985 = vmatpush1.msra.mxu0 0.0
        %6986 = vmatprep.subr.mxu0 0.0
        %6987 = vmatpush1.msra.mxu0 0.0
        %6988 = vmatprep.subr.mxu0 0.0
        %6989 = vmatpush1.msra.mxu0 0.0
        %6990 = vmatprep.subr.mxu0 0.0
        %6991 = vmatpush1.msra.mxu0 0.0
        %6992 = vmatprep.subr.mxu0 0.0
        %6993 = vmatpush1.msra.mxu0 0.0
        %6994 = vmatprep.subr.mxu0 0.0
        %6995 = vmatpush1.msra.mxu0 0.0
        %6996 = vmatprep.subr.mxu0 0.0
        %6997 = vmatpush1.msra.mxu0 0.0
        %6998 = vmatprep.subr.mxu0 0.0
        %6999 = vmatpush1.msra.mxu0 0.0
        %7000 = vmatprep.subr.mxu0 0.0
        %7001 = vmatpush1.msra.mxu0 0.0
        %7002 = vmatprep.subr.mxu0 0.0
        %7003 = vmatpush1.msra.mxu0 0.0
        %7004 = vmatprep.subr.mxu0 0.0
        %7005 = vmatpush1.msra.mxu0 0.0
        %7006 = vmatprep.subr.mxu0 0.0
        %7007 = vmatpush1.msra.mxu0 0.0
        %7008 = vmatprep.subr.mxu0 0.0
        %7009 = vmatpush1.msra.mxu0 0.0
        %7010 = vmatprep.subr.mxu0 0.0
        %7011 = vmatpush1.msra.mxu0 0.0
        %7012 = vmatprep.subr.mxu0 0.0
        %7013 = vmatpush1.msra.mxu0 0.0
        %7014 = vmatprep.subr.mxu0 0.0
        %7015 = vmatpush1.msra.mxu0 0.0
        %7016 = vmatprep.subr.mxu0 0.0
        %7017 = vmatpush1.msra.mxu0 0.0
        %7018 = vmatprep.subr.mxu0 0.0
        %7019 = vmatpush1.msra.mxu0 0.0
        %7020 = vmatprep.subr.mxu0 0.0
        %7021 = vmatpush1.msra.mxu0 0.0
        %7022 = vmatprep.subr.mxu0 0.0
        %7023 = vmatpush1.msra.mxu0 0.0
        %7024 = vmatprep.subr.mxu0 0.0
        %7025 = vmatpush1.msra.mxu0 0.0
        %7026 = vmatprep.mubr.f32.mxu0 0.0
        %7027 = vmatmul.mubr.f32.gmra.mrb[0].mxu0 %v6915
        %v7028 = vpop.f32.mrb[0].mxu0
        %v7029 = vadd.f32 0.0, %v7028
        %v7030 = vpop.f32.mrb[0].mxu0
        %7031 = vmatprep.mubr.f32.mxu0 0.0
        %7032 = vmatmul.mubr.f32.gmra.mrb[0].mxu0 %v6918
        %v7033 = vpop.f32.mrb[0].mxu0
        %v7034 = vadd.f32 0.0, %v7033
        %v7035 = vpop.f32.mrb[0].mxu0
        %7036 = vmatprep.mubr.f32.mxu0 0.0
        %7037 = vmatmul.mubr.f32.gmra.mrb[0].mxu0 %v6921
        %v7038 = vpop.f32.mrb[0].mxu0
        %v7039 = vadd.f32 0.0, %v7038
        %v7040 = vpop.f32.mrb[0].mxu0
        %7041 = vmatprep.mubr.f32.mxu0 0.0
        %7042 = vmatmul.mubr.f32.gmra.mrb[0].mxu0 %v6924
        %v7043 = vpop.f32.mrb[0].mxu0
        %v7044 = vadd.f32 0.0, %v7043
        %v7045 = vpop.f32.mrb[0].mxu0
        %7046 = vmatprep.mubr.f32.mxu0 0.0
        %7047 = vmatmul.mubr.f32.gmra.mrb[0].mxu0 %v6927
        %v7048 = vpop.f32.mrb[0].mxu0
        %v7049 = vadd.f32 0.0, %v7048
        %v7050 = vpop.f32.mrb[0].mxu0
        %7051 = vmatprep.mubr.f32.mxu0 0.0
        %7052 = vmatmul.mubr.f32.gmra.mrb[0].mxu0 %v6930
        %v7053 = vpop.f32.mrb[0].mxu0
        %v7054 = vadd.f32 0.0, %v7053
        %v7055 = vpop.f32.mrb[0].mxu0
        %7056 = vmatprep.mubr.f32.mxu0 0.0
        %7057 = vmatmul.mubr.f32.gmra.mrb[0].mxu0 %v6933
        %v7058 = vpop.f32.mrb[0].mxu0
        %v7059 = vadd.f32 0.0, %v7058
        %v7060 = vpop.f32.mrb[0].mxu0
        %7061 = vmatprep.mubr.f32.mxu0 0.0
        %7062 = vmatmul.mubr.f32.gmra.mrb[0].mxu0 %v6936
        %v7063 = vpop.f32.mrb[0].mxu0
        %v7064 = vadd.f32 0.0, %v7063
        %v7065 = vpop.f32.mrb[0].mxu0
        %7066 = vmatprep.mubr.f32.mxu0 0.0
        %7067 = vmatmul.mubr.f32.gmra.mrb[0].mxu0 %v6939
        %v7068 = vpop.f32.mrb[0].mxu0
        %v7069 = vadd.f32 0.0, %v7068
        %v7070 = vpop.f32.mrb[0].mxu0
        %7071 = vmatprep.mubr.f32.mxu0 0.0
        %7072 = vmatmul.mubr.f32.gmra.mrb[0].mxu0 %v6942
        %v7073 = vpop.f32.mrb[0].mxu0
        %v7074 = vadd.f32 0.0, %v7073
        %v7075 = vpop.f32.mrb[0].mxu0
        %7076 = vmatprep.mubr.f32.mxu0 0.0
        %7077 = vmatmul.mubr.f32.gmra.mrb[0].mxu0 %v6945
        %v7078 = vpop.f32.mrb[0].mxu0
        %v7079 = vadd.f32 0.0, %v7078
        %v7080 = vpop.f32.mrb[0].mxu0
        %7081 = vmatprep.mubr.f32.mxu0 0.0
        %7082 = vmatmul.mubr.f32.gmra.mrb[0].mxu0 %v6948
        %v7083 = vpop.f32.mrb[0].mxu0
        %v7084 = vadd.f32 0.0, %v7083
        %v7085 = vpop.f32.mrb[0].mxu0
        %7086 = vmatprep.mubr.f32.mxu0 0.0
        %7087 = vmatmul.mubr.f32.gmra.mrb[0].mxu0 %v6951
        %v7088 = vpop.f32.mrb[0].mxu0
        %v7089 = vadd.f32 0.0, %v7088
        %v7090 = vpop.f32.mrb[0].mxu0
        %7091 = vmatprep.mubr.f32.mxu0 0.0
        %7092 = vmatmul.mubr.f32.gmra.mrb[0].mxu0 %v6954
        %v7093 = vpop.f32.mrb[0].mxu0
        %v7094 = vadd.f32 0.0, %v7093
        %v7095 = vpop.f32.mrb[0].mxu0
        %7096 = vmatprep.mubr.f32.mxu0 0.0
        %7097 = vmatmul.mubr.f32.gmra.mrb[0].mxu0 %v6957
        %v7098 = vpop.f32.mrb[0].mxu0
        %v7099 = vadd.f32 0.0, %v7098
        %v7100 = vpop.f32.mrb[0].mxu0
        %7101 = vmatprep.mubr.f32.mxu0 0.0
        %7102 = vmatmul.mubr.f32.gmra.mrb[0].mxu0 %v6960
        %v7103 = vpop.f32.mrb[0].mxu0
        %v7104 = vadd.f32 0.0, %v7103
        %v7105 = vpop.f32.mrb[0].mxu0
        %7106 = vdwg.mxu0
        %v7107 = vadd.f32 %v6880, %v7029
        %v7108 = vadd.f32 %v6881, %v7034
        %v7109 = vadd.f32 %v6882, %v7039
        %v7110 = vadd.f32 %v6883, %v7044
        %v7111 = vadd.f32 %v6884, %v7049
        %v7112 = vadd.f32 %v6885, %v7054
        %v7113 = vadd.f32 %v6886, %v7059
        %v7114 = vadd.f32 %v6887, %v7064
        %v7115 = vadd.f32 %v6888, %v7069
        %v7116 = vadd.f32 %v6889, %v7074
        %v7117 = vadd.f32 %v6890, %v7079
        %v7118 = vadd.f32 %v6891, %v7084
        %v7119 = vadd.f32 %v6892, %v7089
        %v7120 = vadd.f32 %v6893, %v7094
        %v7121 = vadd.f32 %v6894, %v7099
        %v7122 = vadd.f32 %v6895, %v7104
        %s7123 = scalar_lea.vmem %s4, 3
        %v7124 = vld [vmem:[%s7123] sm:$0x1]
        %v7126 = vlaneseq
        %v7127 = vshrl.u32 %v7126, 7
        %v7128 = vsub.s32 0, %v7127
        %v7129 = vrot.slane %v7124, %v7128
        %v7131 = vmul.f32 %v7107, %v7129
        %v7132 = vmul.f32 %v7108, %v7129
        %v7133 = vmul.f32 %v7109, %v7129
        %v7134 = vmul.f32 %v7110, %v7129
        %v7135 = vmul.f32 %v7111, %v7129
        %v7136 = vmul.f32 %v7112, %v7129
        %v7137 = vmul.f32 %v7113, %v7129
        %v7138 = vmul.f32 %v7114, %v7129
        %v7139 = vmul.f32 %v7115, %v7129
        %v7140 = vmul.f32 %v7116, %v7129
        %v7141 = vmul.f32 %v7117, %v7129
        %v7142 = vmul.f32 %v7118, %v7129
        %v7143 = vmul.f32 %v7119, %v7129
        %v7144 = vmul.f32 %v7120, %v7129
        %v7145 = vmul.f32 %v7121, %v7129
        %v7146 = vmul.f32 %v7122, %v7129
        %s7147 = scalar_lea.vmem %s5, 3
        %v7148 = vld [vmem:[%s7147] sm:$0x1]
        %v7150 = vlaneseq
        %v7151 = vshrl.u32 %v7150, 7
        %v7152 = vsub.s32 0, %v7151
        %v7153 = vrot.slane %v7148, %v7152
        %v7155 = vadd.f32 %v7131, %v7153
        %v7156 = vadd.f32 %v7132, %v7153
        %v7157 = vadd.f32 %v7133, %v7153
        %v7158 = vadd.f32 %v7134, %v7153
        %v7159 = vadd.f32 %v7135, %v7153
        %v7160 = vadd.f32 %v7136, %v7153
        %v7161 = vadd.f32 %v7137, %v7153
        %v7162 = vadd.f32 %v7138, %v7153
        %v7163 = vadd.f32 %v7139, %v7153
        %v7164 = vadd.f32 %v7140, %v7153
        %v7165 = vadd.f32 %v7141, %v7153
        %v7166 = vadd.f32 %v7142, %v7153
        %v7167 = vadd.f32 %v7143, %v7153
        %v7168 = vadd.f32 %v7144, %v7153
        %v7169 = vadd.f32 %v7145, %v7153
        %v7170 = vadd.f32 %v7146, %v7153
        %v7171 = vmax.f32 %v7155, 0.0
        %v7172 = vmax.f32 %v7156, 0.0
        %v7173 = vmax.f32 %v7157, 0.0
        %v7174 = vmax.f32 %v7158, 0.0
        %v7175 = vmax.f32 %v7159, 0.0
        %v7176 = vmax.f32 %v7160, 0.0
        %v7177 = vmax.f32 %v7161, 0.0
        %v7178 = vmax.f32 %v7162, 0.0
        %v7179 = vmax.f32 %v7163, 0.0
        %v7180 = vmax.f32 %v7164, 0.0
        %v7181 = vmax.f32 %v7165, 0.0
        %v7182 = vmax.f32 %v7166, 0.0
        %v7183 = vmax.f32 %v7167, 0.0
        %v7184 = vmax.f32 %v7168, 0.0
        %v7185 = vmax.f32 %v7169, 0.0
        %v7186 = vmax.f32 %v7170, 0.0
        %s7187 = scalar_lea.vmem %s3, 384
        %v7188 = vld [vmem:[%s7187] sm:$0xff]
        %v7189 = vld [vmem:[%s7187 + $0x8] sm:$0xff]
        %v7190 = vld [vmem:[%s7187 + $0x10] sm:$0xff]
        %v7191 = vld [vmem:[%s7187 + $0x18] sm:$0xff]
        %v7192 = vld [vmem:[%s7187 + $0x20] sm:$0xff]
        %v7193 = vld [vmem:[%s7187 + $0x28] sm:$0xff]
        %v7194 = vld [vmem:[%s7187 + $0x30] sm:$0xff]
        %v7195 = vld [vmem:[%s7187 + $0x38] sm:$0xff]
        %v7196 = vld [vmem:[%s7187 + $0x40] sm:$0xff]
        %v7197 = vld [vmem:[%s7187 + $0x48] sm:$0xff]
        %v7198 = vld [vmem:[%s7187 + $0x50] sm:$0xff]
        %v7199 = vld [vmem:[%s7187 + $0x58] sm:$0xff]
        %v7200 = vld [vmem:[%s7187 + $0x60] sm:$0xff]
        %v7201 = vld [vmem:[%s7187 + $0x68] sm:$0xff]
        %v7202 = vld [vmem:[%s7187 + $0x70] sm:$0xff]
        %v7203 = vld [vmem:[%s7187 + $0x78] sm:$0xff]
        %7204 = vmatprep.subr.mxu0 0.0
        %7205 = vmatpush1.msra.mxu0 %v7188
        %7206 = vmatprep.subr.mxu0 0.0
        %7207 = vmatpush1.msra.mxu0 %v7189
        %7208 = vmatprep.subr.mxu0 0.0
        %7209 = vmatpush1.msra.mxu0 %v7190
        %7210 = vmatprep.subr.mxu0 0.0
        %7211 = vmatpush1.msra.mxu0 %v7191
        %7212 = vmatprep.subr.mxu0 0.0
        %7213 = vmatpush1.msra.mxu0 %v7192
        %7214 = vmatprep.subr.mxu0 0.0
        %7215 = vmatpush1.msra.mxu0 %v7193
        %7216 = vmatprep.subr.mxu0 0.0
        %7217 = vmatpush1.msra.mxu0 %v7194
        %7218 = vmatprep.subr.mxu0 0.0
        %7219 = vmatpush1.msra.mxu0 %v7195
        %7220 = vmatprep.subr.mxu0 0.0
        %7221 = vmatpush1.msra.mxu0 %v7196
        %7222 = vmatprep.subr.mxu0 0.0
        %7223 = vmatpush1.msra.mxu0 %v7197
        %7224 = vmatprep.subr.mxu0 0.0
        %7225 = vmatpush1.msra.mxu0 %v7198
        %7226 = vmatprep.subr.mxu0 0.0
        %7227 = vmatpush1.msra.mxu0 %v7199
        %7228 = vmatprep.subr.mxu0 0.0
        %7229 = vmatpush1.msra.mxu0 %v7200
        %7230 = vmatprep.subr.mxu0 0.0
        %7231 = vmatpush1.msra.mxu0 %v7201
        %7232 = vmatprep.subr.mxu0 0.0
        %7233 = vmatpush1.msra.mxu0 %v7202
        %7234 = vmatprep.subr.mxu0 0.0
        %7235 = vmatpush1.msra.mxu0 %v7203
        %7236 = vmatprep.subr.mxu0 0.0
        %7237 = vmatpush1.msra.mxu0 0.0
        %7238 = vmatprep.subr.mxu0 0.0
        %7239 = vmatpush1.msra.mxu0 0.0
        %7240 = vmatprep.subr.mxu0 0.0
        %7241 = vmatpush1.msra.mxu0 0.0
        %7242 = vmatprep.subr.mxu0 0.0
        %7243 = vmatpush1.msra.mxu0 0.0
        %7244 = vmatprep.subr.mxu0 0.0
        %7245 = vmatpush1.msra.mxu0 0.0
        %7246 = vmatprep.subr.mxu0 0.0
        %7247 = vmatpush1.msra.mxu0 0.0
        %7248 = vmatprep.subr.mxu0 0.0
        %7249 = vmatpush1.msra.mxu0 0.0
        %7250 = vmatprep.subr.mxu0 0.0
        %7251 = vmatpush1.msra.mxu0 0.0
        %7252 = vmatprep.subr.mxu0 0.0
        %7253 = vmatpush1.msra.mxu0 0.0
        %7254 = vmatprep.subr.mxu0 0.0
        %7255 = vmatpush1.msra.mxu0 0.0
        %7256 = vmatprep.subr.mxu0 0.0
        %7257 = vmatpush1.msra.mxu0 0.0
        %7258 = vmatprep.subr.mxu0 0.0
        %7259 = vmatpush1.msra.mxu0 0.0
        %7260 = vmatprep.subr.mxu0 0.0
        %7261 = vmatpush1.msra.mxu0 0.0
        %7262 = vmatprep.subr.mxu0 0.0
        %7263 = vmatpush1.msra.mxu0 0.0
        %7264 = vmatprep.subr.mxu0 0.0
        %7265 = vmatpush1.msra.mxu0 0.0
        %7266 = vmatprep.subr.mxu0 0.0
        %7267 = vmatpush1.msra.mxu0 0.0
        %7268 = vmatprep.mubr.f32.mxu0 0.0
        %7269 = vmatmul.mubr.f32.gmra.mrb[0].mxu0 %v7171
        %v7270 = vpop.f32.mrb[0].mxu0
        %v7271 = vadd.f32 0.0, %v7270
        %v7272 = vpop.f32.mrb[0].mxu0
        %7273 = vmatprep.mubr.f32.mxu0 0.0
        %7274 = vmatmul.mubr.f32.gmra.mrb[0].mxu0 %v7172
        %v7275 = vpop.f32.mrb[0].mxu0
        %v7276 = vadd.f32 0.0, %v7275
        %v7277 = vpop.f32.mrb[0].mxu0
        %7278 = vmatprep.mubr.f32.mxu0 0.0
        %7279 = vmatmul.mubr.f32.gmra.mrb[0].mxu0 %v7173
        %v7280 = vpop.f32.mrb[0].mxu0
        %v7281 = vadd.f32 0.0, %v7280
        %v7282 = vpop.f32.mrb[0].mxu0
        %7283 = vmatprep.mubr.f32.mxu0 0.0
        %7284 = vmatmul.mubr.f32.gmra.mrb[0].mxu0 %v7174
        %v7285 = vpop.f32.mrb[0].mxu0
        %v7286 = vadd.f32 0.0, %v7285
        %v7287 = vpop.f32.mrb[0].mxu0
        %7288 = vmatprep.mubr.f32.mxu0 0.0
        %7289 = vmatmul.mubr.f32.gmra.mrb[0].mxu0 %v7175
        %v7290 = vpop.f32.mrb[0].mxu0
        %v7291 = vadd.f32 0.0, %v7290
        %v7292 = vpop.f32.mrb[0].mxu0
        %7293 = vmatprep.mubr.f32.mxu0 0.0
        %7294 = vmatmul.mubr.f32.gmra.mrb[0].mxu0 %v7176
        %v7295 = vpop.f32.mrb[0].mxu0
        %v7296 = vadd.f32 0.0, %v7295
        %v7297 = vpop.f32.mrb[0].mxu0
        %7298 = vmatprep.mubr.f32.mxu0 0.0
        %7299 = vmatmul.mubr.f32.gmra.mrb[0].mxu0 %v7177
        %v7300 = vpop.f32.mrb[0].mxu0
        %v7301 = vadd.f32 0.0, %v7300
        %v7302 = vpop.f32.mrb[0].mxu0
        %7303 = vmatprep.mubr.f32.mxu0 0.0
        %7304 = vmatmul.mubr.f32.gmra.mrb[0].mxu0 %v7178
        %v7305 = vpop.f32.mrb[0].mxu0
        %v7306 = vadd.f32 0.0, %v7305
        %v7307 = vpop.f32.mrb[0].mxu0
        %7308 = vmatprep.mubr.f32.mxu0 0.0
        %7309 = vmatmul.mubr.f32.gmra.mrb[0].mxu0 %v7179
        %v7310 = vpop.f32.mrb[0].mxu0
        %v7311 = vadd.f32 0.0, %v7310
        %v7312 = vpop.f32.mrb[0].mxu0
        %7313 = vmatprep.mubr.f32.mxu0 0.0
        %7314 = vmatmul.mubr.f32.gmra.mrb[0].mxu0 %v7180
        %v7315 = vpop.f32.mrb[0].mxu0
        %v7316 = vadd.f32 0.0, %v7315
        %v7317 = vpop.f32.mrb[0].mxu0
        %7318 = vmatprep.mubr.f32.mxu0 0.0
        %7319 = vmatmul.mubr.f32.gmra.mrb[0].mxu0 %v7181
        %v7320 = vpop.f32.mrb[0].mxu0
        %v7321 = vadd.f32 0.0, %v7320
        %v7322 = vpop.f32.mrb[0].mxu0
        %7323 = vmatprep.mubr.f32.mxu0 0.0
        %7324 = vmatmul.mubr.f32.gmra.mrb[0].mxu0 %v7182
        %v7325 = vpop.f32.mrb[0].mxu0
        %v7326 = vadd.f32 0.0, %v7325
        %v7327 = vpop.f32.mrb[0].mxu0
        %7328 = vmatprep.mubr.f32.mxu0 0.0
        %7329 = vmatmul.mubr.f32.gmra.mrb[0].mxu0 %v7183
        %v7330 = vpop.f32.mrb[0].mxu0
        %v7331 = vadd.f32 0.0, %v7330
        %v7332 = vpop.f32.mrb[0].mxu0
        %7333 = vmatprep.mubr.f32.mxu0 0.0
        %7334 = vmatmul.mubr.f32.gmra.mrb[0].mxu0 %v7184
        %v7335 = vpop.f32.mrb[0].mxu0
        %v7336 = vadd.f32 0.0, %v7335
        %v7337 = vpop.f32.mrb[0].mxu0
        %7338 = vmatprep.mubr.f32.mxu0 0.0
        %7339 = vmatmul.mubr.f32.gmra.mrb[0].mxu0 %v7185
        %v7340 = vpop.f32.mrb[0].mxu0
        %v7341 = vadd.f32 0.0, %v7340
        %v7342 = vpop.f32.mrb[0].mxu0
        %7343 = vmatprep.mubr.f32.mxu0 0.0
        %7344 = vmatmul.mubr.f32.gmra.mrb[0].mxu0 %v7186
        %v7345 = vpop.f32.mrb[0].mxu0
        %v7346 = vadd.f32 0.0, %v7345
        %v7347 = vpop.f32.mrb[0].mxu0
        %7348 = vdwg.mxu0
        %v7349 = vadd.f32 %v5155, %v7271
        %v7350 = vadd.f32 %v5156, %v7276
        %v7351 = vadd.f32 %v5157, %v7281
        %v7352 = vadd.f32 %v5158, %v7286
        %v7353 = vadd.f32 %v5159, %v7291
        %v7354 = vadd.f32 %v5160, %v7296
        %v7355 = vadd.f32 %v5161, %v7301
        %v7356 = vadd.f32 %v5162, %v7306
        %v7357 = vadd.f32 %v5163, %v7311
        %v7358 = vadd.f32 %v5164, %v7316
        %v7359 = vadd.f32 %v5165, %v7321
        %v7360 = vadd.f32 %v5166, %v7326
        %v7361 = vadd.f32 %v5167, %v7331
        %v7362 = vadd.f32 %v5168, %v7336
        %v7363 = vadd.f32 %v5169, %v7341
        %v7364 = vadd.f32 %v5170, %v7346
        %v7365 = vld [vmem:[%s358] sm:$0x1]
        %v7367 = vlaneseq
        %v7368 = vshrl.u32 %v7367, 7
        %v7369 = vsub.s32 0, %v7368
        %v7370 = vrot.slane %v7365, %v7369
        %v7372 = vadd.f32 %v7349, %v7370
        %v7373 = vadd.f32 %v7350, %v7370
        %v7374 = vadd.f32 %v7351, %v7370
        %v7375 = vadd.f32 %v7352, %v7370
        %v7376 = vadd.f32 %v7353, %v7370
        %v7377 = vadd.f32 %v7354, %v7370
        %v7378 = vadd.f32 %v7355, %v7370
        %v7379 = vadd.f32 %v7356, %v7370
        %v7380 = vadd.f32 %v7357, %v7370
        %v7381 = vadd.f32 %v7358, %v7370
        %v7382 = vadd.f32 %v7359, %v7370
        %v7383 = vadd.f32 %v7360, %v7370
        %v7384 = vadd.f32 %v7361, %v7370
        %v7385 = vadd.f32 %v7362, %v7370
        %v7386 = vadd.f32 %v7363, %v7370
        %v7387 = vadd.f32 %v7364, %v7370
        %v7388 = vld [vmem:[%s7] sm:$0x1]
        %v7390 = vlaneseq
        %v7391 = vshrl.u32 %v7390, 7
        %v7392 = vsub.s32 0, %v7391
        %v7393 = vrot.slane %v7388, %v7392
        %v7395 = vmul.f32 %v7372, %v7393
        %v7396 = vmul.f32 %v7373, %v7393
        %v7397 = vmul.f32 %v7374, %v7393
        %v7398 = vmul.f32 %v7375, %v7393
        %v7399 = vmul.f32 %v7376, %v7393
        %v7400 = vmul.f32 %v7377, %v7393
        %v7401 = vmul.f32 %v7378, %v7393
        %v7402 = vmul.f32 %v7379, %v7393
        %v7403 = vmul.f32 %v7380, %v7393
        %v7404 = vmul.f32 %v7381, %v7393
        %v7405 = vmul.f32 %v7382, %v7393
        %v7406 = vmul.f32 %v7383, %v7393
        %v7407 = vmul.f32 %v7384, %v7393
        %v7408 = vmul.f32 %v7385, %v7393
        %v7409 = vmul.f32 %v7386, %v7393
        %v7410 = vmul.f32 %v7387, %v7393
        %v7411 = vld [vmem:[%s8] sm:$0x1]
        %v7413 = vlaneseq
        %v7414 = vshrl.u32 %v7413, 7
        %v7415 = vsub.s32 0, %v7414
        %v7416 = vrot.slane %v7411, %v7415
        %v7418 = vadd.f32 %v7395, %v7416
        %v7419 = vadd.f32 %v7396, %v7416
        %v7420 = vadd.f32 %v7397, %v7416
        %v7421 = vadd.f32 %v7398, %v7416
        %v7422 = vadd.f32 %v7399, %v7416
        %v7423 = vadd.f32 %v7400, %v7416
        %v7424 = vadd.f32 %v7401, %v7416
        %v7425 = vadd.f32 %v7402, %v7416
        %v7426 = vadd.f32 %v7403, %v7416
        %v7427 = vadd.f32 %v7404, %v7416
        %v7428 = vadd.f32 %v7405, %v7416
        %v7429 = vadd.f32 %v7406, %v7416
        %v7430 = vadd.f32 %v7407, %v7416
        %v7431 = vadd.f32 %v7408, %v7416
        %v7432 = vadd.f32 %v7409, %v7416
        %v7433 = vadd.f32 %v7410, %v7416
        %v7434 = vmax.f32 %v7418, 0.0
        %v7435 = vmax.f32 %v7419, 0.0
        %v7436 = vmax.f32 %v7420, 0.0
        %v7437 = vmax.f32 %v7421, 0.0
        %v7438 = vmax.f32 %v7422, 0.0
        %v7439 = vmax.f32 %v7423, 0.0
        %v7440 = vmax.f32 %v7424, 0.0
        %v7441 = vmax.f32 %v7425, 0.0
        %v7442 = vmax.f32 %v7426, 0.0
        %v7443 = vmax.f32 %v7427, 0.0
        %v7444 = vmax.f32 %v7428, 0.0
        %v7445 = vmax.f32 %v7429, 0.0
        %v7446 = vmax.f32 %v7430, 0.0
        %v7447 = vmax.f32 %v7431, 0.0
        %v7448 = vmax.f32 %v7432, 0.0
        %v7449 = vmax.f32 %v7433, 0.0
        %7450 = vst [vmem:[%s350] sm:$0xff] %v7434
        %7451 = vst [vmem:[%s350 + $0x8] sm:$0xff] %v7435
        %7452 = vst [vmem:[%s350 + $0x10] sm:$0xff] %v7436
        %7453 = vst [vmem:[%s350 + $0x18] sm:$0xff] %v7437
        %7454 = vst [vmem:[%s350 + $0x20] sm:$0xff] %v7438
        %7455 = vst [vmem:[%s350 + $0x28] sm:$0xff] %v7439
        %7456 = vst [vmem:[%s350 + $0x30] sm:$0xff] %v7440
        %7457 = vst [vmem:[%s350 + $0x38] sm:$0xff] %v7441
        %7458 = vst [vmem:[%s350 + $0x40] sm:$0xff] %v7442
        %7459 = vst [vmem:[%s350 + $0x48] sm:$0xff] %v7443
        %7460 = vst [vmem:[%s350 + $0x50] sm:$0xff] %v7444
        %7461 = vst [vmem:[%s350 + $0x58] sm:$0xff] %v7445
        %7462 = vst [vmem:[%s350 + $0x60] sm:$0xff] %v7446
        %7463 = vst [vmem:[%s350 + $0x68] sm:$0xff] %v7447
        %7464 = vst [vmem:[%s350 + $0x70] sm:$0xff] %v7448
        %7465 = vst [vmem:[%s350 + $0x78] sm:$0xff] %v7449
        %s7466 = sand.u32 %s244, 1
        %s7467 = scalar_lea.sflag [#allocation3], %s7466
        %s7468 = sand.u32 %s244, 1
        %s7469 = smul.addr %s7468, 128
        %s7470 = scalar_lea.vmem [#allocation2], %s7469
        // Predicated region
        $region57: #{tpu_custom_call.1} parent=55 // pred_check
          %p7471 = pneg %p254
        $region58: #{tpu_custom_call.1} parent=55 // pred_check_branch
          %7473 = sbr.rel (%p7471) target = $region60
        $region59: #{tpu_custom_call.1} parent=55 // pred_region
          %s7474 = smul.u32 16, %s28
          %s7476 = ssub.s32 2048, 2048
          %7477 = vsyncadd %s7467, %s7476
          %s7478 = smul.addr %s27, 32
          %s7479 = sadd.s32 %s7474, %s7478
          %s7480 = smul.addr %s7479, 128
          %s7481 = scalar_lea.hbm %s9, %s7480
          %s7482 = sshll.u32 %s7470, 4
          %s7483 = int_to_ptr.vmem [resolvable:$true] %s7482
          %7488 = dma.vmem_to_hbm [thread:$0]  %s7483, 2048, %s7481, %s7467, 128, 128, 8
        $region60: #{tpu_custom_call.1} parent=55 // pred_fallthru
          _
      $region56: #{tpu_custom_call.1} parent=5 // pred_fallthru
        _
      %p7489 = scmp.le.s32.totalorder 2, %s18
      // Predicated region
      $region61: #{tpu_custom_call.1} parent=5 // pred_check
        %p7490 = pneg %p7489
      $region62: #{tpu_custom_call.1} parent=5 // pred_check_branch
        %7492 = sbr.rel (%p7490) target = $region64
      $region63: #{tpu_custom_call.1} parent=5 // pred_region
        %s7493 = ssub.s32 %s18, 2
        // Predicated region
        $region65: #{tpu_custom_call.1} parent=63 // pred_check
          %p7494 = pneg %p260
        $region66: #{tpu_custom_call.1} parent=63 // pred_check_branch
          %7496 = sbr.rel (%p7494) target = $region68
        $region67: #{tpu_custom_call.1} parent=63 // pred_region
          %s7497 = sand.u32 %s245, 1
          %s7498 = scalar_lea.sflag [#allocation3], %s7497
          %s7499 = sand.u32 %s245, 1
          %s7500 = smul.addr %s7499, 128
          %s7501 = scalar_lea.vmem [#allocation2], %s7500
          %7502 = dma.done %s7498, 2048
        $region68: #{tpu_custom_call.1} parent=63 // pred_fallthru
          _
      $region64: #{tpu_custom_call.1} parent=5 // pred_fallthru
        _
    $region6: #{tpu_custom_call.1} parent=1 // loop_footer
      %s22 = sadd.s32 1, %s18
    $region7: #{tpu_custom_call.1} parent=1 // loop_footer_branch
      %17 = sbr.rel target = $region3
    $region8: #{tpu_custom_call.1} parent=1 // loop_exit
      _
    %7503 = vsyncpa [#allocation3], 1
    %s7504 = scalar_lea.sflag [#allocation3], 1
    %7505 = vsyncpa %s7504, 1

</llo_original>
